<compile_context>
chip_gen: v7x
topology: tpu7x:2x2x1
jax: 0.10.0
libtpu: 0.0.40
codegen_flags: <defaults>
</compile_context>

<pallas_src>
import functools

import jax
import jax.numpy as jnp
from jax.experimental import pallas as pl
from jax.experimental.pallas import tpu as pltpu

BN_EPS = 1e-5
LN_EPS = 1e-5
MM_DTYPE = jnp.bfloat16   # matmul-operand dtype (f32 accumulation via preferred_element_type)


def _mm(a, b):
    """MXU matmul with bf16 operands and f32 accumulation."""
    return jnp.dot(a.astype(MM_DTYPE), b.astype(MM_DTYPE),
                   preferred_element_type=jnp.float32)


def _layer_norm(y, gamma, beta):
    """Single-pass LayerNorm over the last axis (sum + sum of squares)."""
    inv_d = 1.0 / y.shape[-1]
    mu = jnp.sum(y, axis=-1, keepdims=True) * inv_d
    ms = jnp.sum(y * y, axis=-1, keepdims=True) * inv_d
    var = jnp.maximum(ms - mu * mu, 0.0)
    return (y - mu) * jax.lax.rsqrt(var + LN_EPS) * gamma + beta


# ----------------------------- fused per-graph forward kernel -----------------------
def _lgi_gt_kernel(x_ref, ahat_ref, pool_ref,
                   lin1_w_ref, lin1_b_ref, lin2_w_ref, lin2_b_ref,
                   gin_w1_ref, gin_w2_ref, gin_vec_ref,
                   t_wqkv_ref, t_bqkv_ref, t_wo_ref,
                   t_wf1_ref, t_bf1_ref, t_wf2_ref, t_vec_ref,
                   out_ref, *, num_heads, softmax_dtype):
    n = x_ref.shape[0]                 # nodes in this graph block
    d = lin1_w_ref.shape[1]
    nh = num_heads
    dh = d // nh

    ahat = ahat_ref[...]               # [n, n] bf16 diagonal block (host-cast)

    # x = lin1(x); out = 0
    x = _mm(x_ref[...], lin1_w_ref[...]) + lin1_b_ref[...]
    acc = jnp.zeros_like(x)

    # ---- GIN layer: x = bn(mlp(A_hat @ x)); out += x; x = relu(out) ----------------
    def gin_body(i, carry):
        xc, ac = carry
        vec = gin_vec_ref[i]                         # [6, D]: b1, s1, t1, b2, s2, t2
        agg = _mm(ahat, xc)                          # (1+eps)*x_i + sum_j x_j, eps=0
        h = _mm(agg, gin_w1_ref[i]) + vec[0:1, :]    # mlp Linear 1
        h = h * vec[1:2, :] + vec[2:3, :]            # mlp BN (eval, folded)
        h = jnp.maximum(h, 0.0)                      # mlp ReLU
        h = _mm(h, gin_w2_ref[i]) + vec[3:4, :]      # mlp Linear 2
        h = h * vec[4:5, :] + vec[5:6, :]            # outer bns1[i]/bns2[i] (folded)
        ac = ac + h                                  # out = out + x
        return jnp.maximum(ac, 0.0), ac              # x = relu(out)

    # ---- transformer layer (post-LN MHA + ReLU FFN); out += x; x = out -------------
    def t_layer(i, xc, ac):
        vec = t_vec_ref[i]                           # [6, D]: bo, ln1g, ln1b, bf2, ln2g, ln2b
        # head-batched fused QKV projection; 1/sqrt(dh) pre-folded into wq/bq on host
        xb = jnp.broadcast_to(xc.astype(MM_DTYPE), (nh, n, d))
        qkv = jax.lax.dot_general(xb, t_wqkv_ref[i],
                                  (((2,), (1,)), ((0,), (0,))),
                                  preferred_element_type=jnp.float32) + t_bqkv_ref[i]
        q = qkv[..., 0:dh].astype(MM_DTYPE)          # [H, n, dh]
        k = qkv[..., dh:2 * dh].astype(MM_DTYPE)
        v = qkv[..., 2 * dh:3 * dh].astype(MM_DTYPE)
        s = jax.lax.dot_general(q, k, (((2,), (2,)), ((0,), (0,))),
                                preferred_element_type=jnp.float32)      # [H, n, n]
        s = s - jnp.max(s, axis=-1, keepdims=True)
        p = jnp.exp(s.astype(softmax_dtype))
        den = jnp.sum(p.astype(jnp.float32), axis=-1, keepdims=True)     # [H, n, 1]
        ctx = jax.lax.dot_general(p.astype(MM_DTYPE), v,
                                  (((2,), (1,)), ((0,), (0,))),
                                  preferred_element_type=jnp.float32)    # [H, n, dh]
        ctx = ctx * pl.reciprocal(den, approx=True)
        # head-batched output projection; sum over heads == concat(heads) @ Wo
        attn = jax.lax.dot_general(ctx.astype(MM_DTYPE), t_wo_ref[i],
                                   (((2,), (1,)), ((0,), (0,))),
                                   preferred_element_type=jnp.float32)   # [H, n, D]
        attn = jnp.sum(attn, axis=0) + vec[0:1, :]

        # residual + LN, FFN + residual + LN (post-LN)
        y = _layer_norm(xc + attn, vec[1:2, :], vec[2:3, :])
        f = jnp.maximum(_mm(y, t_wf1_ref[i]) + t_bf1_ref[i], 0.0)
        f = _mm(f, t_wf2_ref[i]) + vec[3:4, :]
        z = _layer_norm(y + f, vec[4:5, :], vec[5:6, :])
        ac = ac + z                                  # out = out + x ; x = out
        return ac, ac

    x, acc = jax.lax.fori_loop(0, 4, gin_body, (x, acc))     # gconvs1[0..3] / bns1
    for t in range(2):                                        # tlayers[0..1]
        x, acc = t_layer(t, x, acc)
    x, acc = jax.lax.fori_loop(4, 8, gin_body, (x, acc))      # gconvs2[0..3] / bns2
    for t in range(2, 4):                                     # tlayers[2..3]
        x, acc = t_layer(t, x, acc)

    # global_mean_pool (per-graph row weights) + lin2; pooled reduction kept in f32
    g = jnp.dot(pool_ref[...], acc, preferred_element_type=jnp.float32)   # [1, D]
    out_ref[...] = _mm(g, lin2_w_ref[...]) + lin2_b_ref[...]


# ----------------------------- host-side plumbing ------------------------------------
def _softmax_dtype():
    # bf16 exp/VPU only pays off on v6e/v7x; v5e has f32-only VPU/EUP.
    try:
        kind = jax.devices()[0].device_kind.lower()
    except Exception:
        return jnp.float32
    return jnp.bfloat16 if ("v6" in kind or "v7" in kind) else jnp.float32


def _vmem_cap_bytes():
    try:
        info = pltpu.get_tpu_info()
        cap = getattr(info, "vmem_capacity_bytes", None)
        if cap:
            return int(cap)
    except Exception:
        pass
    try:
        kind = jax.devices()[0].device_kind.lower()
        return (64 if "v7" in kind else 128) * 1024 * 1024
    except Exception:
        return 64 * 1024 * 1024     # conservative default


def _vmem_limit_bytes(resident_bytes, block_bytes, interm_bytes):
    cap = _vmem_cap_bytes()
    want = resident_bytes + 2 * block_bytes + interm_bytes + (4 << 20)   # headroom
    return int(min(max(want, 16 << 20), int(cap * 0.85)))


def _cost_estimate(num_graphs, n, in_ch, d, d_ff, c, nh, nbytes_in, nbytes_out):
    big_n = num_graphs * n
    dh = d // nh
    flops = 2 * big_n * in_ch * d                                   # lin1
    flops += 8 * (2 * num_graphs * n * n * d + 2 * 2 * big_n * d * d)   # GIN aggregate + 2 linears
    flops += 4 * (2 * big_n * d * 3 * d                             # qkv
                  + 2 * num_graphs * nh * n * n * dh * 2            # scores + context
                  + 2 * big_n * d * d * 1                           # out projection
                  + 2 * big_n * d * d_ff * 2)                       # FFN
    flops += 2 * num_graphs * n * d + 2 * num_graphs * d * c        # pool + lin2
    transcendentals = 4 * num_graphs * nh * n * n + 8 * big_n       # softmax exp + LN rsqrt
    return pl.CostEstimate(flops=int(flops), transcendentals=int(transcendentals),
                           bytes_accessed=int(nbytes_in + nbytes_out))


def lgi_gt_forward(x_blocks, ahat_blocks, pool, params, num_heads):
    """x_blocks [G, n, in_ch] f32, ahat_blocks [G, n, n] bf16, pool [G, 1, n] f32."""
    num_graphs, n, in_ch = x_blocks.shape
    d = params["lin1_w"].shape[1]
    c = params["lin2_w"].shape[1]
    d_ff = params["t_wf1"].shape[-1]
    assert d % num_heads == 0, "feature dim must be divisible by num_heads"
    dh = d // num_heads

    weight_keys = ["lin1_w", "lin1_b", "lin2_w", "lin2_b",
                   "gin_w1", "gin_w2", "gin_vec",
                   "t_wqkv", "t_bqkv", "t_wo",
                   "t_wf1", "t_bf1", "t_wf2", "t_vec"]
    weights = [params[k] for k in weight_keys]

    kernel = functools.partial(_lgi_gt_kernel, num_heads=num_heads,
                               softmax_dtype=_softmax_dtype())

    def _resident_spec(arr):
        zeros = (0,) * arr.ndim
        return pl.BlockSpec(arr.shape, lambda gi, _z=zeros: _z)   # constant index -> loaded once

    in_specs = [
        pl.BlockSpec((None, n, in_ch), lambda gi: (gi, 0, 0)),    # per-graph node features
        pl.BlockSpec((None, n, n), lambda gi: (gi, 0, 0)),        # per-graph A_hat diagonal block
        pl.BlockSpec((None, 1, n), lambda gi: (gi, 0, 0)),        # per-graph mean-pool row
    ] + [_resident_spec(w) for w in weights]
    out_specs = pl.BlockSpec((None, 1, c), lambda gi: (gi, 0, 0))

    resident_bytes = sum(int(w.nbytes) for w in weights)
    block_bytes = n * in_ch * 4 + n * n * 2 + n * 4 + c * 4
    interm_bytes = 4 * (3 * num_heads * n * n + 2 * num_heads * n * 3 * dh
                        + 2 * n * d_ff + 8 * n * d)
    nbytes_in = int(x_blocks.nbytes) + int(ahat_blocks.nbytes) + int(pool.nbytes) + resident_bytes
    nbytes_out = num_graphs * c * 4

    out = pl.pallas_call(
        kernel,
        out_shape=jax.ShapeDtypeStruct((num_graphs, 1, c), jnp.float32),
        grid=(num_graphs,),
        in_specs=in_specs,
        out_specs=out_specs,
        compiler_params=pltpu.CompilerParams(
            dimension_semantics=("parallel",),
            vmem_limit_bytes=_vmem_limit_bytes(resident_bytes, block_bytes, interm_bytes)),
        cost_estimate=_cost_estimate(num_graphs, n, in_ch, d, d_ff, c, num_heads,
                                     nbytes_in, nbytes_out),
    )(x_blocks, ahat_blocks, pool, *weights)
    return out.reshape(num_graphs, c)


# ----------------------------- parameter construction --------------------------------
def _dense(key, fan_in, fan_out):
    kw, kb = jax.random.split(key)
    lim = 1.0 / jnp.sqrt(fan_in)
    w = jax.random.uniform(kw, (fan_in, fan_out), jnp.float32, -lim, lim)
    b = jax.random.uniform(kb, (1, fan_out), jnp.float32, -lim, lim)
    return w, b


def _bn_fold(key, d):
    kg, kb = jax.random.split(key)
    gamma = 1.0 + 0.1 * jax.random.normal(kg, (1, d), jnp.float32)
    beta = 0.1 * jax.random.normal(kb, (1, d), jnp.float32)
    # eval mode, running_mean=0, running_var=1
    scale = gamma / jnp.sqrt(1.0 + BN_EPS)
    shift = beta
    return scale, shift


def _make_gin_layer(key, d):
    k1, k2, k3, k4 = jax.random.split(key, 4)
    w1, b1 = _dense(k1, d, d)
    s1, t1 = _bn_fold(k2, d)       # BN inside mlp
    w2, b2 = _dense(k3, d, d)
    s2, t2 = _bn_fold(k4, d)       # outer bns1[i] / bns2[i]
    vec = jnp.concatenate([b1, s1, t1, b2, s2, t2], axis=0)   # [6, d]
    return w1, w2, vec


def _make_tlayer(key, d, d_ff, num_heads):
    ks = jax.random.split(key, 6)
    wq, bq = _dense(ks[0], d, d)
    wk, bk = _dense(ks[1], d, d)
    wv, bv = _dense(ks[2], d, d)
    wo, bo = _dense(ks[3], d, d)
    wf1, bf1 = _dense(ks[4], d, d_ff)
    wf2, bf2 = _dense(ks[5], d_ff, d)
    dh = d // num_heads
    scale = 1.0 / float(dh) ** 0.5
    wq = wq * scale                 # fold attention scale into the query projection
    bq = bq * scale
    # head-batched QKV weights [H, D, 3*dh] / bias [H, 1, 3*dh]
    wqkv = jnp.stack([jnp.concatenate([wq[:, h * dh:(h + 1) * dh],
                                       wk[:, h * dh:(h + 1) * dh],
                                       wv[:, h * dh:(h + 1) * dh]], axis=1)
                      for h in range(num_heads)], axis=0)
    bqkv = jnp.stack([jnp.concatenate([bq[:, h * dh:(h + 1) * dh],
                                       bk[:, h * dh:(h + 1) * dh],
                                       bv[:, h * dh:(h + 1) * dh]], axis=1)
                      for h in range(num_heads)], axis=0)
    wo_h = jnp.stack([wo[h * dh:(h + 1) * dh, :] for h in range(num_heads)], axis=0)  # [H, dh, D]
    ln1g = jnp.ones((1, d), jnp.float32); ln1b = jnp.zeros((1, d), jnp.float32)
    ln2g = jnp.ones((1, d), jnp.float32); ln2b = jnp.zeros((1, d), jnp.float32)
    vec = jnp.concatenate([bo, ln1g, ln1b, bf2, ln2g, ln2b], axis=0)   # [6, d]
    return wqkv, bqkv, wo_h, wf1, bf1, wf2, vec


def build_params(key, in_ch, d, d_ff, out_ch, num_heads):
    assert d % num_heads == 0
    keys = jax.random.split(key, 16)
    lin1_w, lin1_b = _dense(keys[0], in_ch, d)
    lin2_w, lin2_b = _dense(keys[1], d, out_ch)
    gin = [_make_gin_layer(keys[2 + i], d) for i in range(8)]          # gconvs1 then gconvs2
    tls = [_make_tlayer(keys[10 + i], d, d_ff, num_heads) for i in range(4)]

    bf16 = lambda a: a.astype(jnp.bfloat16)   # store big weight matrices as bf16
    return dict(
        lin1_w=bf16(lin1_w), lin1_b=lin1_b,
        lin2_w=bf16(lin2_w), lin2_b=lin2_b,
        gin_w1=bf16(jnp.stack([g[0] for g in gin])),                   # [8, d, d]
        gin_w2=bf16(jnp.stack([g[1] for g in gin])),                   # [8, d, d]
        gin_vec=jnp.stack([g[2] for g in gin]),                        # [8, 6, d] f32
        t_wqkv=bf16(jnp.stack([t[0] for t in tls])),                   # [4, H, d, 3*dh]
        t_bqkv=jnp.stack([t[1] for t in tls]),                         # [4, H, 1, 3*dh] f32
        t_wo=bf16(jnp.stack([t[2] for t in tls])),                     # [4, H, dh, d]
        t_wf1=bf16(jnp.stack([t[3] for t in tls])),                    # [4, d, d_ff]
        t_bf1=jnp.stack([t[4] for t in tls]),                          # [4, 1, d_ff] f32
        t_wf2=bf16(jnp.stack([t[5] for t in tls])),                    # [4, d_ff, d]
        t_vec=jnp.stack([t[6] for t in tls]),                          # [4, 6, d] f32
    )


# ----------------------------- demo ---------------------------------------------------
if __name__ == "__main__":
    # small config (production sizing should use 128/256-aligned gconv_dim / d_ff)
    in_channels, gconv_dim, out_channels = 8, 32, 4
    num_heads, d_ff = 4, 2 * gconv_dim
    num_graphs, nodes_per_graph = 2, 8

    key = jax.random.PRNGKey(0)
    k_x, k_p = jax.random.split(key)

    # node features per graph block
    x = jax.random.normal(k_x, (num_graphs, nodes_per_graph, in_channels), jnp.float32)

    # ring-graph adjacency per graph; A_hat = A + (1+eps)*I with eps=0
    n = nodes_per_graph
    idx = jnp.arange(n)
    A = jnp.zeros((n, n), jnp.float32)
    A = A.at[idx, (idx + 1) % n].set(1.0)
    A = A.at[(idx + 1) % n, idx].set(1.0)
    a_hat_graph = A + jnp.eye(n, dtype=jnp.float32)
    a_hat = jnp.tile(a_hat_graph[None, :, :], (num_graphs, 1, 1)).astype(jnp.bfloat16)

    # per-graph mean-pool row weights (global_mean_pool)
    pool = jnp.full((num_graphs, 1, n), 1.0 / n, jnp.float32)

    params = build_params(k_p, in_channels, gconv_dim, d_ff, out_channels, num_heads)

    out = lgi_gt_forward(x, a_hat, pool, params, num_heads)
    out = jax.block_until_ready(out)
    assert out.shape == (num_graphs, out_channels)
    assert bool(jnp.all(jnp.isfinite(out)))
    print("KERNEL_OK")
</pallas_src>

<mosaic_0001>
module attributes {stable_mosaic.version = 11 : i64} {
  func.func @_lgi_gt_kernel(%arg0: i32, %arg1: memref<1x8x8xf32, #tpu.memory_space<vmem>>, %arg2: memref<1x8x8xbf16, #tpu.memory_space<vmem>>, %arg3: memref<1x1x8xf32, #tpu.memory_space<vmem>>, %arg4: memref<8x32xbf16, #tpu.memory_space<vmem>>, %arg5: memref<1x32xf32, #tpu.memory_space<vmem>>, %arg6: memref<32x4xbf16, #tpu.memory_space<vmem>>, %arg7: memref<1x4xf32, #tpu.memory_space<vmem>>, %arg8: memref<8x32x32xbf16, #tpu.memory_space<vmem>>, %arg9: memref<8x32x32xbf16, #tpu.memory_space<vmem>>, %arg10: memref<8x6x32xf32, #tpu.memory_space<vmem>>, %arg11: memref<4x4x32x24xbf16, #tpu.memory_space<vmem>>, %arg12: memref<4x4x1x24xf32, #tpu.memory_space<vmem>>, %arg13: memref<4x4x8x32xbf16, #tpu.memory_space<vmem>>, %arg14: memref<4x32x64xbf16, #tpu.memory_space<vmem>>, %arg15: memref<4x1x64xf32, #tpu.memory_space<vmem>>, %arg16: memref<4x64x32xbf16, #tpu.memory_space<vmem>>, %arg17: memref<4x6x32xf32, #tpu.memory_space<vmem>>, %arg18: memref<1x1x4xf32, #tpu.memory_space<vmem>>) attributes {dimension_semantics = [#tpu.dimension_semantics<parallel>], iteration_bounds = array<i64: 2>, scalar_prefetch = 0 : i64, scratch_operands = 0 : i64, tpu.core_type = #tpu.core_type<tc>, window_params = [{transform_indices = @transform_0, window_bounds = array<i64: 1, 8, 8>}, {transform_indices = @transform_1, window_bounds = array<i64: 1, 8, 8>}, {transform_indices = @transform_2, window_bounds = array<i64: 1, 1, 8>}, {pipeline_mode = #tpu.pipeline_mode<synchronous>, transform_indices = @transform_3, window_bounds = array<i64: 8, 32>}, {pipeline_mode = #tpu.pipeline_mode<synchronous>, transform_indices = @transform_4, window_bounds = array<i64: 1, 32>}, {pipeline_mode = #tpu.pipeline_mode<synchronous>, transform_indices = @transform_5, window_bounds = array<i64: 32, 4>}, {pipeline_mode = #tpu.pipeline_mode<synchronous>, transform_indices = @transform_6, window_bounds = array<i64: 1, 4>}, {pipeline_mode = #tpu.pipeline_mode<synchronous>, transform_indices = @transform_7, window_bounds = array<i64: 8, 32, 32>}, {pipeline_mode = #tpu.pipeline_mode<synchronous>, transform_indices = @transform_8, window_bounds = array<i64: 8, 32, 32>}, {pipeline_mode = #tpu.pipeline_mode<synchronous>, transform_indices = @transform_9, window_bounds = array<i64: 8, 6, 32>}, {pipeline_mode = #tpu.pipeline_mode<synchronous>, transform_indices = @transform_10, window_bounds = array<i64: 4, 4, 32, 24>}, {pipeline_mode = #tpu.pipeline_mode<synchronous>, transform_indices = @transform_11, window_bounds = array<i64: 4, 4, 1, 24>}, {pipeline_mode = #tpu.pipeline_mode<synchronous>, transform_indices = @transform_12, window_bounds = array<i64: 4, 4, 8, 32>}, {pipeline_mode = #tpu.pipeline_mode<synchronous>, transform_indices = @transform_13, window_bounds = array<i64: 4, 32, 64>}, {pipeline_mode = #tpu.pipeline_mode<synchronous>, transform_indices = @transform_14, window_bounds = array<i64: 4, 1, 64>}, {pipeline_mode = #tpu.pipeline_mode<synchronous>, transform_indices = @transform_15, window_bounds = array<i64: 4, 64, 32>}, {pipeline_mode = #tpu.pipeline_mode<synchronous>, transform_indices = @transform_16, window_bounds = array<i64: 4, 6, 32>}, {transform_indices = @transform_17, window_bounds = array<i64: 1, 1, 4>}]} {
    %c0 = arith.constant 0 : index
    %c0_0 = arith.constant 0 : index
    %c0_1 = arith.constant 0 : index
    %0 = vector.load %arg2[%c0, %c0_0, %c0_1] : memref<1x8x8xbf16, #tpu.memory_space<vmem>>, vector<1x8x8xbf16>
    %1 = vector.shape_cast %0 : vector<1x8x8xbf16> to vector<8x8xbf16>
    %c0_2 = arith.constant 0 : index
    %c0_3 = arith.constant 0 : index
    %c0_4 = arith.constant 0 : index
    %2 = vector.load %arg1[%c0_2, %c0_3, %c0_4] : memref<1x8x8xf32, #tpu.memory_space<vmem>>, vector<1x8x8xf32>
    %3 = vector.shape_cast %2 : vector<1x8x8xf32> to vector<8x8xf32>
    %c0_5 = arith.constant 0 : index
    %c0_6 = arith.constant 0 : index
    %4 = vector.load %arg4[%c0_5, %c0_6] : memref<8x32xbf16, #tpu.memory_space<vmem>>, vector<8x32xbf16>
    %5 = arith.truncf %3 : vector<8x8xf32> to vector<8x8xbf16>
    %cst = arith.constant dense<0.000000e+00> : vector<8x32xf32>
    %6 = tpu.matmul %5, %4, %cst {dimension_numbers = #tpu.dot_dimension_numbers<[1], [0], [0], [1], [0, 0, 1, 1], [], []>} : vector<8x8xbf16>, vector<8x32xbf16>, vector<8x32xf32> -> vector<8x32xf32>
    %c0_7 = arith.constant 0 : index
    %c0_8 = arith.constant 0 : index
    %7 = vector.load %arg5[%c0_7, %c0_8] : memref<1x32xf32, #tpu.memory_space<vmem>>, vector<1x32xf32>
    %8 = vector.broadcast %7 : vector<1x32xf32> to vector<8x32xf32>
    %9 = arith.addf %6, %8 : vector<8x32xf32>
    %cst_9 = arith.constant 0.000000e+00 : f32
    %10 = vector.broadcast %cst_9 : f32 to vector<8x32xf32>
    %c0_i32 = arith.constant 0 : i32
    %c4_i32 = arith.constant 4 : i32
    %11 = arith.addi %c0_i32, %c4_i32 : i32
    %c1_i32 = arith.constant 1 : i32
    %12:2 = scf.for %arg19 = %c0_i32 to %11 step %c1_i32 iter_args(%arg20 = %9, %arg21 = %10) -> (vector<8x32xf32>, vector<8x32xf32>)  : i32 {
      %470 = arith.index_cast %arg19 : i32 to index
      %c0_208 = arith.constant 0 : index
      %c0_209 = arith.constant 0 : index
      %471 = vector.load %arg10[%470, %c0_208, %c0_209] : memref<8x6x32xf32, #tpu.memory_space<vmem>>, vector<1x6x32xf32>
      %472 = vector.shape_cast %471 : vector<1x6x32xf32> to vector<6x32xf32>
      %473 = arith.truncf %arg20 : vector<8x32xf32> to vector<8x32xbf16>
      %cst_210 = arith.constant dense<0.000000e+00> : vector<8x32xf32>
      %474 = tpu.matmul %1, %473, %cst_210 {dimension_numbers = #tpu.dot_dimension_numbers<[1], [0], [0], [1], [0, 0, 1, 1], [], []>} : vector<8x8xbf16>, vector<8x32xbf16>, vector<8x32xf32> -> vector<8x32xf32>
      %475 = arith.index_cast %arg19 : i32 to index
      %c0_211 = arith.constant 0 : index
      %c0_212 = arith.constant 0 : index
      %476 = vector.load %arg8[%475, %c0_211, %c0_212] : memref<8x32x32xbf16, #tpu.memory_space<vmem>>, vector<1x32x32xbf16>
      %477 = vector.shape_cast %476 : vector<1x32x32xbf16> to vector<32x32xbf16>
      %478 = arith.truncf %474 : vector<8x32xf32> to vector<8x32xbf16>
      %cst_213 = arith.constant dense<0.000000e+00> : vector<8x32xf32>
      %479 = tpu.matmul %478, %477, %cst_213 {dimension_numbers = #tpu.dot_dimension_numbers<[1], [0], [0], [1], [0, 0, 1, 1], [], []>} : vector<8x32xbf16>, vector<32x32xbf16>, vector<8x32xf32> -> vector<8x32xf32>
      %480 = vector.extract_strided_slice %472 {offsets = [0, 0], sizes = [1, 32], strides = [1, 1]} : vector<6x32xf32> to vector<1x32xf32>
      %481 = vector.broadcast %480 : vector<1x32xf32> to vector<8x32xf32>
      %482 = arith.addf %479, %481 : vector<8x32xf32>
      %483 = vector.extract_strided_slice %472 {offsets = [1, 0], sizes = [1, 32], strides = [1, 1]} : vector<6x32xf32> to vector<1x32xf32>
      %484 = vector.broadcast %483 : vector<1x32xf32> to vector<8x32xf32>
      %485 = arith.mulf %482, %484 : vector<8x32xf32>
      %486 = vector.extract_strided_slice %472 {offsets = [2, 0], sizes = [1, 32], strides = [1, 1]} : vector<6x32xf32> to vector<1x32xf32>
      %487 = vector.broadcast %486 : vector<1x32xf32> to vector<8x32xf32>
      %488 = arith.addf %485, %487 : vector<8x32xf32>
      %cst_214 = arith.constant 0.000000e+00 : f32
      %489 = vector.broadcast %cst_214 : f32 to vector<8x32xf32>
      %490 = arith.maximumf %488, %489 : vector<8x32xf32>
      %491 = arith.index_cast %arg19 : i32 to index
      %c0_215 = arith.constant 0 : index
      %c0_216 = arith.constant 0 : index
      %492 = vector.load %arg9[%491, %c0_215, %c0_216] : memref<8x32x32xbf16, #tpu.memory_space<vmem>>, vector<1x32x32xbf16>
      %493 = vector.shape_cast %492 : vector<1x32x32xbf16> to vector<32x32xbf16>
      %494 = arith.truncf %490 : vector<8x32xf32> to vector<8x32xbf16>
      %cst_217 = arith.constant dense<0.000000e+00> : vector<8x32xf32>
      %495 = tpu.matmul %494, %493, %cst_217 {dimension_numbers = #tpu.dot_dimension_numbers<[1], [0], [0], [1], [0, 0, 1, 1], [], []>} : vector<8x32xbf16>, vector<32x32xbf16>, vector<8x32xf32> -> vector<8x32xf32>
      %496 = vector.extract_strided_slice %472 {offsets = [3, 0], sizes = [1, 32], strides = [1, 1]} : vector<6x32xf32> to vector<1x32xf32>
      %497 = vector.broadcast %496 : vector<1x32xf32> to vector<8x32xf32>
      %498 = arith.addf %495, %497 : vector<8x32xf32>
      %499 = vector.extract_strided_slice %472 {offsets = [4, 0], sizes = [1, 32], strides = [1, 1]} : vector<6x32xf32> to vector<1x32xf32>
      %500 = vector.broadcast %499 : vector<1x32xf32> to vector<8x32xf32>
      %501 = arith.mulf %498, %500 : vector<8x32xf32>
      %502 = vector.extract_strided_slice %472 {offsets = [5, 0], sizes = [1, 32], strides = [1, 1]} : vector<6x32xf32> to vector<1x32xf32>
      %503 = vector.broadcast %502 : vector<1x32xf32> to vector<8x32xf32>
      %504 = arith.addf %501, %503 : vector<8x32xf32>
      %505 = arith.addf %arg21, %504 : vector<8x32xf32>
      %cst_218 = arith.constant 0.000000e+00 : f32
      %506 = vector.broadcast %cst_218 : f32 to vector<8x32xf32>
      %507 = arith.maximumf %505, %506 : vector<8x32xf32>
      scf.yield %507, %505 : vector<8x32xf32>, vector<8x32xf32>
    }
    %c4_i32_10 = arith.constant 4 : i32
    %c0_11 = arith.constant 0 : index
    %c0_12 = arith.constant 0 : index
    %c0_13 = arith.constant 0 : index
    %13 = vector.load %arg17[%c0_11, %c0_12, %c0_13] : memref<4x6x32xf32, #tpu.memory_space<vmem>>, vector<1x6x32xf32>
    %14 = vector.shape_cast %13 : vector<1x6x32xf32> to vector<6x32xf32>
    %15 = arith.truncf %12#0 : vector<8x32xf32> to vector<8x32xbf16>
    %16 = vector.shape_cast %15 : vector<8x32xbf16> to vector<1x8x32xbf16>
    %17 = vector.broadcast %16 : vector<1x8x32xbf16> to vector<4x8x32xbf16>
    %c0_14 = arith.constant 0 : index
    %c0_15 = arith.constant 0 : index
    %c0_16 = arith.constant 0 : index
    %c0_17 = arith.constant 0 : index
    %18 = vector.load %arg11[%c0_14, %c0_15, %c0_16, %c0_17] : memref<4x4x32x24xbf16, #tpu.memory_space<vmem>>, vector<1x4x32x24xbf16>
    %19 = vector.shape_cast %18 : vector<1x4x32x24xbf16> to vector<4x32x24xbf16>
    %cst_18 = arith.constant dense<0.000000e+00> : vector<4x8x24xf32>
    %20 = tpu.matmul %17, %19, %cst_18 {dimension_numbers = #tpu.dot_dimension_numbers<[2], [1], [1], [2], [0, 0, 0, 1, 1, 2], [0], [0]>} : vector<4x8x32xbf16>, vector<4x32x24xbf16>, vector<4x8x24xf32> -> vector<4x8x24xf32>
    %c0_19 = arith.constant 0 : index
    %c0_20 = arith.constant 0 : index
    %c0_21 = arith.constant 0 : index
    %c0_22 = arith.constant 0 : index
    %21 = vector.load %arg12[%c0_19, %c0_20, %c0_21, %c0_22] : memref<4x4x1x24xf32, #tpu.memory_space<vmem>>, vector<1x4x1x24xf32>
    %22 = vector.shape_cast %21 : vector<1x4x1x24xf32> to vector<4x1x24xf32>
    %23 = vector.broadcast %22 : vector<4x1x24xf32> to vector<4x8x24xf32>
    %24 = arith.addf %20, %23 : vector<4x8x24xf32>
    %25 = vector.extract_strided_slice %24 {offsets = [0, 0, 0], sizes = [4, 8, 8], strides = [1, 1, 1]} : vector<4x8x24xf32> to vector<4x8x8xf32>
    %26 = arith.truncf %25 : vector<4x8x8xf32> to vector<4x8x8xbf16>
    %27 = vector.extract_strided_slice %24 {offsets = [0, 0, 8], sizes = [4, 8, 8], strides = [1, 1, 1]} : vector<4x8x24xf32> to vector<4x8x8xf32>
    %28 = arith.truncf %27 : vector<4x8x8xf32> to vector<4x8x8xbf16>
    %29 = vector.extract_strided_slice %24 {offsets = [0, 0, 16], sizes = [4, 8, 8], strides = [1, 1, 1]} : vector<4x8x24xf32> to vector<4x8x8xf32>
    %30 = arith.truncf %29 : vector<4x8x8xf32> to vector<4x8x8xbf16>
    %cst_23 = arith.constant dense<0.000000e+00> : vector<4x8x8xf32>
    %31 = tpu.matmul %26, %28, %cst_23 {dimension_numbers = #tpu.dot_dimension_numbers<[2], [2], [1], [1], [0, 0, 0, 1, 1, 1], [0], [0]>} : vector<4x8x8xbf16>, vector<4x8x8xbf16>, vector<4x8x8xf32> -> vector<4x8x8xf32>
    %cst_24 = arith.constant dense<0xFF800000> : vector<4x8xf32>
    %32 = vector.multi_reduction <maximumf>, %31, %cst_24 [2] : vector<4x8x8xf32> to vector<4x8xf32>
    %33 = vector.shape_cast %32 : vector<4x8xf32> to vector<4x8x1xf32>
    %34 = vector.broadcast %33 : vector<4x8x1xf32> to vector<4x8x8xf32>
    %35 = arith.subf %31, %34 : vector<4x8x8xf32>
    %36 = math.exp %35 : vector<4x8x8xf32>
    %cst_25 = arith.constant dense<0.000000e+00> : vector<4x8xf32>
    %37 = vector.multi_reduction <add>, %36, %cst_25 [2] : vector<4x8x8xf32> to vector<4x8xf32>
    %38 = vector.shape_cast %37 : vector<4x8xf32> to vector<4x8x1xf32>
    %39 = arith.truncf %36 : vector<4x8x8xf32> to vector<4x8x8xbf16>
    %cst_26 = arith.constant dense<0.000000e+00> : vector<4x8x8xf32>
    %40 = tpu.matmul %39, %30, %cst_26 {dimension_numbers = #tpu.dot_dimension_numbers<[2], [1], [1], [2], [0, 0, 0, 1, 1, 2], [0], [0]>} : vector<4x8x8xbf16>, vector<4x8x8xbf16>, vector<4x8x8xf32> -> vector<4x8x8xf32>
    %41 = tpu.reciprocal %38 {approx = true} : vector<4x8x1xf32> -> vector<4x8x1xf32>
    %42 = vector.broadcast %41 : vector<4x8x1xf32> to vector<4x8x8xf32>
    %43 = arith.mulf %40, %42 : vector<4x8x8xf32>
    %44 = arith.truncf %43 : vector<4x8x8xf32> to vector<4x8x8xbf16>
    %c0_27 = arith.constant 0 : index
    %c0_28 = arith.constant 0 : index
    %c0_29 = arith.constant 0 : index
    %c0_30 = arith.constant 0 : index
    %45 = vector.load %arg13[%c0_27, %c0_28, %c0_29, %c0_30] : memref<4x4x8x32xbf16, #tpu.memory_space<vmem>>, vector<1x4x8x32xbf16>
    %46 = vector.shape_cast %45 : vector<1x4x8x32xbf16> to vector<4x8x32xbf16>
    %cst_31 = arith.constant dense<0.000000e+00> : vector<4x8x32xf32>
    %47 = tpu.matmul %44, %46, %cst_31 {dimension_numbers = #tpu.dot_dimension_numbers<[2], [1], [1], [2], [0, 0, 0, 1, 1, 2], [0], [0]>} : vector<4x8x8xbf16>, vector<4x8x32xbf16>, vector<4x8x32xf32> -> vector<4x8x32xf32>
    %cst_32 = arith.constant dense<0.000000e+00> : vector<8x32xf32>
    %48 = vector.multi_reduction <add>, %47, %cst_32 [0] : vector<4x8x32xf32> to vector<8x32xf32>
    %49 = vector.extract_strided_slice %14 {offsets = [0, 0], sizes = [1, 32], strides = [1, 1]} : vector<6x32xf32> to vector<1x32xf32>
    %50 = vector.broadcast %49 : vector<1x32xf32> to vector<8x32xf32>
    %51 = arith.addf %48, %50 : vector<8x32xf32>
    %52 = arith.addf %12#0, %51 : vector<8x32xf32>
    %53 = vector.extract_strided_slice %14 {offsets = [1, 0], sizes = [1, 32], strides = [1, 1]} : vector<6x32xf32> to vector<1x32xf32>
    %54 = vector.extract_strided_slice %14 {offsets = [2, 0], sizes = [1, 32], strides = [1, 1]} : vector<6x32xf32> to vector<1x32xf32>
    %cst_33 = arith.constant dense<0.000000e+00> : vector<8xf32>
    %55 = vector.multi_reduction <add>, %52, %cst_33 [1] : vector<8x32xf32> to vector<8xf32>
    %56 = vector.shape_cast %55 : vector<8xf32> to vector<8x1xf32>
    %cst_34 = arith.constant 3.125000e-02 : f32
    %57 = vector.broadcast %cst_34 : f32 to vector<8x1xf32>
    %58 = arith.mulf %56, %57 : vector<8x1xf32>
    %59 = arith.mulf %52, %52 : vector<8x32xf32>
    %cst_35 = arith.constant dense<0.000000e+00> : vector<8xf32>
    %60 = vector.multi_reduction <add>, %59, %cst_35 [1] : vector<8x32xf32> to vector<8xf32>
    %61 = vector.shape_cast %60 : vector<8xf32> to vector<8x1xf32>
    %cst_36 = arith.constant 3.125000e-02 : f32
    %62 = vector.broadcast %cst_36 : f32 to vector<8x1xf32>
    %63 = arith.mulf %61, %62 : vector<8x1xf32>
    %64 = arith.mulf %58, %58 : vector<8x1xf32>
    %65 = arith.subf %63, %64 : vector<8x1xf32>
    %cst_37 = arith.constant 0.000000e+00 : f32
    %66 = vector.broadcast %cst_37 : f32 to vector<8x1xf32>
    %67 = arith.maximumf %65, %66 : vector<8x1xf32>
    %68 = vector.broadcast %58 : vector<8x1xf32> to vector<8x32xf32>
    %69 = arith.subf %52, %68 : vector<8x32xf32>
    %cst_38 = arith.constant 9.99999974E-6 : f32
    %70 = vector.broadcast %cst_38 : f32 to vector<8x1xf32>
    %71 = arith.addf %67, %70 : vector<8x1xf32>
    %72 = math.rsqrt %71 : vector<8x1xf32>
    %73 = vector.broadcast %72 : vector<8x1xf32> to vector<8x32xf32>
    %74 = arith.mulf %69, %73 : vector<8x32xf32>
    %75 = vector.broadcast %53 : vector<1x32xf32> to vector<8x32xf32>
    %76 = arith.mulf %74, %75 : vector<8x32xf32>
    %77 = vector.broadcast %54 : vector<1x32xf32> to vector<8x32xf32>
    %78 = arith.addf %76, %77 : vector<8x32xf32>
    %c0_39 = arith.constant 0 : index
    %c0_40 = arith.constant 0 : index
    %c0_41 = arith.constant 0 : index
    %79 = vector.load %arg14[%c0_39, %c0_40, %c0_41] : memref<4x32x64xbf16, #tpu.memory_space<vmem>>, vector<1x32x64xbf16>
    %80 = vector.shape_cast %79 : vector<1x32x64xbf16> to vector<32x64xbf16>
    %81 = arith.truncf %78 : vector<8x32xf32> to vector<8x32xbf16>
    %cst_42 = arith.constant dense<0.000000e+00> : vector<8x64xf32>
    %82 = tpu.matmul %81, %80, %cst_42 {dimension_numbers = #tpu.dot_dimension_numbers<[1], [0], [0], [1], [0, 0, 1, 1], [], []>} : vector<8x32xbf16>, vector<32x64xbf16>, vector<8x64xf32> -> vector<8x64xf32>
    %c0_43 = arith.constant 0 : index
    %c0_44 = arith.constant 0 : index
    %c0_45 = arith.constant 0 : index
    %83 = vector.load %arg15[%c0_43, %c0_44, %c0_45] : memref<4x1x64xf32, #tpu.memory_space<vmem>>, vector<1x1x64xf32>
    %84 = vector.shape_cast %83 : vector<1x1x64xf32> to vector<1x64xf32>
    %85 = vector.broadcast %84 : vector<1x64xf32> to vector<8x64xf32>
    %86 = arith.addf %82, %85 : vector<8x64xf32>
    %cst_46 = arith.constant 0.000000e+00 : f32
    %87 = vector.broadcast %cst_46 : f32 to vector<8x64xf32>
    %88 = arith.maximumf %86, %87 : vector<8x64xf32>
    %c0_47 = arith.constant 0 : index
    %c0_48 = arith.constant 0 : index
    %c0_49 = arith.constant 0 : index
    %89 = vector.load %arg16[%c0_47, %c0_48, %c0_49] : memref<4x64x32xbf16, #tpu.memory_space<vmem>>, vector<1x64x32xbf16>
    %90 = vector.shape_cast %89 : vector<1x64x32xbf16> to vector<64x32xbf16>
    %91 = arith.truncf %88 : vector<8x64xf32> to vector<8x64xbf16>
    %cst_50 = arith.constant dense<0.000000e+00> : vector<8x32xf32>
    %92 = tpu.matmul %91, %90, %cst_50 {dimension_numbers = #tpu.dot_dimension_numbers<[1], [0], [0], [1], [0, 0, 1, 1], [], []>} : vector<8x64xbf16>, vector<64x32xbf16>, vector<8x32xf32> -> vector<8x32xf32>
    %93 = vector.extract_strided_slice %14 {offsets = [3, 0], sizes = [1, 32], strides = [1, 1]} : vector<6x32xf32> to vector<1x32xf32>
    %94 = vector.broadcast %93 : vector<1x32xf32> to vector<8x32xf32>
    %95 = arith.addf %92, %94 : vector<8x32xf32>
    %96 = arith.addf %78, %95 : vector<8x32xf32>
    %97 = vector.extract_strided_slice %14 {offsets = [4, 0], sizes = [1, 32], strides = [1, 1]} : vector<6x32xf32> to vector<1x32xf32>
    %98 = vector.extract_strided_slice %14 {offsets = [5, 0], sizes = [1, 32], strides = [1, 1]} : vector<6x32xf32> to vector<1x32xf32>
    %cst_51 = arith.constant dense<0.000000e+00> : vector<8xf32>
    %99 = vector.multi_reduction <add>, %96, %cst_51 [1] : vector<8x32xf32> to vector<8xf32>
    %100 = vector.shape_cast %99 : vector<8xf32> to vector<8x1xf32>
    %cst_52 = arith.constant 3.125000e-02 : f32
    %101 = vector.broadcast %cst_52 : f32 to vector<8x1xf32>
    %102 = arith.mulf %100, %101 : vector<8x1xf32>
    %103 = arith.mulf %96, %96 : vector<8x32xf32>
    %cst_53 = arith.constant dense<0.000000e+00> : vector<8xf32>
    %104 = vector.multi_reduction <add>, %103, %cst_53 [1] : vector<8x32xf32> to vector<8xf32>
    %105 = vector.shape_cast %104 : vector<8xf32> to vector<8x1xf32>
    %cst_54 = arith.constant 3.125000e-02 : f32
    %106 = vector.broadcast %cst_54 : f32 to vector<8x1xf32>
    %107 = arith.mulf %105, %106 : vector<8x1xf32>
    %108 = arith.mulf %102, %102 : vector<8x1xf32>
    %109 = arith.subf %107, %108 : vector<8x1xf32>
    %cst_55 = arith.constant 0.000000e+00 : f32
    %110 = vector.broadcast %cst_55 : f32 to vector<8x1xf32>
    %111 = arith.maximumf %109, %110 : vector<8x1xf32>
    %112 = vector.broadcast %102 : vector<8x1xf32> to vector<8x32xf32>
    %113 = arith.subf %96, %112 : vector<8x32xf32>
    %cst_56 = arith.constant 9.99999974E-6 : f32
    %114 = vector.broadcast %cst_56 : f32 to vector<8x1xf32>
    %115 = arith.addf %111, %114 : vector<8x1xf32>
    %116 = math.rsqrt %115 : vector<8x1xf32>
    %117 = vector.broadcast %116 : vector<8x1xf32> to vector<8x32xf32>
    %118 = arith.mulf %113, %117 : vector<8x32xf32>
    %119 = vector.broadcast %97 : vector<1x32xf32> to vector<8x32xf32>
    %120 = arith.mulf %118, %119 : vector<8x32xf32>
    %121 = vector.broadcast %98 : vector<1x32xf32> to vector<8x32xf32>
    %122 = arith.addf %120, %121 : vector<8x32xf32>
    %123 = arith.addf %12#1, %122 : vector<8x32xf32>
    %c1 = arith.constant 1 : index
    %c0_57 = arith.constant 0 : index
    %c0_58 = arith.constant 0 : index
    %124 = vector.load %arg17[%c1, %c0_57, %c0_58] : memref<4x6x32xf32, #tpu.memory_space<vmem>>, vector<1x6x32xf32>
    %125 = vector.shape_cast %124 : vector<1x6x32xf32> to vector<6x32xf32>
    %126 = arith.truncf %123 : vector<8x32xf32> to vector<8x32xbf16>
    %127 = vector.shape_cast %126 : vector<8x32xbf16> to vector<1x8x32xbf16>
    %128 = vector.broadcast %127 : vector<1x8x32xbf16> to vector<4x8x32xbf16>
    %c1_59 = arith.constant 1 : index
    %c0_60 = arith.constant 0 : index
    %c0_61 = arith.constant 0 : index
    %c0_62 = arith.constant 0 : index
    %129 = vector.load %arg11[%c1_59, %c0_60, %c0_61, %c0_62] : memref<4x4x32x24xbf16, #tpu.memory_space<vmem>>, vector<1x4x32x24xbf16>
    %130 = vector.shape_cast %129 : vector<1x4x32x24xbf16> to vector<4x32x24xbf16>
    %cst_63 = arith.constant dense<0.000000e+00> : vector<4x8x24xf32>
    %131 = tpu.matmul %128, %130, %cst_63 {dimension_numbers = #tpu.dot_dimension_numbers<[2], [1], [1], [2], [0, 0, 0, 1, 1, 2], [0], [0]>} : vector<4x8x32xbf16>, vector<4x32x24xbf16>, vector<4x8x24xf32> -> vector<4x8x24xf32>
    %c1_64 = arith.constant 1 : index
    %c0_65 = arith.constant 0 : index
    %c0_66 = arith.constant 0 : index
    %c0_67 = arith.constant 0 : index
    %132 = vector.load %arg12[%c1_64, %c0_65, %c0_66, %c0_67] : memref<4x4x1x24xf32, #tpu.memory_space<vmem>>, vector<1x4x1x24xf32>
    %133 = vector.shape_cast %132 : vector<1x4x1x24xf32> to vector<4x1x24xf32>
    %134 = vector.broadcast %133 : vector<4x1x24xf32> to vector<4x8x24xf32>
    %135 = arith.addf %131, %134 : vector<4x8x24xf32>
    %136 = vector.extract_strided_slice %135 {offsets = [0, 0, 0], sizes = [4, 8, 8], strides = [1, 1, 1]} : vector<4x8x24xf32> to vector<4x8x8xf32>
    %137 = arith.truncf %136 : vector<4x8x8xf32> to vector<4x8x8xbf16>
    %138 = vector.extract_strided_slice %135 {offsets = [0, 0, 8], sizes = [4, 8, 8], strides = [1, 1, 1]} : vector<4x8x24xf32> to vector<4x8x8xf32>
    %139 = arith.truncf %138 : vector<4x8x8xf32> to vector<4x8x8xbf16>
    %140 = vector.extract_strided_slice %135 {offsets = [0, 0, 16], sizes = [4, 8, 8], strides = [1, 1, 1]} : vector<4x8x24xf32> to vector<4x8x8xf32>
    %141 = arith.truncf %140 : vector<4x8x8xf32> to vector<4x8x8xbf16>
    %cst_68 = arith.constant dense<0.000000e+00> : vector<4x8x8xf32>
    %142 = tpu.matmul %137, %139, %cst_68 {dimension_numbers = #tpu.dot_dimension_numbers<[2], [2], [1], [1], [0, 0, 0, 1, 1, 1], [0], [0]>} : vector<4x8x8xbf16>, vector<4x8x8xbf16>, vector<4x8x8xf32> -> vector<4x8x8xf32>
    %cst_69 = arith.constant dense<0xFF800000> : vector<4x8xf32>
    %143 = vector.multi_reduction <maximumf>, %142, %cst_69 [2] : vector<4x8x8xf32> to vector<4x8xf32>
    %144 = vector.shape_cast %143 : vector<4x8xf32> to vector<4x8x1xf32>
    %145 = vector.broadcast %144 : vector<4x8x1xf32> to vector<4x8x8xf32>
    %146 = arith.subf %142, %145 : vector<4x8x8xf32>
    %147 = math.exp %146 : vector<4x8x8xf32>
    %cst_70 = arith.constant dense<0.000000e+00> : vector<4x8xf32>
    %148 = vector.multi_reduction <add>, %147, %cst_70 [2] : vector<4x8x8xf32> to vector<4x8xf32>
    %149 = vector.shape_cast %148 : vector<4x8xf32> to vector<4x8x1xf32>
    %150 = arith.truncf %147 : vector<4x8x8xf32> to vector<4x8x8xbf16>
    %cst_71 = arith.constant dense<0.000000e+00> : vector<4x8x8xf32>
    %151 = tpu.matmul %150, %141, %cst_71 {dimension_numbers = #tpu.dot_dimension_numbers<[2], [1], [1], [2], [0, 0, 0, 1, 1, 2], [0], [0]>} : vector<4x8x8xbf16>, vector<4x8x8xbf16>, vector<4x8x8xf32> -> vector<4x8x8xf32>
    %152 = tpu.reciprocal %149 {approx = true} : vector<4x8x1xf32> -> vector<4x8x1xf32>
    %153 = vector.broadcast %152 : vector<4x8x1xf32> to vector<4x8x8xf32>
    %154 = arith.mulf %151, %153 : vector<4x8x8xf32>
    %155 = arith.truncf %154 : vector<4x8x8xf32> to vector<4x8x8xbf16>
    %c1_72 = arith.constant 1 : index
    %c0_73 = arith.constant 0 : index
    %c0_74 = arith.constant 0 : index
    %c0_75 = arith.constant 0 : index
    %156 = vector.load %arg13[%c1_72, %c0_73, %c0_74, %c0_75] : memref<4x4x8x32xbf16, #tpu.memory_space<vmem>>, vector<1x4x8x32xbf16>
    %157 = vector.shape_cast %156 : vector<1x4x8x32xbf16> to vector<4x8x32xbf16>
    %cst_76 = arith.constant dense<0.000000e+00> : vector<4x8x32xf32>
    %158 = tpu.matmul %155, %157, %cst_76 {dimension_numbers = #tpu.dot_dimension_numbers<[2], [1], [1], [2], [0, 0, 0, 1, 1, 2], [0], [0]>} : vector<4x8x8xbf16>, vector<4x8x32xbf16>, vector<4x8x32xf32> -> vector<4x8x32xf32>
    %cst_77 = arith.constant dense<0.000000e+00> : vector<8x32xf32>
    %159 = vector.multi_reduction <add>, %158, %cst_77 [0] : vector<4x8x32xf32> to vector<8x32xf32>
    %160 = vector.extract_strided_slice %125 {offsets = [0, 0], sizes = [1, 32], strides = [1, 1]} : vector<6x32xf32> to vector<1x32xf32>
    %161 = vector.broadcast %160 : vector<1x32xf32> to vector<8x32xf32>
    %162 = arith.addf %159, %161 : vector<8x32xf32>
    %163 = arith.addf %123, %162 : vector<8x32xf32>
    %164 = vector.extract_strided_slice %125 {offsets = [1, 0], sizes = [1, 32], strides = [1, 1]} : vector<6x32xf32> to vector<1x32xf32>
    %165 = vector.extract_strided_slice %125 {offsets = [2, 0], sizes = [1, 32], strides = [1, 1]} : vector<6x32xf32> to vector<1x32xf32>
    %cst_78 = arith.constant dense<0.000000e+00> : vector<8xf32>
    %166 = vector.multi_reduction <add>, %163, %cst_78 [1] : vector<8x32xf32> to vector<8xf32>
    %167 = vector.shape_cast %166 : vector<8xf32> to vector<8x1xf32>
    %cst_79 = arith.constant 3.125000e-02 : f32
    %168 = vector.broadcast %cst_79 : f32 to vector<8x1xf32>
    %169 = arith.mulf %167, %168 : vector<8x1xf32>
    %170 = arith.mulf %163, %163 : vector<8x32xf32>
    %cst_80 = arith.constant dense<0.000000e+00> : vector<8xf32>
    %171 = vector.multi_reduction <add>, %170, %cst_80 [1] : vector<8x32xf32> to vector<8xf32>
    %172 = vector.shape_cast %171 : vector<8xf32> to vector<8x1xf32>
    %cst_81 = arith.constant 3.125000e-02 : f32
    %173 = vector.broadcast %cst_81 : f32 to vector<8x1xf32>
    %174 = arith.mulf %172, %173 : vector<8x1xf32>
    %175 = arith.mulf %169, %169 : vector<8x1xf32>
    %176 = arith.subf %174, %175 : vector<8x1xf32>
    %cst_82 = arith.constant 0.000000e+00 : f32
    %177 = vector.broadcast %cst_82 : f32 to vector<8x1xf32>
    %178 = arith.maximumf %176, %177 : vector<8x1xf32>
    %179 = vector.broadcast %169 : vector<8x1xf32> to vector<8x32xf32>
    %180 = arith.subf %163, %179 : vector<8x32xf32>
    %cst_83 = arith.constant 9.99999974E-6 : f32
    %181 = vector.broadcast %cst_83 : f32 to vector<8x1xf32>
    %182 = arith.addf %178, %181 : vector<8x1xf32>
    %183 = math.rsqrt %182 : vector<8x1xf32>
    %184 = vector.broadcast %183 : vector<8x1xf32> to vector<8x32xf32>
    %185 = arith.mulf %180, %184 : vector<8x32xf32>
    %186 = vector.broadcast %164 : vector<1x32xf32> to vector<8x32xf32>
    %187 = arith.mulf %185, %186 : vector<8x32xf32>
    %188 = vector.broadcast %165 : vector<1x32xf32> to vector<8x32xf32>
    %189 = arith.addf %187, %188 : vector<8x32xf32>
    %c1_84 = arith.constant 1 : index
    %c0_85 = arith.constant 0 : index
    %c0_86 = arith.constant 0 : index
    %190 = vector.load %arg14[%c1_84, %c0_85, %c0_86] : memref<4x32x64xbf16, #tpu.memory_space<vmem>>, vector<1x32x64xbf16>
    %191 = vector.shape_cast %190 : vector<1x32x64xbf16> to vector<32x64xbf16>
    %192 = arith.truncf %189 : vector<8x32xf32> to vector<8x32xbf16>
    %cst_87 = arith.constant dense<0.000000e+00> : vector<8x64xf32>
    %193 = tpu.matmul %192, %191, %cst_87 {dimension_numbers = #tpu.dot_dimension_numbers<[1], [0], [0], [1], [0, 0, 1, 1], [], []>} : vector<8x32xbf16>, vector<32x64xbf16>, vector<8x64xf32> -> vector<8x64xf32>
    %c1_88 = arith.constant 1 : index
    %c0_89 = arith.constant 0 : index
    %c0_90 = arith.constant 0 : index
    %194 = vector.load %arg15[%c1_88, %c0_89, %c0_90] : memref<4x1x64xf32, #tpu.memory_space<vmem>>, vector<1x1x64xf32>
    %195 = vector.shape_cast %194 : vector<1x1x64xf32> to vector<1x64xf32>
    %196 = vector.broadcast %195 : vector<1x64xf32> to vector<8x64xf32>
    %197 = arith.addf %193, %196 : vector<8x64xf32>
    %cst_91 = arith.constant 0.000000e+00 : f32
    %198 = vector.broadcast %cst_91 : f32 to vector<8x64xf32>
    %199 = arith.maximumf %197, %198 : vector<8x64xf32>
    %c1_92 = arith.constant 1 : index
    %c0_93 = arith.constant 0 : index
    %c0_94 = arith.constant 0 : index
    %200 = vector.load %arg16[%c1_92, %c0_93, %c0_94] : memref<4x64x32xbf16, #tpu.memory_space<vmem>>, vector<1x64x32xbf16>
    %201 = vector.shape_cast %200 : vector<1x64x32xbf16> to vector<64x32xbf16>
    %202 = arith.truncf %199 : vector<8x64xf32> to vector<8x64xbf16>
    %cst_95 = arith.constant dense<0.000000e+00> : vector<8x32xf32>
    %203 = tpu.matmul %202, %201, %cst_95 {dimension_numbers = #tpu.dot_dimension_numbers<[1], [0], [0], [1], [0, 0, 1, 1], [], []>} : vector<8x64xbf16>, vector<64x32xbf16>, vector<8x32xf32> -> vector<8x32xf32>
    %204 = vector.extract_strided_slice %125 {offsets = [3, 0], sizes = [1, 32], strides = [1, 1]} : vector<6x32xf32> to vector<1x32xf32>
    %205 = vector.broadcast %204 : vector<1x32xf32> to vector<8x32xf32>
    %206 = arith.addf %203, %205 : vector<8x32xf32>
    %207 = arith.addf %189, %206 : vector<8x32xf32>
    %208 = vector.extract_strided_slice %125 {offsets = [4, 0], sizes = [1, 32], strides = [1, 1]} : vector<6x32xf32> to vector<1x32xf32>
    %209 = vector.extract_strided_slice %125 {offsets = [5, 0], sizes = [1, 32], strides = [1, 1]} : vector<6x32xf32> to vector<1x32xf32>
    %cst_96 = arith.constant dense<0.000000e+00> : vector<8xf32>
    %210 = vector.multi_reduction <add>, %207, %cst_96 [1] : vector<8x32xf32> to vector<8xf32>
    %211 = vector.shape_cast %210 : vector<8xf32> to vector<8x1xf32>
    %cst_97 = arith.constant 3.125000e-02 : f32
    %212 = vector.broadcast %cst_97 : f32 to vector<8x1xf32>
    %213 = arith.mulf %211, %212 : vector<8x1xf32>
    %214 = arith.mulf %207, %207 : vector<8x32xf32>
    %cst_98 = arith.constant dense<0.000000e+00> : vector<8xf32>
    %215 = vector.multi_reduction <add>, %214, %cst_98 [1] : vector<8x32xf32> to vector<8xf32>
    %216 = vector.shape_cast %215 : vector<8xf32> to vector<8x1xf32>
    %cst_99 = arith.constant 3.125000e-02 : f32
    %217 = vector.broadcast %cst_99 : f32 to vector<8x1xf32>
    %218 = arith.mulf %216, %217 : vector<8x1xf32>
    %219 = arith.mulf %213, %213 : vector<8x1xf32>
    %220 = arith.subf %218, %219 : vector<8x1xf32>
    %cst_100 = arith.constant 0.000000e+00 : f32
    %221 = vector.broadcast %cst_100 : f32 to vector<8x1xf32>
    %222 = arith.maximumf %220, %221 : vector<8x1xf32>
    %223 = vector.broadcast %213 : vector<8x1xf32> to vector<8x32xf32>
    %224 = arith.subf %207, %223 : vector<8x32xf32>
    %cst_101 = arith.constant 9.99999974E-6 : f32
    %225 = vector.broadcast %cst_101 : f32 to vector<8x1xf32>
    %226 = arith.addf %222, %225 : vector<8x1xf32>
    %227 = math.rsqrt %226 : vector<8x1xf32>
    %228 = vector.broadcast %227 : vector<8x1xf32> to vector<8x32xf32>
    %229 = arith.mulf %224, %228 : vector<8x32xf32>
    %230 = vector.broadcast %208 : vector<1x32xf32> to vector<8x32xf32>
    %231 = arith.mulf %229, %230 : vector<8x32xf32>
    %232 = vector.broadcast %209 : vector<1x32xf32> to vector<8x32xf32>
    %233 = arith.addf %231, %232 : vector<8x32xf32>
    %234 = arith.addf %123, %233 : vector<8x32xf32>
    %c4_i32_102 = arith.constant 4 : i32
    %c4_i32_103 = arith.constant 4 : i32
    %235 = arith.addi %c4_i32_102, %c4_i32_103 : i32
    %c1_i32_104 = arith.constant 1 : i32
    %236:2 = scf.for %arg19 = %c4_i32_102 to %235 step %c1_i32_104 iter_args(%arg20 = %234, %arg21 = %234) -> (vector<8x32xf32>, vector<8x32xf32>)  : i32 {
      %470 = arith.index_cast %arg19 : i32 to index
      %c0_208 = arith.constant 0 : index
      %c0_209 = arith.constant 0 : index
      %471 = vector.load %arg10[%470, %c0_208, %c0_209] : memref<8x6x32xf32, #tpu.memory_space<vmem>>, vector<1x6x32xf32>
      %472 = vector.shape_cast %471 : vector<1x6x32xf32> to vector<6x32xf32>
      %473 = arith.truncf %arg20 : vector<8x32xf32> to vector<8x32xbf16>
      %cst_210 = arith.constant dense<0.000000e+00> : vector<8x32xf32>
      %474 = tpu.matmul %1, %473, %cst_210 {dimension_numbers = #tpu.dot_dimension_numbers<[1], [0], [0], [1], [0, 0, 1, 1], [], []>} : vector<8x8xbf16>, vector<8x32xbf16>, vector<8x32xf32> -> vector<8x32xf32>
      %475 = arith.index_cast %arg19 : i32 to index
      %c0_211 = arith.constant 0 : index
      %c0_212 = arith.constant 0 : index
      %476 = vector.load %arg8[%475, %c0_211, %c0_212] : memref<8x32x32xbf16, #tpu.memory_space<vmem>>, vector<1x32x32xbf16>
      %477 = vector.shape_cast %476 : vector<1x32x32xbf16> to vector<32x32xbf16>
      %478 = arith.truncf %474 : vector<8x32xf32> to vector<8x32xbf16>
      %cst_213 = arith.constant dense<0.000000e+00> : vector<8x32xf32>
      %479 = tpu.matmul %478, %477, %cst_213 {dimension_numbers = #tpu.dot_dimension_numbers<[1], [0], [0], [1], [0, 0, 1, 1], [], []>} : vector<8x32xbf16>, vector<32x32xbf16>, vector<8x32xf32> -> vector<8x32xf32>
      %480 = vector.extract_strided_slice %472 {offsets = [0, 0], sizes = [1, 32], strides = [1, 1]} : vector<6x32xf32> to vector<1x32xf32>
      %481 = vector.broadcast %480 : vector<1x32xf32> to vector<8x32xf32>
      %482 = arith.addf %479, %481 : vector<8x32xf32>
      %483 = vector.extract_strided_slice %472 {offsets = [1, 0], sizes = [1, 32], strides = [1, 1]} : vector<6x32xf32> to vector<1x32xf32>
      %484 = vector.broadcast %483 : vector<1x32xf32> to vector<8x32xf32>
      %485 = arith.mulf %482, %484 : vector<8x32xf32>
      %486 = vector.extract_strided_slice %472 {offsets = [2, 0], sizes = [1, 32], strides = [1, 1]} : vector<6x32xf32> to vector<1x32xf32>
      %487 = vector.broadcast %486 : vector<1x32xf32> to vector<8x32xf32>
      %488 = arith.addf %485, %487 : vector<8x32xf32>
      %cst_214 = arith.constant 0.000000e+00 : f32
      %489 = vector.broadcast %cst_214 : f32 to vector<8x32xf32>
      %490 = arith.maximumf %488, %489 : vector<8x32xf32>
      %491 = arith.index_cast %arg19 : i32 to index
      %c0_215 = arith.constant 0 : index
      %c0_216 = arith.constant 0 : index
      %492 = vector.load %arg9[%491, %c0_215, %c0_216] : memref<8x32x32xbf16, #tpu.memory_space<vmem>>, vector<1x32x32xbf16>
      %493 = vector.shape_cast %492 : vector<1x32x32xbf16> to vector<32x32xbf16>
      %494 = arith.truncf %490 : vector<8x32xf32> to vector<8x32xbf16>
      %cst_217 = arith.constant dense<0.000000e+00> : vector<8x32xf32>
      %495 = tpu.matmul %494, %493, %cst_217 {dimension_numbers = #tpu.dot_dimension_numbers<[1], [0], [0], [1], [0, 0, 1, 1], [], []>} : vector<8x32xbf16>, vector<32x32xbf16>, vector<8x32xf32> -> vector<8x32xf32>
      %496 = vector.extract_strided_slice %472 {offsets = [3, 0], sizes = [1, 32], strides = [1, 1]} : vector<6x32xf32> to vector<1x32xf32>
      %497 = vector.broadcast %496 : vector<1x32xf32> to vector<8x32xf32>
      %498 = arith.addf %495, %497 : vector<8x32xf32>
      %499 = vector.extract_strided_slice %472 {offsets = [4, 0], sizes = [1, 32], strides = [1, 1]} : vector<6x32xf32> to vector<1x32xf32>
      %500 = vector.broadcast %499 : vector<1x32xf32> to vector<8x32xf32>
      %501 = arith.mulf %498, %500 : vector<8x32xf32>
      %502 = vector.extract_strided_slice %472 {offsets = [5, 0], sizes = [1, 32], strides = [1, 1]} : vector<6x32xf32> to vector<1x32xf32>
      %503 = vector.broadcast %502 : vector<1x32xf32> to vector<8x32xf32>
      %504 = arith.addf %501, %503 : vector<8x32xf32>
      %505 = arith.addf %arg21, %504 : vector<8x32xf32>
      %cst_218 = arith.constant 0.000000e+00 : f32
      %506 = vector.broadcast %cst_218 : f32 to vector<8x32xf32>
      %507 = arith.maximumf %505, %506 : vector<8x32xf32>
      scf.yield %507, %505 : vector<8x32xf32>, vector<8x32xf32>
    }
    %c4_i32_105 = arith.constant 4 : i32
    %c2 = arith.constant 2 : index
    %c0_106 = arith.constant 0 : index
    %c0_107 = arith.constant 0 : index
    %237 = vector.load %arg17[%c2, %c0_106, %c0_107] : memref<4x6x32xf32, #tpu.memory_space<vmem>>, vector<1x6x32xf32>
    %238 = vector.shape_cast %237 : vector<1x6x32xf32> to vector<6x32xf32>
    %239 = arith.truncf %236#0 : vector<8x32xf32> to vector<8x32xbf16>
    %240 = vector.shape_cast %239 : vector<8x32xbf16> to vector<1x8x32xbf16>
    %241 = vector.broadcast %240 : vector<1x8x32xbf16> to vector<4x8x32xbf16>
    %c2_108 = arith.constant 2 : index
    %c0_109 = arith.constant 0 : index
    %c0_110 = arith.constant 0 : index
    %c0_111 = arith.constant 0 : index
    %242 = vector.load %arg11[%c2_108, %c0_109, %c0_110, %c0_111] : memref<4x4x32x24xbf16, #tpu.memory_space<vmem>>, vector<1x4x32x24xbf16>
    %243 = vector.shape_cast %242 : vector<1x4x32x24xbf16> to vector<4x32x24xbf16>
    %cst_112 = arith.constant dense<0.000000e+00> : vector<4x8x24xf32>
    %244 = tpu.matmul %241, %243, %cst_112 {dimension_numbers = #tpu.dot_dimension_numbers<[2], [1], [1], [2], [0, 0, 0, 1, 1, 2], [0], [0]>} : vector<4x8x32xbf16>, vector<4x32x24xbf16>, vector<4x8x24xf32> -> vector<4x8x24xf32>
    %c2_113 = arith.constant 2 : index
    %c0_114 = arith.constant 0 : index
    %c0_115 = arith.constant 0 : index
    %c0_116 = arith.constant 0 : index
    %245 = vector.load %arg12[%c2_113, %c0_114, %c0_115, %c0_116] : memref<4x4x1x24xf32, #tpu.memory_space<vmem>>, vector<1x4x1x24xf32>
    %246 = vector.shape_cast %245 : vector<1x4x1x24xf32> to vector<4x1x24xf32>
    %247 = vector.broadcast %246 : vector<4x1x24xf32> to vector<4x8x24xf32>
    %248 = arith.addf %244, %247 : vector<4x8x24xf32>
    %249 = vector.extract_strided_slice %248 {offsets = [0, 0, 0], sizes = [4, 8, 8], strides = [1, 1, 1]} : vector<4x8x24xf32> to vector<4x8x8xf32>
    %250 = arith.truncf %249 : vector<4x8x8xf32> to vector<4x8x8xbf16>
    %251 = vector.extract_strided_slice %248 {offsets = [0, 0, 8], sizes = [4, 8, 8], strides = [1, 1, 1]} : vector<4x8x24xf32> to vector<4x8x8xf32>
    %252 = arith.truncf %251 : vector<4x8x8xf32> to vector<4x8x8xbf16>
    %253 = vector.extract_strided_slice %248 {offsets = [0, 0, 16], sizes = [4, 8, 8], strides = [1, 1, 1]} : vector<4x8x24xf32> to vector<4x8x8xf32>
    %254 = arith.truncf %253 : vector<4x8x8xf32> to vector<4x8x8xbf16>
    %cst_117 = arith.constant dense<0.000000e+00> : vector<4x8x8xf32>
    %255 = tpu.matmul %250, %252, %cst_117 {dimension_numbers = #tpu.dot_dimension_numbers<[2], [2], [1], [1], [0, 0, 0, 1, 1, 1], [0], [0]>} : vector<4x8x8xbf16>, vector<4x8x8xbf16>, vector<4x8x8xf32> -> vector<4x8x8xf32>
    %cst_118 = arith.constant dense<0xFF800000> : vector<4x8xf32>
    %256 = vector.multi_reduction <maximumf>, %255, %cst_118 [2] : vector<4x8x8xf32> to vector<4x8xf32>
    %257 = vector.shape_cast %256 : vector<4x8xf32> to vector<4x8x1xf32>
    %258 = vector.broadcast %257 : vector<4x8x1xf32> to vector<4x8x8xf32>
    %259 = arith.subf %255, %258 : vector<4x8x8xf32>
    %260 = math.exp %259 : vector<4x8x8xf32>
    %cst_119 = arith.constant dense<0.000000e+00> : vector<4x8xf32>
    %261 = vector.multi_reduction <add>, %260, %cst_119 [2] : vector<4x8x8xf32> to vector<4x8xf32>
    %262 = vector.shape_cast %261 : vector<4x8xf32> to vector<4x8x1xf32>
    %263 = arith.truncf %260 : vector<4x8x8xf32> to vector<4x8x8xbf16>
    %cst_120 = arith.constant dense<0.000000e+00> : vector<4x8x8xf32>
    %264 = tpu.matmul %263, %254, %cst_120 {dimension_numbers = #tpu.dot_dimension_numbers<[2], [1], [1], [2], [0, 0, 0, 1, 1, 2], [0], [0]>} : vector<4x8x8xbf16>, vector<4x8x8xbf16>, vector<4x8x8xf32> -> vector<4x8x8xf32>
    %265 = tpu.reciprocal %262 {approx = true} : vector<4x8x1xf32> -> vector<4x8x1xf32>
    %266 = vector.broadcast %265 : vector<4x8x1xf32> to vector<4x8x8xf32>
    %267 = arith.mulf %264, %266 : vector<4x8x8xf32>
    %268 = arith.truncf %267 : vector<4x8x8xf32> to vector<4x8x8xbf16>
    %c2_121 = arith.constant 2 : index
    %c0_122 = arith.constant 0 : index
    %c0_123 = arith.constant 0 : index
    %c0_124 = arith.constant 0 : index
    %269 = vector.load %arg13[%c2_121, %c0_122, %c0_123, %c0_124] : memref<4x4x8x32xbf16, #tpu.memory_space<vmem>>, vector<1x4x8x32xbf16>
    %270 = vector.shape_cast %269 : vector<1x4x8x32xbf16> to vector<4x8x32xbf16>
    %cst_125 = arith.constant dense<0.000000e+00> : vector<4x8x32xf32>
    %271 = tpu.matmul %268, %270, %cst_125 {dimension_numbers = #tpu.dot_dimension_numbers<[2], [1], [1], [2], [0, 0, 0, 1, 1, 2], [0], [0]>} : vector<4x8x8xbf16>, vector<4x8x32xbf16>, vector<4x8x32xf32> -> vector<4x8x32xf32>
    %cst_126 = arith.constant dense<0.000000e+00> : vector<8x32xf32>
    %272 = vector.multi_reduction <add>, %271, %cst_126 [0] : vector<4x8x32xf32> to vector<8x32xf32>
    %273 = vector.extract_strided_slice %238 {offsets = [0, 0], sizes = [1, 32], strides = [1, 1]} : vector<6x32xf32> to vector<1x32xf32>
    %274 = vector.broadcast %273 : vector<1x32xf32> to vector<8x32xf32>
    %275 = arith.addf %272, %274 : vector<8x32xf32>
    %276 = arith.addf %236#0, %275 : vector<8x32xf32>
    %277 = vector.extract_strided_slice %238 {offsets = [1, 0], sizes = [1, 32], strides = [1, 1]} : vector<6x32xf32> to vector<1x32xf32>
    %278 = vector.extract_strided_slice %238 {offsets = [2, 0], sizes = [1, 32], strides = [1, 1]} : vector<6x32xf32> to vector<1x32xf32>
    %cst_127 = arith.constant dense<0.000000e+00> : vector<8xf32>
    %279 = vector.multi_reduction <add>, %276, %cst_127 [1] : vector<8x32xf32> to vector<8xf32>
    %280 = vector.shape_cast %279 : vector<8xf32> to vector<8x1xf32>
    %cst_128 = arith.constant 3.125000e-02 : f32
    %281 = vector.broadcast %cst_128 : f32 to vector<8x1xf32>
    %282 = arith.mulf %280, %281 : vector<8x1xf32>
    %283 = arith.mulf %276, %276 : vector<8x32xf32>
    %cst_129 = arith.constant dense<0.000000e+00> : vector<8xf32>
    %284 = vector.multi_reduction <add>, %283, %cst_129 [1] : vector<8x32xf32> to vector<8xf32>
    %285 = vector.shape_cast %284 : vector<8xf32> to vector<8x1xf32>
    %cst_130 = arith.constant 3.125000e-02 : f32
    %286 = vector.broadcast %cst_130 : f32 to vector<8x1xf32>
    %287 = arith.mulf %285, %286 : vector<8x1xf32>
    %288 = arith.mulf %282, %282 : vector<8x1xf32>
    %289 = arith.subf %287, %288 : vector<8x1xf32>
    %cst_131 = arith.constant 0.000000e+00 : f32
    %290 = vector.broadcast %cst_131 : f32 to vector<8x1xf32>
    %291 = arith.maximumf %289, %290 : vector<8x1xf32>
    %292 = vector.broadcast %282 : vector<8x1xf32> to vector<8x32xf32>
    %293 = arith.subf %276, %292 : vector<8x32xf32>
    %cst_132 = arith.constant 9.99999974E-6 : f32
    %294 = vector.broadcast %cst_132 : f32 to vector<8x1xf32>
    %295 = arith.addf %291, %294 : vector<8x1xf32>
    %296 = math.rsqrt %295 : vector<8x1xf32>
    %297 = vector.broadcast %296 : vector<8x1xf32> to vector<8x32xf32>
    %298 = arith.mulf %293, %297 : vector<8x32xf32>
    %299 = vector.broadcast %277 : vector<1x32xf32> to vector<8x32xf32>
    %300 = arith.mulf %298, %299 : vector<8x32xf32>
    %301 = vector.broadcast %278 : vector<1x32xf32> to vector<8x32xf32>
    %302 = arith.addf %300, %301 : vector<8x32xf32>
    %c2_133 = arith.constant 2 : index
    %c0_134 = arith.constant 0 : index
    %c0_135 = arith.constant 0 : index
    %303 = vector.load %arg14[%c2_133, %c0_134, %c0_135] : memref<4x32x64xbf16, #tpu.memory_space<vmem>>, vector<1x32x64xbf16>
    %304 = vector.shape_cast %303 : vector<1x32x64xbf16> to vector<32x64xbf16>
    %305 = arith.truncf %302 : vector<8x32xf32> to vector<8x32xbf16>
    %cst_136 = arith.constant dense<0.000000e+00> : vector<8x64xf32>
    %306 = tpu.matmul %305, %304, %cst_136 {dimension_numbers = #tpu.dot_dimension_numbers<[1], [0], [0], [1], [0, 0, 1, 1], [], []>} : vector<8x32xbf16>, vector<32x64xbf16>, vector<8x64xf32> -> vector<8x64xf32>
    %c2_137 = arith.constant 2 : index
    %c0_138 = arith.constant 0 : index
    %c0_139 = arith.constant 0 : index
    %307 = vector.load %arg15[%c2_137, %c0_138, %c0_139] : memref<4x1x64xf32, #tpu.memory_space<vmem>>, vector<1x1x64xf32>
    %308 = vector.shape_cast %307 : vector<1x1x64xf32> to vector<1x64xf32>
    %309 = vector.broadcast %308 : vector<1x64xf32> to vector<8x64xf32>
    %310 = arith.addf %306, %309 : vector<8x64xf32>
    %cst_140 = arith.constant 0.000000e+00 : f32
    %311 = vector.broadcast %cst_140 : f32 to vector<8x64xf32>
    %312 = arith.maximumf %310, %311 : vector<8x64xf32>
    %c2_141 = arith.constant 2 : index
    %c0_142 = arith.constant 0 : index
    %c0_143 = arith.constant 0 : index
    %313 = vector.load %arg16[%c2_141, %c0_142, %c0_143] : memref<4x64x32xbf16, #tpu.memory_space<vmem>>, vector<1x64x32xbf16>
    %314 = vector.shape_cast %313 : vector<1x64x32xbf16> to vector<64x32xbf16>
    %315 = arith.truncf %312 : vector<8x64xf32> to vector<8x64xbf16>
    %cst_144 = arith.constant dense<0.000000e+00> : vector<8x32xf32>
    %316 = tpu.matmul %315, %314, %cst_144 {dimension_numbers = #tpu.dot_dimension_numbers<[1], [0], [0], [1], [0, 0, 1, 1], [], []>} : vector<8x64xbf16>, vector<64x32xbf16>, vector<8x32xf32> -> vector<8x32xf32>
    %317 = vector.extract_strided_slice %238 {offsets = [3, 0], sizes = [1, 32], strides = [1, 1]} : vector<6x32xf32> to vector<1x32xf32>
    %318 = vector.broadcast %317 : vector<1x32xf32> to vector<8x32xf32>
    %319 = arith.addf %316, %318 : vector<8x32xf32>
    %320 = arith.addf %302, %319 : vector<8x32xf32>
    %321 = vector.extract_strided_slice %238 {offsets = [4, 0], sizes = [1, 32], strides = [1, 1]} : vector<6x32xf32> to vector<1x32xf32>
    %322 = vector.extract_strided_slice %238 {offsets = [5, 0], sizes = [1, 32], strides = [1, 1]} : vector<6x32xf32> to vector<1x32xf32>
    %cst_145 = arith.constant dense<0.000000e+00> : vector<8xf32>
    %323 = vector.multi_reduction <add>, %320, %cst_145 [1] : vector<8x32xf32> to vector<8xf32>
    %324 = vector.shape_cast %323 : vector<8xf32> to vector<8x1xf32>
    %cst_146 = arith.constant 3.125000e-02 : f32
    %325 = vector.broadcast %cst_146 : f32 to vector<8x1xf32>
    %326 = arith.mulf %324, %325 : vector<8x1xf32>
    %327 = arith.mulf %320, %320 : vector<8x32xf32>
    %cst_147 = arith.constant dense<0.000000e+00> : vector<8xf32>
    %328 = vector.multi_reduction <add>, %327, %cst_147 [1] : vector<8x32xf32> to vector<8xf32>
    %329 = vector.shape_cast %328 : vector<8xf32> to vector<8x1xf32>
    %cst_148 = arith.constant 3.125000e-02 : f32
    %330 = vector.broadcast %cst_148 : f32 to vector<8x1xf32>
    %331 = arith.mulf %329, %330 : vector<8x1xf32>
    %332 = arith.mulf %326, %326 : vector<8x1xf32>
    %333 = arith.subf %331, %332 : vector<8x1xf32>
    %cst_149 = arith.constant 0.000000e+00 : f32
    %334 = vector.broadcast %cst_149 : f32 to vector<8x1xf32>
    %335 = arith.maximumf %333, %334 : vector<8x1xf32>
    %336 = vector.broadcast %326 : vector<8x1xf32> to vector<8x32xf32>
    %337 = arith.subf %320, %336 : vector<8x32xf32>
    %cst_150 = arith.constant 9.99999974E-6 : f32
    %338 = vector.broadcast %cst_150 : f32 to vector<8x1xf32>
    %339 = arith.addf %335, %338 : vector<8x1xf32>
    %340 = math.rsqrt %339 : vector<8x1xf32>
    %341 = vector.broadcast %340 : vector<8x1xf32> to vector<8x32xf32>
    %342 = arith.mulf %337, %341 : vector<8x32xf32>
    %343 = vector.broadcast %321 : vector<1x32xf32> to vector<8x32xf32>
    %344 = arith.mulf %342, %343 : vector<8x32xf32>
    %345 = vector.broadcast %322 : vector<1x32xf32> to vector<8x32xf32>
    %346 = arith.addf %344, %345 : vector<8x32xf32>
    %347 = arith.addf %236#1, %346 : vector<8x32xf32>
    %c3 = arith.constant 3 : index
    %c0_151 = arith.constant 0 : index
    %c0_152 = arith.constant 0 : index
    %348 = vector.load %arg17[%c3, %c0_151, %c0_152] : memref<4x6x32xf32, #tpu.memory_space<vmem>>, vector<1x6x32xf32>
    %349 = vector.shape_cast %348 : vector<1x6x32xf32> to vector<6x32xf32>
    %350 = arith.truncf %347 : vector<8x32xf32> to vector<8x32xbf16>
    %351 = vector.shape_cast %350 : vector<8x32xbf16> to vector<1x8x32xbf16>
    %352 = vector.broadcast %351 : vector<1x8x32xbf16> to vector<4x8x32xbf16>
    %c3_153 = arith.constant 3 : index
    %c0_154 = arith.constant 0 : index
    %c0_155 = arith.constant 0 : index
    %c0_156 = arith.constant 0 : index
    %353 = vector.load %arg11[%c3_153, %c0_154, %c0_155, %c0_156] : memref<4x4x32x24xbf16, #tpu.memory_space<vmem>>, vector<1x4x32x24xbf16>
    %354 = vector.shape_cast %353 : vector<1x4x32x24xbf16> to vector<4x32x24xbf16>
    %cst_157 = arith.constant dense<0.000000e+00> : vector<4x8x24xf32>
    %355 = tpu.matmul %352, %354, %cst_157 {dimension_numbers = #tpu.dot_dimension_numbers<[2], [1], [1], [2], [0, 0, 0, 1, 1, 2], [0], [0]>} : vector<4x8x32xbf16>, vector<4x32x24xbf16>, vector<4x8x24xf32> -> vector<4x8x24xf32>
    %c3_158 = arith.constant 3 : index
    %c0_159 = arith.constant 0 : index
    %c0_160 = arith.constant 0 : index
    %c0_161 = arith.constant 0 : index
    %356 = vector.load %arg12[%c3_158, %c0_159, %c0_160, %c0_161] : memref<4x4x1x24xf32, #tpu.memory_space<vmem>>, vector<1x4x1x24xf32>
    %357 = vector.shape_cast %356 : vector<1x4x1x24xf32> to vector<4x1x24xf32>
    %358 = vector.broadcast %357 : vector<4x1x24xf32> to vector<4x8x24xf32>
    %359 = arith.addf %355, %358 : vector<4x8x24xf32>
    %360 = vector.extract_strided_slice %359 {offsets = [0, 0, 0], sizes = [4, 8, 8], strides = [1, 1, 1]} : vector<4x8x24xf32> to vector<4x8x8xf32>
    %361 = arith.truncf %360 : vector<4x8x8xf32> to vector<4x8x8xbf16>
    %362 = vector.extract_strided_slice %359 {offsets = [0, 0, 8], sizes = [4, 8, 8], strides = [1, 1, 1]} : vector<4x8x24xf32> to vector<4x8x8xf32>
    %363 = arith.truncf %362 : vector<4x8x8xf32> to vector<4x8x8xbf16>
    %364 = vector.extract_strided_slice %359 {offsets = [0, 0, 16], sizes = [4, 8, 8], strides = [1, 1, 1]} : vector<4x8x24xf32> to vector<4x8x8xf32>
    %365 = arith.truncf %364 : vector<4x8x8xf32> to vector<4x8x8xbf16>
    %cst_162 = arith.constant dense<0.000000e+00> : vector<4x8x8xf32>
    %366 = tpu.matmul %361, %363, %cst_162 {dimension_numbers = #tpu.dot_dimension_numbers<[2], [2], [1], [1], [0, 0, 0, 1, 1, 1], [0], [0]>} : vector<4x8x8xbf16>, vector<4x8x8xbf16>, vector<4x8x8xf32> -> vector<4x8x8xf32>
    %cst_163 = arith.constant dense<0xFF800000> : vector<4x8xf32>
    %367 = vector.multi_reduction <maximumf>, %366, %cst_163 [2] : vector<4x8x8xf32> to vector<4x8xf32>
    %368 = vector.shape_cast %367 : vector<4x8xf32> to vector<4x8x1xf32>
    %369 = vector.broadcast %368 : vector<4x8x1xf32> to vector<4x8x8xf32>
    %370 = arith.subf %366, %369 : vector<4x8x8xf32>
    %371 = math.exp %370 : vector<4x8x8xf32>
    %cst_164 = arith.constant dense<0.000000e+00> : vector<4x8xf32>
    %372 = vector.multi_reduction <add>, %371, %cst_164 [2] : vector<4x8x8xf32> to vector<4x8xf32>
    %373 = vector.shape_cast %372 : vector<4x8xf32> to vector<4x8x1xf32>
    %374 = arith.truncf %371 : vector<4x8x8xf32> to vector<4x8x8xbf16>
    %cst_165 = arith.constant dense<0.000000e+00> : vector<4x8x8xf32>
    %375 = tpu.matmul %374, %365, %cst_165 {dimension_numbers = #tpu.dot_dimension_numbers<[2], [1], [1], [2], [0, 0, 0, 1, 1, 2], [0], [0]>} : vector<4x8x8xbf16>, vector<4x8x8xbf16>, vector<4x8x8xf32> -> vector<4x8x8xf32>
    %376 = tpu.reciprocal %373 {approx = true} : vector<4x8x1xf32> -> vector<4x8x1xf32>
    %377 = vector.broadcast %376 : vector<4x8x1xf32> to vector<4x8x8xf32>
    %378 = arith.mulf %375, %377 : vector<4x8x8xf32>
    %379 = arith.truncf %378 : vector<4x8x8xf32> to vector<4x8x8xbf16>
    %c3_166 = arith.constant 3 : index
    %c0_167 = arith.constant 0 : index
    %c0_168 = arith.constant 0 : index
    %c0_169 = arith.constant 0 : index
    %380 = vector.load %arg13[%c3_166, %c0_167, %c0_168, %c0_169] : memref<4x4x8x32xbf16, #tpu.memory_space<vmem>>, vector<1x4x8x32xbf16>
    %381 = vector.shape_cast %380 : vector<1x4x8x32xbf16> to vector<4x8x32xbf16>
    %cst_170 = arith.constant dense<0.000000e+00> : vector<4x8x32xf32>
    %382 = tpu.matmul %379, %381, %cst_170 {dimension_numbers = #tpu.dot_dimension_numbers<[2], [1], [1], [2], [0, 0, 0, 1, 1, 2], [0], [0]>} : vector<4x8x8xbf16>, vector<4x8x32xbf16>, vector<4x8x32xf32> -> vector<4x8x32xf32>
    %cst_171 = arith.constant dense<0.000000e+00> : vector<8x32xf32>
    %383 = vector.multi_reduction <add>, %382, %cst_171 [0] : vector<4x8x32xf32> to vector<8x32xf32>
    %384 = vector.extract_strided_slice %349 {offsets = [0, 0], sizes = [1, 32], strides = [1, 1]} : vector<6x32xf32> to vector<1x32xf32>
    %385 = vector.broadcast %384 : vector<1x32xf32> to vector<8x32xf32>
    %386 = arith.addf %383, %385 : vector<8x32xf32>
    %387 = arith.addf %347, %386 : vector<8x32xf32>
    %388 = vector.extract_strided_slice %349 {offsets = [1, 0], sizes = [1, 32], strides = [1, 1]} : vector<6x32xf32> to vector<1x32xf32>
    %389 = vector.extract_strided_slice %349 {offsets = [2, 0], sizes = [1, 32], strides = [1, 1]} : vector<6x32xf32> to vector<1x32xf32>
    %cst_172 = arith.constant dense<0.000000e+00> : vector<8xf32>
    %390 = vector.multi_reduction <add>, %387, %cst_172 [1] : vector<8x32xf32> to vector<8xf32>
    %391 = vector.shape_cast %390 : vector<8xf32> to vector<8x1xf32>
    %cst_173 = arith.constant 3.125000e-02 : f32
    %392 = vector.broadcast %cst_173 : f32 to vector<8x1xf32>
    %393 = arith.mulf %391, %392 : vector<8x1xf32>
    %394 = arith.mulf %387, %387 : vector<8x32xf32>
    %cst_174 = arith.constant dense<0.000000e+00> : vector<8xf32>
    %395 = vector.multi_reduction <add>, %394, %cst_174 [1] : vector<8x32xf32> to vector<8xf32>
    %396 = vector.shape_cast %395 : vector<8xf32> to vector<8x1xf32>
    %cst_175 = arith.constant 3.125000e-02 : f32
    %397 = vector.broadcast %cst_175 : f32 to vector<8x1xf32>
    %398 = arith.mulf %396, %397 : vector<8x1xf32>
    %399 = arith.mulf %393, %393 : vector<8x1xf32>
    %400 = arith.subf %398, %399 : vector<8x1xf32>
    %cst_176 = arith.constant 0.000000e+00 : f32
    %401 = vector.broadcast %cst_176 : f32 to vector<8x1xf32>
    %402 = arith.maximumf %400, %401 : vector<8x1xf32>
    %403 = vector.broadcast %393 : vector<8x1xf32> to vector<8x32xf32>
    %404 = arith.subf %387, %403 : vector<8x32xf32>
    %cst_177 = arith.constant 9.99999974E-6 : f32
    %405 = vector.broadcast %cst_177 : f32 to vector<8x1xf32>
    %406 = arith.addf %402, %405 : vector<8x1xf32>
    %407 = math.rsqrt %406 : vector<8x1xf32>
    %408 = vector.broadcast %407 : vector<8x1xf32> to vector<8x32xf32>
    %409 = arith.mulf %404, %408 : vector<8x32xf32>
    %410 = vector.broadcast %388 : vector<1x32xf32> to vector<8x32xf32>
    %411 = arith.mulf %409, %410 : vector<8x32xf32>
    %412 = vector.broadcast %389 : vector<1x32xf32> to vector<8x32xf32>
    %413 = arith.addf %411, %412 : vector<8x32xf32>
    %c3_178 = arith.constant 3 : index
    %c0_179 = arith.constant 0 : index
    %c0_180 = arith.constant 0 : index
    %414 = vector.load %arg14[%c3_178, %c0_179, %c0_180] : memref<4x32x64xbf16, #tpu.memory_space<vmem>>, vector<1x32x64xbf16>
    %415 = vector.shape_cast %414 : vector<1x32x64xbf16> to vector<32x64xbf16>
    %416 = arith.truncf %413 : vector<8x32xf32> to vector<8x32xbf16>
    %cst_181 = arith.constant dense<0.000000e+00> : vector<8x64xf32>
    %417 = tpu.matmul %416, %415, %cst_181 {dimension_numbers = #tpu.dot_dimension_numbers<[1], [0], [0], [1], [0, 0, 1, 1], [], []>} : vector<8x32xbf16>, vector<32x64xbf16>, vector<8x64xf32> -> vector<8x64xf32>
    %c3_182 = arith.constant 3 : index
    %c0_183 = arith.constant 0 : index
    %c0_184 = arith.constant 0 : index
    %418 = vector.load %arg15[%c3_182, %c0_183, %c0_184] : memref<4x1x64xf32, #tpu.memory_space<vmem>>, vector<1x1x64xf32>
    %419 = vector.shape_cast %418 : vector<1x1x64xf32> to vector<1x64xf32>
    %420 = vector.broadcast %419 : vector<1x64xf32> to vector<8x64xf32>
    %421 = arith.addf %417, %420 : vector<8x64xf32>
    %cst_185 = arith.constant 0.000000e+00 : f32
    %422 = vector.broadcast %cst_185 : f32 to vector<8x64xf32>
    %423 = arith.maximumf %421, %422 : vector<8x64xf32>
    %c3_186 = arith.constant 3 : index
    %c0_187 = arith.constant 0 : index
    %c0_188 = arith.constant 0 : index
    %424 = vector.load %arg16[%c3_186, %c0_187, %c0_188] : memref<4x64x32xbf16, #tpu.memory_space<vmem>>, vector<1x64x32xbf16>
    %425 = vector.shape_cast %424 : vector<1x64x32xbf16> to vector<64x32xbf16>
    %426 = arith.truncf %423 : vector<8x64xf32> to vector<8x64xbf16>
    %cst_189 = arith.constant dense<0.000000e+00> : vector<8x32xf32>
    %427 = tpu.matmul %426, %425, %cst_189 {dimension_numbers = #tpu.dot_dimension_numbers<[1], [0], [0], [1], [0, 0, 1, 1], [], []>} : vector<8x64xbf16>, vector<64x32xbf16>, vector<8x32xf32> -> vector<8x32xf32>
    %428 = vector.extract_strided_slice %349 {offsets = [3, 0], sizes = [1, 32], strides = [1, 1]} : vector<6x32xf32> to vector<1x32xf32>
    %429 = vector.broadcast %428 : vector<1x32xf32> to vector<8x32xf32>
    %430 = arith.addf %427, %429 : vector<8x32xf32>
    %431 = arith.addf %413, %430 : vector<8x32xf32>
    %432 = vector.extract_strided_slice %349 {offsets = [4, 0], sizes = [1, 32], strides = [1, 1]} : vector<6x32xf32> to vector<1x32xf32>
    %433 = vector.extract_strided_slice %349 {offsets = [5, 0], sizes = [1, 32], strides = [1, 1]} : vector<6x32xf32> to vector<1x32xf32>
    %cst_190 = arith.constant dense<0.000000e+00> : vector<8xf32>
    %434 = vector.multi_reduction <add>, %431, %cst_190 [1] : vector<8x32xf32> to vector<8xf32>
    %435 = vector.shape_cast %434 : vector<8xf32> to vector<8x1xf32>
    %cst_191 = arith.constant 3.125000e-02 : f32
    %436 = vector.broadcast %cst_191 : f32 to vector<8x1xf32>
    %437 = arith.mulf %435, %436 : vector<8x1xf32>
    %438 = arith.mulf %431, %431 : vector<8x32xf32>
    %cst_192 = arith.constant dense<0.000000e+00> : vector<8xf32>
    %439 = vector.multi_reduction <add>, %438, %cst_192 [1] : vector<8x32xf32> to vector<8xf32>
    %440 = vector.shape_cast %439 : vector<8xf32> to vector<8x1xf32>
    %cst_193 = arith.constant 3.125000e-02 : f32
    %441 = vector.broadcast %cst_193 : f32 to vector<8x1xf32>
    %442 = arith.mulf %440, %441 : vector<8x1xf32>
    %443 = arith.mulf %437, %437 : vector<8x1xf32>
    %444 = arith.subf %442, %443 : vector<8x1xf32>
    %cst_194 = arith.constant 0.000000e+00 : f32
    %445 = vector.broadcast %cst_194 : f32 to vector<8x1xf32>
    %446 = arith.maximumf %444, %445 : vector<8x1xf32>
    %447 = vector.broadcast %437 : vector<8x1xf32> to vector<8x32xf32>
    %448 = arith.subf %431, %447 : vector<8x32xf32>
    %cst_195 = arith.constant 9.99999974E-6 : f32
    %449 = vector.broadcast %cst_195 : f32 to vector<8x1xf32>
    %450 = arith.addf %446, %449 : vector<8x1xf32>
    %451 = math.rsqrt %450 : vector<8x1xf32>
    %452 = vector.broadcast %451 : vector<8x1xf32> to vector<8x32xf32>
    %453 = arith.mulf %448, %452 : vector<8x32xf32>
    %454 = vector.broadcast %432 : vector<1x32xf32> to vector<8x32xf32>
    %455 = arith.mulf %453, %454 : vector<8x32xf32>
    %456 = vector.broadcast %433 : vector<1x32xf32> to vector<8x32xf32>
    %457 = arith.addf %455, %456 : vector<8x32xf32>
    %458 = arith.addf %347, %457 : vector<8x32xf32>
    %c0_196 = arith.constant 0 : index
    %c0_197 = arith.constant 0 : index
    %c0_198 = arith.constant 0 : index
    %459 = vector.load %arg3[%c0_196, %c0_197, %c0_198] : memref<1x1x8xf32, #tpu.memory_space<vmem>>, vector<1x1x8xf32>
    %460 = vector.shape_cast %459 : vector<1x1x8xf32> to vector<1x8xf32>
    %cst_199 = arith.constant dense<0.000000e+00> : vector<1x32xf32>
    %461 = tpu.matmul %460, %458, %cst_199 {dimension_numbers = #tpu.dot_dimension_numbers<[1], [0], [0], [1], [0, 0, 1, 1], [], []>} : vector<1x8xf32>, vector<8x32xf32>, vector<1x32xf32> -> vector<1x32xf32>
    %c0_200 = arith.constant 0 : index
    %c0_201 = arith.constant 0 : index
    %462 = vector.load %arg6[%c0_200, %c0_201] : memref<32x4xbf16, #tpu.memory_space<vmem>>, vector<32x4xbf16>
    %463 = arith.truncf %461 : vector<1x32xf32> to vector<1x32xbf16>
    %cst_202 = arith.constant dense<0.000000e+00> : vector<1x4xf32>
    %464 = tpu.matmul %463, %462, %cst_202 {dimension_numbers = #tpu.dot_dimension_numbers<[1], [0], [0], [1], [0, 0, 1, 1], [], []>} : vector<1x32xbf16>, vector<32x4xbf16>, vector<1x4xf32> -> vector<1x4xf32>
    %c0_203 = arith.constant 0 : index
    %c0_204 = arith.constant 0 : index
    %465 = vector.load %arg7[%c0_203, %c0_204] : memref<1x4xf32, #tpu.memory_space<vmem>>, vector<1x4xf32>
    %466 = arith.addf %464, %465 : vector<1x4xf32>
    %c0_205 = arith.constant 0 : index
    %c0_206 = arith.constant 0 : index
    %c0_207 = arith.constant 0 : index
    %467 = vector.load %arg18[%c0_205, %c0_206, %c0_207] : memref<1x1x4xf32, #tpu.memory_space<vmem>>, vector<1x1x4xf32>
    %468 = vector.shape_cast %467 : vector<1x1x4xf32> to vector<1x4xf32>
    %469 = vector.shape_cast %466 : vector<1x4xf32> to vector<1x1x4xf32>
    tpu.vector_store %arg18[%c0_205, %c0_206, %c0_207], %469 {strides = array<i32>} : memref<1x1x4xf32, #tpu.memory_space<vmem>>, vector<1x1x4xf32>,
    return
  }
  func.func @transform_0(%arg0: i32) -> (i32, i32, i32) {
    %c0_i32 = arith.constant 0 : i32
    %c0_i32_0 = arith.constant 0 : i32
    %c0_i32_1 = arith.constant 0 : i32
    return %arg0, %c0_i32, %c0_i32_0 : i32, i32, i32
  }
  func.func @transform_1(%arg0: i32) -> (i32, i32, i32) {
    %c0_i32 = arith.constant 0 : i32
    %c0_i32_0 = arith.constant 0 : i32
    %c0_i32_1 = arith.constant 0 : i32
    return %arg0, %c0_i32, %c0_i32_0 : i32, i32, i32
  }
  func.func @transform_2(%arg0: i32) -> (i32, i32, i32) {
    %c0_i32 = arith.constant 0 : i32
    %c0_i32_0 = arith.constant 0 : i32
    %c0_i32_1 = arith.constant 0 : i32
    return %arg0, %c0_i32, %c0_i32_0 : i32, i32, i32
  }
  func.func @transform_3(%arg0: i32) -> (i32, i32) {
    %c0_i32 = arith.constant 0 : i32
    %c0_i32_0 = arith.constant 0 : i32
    %c0_i32_1 = arith.constant 0 : i32
    return %c0_i32, %c0_i32_0 : i32, i32
  }
  func.func @transform_4(%arg0: i32) -> (i32, i32) {
    %c0_i32 = arith.constant 0 : i32
    %c0_i32_0 = arith.constant 0 : i32
    %c0_i32_1 = arith.constant 0 : i32
    return %c0_i32, %c0_i32_0 : i32, i32
  }
  func.func @transform_5(%arg0: i32) -> (i32, i32) {
    %c0_i32 = arith.constant 0 : i32
    %c0_i32_0 = arith.constant 0 : i32
    %c0_i32_1 = arith.constant 0 : i32
    return %c0_i32, %c0_i32_0 : i32, i32
  }
  func.func @transform_6(%arg0: i32) -> (i32, i32) {
    %c0_i32 = arith.constant 0 : i32
    %c0_i32_0 = arith.constant 0 : i32
    %c0_i32_1 = arith.constant 0 : i32
    return %c0_i32, %c0_i32_0 : i32, i32
  }
  func.func @transform_7(%arg0: i32) -> (i32, i32, i32) {
    %c0_i32 = arith.constant 0 : i32
    %c0_i32_0 = arith.constant 0 : i32
    %c0_i32_1 = arith.constant 0 : i32
    %c0_i32_2 = arith.constant 0 : i32
    return %c0_i32, %c0_i32_0, %c0_i32_1 : i32, i32, i32
  }
  func.func @transform_8(%arg0: i32) -> (i32, i32, i32) {
    %c0_i32 = arith.constant 0 : i32
    %c0_i32_0 = arith.constant 0 : i32
    %c0_i32_1 = arith.constant 0 : i32
    %c0_i32_2 = arith.constant 0 : i32
    return %c0_i32, %c0_i32_0, %c0_i32_1 : i32, i32, i32
  }
  func.func @transform_9(%arg0: i32) -> (i32, i32, i32) {
    %c0_i32 = arith.constant 0 : i32
    %c0_i32_0 = arith.constant 0 : i32
    %c0_i32_1 = arith.constant 0 : i32
    %c0_i32_2 = arith.constant 0 : i32
    return %c0_i32, %c0_i32_0, %c0_i32_1 : i32, i32, i32
  }
  func.func @transform_10(%arg0: i32) -> (i32, i32, i32, i32) {
    %c0_i32 = arith.constant 0 : i32
    %c0_i32_0 = arith.constant 0 : i32
    %c0_i32_1 = arith.constant 0 : i32
    %c0_i32_2 = arith.constant 0 : i32
    %c0_i32_3 = arith.constant 0 : i32
    return %c0_i32, %c0_i32_0, %c0_i32_1, %c0_i32_2 : i32, i32, i32, i32
  }
  func.func @transform_11(%arg0: i32) -> (i32, i32, i32, i32) {
    %c0_i32 = arith.constant 0 : i32
    %c0_i32_0 = arith.constant 0 : i32
    %c0_i32_1 = arith.constant 0 : i32
    %c0_i32_2 = arith.constant 0 : i32
    %c0_i32_3 = arith.constant 0 : i32
    return %c0_i32, %c0_i32_0, %c0_i32_1, %c0_i32_2 : i32, i32, i32, i32
  }
  func.func @transform_12(%arg0: i32) -> (i32, i32, i32, i32) {
    %c0_i32 = arith.constant 0 : i32
    %c0_i32_0 = arith.constant 0 : i32
    %c0_i32_1 = arith.constant 0 : i32
    %c0_i32_2 = arith.constant 0 : i32
    %c0_i32_3 = arith.constant 0 : i32
    return %c0_i32, %c0_i32_0, %c0_i32_1, %c0_i32_2 : i32, i32, i32, i32
  }
  func.func @transform_13(%arg0: i32) -> (i32, i32, i32) {
    %c0_i32 = arith.constant 0 : i32
    %c0_i32_0 = arith.constant 0 : i32
    %c0_i32_1 = arith.constant 0 : i32
    %c0_i32_2 = arith.constant 0 : i32
    return %c0_i32, %c0_i32_0, %c0_i32_1 : i32, i32, i32
  }
  func.func @transform_14(%arg0: i32) -> (i32, i32, i32) {
    %c0_i32 = arith.constant 0 : i32
    %c0_i32_0 = arith.constant 0 : i32
    %c0_i32_1 = arith.constant 0 : i32
    %c0_i32_2 = arith.constant 0 : i32
    return %c0_i32, %c0_i32_0, %c0_i32_1 : i32, i32, i32
  }
  func.func @transform_15(%arg0: i32) -> (i32, i32, i32) {
    %c0_i32 = arith.constant 0 : i32
    %c0_i32_0 = arith.constant 0 : i32
    %c0_i32_1 = arith.constant 0 : i32
    %c0_i32_2 = arith.constant 0 : i32
    return %c0_i32, %c0_i32_0, %c0_i32_1 : i32, i32, i32
  }
  func.func @transform_16(%arg0: i32) -> (i32, i32, i32) {
    %c0_i32 = arith.constant 0 : i32
    %c0_i32_0 = arith.constant 0 : i32
    %c0_i32_1 = arith.constant 0 : i32
    %c0_i32_2 = arith.constant 0 : i32
    return %c0_i32, %c0_i32_0, %c0_i32_1 : i32, i32, i32
  }
  func.func @transform_17(%arg0: i32) -> (i32, i32, i32) {
    %c0_i32 = arith.constant 0 : i32
    %c0_i32_0 = arith.constant 0 : i32
    %c0_i32_1 = arith.constant 0 : i32
    return %arg0, %c0_i32, %c0_i32_0 : i32, i32, i32
  }
}

</mosaic_0001>

<llo_original>
// kernel: tpu_custom_call.1
$region0: #{tpu_custom_call.1}
  #allocation0 [shape = 'u32[]', space=smem, size = 0x4, offset = 0x4, fixed_abs, tag = 'smem constant byte address 0x4 - core index']
  #allocation1 [shape = 'u32[144,128]{1,0:T(1,128)}', space=vmem, size = 0x12000, scoped, tag = 'internal scratch']
  %s0 = inlined_call_operand.vmem [shape: f32[2,8,8], index: 0, kind: input, shape index: {}]
  %s1 = inlined_call_operand.vmem [shape: bf16[2,8,8], index: 1, kind: input, shape index: {}]
  %s2 = inlined_call_operand.vmem [shape: f32[2,1,8], index: 2, kind: input, shape index: {}]
  %s3 = inlined_call_operand.vmem [shape: bf16[8,32], index: 3, kind: input, shape index: {}]
  %s4 = inlined_call_operand.vmem [shape: f32[1,32], index: 4, kind: input, shape index: {}]
  %s5 = inlined_call_operand.vmem [shape: bf16[32,4], index: 5, kind: input, shape index: {}]
  %s6 = inlined_call_operand.vmem [shape: f32[1,4], index: 6, kind: input, shape index: {}]
  %s7 = inlined_call_operand.vmem [shape: bf16[8,32,32], index: 7, kind: input, shape index: {}]
  %s8 = inlined_call_operand.vmem [shape: bf16[8,32,32], index: 8, kind: input, shape index: {}]
  %s9 = inlined_call_operand.vmem [shape: f32[8,6,32], index: 9, kind: input, shape index: {}]
  %s10 = inlined_call_operand.vmem [shape: bf16[4,4,32,24], index: 10, kind: input, shape index: {}]
  %s11 = inlined_call_operand.vmem [shape: f32[4,4,1,24], index: 11, kind: input, shape index: {}]
  %s12 = inlined_call_operand.vmem [shape: bf16[4,4,8,32], index: 12, kind: input, shape index: {}]
  %s13 = inlined_call_operand.vmem [shape: bf16[4,32,64], index: 13, kind: input, shape index: {}]
  %s14 = inlined_call_operand.vmem [shape: f32[4,1,64], index: 14, kind: input, shape index: {}]
  %s15 = inlined_call_operand.vmem [shape: bf16[4,64,32], index: 15, kind: input, shape index: {}]
  %s16 = inlined_call_operand.vmem [shape: f32[4,6,32], index: 16, kind: input, shape index: {}]
  %s17 = inlined_call_operand.hbm [shape: f32[2,1,4], index: 17, kind: output, shape index: {}]
  %s18 = sld [smem:[#allocation0]]
  $region115: #{tpu_custom_call.1} parent=0
    _
  %s20 = ssub.s32 1, %s18
  %s21 = scalar_select 0, %s20, %s18
  $region1: #{tpu_custom_call.1} parent=0
    #allocation2 [shape = 'u8[1024]{0}', space=vmem, size = 0x400, scoped, tag = 'output window, operand 0']
    #allocation3 [shape = 's32[2]{0}', space=sflag, size = 0x8, scoped, tag = 'scoped memory for tpu_custom_call.1']
    %22 = vsyncpa [#allocation3], 0
    %s23 = scalar_lea.sflag [#allocation3], 1
    %24 = vsyncpa %s23, 0
    loop: start=0, step=1, limit=4
    $region2: #{tpu_custom_call.1} parent=1 // loop_pre_header
      _
    $region3: #{tpu_custom_call.1} parent=1 // loop_header
      %s26 = sphi 0, %s30
      %p27 = scmp.ge.s32.totalorder %s26, 4
      %s36 = sphi 0, %s38
      %s39 = sphi 0, %s36
      %s40 = sphi 0, %s39
      %s56 = sphi 0, %s40
      %s62 = sphi 0, %s64
      %s65 = sphi 0, %s62
      %s66 = sphi 0, %s65
      %s82 = sphi 0, %s66
      %s88 = sphi 0, %s90
      %s91 = sphi 0, %s88
      %s92 = sphi 0, %s91
      %s108 = sphi 0, %s92
      %s112 = sphi 0, %s112
      %s114 = sphi 0, %s112
      %s115 = sphi 0, %s114
      %s129 = sphi 0, %s115
      %s133 = sphi 0, %s133
      %s135 = sphi 0, %s133
      %s136 = sphi 0, %s135
      %s150 = sphi 0, %s136
      %s154 = sphi 0, %s154
      %s156 = sphi 0, %s154
      %s157 = sphi 0, %s156
      %s171 = sphi 0, %s157
      %s175 = sphi 0, %s175
      %s177 = sphi 0, %s175
      %s178 = sphi 0, %s177
      %s192 = sphi 0, %s178
      %s196 = sphi 0, %s196
      %s198 = sphi 0, %s196
      %s199 = sphi 0, %s198
      %s213 = sphi 0, %s199
      %s217 = sphi 0, %s217
      %s219 = sphi 0, %s217
      %s220 = sphi 0, %s219
      %s234 = sphi 0, %s220
      %s238 = sphi 0, %s238
      %s240 = sphi 0, %s238
      %s241 = sphi 0, %s240
      %s255 = sphi 0, %s241
      %s259 = sphi 0, %s259
      %s261 = sphi 0, %s259
      %s262 = sphi 0, %s261
      %s276 = sphi 0, %s262
      %s280 = sphi 0, %s280
      %s282 = sphi 0, %s280
      %s283 = sphi 0, %s282
      %s297 = sphi 0, %s283
      %s301 = sphi 0, %s301
      %s303 = sphi 0, %s301
      %s304 = sphi 0, %s303
      %s318 = sphi 0, %s304
      %s322 = sphi 0, %s322
      %s324 = sphi 0, %s322
      %s325 = sphi 0, %s324
      %s339 = sphi 0, %s325
      %s343 = sphi 0, %s343
      %s345 = sphi 0, %s343
      %s346 = sphi 0, %s345
      %s360 = sphi 0, %s346
      %s364 = sphi 0, %s364
      %s366 = sphi 0, %s364
      %s367 = sphi 0, %s366
      %s381 = sphi 0, %s367
      %s385 = sphi 0, %s385
      %s387 = sphi 0, %s385
      %s388 = sphi 0, %s387
      %s402 = sphi 0, %s388
      %s408 = sphi 0, %s410
      %s411 = sphi 0, %s408
      %s412 = sphi 0, %s411
      %s428 = sphi 0, %s412
    $region4: #{tpu_custom_call.1} parent=1 // loop_header_branch
      %29 = sbr.rel (%p27) target = $region8
    $region5: #{tpu_custom_call.1} parent=1 // loop_body
      %s31 = ssub.s32 %s26, 1
      %s32 = ssub.s32 %s26, 2
      %s33 = sadd.s32 %s26, 1
      %s34 = ssub.s32 %s26, %s33
      %p35 = scmp.eq.s32.totalorder %s34, 0
      %s37 = sadd.s32 %s36, 1
      %s38 = scalar_select %p35, %s36, %s37
      %p41 = pneg %p35
      %p42 = scmp.eq.s32.totalorder %s26, 1
      %p43 = por %p41, %p42
      %p44 = scmp.ne.s32.totalorder %s36, %s39
      %p45 = scmp.eq.s32.totalorder %s26, 0
      %p46 = por %p44, %p45
      %p47 = scmp.ne.s32.totalorder %s36, %s39
      %p48 = scmp.eq.s32.totalorder %s31, 1
      %p49 = por %p47, %p48
      %p50 = scmp.ne.s32.totalorder %s39, %s40
      %p51 = scmp.eq.s32.totalorder %s31, 0
      %p52 = por %p50, %p51
      %p53 = scmp.ne.s32.totalorder %s39, %s40
      %p54 = scmp.eq.s32.totalorder %s32, 1
      %p55 = por %p53, %p54
      %p57 = scmp.ne.s32.totalorder %s40, %s56
      %p58 = scmp.eq.s32.totalorder %s32, 0
      %p59 = por %p57, %p58
      %s60 = ssub.s32 %s26, %s33
      %p61 = scmp.eq.s32.totalorder %s60, 0
      %s63 = sadd.s32 %s62, 1
      %s64 = scalar_select %p61, %s62, %s63
      %p67 = pneg %p61
      %p68 = scmp.eq.s32.totalorder %s26, 1
      %p69 = por %p67, %p68
      %p70 = scmp.ne.s32.totalorder %s62, %s65
      %p71 = scmp.eq.s32.totalorder %s26, 0
      %p72 = por %p70, %p71
      %p73 = scmp.ne.s32.totalorder %s62, %s65
      %p74 = scmp.eq.s32.totalorder %s31, 1
      %p75 = por %p73, %p74
      %p76 = scmp.ne.s32.totalorder %s65, %s66
      %p77 = scmp.eq.s32.totalorder %s31, 0
      %p78 = por %p76, %p77
      %p79 = scmp.ne.s32.totalorder %s65, %s66
      %p80 = scmp.eq.s32.totalorder %s32, 1
      %p81 = por %p79, %p80
      %p83 = scmp.ne.s32.totalorder %s66, %s82
      %p84 = scmp.eq.s32.totalorder %s32, 0
      %p85 = por %p83, %p84
      %s86 = ssub.s32 %s26, %s33
      %p87 = scmp.eq.s32.totalorder %s86, 0
      %s89 = sadd.s32 %s88, 1
      %s90 = scalar_select %p87, %s88, %s89
      %p93 = pneg %p87
      %p94 = scmp.eq.s32.totalorder %s26, 1
      %p95 = por %p93, %p94
      %p96 = scmp.ne.s32.totalorder %s88, %s91
      %p97 = scmp.eq.s32.totalorder %s26, 0
      %p98 = por %p96, %p97
      %p99 = scmp.ne.s32.totalorder %s88, %s91
      %p100 = scmp.eq.s32.totalorder %s31, 1
      %p101 = por %p99, %p100
      %p102 = scmp.ne.s32.totalorder %s91, %s92
      %p103 = scmp.eq.s32.totalorder %s31, 0
      %p104 = por %p102, %p103
      %p105 = scmp.ne.s32.totalorder %s91, %s92
      %p106 = scmp.eq.s32.totalorder %s32, 1
      %p107 = por %p105, %p106
      %p109 = scmp.ne.s32.totalorder %s92, %s108
      %p110 = scmp.eq.s32.totalorder %s32, 0
      %p111 = por %p109, %p110
      %s113 = sadd.s32 %s112, 1
      %p116 = scmp.eq.s32.totalorder %s26, 1
      %p117 = scmp.ne.s32.totalorder %s112, %s114
      %p118 = scmp.eq.s32.totalorder %s26, 0
      %p119 = por %p117, %p118
      %p120 = scmp.ne.s32.totalorder %s112, %s114
      %p121 = scmp.eq.s32.totalorder %s31, 1
      %p122 = por %p120, %p121
      %p123 = scmp.ne.s32.totalorder %s114, %s115
      %p124 = scmp.eq.s32.totalorder %s31, 0
      %p125 = por %p123, %p124
      %p126 = scmp.ne.s32.totalorder %s114, %s115
      %p127 = scmp.eq.s32.totalorder %s32, 1
      %p128 = por %p126, %p127
      %p130 = scmp.ne.s32.totalorder %s115, %s129
      %p131 = scmp.eq.s32.totalorder %s32, 0
      %p132 = por %p130, %p131
      %s134 = sadd.s32 %s133, 1
      %p137 = scmp.eq.s32.totalorder %s26, 1
      %p138 = scmp.ne.s32.totalorder %s133, %s135
      %p139 = scmp.eq.s32.totalorder %s26, 0
      %p140 = por %p138, %p139
      %p141 = scmp.ne.s32.totalorder %s133, %s135
      %p142 = scmp.eq.s32.totalorder %s31, 1
      %p143 = por %p141, %p142
      %p144 = scmp.ne.s32.totalorder %s135, %s136
      %p145 = scmp.eq.s32.totalorder %s31, 0
      %p146 = por %p144, %p145
      %p147 = scmp.ne.s32.totalorder %s135, %s136
      %p148 = scmp.eq.s32.totalorder %s32, 1
      %p149 = por %p147, %p148
      %p151 = scmp.ne.s32.totalorder %s136, %s150
      %p152 = scmp.eq.s32.totalorder %s32, 0
      %p153 = por %p151, %p152
      %s155 = sadd.s32 %s154, 1
      %p158 = scmp.eq.s32.totalorder %s26, 1
      %p159 = scmp.ne.s32.totalorder %s154, %s156
      %p160 = scmp.eq.s32.totalorder %s26, 0
      %p161 = por %p159, %p160
      %p162 = scmp.ne.s32.totalorder %s154, %s156
      %p163 = scmp.eq.s32.totalorder %s31, 1
      %p164 = por %p162, %p163
      %p165 = scmp.ne.s32.totalorder %s156, %s157
      %p166 = scmp.eq.s32.totalorder %s31, 0
      %p167 = por %p165, %p166
      %p168 = scmp.ne.s32.totalorder %s156, %s157
      %p169 = scmp.eq.s32.totalorder %s32, 1
      %p170 = por %p168, %p169
      %p172 = scmp.ne.s32.totalorder %s157, %s171
      %p173 = scmp.eq.s32.totalorder %s32, 0
      %p174 = por %p172, %p173
      %s176 = sadd.s32 %s175, 1
      %p179 = scmp.eq.s32.totalorder %s26, 1
      %p180 = scmp.ne.s32.totalorder %s175, %s177
      %p181 = scmp.eq.s32.totalorder %s26, 0
      %p182 = por %p180, %p181
      %p183 = scmp.ne.s32.totalorder %s175, %s177
      %p184 = scmp.eq.s32.totalorder %s31, 1
      %p185 = por %p183, %p184
      %p186 = scmp.ne.s32.totalorder %s177, %s178
      %p187 = scmp.eq.s32.totalorder %s31, 0
      %p188 = por %p186, %p187
      %p189 = scmp.ne.s32.totalorder %s177, %s178
      %p190 = scmp.eq.s32.totalorder %s32, 1
      %p191 = por %p189, %p190
      %p193 = scmp.ne.s32.totalorder %s178, %s192
      %p194 = scmp.eq.s32.totalorder %s32, 0
      %p195 = por %p193, %p194
      %s197 = sadd.s32 %s196, 1
      %p200 = scmp.eq.s32.totalorder %s26, 1
      %p201 = scmp.ne.s32.totalorder %s196, %s198
      %p202 = scmp.eq.s32.totalorder %s26, 0
      %p203 = por %p201, %p202
      %p204 = scmp.ne.s32.totalorder %s196, %s198
      %p205 = scmp.eq.s32.totalorder %s31, 1
      %p206 = por %p204, %p205
      %p207 = scmp.ne.s32.totalorder %s198, %s199
      %p208 = scmp.eq.s32.totalorder %s31, 0
      %p209 = por %p207, %p208
      %p210 = scmp.ne.s32.totalorder %s198, %s199
      %p211 = scmp.eq.s32.totalorder %s32, 1
      %p212 = por %p210, %p211
      %p214 = scmp.ne.s32.totalorder %s199, %s213
      %p215 = scmp.eq.s32.totalorder %s32, 0
      %p216 = por %p214, %p215
      %s218 = sadd.s32 %s217, 1
      %p221 = scmp.eq.s32.totalorder %s26, 1
      %p222 = scmp.ne.s32.totalorder %s217, %s219
      %p223 = scmp.eq.s32.totalorder %s26, 0
      %p224 = por %p222, %p223
      %p225 = scmp.ne.s32.totalorder %s217, %s219
      %p226 = scmp.eq.s32.totalorder %s31, 1
      %p227 = por %p225, %p226
      %p228 = scmp.ne.s32.totalorder %s219, %s220
      %p229 = scmp.eq.s32.totalorder %s31, 0
      %p230 = por %p228, %p229
      %p231 = scmp.ne.s32.totalorder %s219, %s220
      %p232 = scmp.eq.s32.totalorder %s32, 1
      %p233 = por %p231, %p232
      %p235 = scmp.ne.s32.totalorder %s220, %s234
      %p236 = scmp.eq.s32.totalorder %s32, 0
      %p237 = por %p235, %p236
      %s239 = sadd.s32 %s238, 1
      %p242 = scmp.eq.s32.totalorder %s26, 1
      %p243 = scmp.ne.s32.totalorder %s238, %s240
      %p244 = scmp.eq.s32.totalorder %s26, 0
      %p245 = por %p243, %p244
      %p246 = scmp.ne.s32.totalorder %s238, %s240
      %p247 = scmp.eq.s32.totalorder %s31, 1
      %p248 = por %p246, %p247
      %p249 = scmp.ne.s32.totalorder %s240, %s241
      %p250 = scmp.eq.s32.totalorder %s31, 0
      %p251 = por %p249, %p250
      %p252 = scmp.ne.s32.totalorder %s240, %s241
      %p253 = scmp.eq.s32.totalorder %s32, 1
      %p254 = por %p252, %p253
      %p256 = scmp.ne.s32.totalorder %s241, %s255
      %p257 = scmp.eq.s32.totalorder %s32, 0
      %p258 = por %p256, %p257
      %s260 = sadd.s32 %s259, 1
      %p263 = scmp.eq.s32.totalorder %s26, 1
      %p264 = scmp.ne.s32.totalorder %s259, %s261
      %p265 = scmp.eq.s32.totalorder %s26, 0
      %p266 = por %p264, %p265
      %p267 = scmp.ne.s32.totalorder %s259, %s261
      %p268 = scmp.eq.s32.totalorder %s31, 1
      %p269 = por %p267, %p268
      %p270 = scmp.ne.s32.totalorder %s261, %s262
      %p271 = scmp.eq.s32.totalorder %s31, 0
      %p272 = por %p270, %p271
      %p273 = scmp.ne.s32.totalorder %s261, %s262
      %p274 = scmp.eq.s32.totalorder %s32, 1
      %p275 = por %p273, %p274
      %p277 = scmp.ne.s32.totalorder %s262, %s276
      %p278 = scmp.eq.s32.totalorder %s32, 0
      %p279 = por %p277, %p278
      %s281 = sadd.s32 %s280, 1
      %p284 = scmp.eq.s32.totalorder %s26, 1
      %p285 = scmp.ne.s32.totalorder %s280, %s282
      %p286 = scmp.eq.s32.totalorder %s26, 0
      %p287 = por %p285, %p286
      %p288 = scmp.ne.s32.totalorder %s280, %s282
      %p289 = scmp.eq.s32.totalorder %s31, 1
      %p290 = por %p288, %p289
      %p291 = scmp.ne.s32.totalorder %s282, %s283
      %p292 = scmp.eq.s32.totalorder %s31, 0
      %p293 = por %p291, %p292
      %p294 = scmp.ne.s32.totalorder %s282, %s283
      %p295 = scmp.eq.s32.totalorder %s32, 1
      %p296 = por %p294, %p295
      %p298 = scmp.ne.s32.totalorder %s283, %s297
      %p299 = scmp.eq.s32.totalorder %s32, 0
      %p300 = por %p298, %p299
      %s302 = sadd.s32 %s301, 1
      %p305 = scmp.eq.s32.totalorder %s26, 1
      %p306 = scmp.ne.s32.totalorder %s301, %s303
      %p307 = scmp.eq.s32.totalorder %s26, 0
      %p308 = por %p306, %p307
      %p309 = scmp.ne.s32.totalorder %s301, %s303
      %p310 = scmp.eq.s32.totalorder %s31, 1
      %p311 = por %p309, %p310
      %p312 = scmp.ne.s32.totalorder %s303, %s304
      %p313 = scmp.eq.s32.totalorder %s31, 0
      %p314 = por %p312, %p313
      %p315 = scmp.ne.s32.totalorder %s303, %s304
      %p316 = scmp.eq.s32.totalorder %s32, 1
      %p317 = por %p315, %p316
      %p319 = scmp.ne.s32.totalorder %s304, %s318
      %p320 = scmp.eq.s32.totalorder %s32, 0
      %p321 = por %p319, %p320
      %s323 = sadd.s32 %s322, 1
      %p326 = scmp.eq.s32.totalorder %s26, 1
      %p327 = scmp.ne.s32.totalorder %s322, %s324
      %p328 = scmp.eq.s32.totalorder %s26, 0
      %p329 = por %p327, %p328
      %p330 = scmp.ne.s32.totalorder %s322, %s324
      %p331 = scmp.eq.s32.totalorder %s31, 1
      %p332 = por %p330, %p331
      %p333 = scmp.ne.s32.totalorder %s324, %s325
      %p334 = scmp.eq.s32.totalorder %s31, 0
      %p335 = por %p333, %p334
      %p336 = scmp.ne.s32.totalorder %s324, %s325
      %p337 = scmp.eq.s32.totalorder %s32, 1
      %p338 = por %p336, %p337
      %p340 = scmp.ne.s32.totalorder %s325, %s339
      %p341 = scmp.eq.s32.totalorder %s32, 0
      %p342 = por %p340, %p341
      %s344 = sadd.s32 %s343, 1
      %p347 = scmp.eq.s32.totalorder %s26, 1
      %p348 = scmp.ne.s32.totalorder %s343, %s345
      %p349 = scmp.eq.s32.totalorder %s26, 0
      %p350 = por %p348, %p349
      %p351 = scmp.ne.s32.totalorder %s343, %s345
      %p352 = scmp.eq.s32.totalorder %s31, 1
      %p353 = por %p351, %p352
      %p354 = scmp.ne.s32.totalorder %s345, %s346
      %p355 = scmp.eq.s32.totalorder %s31, 0
      %p356 = por %p354, %p355
      %p357 = scmp.ne.s32.totalorder %s345, %s346
      %p358 = scmp.eq.s32.totalorder %s32, 1
      %p359 = por %p357, %p358
      %p361 = scmp.ne.s32.totalorder %s346, %s360
      %p362 = scmp.eq.s32.totalorder %s32, 0
      %p363 = por %p361, %p362
      %s365 = sadd.s32 %s364, 1
      %p368 = scmp.eq.s32.totalorder %s26, 1
      %p369 = scmp.ne.s32.totalorder %s364, %s366
      %p370 = scmp.eq.s32.totalorder %s26, 0
      %p371 = por %p369, %p370
      %p372 = scmp.ne.s32.totalorder %s364, %s366
      %p373 = scmp.eq.s32.totalorder %s31, 1
      %p374 = por %p372, %p373
      %p375 = scmp.ne.s32.totalorder %s366, %s367
      %p376 = scmp.eq.s32.totalorder %s31, 0
      %p377 = por %p375, %p376
      %p378 = scmp.ne.s32.totalorder %s366, %s367
      %p379 = scmp.eq.s32.totalorder %s32, 1
      %p380 = por %p378, %p379
      %p382 = scmp.ne.s32.totalorder %s367, %s381
      %p383 = scmp.eq.s32.totalorder %s32, 0
      %p384 = por %p382, %p383
      %s386 = sadd.s32 %s385, 1
      %p389 = scmp.eq.s32.totalorder %s26, 1
      %p390 = scmp.ne.s32.totalorder %s385, %s387
      %p391 = scmp.eq.s32.totalorder %s26, 0
      %p392 = por %p390, %p391
      %p393 = scmp.ne.s32.totalorder %s385, %s387
      %p394 = scmp.eq.s32.totalorder %s31, 1
      %p395 = por %p393, %p394
      %p396 = scmp.ne.s32.totalorder %s387, %s388
      %p397 = scmp.eq.s32.totalorder %s31, 0
      %p398 = por %p396, %p397
      %p399 = scmp.ne.s32.totalorder %s387, %s388
      %p400 = scmp.eq.s32.totalorder %s32, 1
      %p401 = por %p399, %p400
      %p403 = scmp.ne.s32.totalorder %s388, %s402
      %p404 = scmp.eq.s32.totalorder %s32, 0
      %p405 = por %p403, %p404
      %s406 = ssub.s32 %s26, %s33
      %p407 = scmp.eq.s32.totalorder %s406, 0
      %s409 = sadd.s32 %s408, 1
      %s410 = scalar_select %p407, %s408, %s409
      %p413 = pneg %p407
      %p414 = scmp.eq.s32.totalorder %s26, 1
      %p415 = por %p413, %p414
      %p416 = scmp.ne.s32.totalorder %s408, %s411
      %p417 = scmp.eq.s32.totalorder %s26, 0
      %p418 = por %p416, %p417
      %p419 = scmp.ne.s32.totalorder %s408, %s411
      %p420 = scmp.eq.s32.totalorder %s31, 1
      %p421 = por %p419, %p420
      %p422 = scmp.ne.s32.totalorder %s411, %s412
      %p423 = scmp.eq.s32.totalorder %s31, 0
      %p424 = por %p422, %p423
      %p425 = scmp.ne.s32.totalorder %s411, %s412
      %p426 = scmp.eq.s32.totalorder %s32, 1
      %p427 = por %p425, %p426
      %p429 = scmp.ne.s32.totalorder %s412, %s428
      %p430 = scmp.eq.s32.totalorder %s32, 0
      %p431 = por %p429, %p430
      %p432 = scmp.le.s32.totalorder 1, %s26
      %p433 = scmp.lt.s32.totalorder %s26, 3
      %p434 = pnand %p432, %p433
      %p435 = pneg %p434
      // Predicated region
      $region9: #{tpu_custom_call.1} parent=5 // pred_check
        _
      $region10: #{tpu_custom_call.1} parent=5 // pred_check_branch
        %437 = sbr.rel (%p434) target = $region12
      $region11: #{tpu_custom_call.1} parent=5 // pred_region
        %s438 = ssub.s32 %s26, 1
        // Predicated region
        $region13: #{tpu_custom_call.1} parent=11 // pred_check
          %p439 = pneg %p125
        $region14: #{tpu_custom_call.1} parent=11 // pred_check_branch
          %441 = sbr.rel (%p439) target = $region16
        $region15: #{tpu_custom_call.1} parent=11 // pred_region
          _
        $region16: #{tpu_custom_call.1} parent=11 // pred_fallthru
          _
        // Predicated region
        $region17: #{tpu_custom_call.1} parent=11 // pred_check
          %p442 = pneg %p146
        $region18: #{tpu_custom_call.1} parent=11 // pred_check_branch
          %444 = sbr.rel (%p442) target = $region20
        $region19: #{tpu_custom_call.1} parent=11 // pred_region
          _
        $region20: #{tpu_custom_call.1} parent=11 // pred_fallthru
          _
        // Predicated region
        $region21: #{tpu_custom_call.1} parent=11 // pred_check
          %p445 = pneg %p167
        $region22: #{tpu_custom_call.1} parent=11 // pred_check_branch
          %447 = sbr.rel (%p445) target = $region24
        $region23: #{tpu_custom_call.1} parent=11 // pred_region
          _
        $region24: #{tpu_custom_call.1} parent=11 // pred_fallthru
          _
        // Predicated region
        $region25: #{tpu_custom_call.1} parent=11 // pred_check
          %p448 = pneg %p188
        $region26: #{tpu_custom_call.1} parent=11 // pred_check_branch
          %450 = sbr.rel (%p448) target = $region28
        $region27: #{tpu_custom_call.1} parent=11 // pred_region
          _
        $region28: #{tpu_custom_call.1} parent=11 // pred_fallthru
          _
        // Predicated region
        $region29: #{tpu_custom_call.1} parent=11 // pred_check
          %p451 = pneg %p209
        $region30: #{tpu_custom_call.1} parent=11 // pred_check_branch
          %453 = sbr.rel (%p451) target = $region32
        $region31: #{tpu_custom_call.1} parent=11 // pred_region
          _
        $region32: #{tpu_custom_call.1} parent=11 // pred_fallthru
          _
        // Predicated region
        $region33: #{tpu_custom_call.1} parent=11 // pred_check
          %p454 = pneg %p230
        $region34: #{tpu_custom_call.1} parent=11 // pred_check_branch
          %456 = sbr.rel (%p454) target = $region36
        $region35: #{tpu_custom_call.1} parent=11 // pred_region
          _
        $region36: #{tpu_custom_call.1} parent=11 // pred_fallthru
          _
        // Predicated region
        $region37: #{tpu_custom_call.1} parent=11 // pred_check
          %p457 = pneg %p251
        $region38: #{tpu_custom_call.1} parent=11 // pred_check_branch
          %459 = sbr.rel (%p457) target = $region40
        $region39: #{tpu_custom_call.1} parent=11 // pred_region
          _
        $region40: #{tpu_custom_call.1} parent=11 // pred_fallthru
          _
        // Predicated region
        $region41: #{tpu_custom_call.1} parent=11 // pred_check
          %p460 = pneg %p272
        $region42: #{tpu_custom_call.1} parent=11 // pred_check_branch
          %462 = sbr.rel (%p460) target = $region44
        $region43: #{tpu_custom_call.1} parent=11 // pred_region
          _
        $region44: #{tpu_custom_call.1} parent=11 // pred_fallthru
          _
        // Predicated region
        $region45: #{tpu_custom_call.1} parent=11 // pred_check
          %p463 = pneg %p293
        $region46: #{tpu_custom_call.1} parent=11 // pred_check_branch
          %465 = sbr.rel (%p463) target = $region48
        $region47: #{tpu_custom_call.1} parent=11 // pred_region
          _
        $region48: #{tpu_custom_call.1} parent=11 // pred_fallthru
          _
        // Predicated region
        $region49: #{tpu_custom_call.1} parent=11 // pred_check
          %p466 = pneg %p314
        $region50: #{tpu_custom_call.1} parent=11 // pred_check_branch
          %468 = sbr.rel (%p466) target = $region52
        $region51: #{tpu_custom_call.1} parent=11 // pred_region
          _
        $region52: #{tpu_custom_call.1} parent=11 // pred_fallthru
          _
        // Predicated region
        $region53: #{tpu_custom_call.1} parent=11 // pred_check
          %p469 = pneg %p335
        $region54: #{tpu_custom_call.1} parent=11 // pred_check_branch
          %471 = sbr.rel (%p469) target = $region56
        $region55: #{tpu_custom_call.1} parent=11 // pred_region
          _
        $region56: #{tpu_custom_call.1} parent=11 // pred_fallthru
          _
        // Predicated region
        $region57: #{tpu_custom_call.1} parent=11 // pred_check
          %p472 = pneg %p356
        $region58: #{tpu_custom_call.1} parent=11 // pred_check_branch
          %474 = sbr.rel (%p472) target = $region60
        $region59: #{tpu_custom_call.1} parent=11 // pred_region
          _
        $region60: #{tpu_custom_call.1} parent=11 // pred_fallthru
          _
        // Predicated region
        $region61: #{tpu_custom_call.1} parent=11 // pred_check
          %p475 = pneg %p377
        $region62: #{tpu_custom_call.1} parent=11 // pred_check_branch
          %477 = sbr.rel (%p475) target = $region64
        $region63: #{tpu_custom_call.1} parent=11 // pred_region
          _
        $region64: #{tpu_custom_call.1} parent=11 // pred_fallthru
          _
        // Predicated region
        $region65: #{tpu_custom_call.1} parent=11 // pred_check
          %p478 = pneg %p398
        $region66: #{tpu_custom_call.1} parent=11 // pred_check_branch
          %480 = sbr.rel (%p478) target = $region68
        $region67: #{tpu_custom_call.1} parent=11 // pred_region
          _
        $region68: #{tpu_custom_call.1} parent=11 // pred_fallthru
          _
      $region12: #{tpu_custom_call.1} parent=5 // pred_fallthru
        _
      %p481 = scmp.lt.s32.totalorder %s26, 2
      // Predicated region
      $region69: #{tpu_custom_call.1} parent=5 // pred_check
        %p482 = pneg %p481
      $region70: #{tpu_custom_call.1} parent=5 // pred_check_branch
        %484 = sbr.rel (%p482) target = $region72
      $region71: #{tpu_custom_call.1} parent=5 // pred_region
        // Predicated region
        $region73: #{tpu_custom_call.1} parent=71 // pred_check
          %p485 = pneg %p46
        $region74: #{tpu_custom_call.1} parent=71 // pred_check_branch
          %487 = sbr.rel (%p485) target = $region76
        $region75: #{tpu_custom_call.1} parent=71 // pred_region
          %p488 = scmp.lt.s32.totalorder %s26, 1
          %s489 = scalar_select %p488, %s26, 1
          %s490 = smul.addr %s489, 8
          %s491 = scalar_lea.vmem %s0, %s490
        $region76: #{tpu_custom_call.1} parent=71 // pred_fallthru
          _
        // Predicated region
        $region77: #{tpu_custom_call.1} parent=71 // pred_check
          %p492 = pneg %p72
        $region78: #{tpu_custom_call.1} parent=71 // pred_check_branch
          %494 = sbr.rel (%p492) target = $region80
        $region79: #{tpu_custom_call.1} parent=71 // pred_region
          %p495 = scmp.lt.s32.totalorder %s26, 1
          %s496 = scalar_select %p495, %s26, 1
          %s497 = smul.addr %s496, 4
          %s498 = scalar_lea.vmem %s1, %s497
        $region80: #{tpu_custom_call.1} parent=71 // pred_fallthru
          _
        // Predicated region
        $region81: #{tpu_custom_call.1} parent=71 // pred_check
          %p499 = pneg %p98
        $region82: #{tpu_custom_call.1} parent=71 // pred_check_branch
          %501 = sbr.rel (%p499) target = $region84
        $region83: #{tpu_custom_call.1} parent=71 // pred_region
          %p502 = scmp.lt.s32.totalorder %s26, 1
          %s503 = scalar_select %p502, %s26, 1
          %s504 = scalar_lea.vmem %s2, %s503
        $region84: #{tpu_custom_call.1} parent=71 // pred_fallthru
          _
      $region72: #{tpu_custom_call.1} parent=5 // pred_fallthru
        _
      %p505 = scmp.le.s32.totalorder 1, %s26
      %p506 = scmp.lt.s32.totalorder %s26, 3
      %p507 = pnand %p505, %p506
      %p508 = pneg %p507
      // Predicated region
      $region85: #{tpu_custom_call.1} parent=5 // pred_check
        _
      $region86: #{tpu_custom_call.1} parent=5 // pred_check_branch
        %510 = sbr.rel (%p507) target = $region88
      $region87: #{tpu_custom_call.1} parent=5 // pred_region
        %s511 = ssub.s32 %s26, 1
        %p512 = scmp.lt.s32.totalorder %s31, 1
        %s513 = scalar_select %p512, %s31, 1
        %s514 = smul.addr %s513, 8
        %s515 = scalar_lea.vmem %s0, %s514
        %p516 = pneg %p52
        %p517 = pneg %p49
        %p518 = scmp.lt.s32.totalorder %s31, 1
        %s519 = scalar_select %p518, %s31, 1
        %s520 = smul.addr %s519, 4
        %s521 = scalar_lea.vmem %s1, %s520
        %p522 = pneg %p78
        %p523 = pneg %p75
        %p524 = scmp.lt.s32.totalorder %s31, 1
        %s525 = scalar_select %p524, %s31, 1
        %s526 = scalar_lea.vmem %s2, %s525
        %p527 = pneg %p104
        %p528 = pneg %p101
        %p529 = pneg %p125
        %p530 = pneg %p122
        %p531 = pneg %p146
        %p532 = pneg %p143
        %p533 = pneg %p167
        %p534 = pneg %p164
        %p535 = pneg %p188
        %p536 = pneg %p185
        %p537 = pneg %p209
        %p538 = pneg %p206
        %p539 = pneg %p230
        %p540 = pneg %p227
        %p541 = pneg %p251
        %p542 = pneg %p248
        %p543 = pneg %p272
        %p544 = pneg %p269
        %p545 = pneg %p293
        %p546 = pneg %p290
        %p547 = pneg %p314
        %p548 = pneg %p311
        %p549 = pneg %p335
        %p550 = pneg %p332
        %p551 = pneg %p356
        %p552 = pneg %p353
        %p553 = pneg %p377
        %p554 = pneg %p374
        %p555 = pneg %p398
        %p556 = pneg %p395
        %p557 = pneg %p424
        %p558 = pneg %p421
        %s559 = sand.u32 %s411, 1
        %s560 = scalar_lea.sflag [#allocation3], %s559
        %s561 = sand.u32 %s411, 1
        %s562 = scalar_lea.vmem [#allocation2], %s561
        %p563 = scmp.lt.s32.totalorder %s31, 1
        %s564 = scalar_select %p563, %s31, 1
        %s565 = smul.addr %s564, 8
        %s566 = scalar_lea.vmem %s0, %s565
        %p567 = scmp.lt.s32.totalorder %s31, 1
        %s568 = scalar_select %p567, %s31, 1
        %s569 = smul.addr %s568, 4
        %s570 = scalar_lea.vmem %s1, %s569
        %p571 = scmp.lt.s32.totalorder %s31, 1
        %s572 = scalar_select %p571, %s31, 1
        %s573 = scalar_lea.vmem %s2, %s572
        %v575 = vld [vmem:[%s570] sm:$0xf]
        %v576 = vld [vmem:[%s566] sm:$0xff]
        %v577 = vld [vmem:[%s3] sm:$0xf]
        %v578 = vpack.c.bf16 %v576, %v576
        %v579 = vld [vmem:[%s4] sm:$0x1]
        %v581 = vlaneseq
        %v582 = vshrl.u32 %v581, 7
        %v583 = vsub.s32 0, %v582
        %v584 = vrot.slane %v579, %v583
        %vm586 = vcmask 64512
        %v588 = vsel %vm586, %v578, 0
        %vm590 = vcmask 1043456
        %v592 = vsel %vm590, %v577, 0
        %594 = vmatprep.subr.bf16.mxu0 0
        %595 = vmatpush1.bf16.msra.mxu0 %v592
        %596 = vmatprep.subr.bf16.mxu0 0
        %597 = vmatpush1.bf16.msra.mxu0 0
        %598 = vmatprep.subr.bf16.mxu0 0
        %599 = vmatpush1.bf16.msra.mxu0 0
        %600 = vmatprep.subr.bf16.mxu0 0
        %601 = vmatpush1.bf16.msra.mxu0 0
        %602 = vmatprep.subr.bf16.mxu0 0
        %603 = vmatpush1.bf16.msra.mxu0 0
        %604 = vmatprep.subr.bf16.mxu0 0
        %605 = vmatpush1.bf16.msra.mxu0 0
        %606 = vmatprep.subr.bf16.mxu0 0
        %607 = vmatpush1.bf16.msra.mxu0 0
        %608 = vmatprep.subr.bf16.mxu0 0
        %609 = vmatpush1.bf16.msra.mxu0 0
        %610 = vmatprep.subr.bf16.mxu0 0
        %611 = vmatpush1.bf16.msra.mxu0 0
        %612 = vmatprep.subr.bf16.mxu0 0
        %613 = vmatpush1.bf16.msra.mxu0 0
        %614 = vmatprep.subr.bf16.mxu0 0
        %615 = vmatpush1.bf16.msra.mxu0 0
        %616 = vmatprep.subr.bf16.mxu0 0
        %617 = vmatpush1.bf16.msra.mxu0 0
        %618 = vmatprep.subr.bf16.mxu0 0
        %619 = vmatpush1.bf16.msra.mxu0 0
        %620 = vmatprep.subr.bf16.mxu0 0
        %621 = vmatpush1.bf16.msra.mxu0 0
        %622 = vmatprep.subr.bf16.mxu0 0
        %623 = vmatpush1.bf16.msra.mxu0 0
        %624 = vmatprep.subr.bf16.mxu0 0
        %625 = vmatpush1.bf16.msra.mxu0 0
        %626 = vmatprep.mubr.bf16.mxu0 0
        %627 = vmatmul.mubr.bf16.gmra.mrb[0].mxu0 %v588
        %v628 = vpop.f32.mrb[0].mxu0
        %v629 = vadd.f32 %v584, %v628
        %v630 = vpop.f32.mrb[0].mxu0
        %v631 = vpop.f32.mrb[0].mxu0
        %v632 = vpop.f32.mrb[0].mxu0
        %633 = vdwg.mxu0
        loop: start=0, step=1, limit=4
        $region89: #{tpu_custom_call.1} parent=87 // loop_pre_header
          _
        $region90: #{tpu_custom_call.1} parent=87 // loop_header
          %s635 = sphi 0, %s639
          %p636 = scmp.ge.s32.totalorder %s635, 4
          %v640 = vphi %v629, %v848
          %v641 = vphi 0.0, %v847
        $region91: #{tpu_custom_call.1} parent=87 // loop_header_branch
          %638 = sbr.rel (%p636) target = $region95
        $region92: #{tpu_custom_call.1} parent=87 // loop_body
          %s642 = smul.u32 %s635, 8
          %s643 = scalar_lea.vmem %s9, %s642
          %v644 = vld [vmem:[%s643] sm:$0x3f]
          %v645 = vpack.c.bf16 %v640, %v640
          %v647 = vsel %vm586, %v575, 0
          %v650 = vsel %vm590, %v645, 0
          %652 = vmatprep.subr.bf16.mxu0 0
          %653 = vmatpush1.bf16.msra.mxu0 %v650
          %654 = vmatprep.subr.bf16.mxu0 0
          %655 = vmatpush1.bf16.msra.mxu0 0
          %656 = vmatprep.subr.bf16.mxu0 0
          %657 = vmatpush1.bf16.msra.mxu0 0
          %658 = vmatprep.subr.bf16.mxu0 0
          %659 = vmatpush1.bf16.msra.mxu0 0
          %660 = vmatprep.subr.bf16.mxu0 0
          %661 = vmatpush1.bf16.msra.mxu0 0
          %662 = vmatprep.subr.bf16.mxu0 0
          %663 = vmatpush1.bf16.msra.mxu0 0
          %664 = vmatprep.subr.bf16.mxu0 0
          %665 = vmatpush1.bf16.msra.mxu0 0
          %666 = vmatprep.subr.bf16.mxu0 0
          %667 = vmatpush1.bf16.msra.mxu0 0
          %668 = vmatprep.subr.bf16.mxu0 0
          %669 = vmatpush1.bf16.msra.mxu0 0
          %670 = vmatprep.subr.bf16.mxu0 0
          %671 = vmatpush1.bf16.msra.mxu0 0
          %672 = vmatprep.subr.bf16.mxu0 0
          %673 = vmatpush1.bf16.msra.mxu0 0
          %674 = vmatprep.subr.bf16.mxu0 0
          %675 = vmatpush1.bf16.msra.mxu0 0
          %676 = vmatprep.subr.bf16.mxu0 0
          %677 = vmatpush1.bf16.msra.mxu0 0
          %678 = vmatprep.subr.bf16.mxu0 0
          %679 = vmatpush1.bf16.msra.mxu0 0
          %680 = vmatprep.subr.bf16.mxu0 0
          %681 = vmatpush1.bf16.msra.mxu0 0
          %682 = vmatprep.subr.bf16.mxu0 0
          %683 = vmatpush1.bf16.msra.mxu0 0
          %684 = vmatprep.mubr.bf16.mxu0 0
          %685 = vmatmul.mubr.bf16.gmra.mrb[0].mxu0 %v647
          %v686 = vpop.f32.mrb[0].mxu0
          %v687 = vadd.f32 0.0, %v686
          %v688 = vpop.f32.mrb[0].mxu0
          %v689 = vpop.f32.mrb[0].mxu0
          %v690 = vpop.f32.mrb[0].mxu0
          %691 = vdwg.mxu0
          %s692 = smul.u32 %s635, 4
          %s693 = smul.addr %s692, 4
          %s694 = scalar_lea.vmem %s7, %s693
          %v695 = vld [vmem:[%s694] sm:$0xf]
          %v696 = vld [vmem:[%s694 + $0x4] sm:$0xf]
          %v697 = vld [vmem:[%s694 + $0x8] sm:$0xf]
          %v698 = vld [vmem:[%s694 + $0xc] sm:$0xf]
          %v699 = vpack.c.bf16 %v687, %v687
          %v700 = vlaneseq
          %v701 = vshrl.u32 %v700, 7
          %v702 = vsub.s32 0, %v701
          %v703 = vrot.slane %v644, %v702
          %v708 = vunpack.c.l.b16 %v695
          %v709 = vunpack.c.l.b16 %v696
          %v710 = vunpack.c.l.b16 %v697
          %v711 = vunpack.c.l.b16 %v698
          %v712 = vpack.c.b16 %v709, %v708
          %v713 = vpack.c.b16 %v711, %v710
          %vm716 = vcmask 261120
          %v718 = vsel %vm716, %v699, 0
          %720 = vmatprep.subr.bf16.mxu0 0
          %721 = vmatpush1.bf16.msra.mxu0 %v712
          %722 = vmatprep.subr.bf16.mxu0 0
          %723 = vmatpush1.bf16.msra.mxu0 %v713
          %724 = vmatprep.subr.bf16.mxu0 0
          %725 = vmatpush1.bf16.msra.mxu0 0
          %726 = vmatprep.subr.bf16.mxu0 0
          %727 = vmatpush1.bf16.msra.mxu0 0
          %728 = vmatprep.subr.bf16.mxu0 0
          %729 = vmatpush1.bf16.msra.mxu0 0
          %730 = vmatprep.subr.bf16.mxu0 0
          %731 = vmatpush1.bf16.msra.mxu0 0
          %732 = vmatprep.subr.bf16.mxu0 0
          %733 = vmatpush1.bf16.msra.mxu0 0
          %734 = vmatprep.subr.bf16.mxu0 0
          %735 = vmatpush1.bf16.msra.mxu0 0
          %736 = vmatprep.subr.bf16.mxu0 0
          %737 = vmatpush1.bf16.msra.mxu0 0
          %738 = vmatprep.subr.bf16.mxu0 0
          %739 = vmatpush1.bf16.msra.mxu0 0
          %740 = vmatprep.subr.bf16.mxu0 0
          %741 = vmatpush1.bf16.msra.mxu0 0
          %742 = vmatprep.subr.bf16.mxu0 0
          %743 = vmatpush1.bf16.msra.mxu0 0
          %744 = vmatprep.subr.bf16.mxu0 0
          %745 = vmatpush1.bf16.msra.mxu0 0
          %746 = vmatprep.subr.bf16.mxu0 0
          %747 = vmatpush1.bf16.msra.mxu0 0
          %748 = vmatprep.subr.bf16.mxu0 0
          %749 = vmatpush1.bf16.msra.mxu0 0
          %750 = vmatprep.subr.bf16.mxu0 0
          %751 = vmatpush1.bf16.msra.mxu0 0
          %752 = vmatprep.mubr.bf16.mxu0 0
          %753 = vmatmul.mubr.bf16.gmra.mrb[0].mxu0 %v718
          %v754 = vpop.f32.mrb[0].mxu0
          %v755 = vadd.f32 %v703, %v754
          %v756 = vpop.f32.mrb[0].mxu0
          %v757 = vpop.f32.mrb[0].mxu0
          %v758 = vpop.f32.mrb[0].mxu0
          %759 = vdwg.mxu0
          %v760 = vlaneseq
          %v761 = vshrl.u32 %v760, 7
          %v762 = vsub.s32 1, %v761
          %v763 = vrot.slane %v644, %v762
          %v764 = vmul.f32 %v755, %v763
          %v765 = vlaneseq
          %v766 = vshrl.u32 %v765, 7
          %v767 = vsub.s32 2, %v766
          %v768 = vrot.slane %v644, %v767
          %v769 = vadd.f32 %v764, %v768
          %v770 = vmax.f32 %v769, 0.0
          %s771 = smul.addr %s692, 4
          %s772 = scalar_lea.vmem %s8, %s771
          %v773 = vld [vmem:[%s772] sm:$0xf]
          %v774 = vld [vmem:[%s772 + $0x4] sm:$0xf]
          %v775 = vld [vmem:[%s772 + $0x8] sm:$0xf]
          %v776 = vld [vmem:[%s772 + $0xc] sm:$0xf]
          %v777 = vpack.c.bf16 %v770, %v770
          %v778 = vlaneseq
          %v779 = vshrl.u32 %v778, 7
          %v780 = vsub.s32 3, %v779
          %v781 = vrot.slane %v644, %v780
          %v786 = vunpack.c.l.b16 %v773
          %v787 = vunpack.c.l.b16 %v774
          %v788 = vunpack.c.l.b16 %v775
          %v789 = vunpack.c.l.b16 %v776
          %v790 = vpack.c.b16 %v787, %v786
          %v791 = vpack.c.b16 %v789, %v788
          %v795 = vsel %vm716, %v777, 0
          %797 = vmatprep.subr.bf16.mxu0 0
          %798 = vmatpush1.bf16.msra.mxu0 %v790
          %799 = vmatprep.subr.bf16.mxu0 0
          %800 = vmatpush1.bf16.msra.mxu0 %v791
          %801 = vmatprep.subr.bf16.mxu0 0
          %802 = vmatpush1.bf16.msra.mxu0 0
          %803 = vmatprep.subr.bf16.mxu0 0
          %804 = vmatpush1.bf16.msra.mxu0 0
          %805 = vmatprep.subr.bf16.mxu0 0
          %806 = vmatpush1.bf16.msra.mxu0 0
          %807 = vmatprep.subr.bf16.mxu0 0
          %808 = vmatpush1.bf16.msra.mxu0 0
          %809 = vmatprep.subr.bf16.mxu0 0
          %810 = vmatpush1.bf16.msra.mxu0 0
          %811 = vmatprep.subr.bf16.mxu0 0
          %812 = vmatpush1.bf16.msra.mxu0 0
          %813 = vmatprep.subr.bf16.mxu0 0
          %814 = vmatpush1.bf16.msra.mxu0 0
          %815 = vmatprep.subr.bf16.mxu0 0
          %816 = vmatpush1.bf16.msra.mxu0 0
          %817 = vmatprep.subr.bf16.mxu0 0
          %818 = vmatpush1.bf16.msra.mxu0 0
          %819 = vmatprep.subr.bf16.mxu0 0
          %820 = vmatpush1.bf16.msra.mxu0 0
          %821 = vmatprep.subr.bf16.mxu0 0
          %822 = vmatpush1.bf16.msra.mxu0 0
          %823 = vmatprep.subr.bf16.mxu0 0
          %824 = vmatpush1.bf16.msra.mxu0 0
          %825 = vmatprep.subr.bf16.mxu0 0
          %826 = vmatpush1.bf16.msra.mxu0 0
          %827 = vmatprep.subr.bf16.mxu0 0
          %828 = vmatpush1.bf16.msra.mxu0 0
          %829 = vmatprep.mubr.bf16.mxu0 0
          %830 = vmatmul.mubr.bf16.gmra.mrb[0].mxu0 %v795
          %v831 = vpop.f32.mrb[0].mxu0
          %v832 = vadd.f32 %v781, %v831
          %v833 = vpop.f32.mrb[0].mxu0
          %v834 = vpop.f32.mrb[0].mxu0
          %v835 = vpop.f32.mrb[0].mxu0
          %836 = vdwg.mxu0
          %v837 = vlaneseq
          %v838 = vshrl.u32 %v837, 7
          %v839 = vsub.s32 4, %v838
          %v840 = vrot.slane %v644, %v839
          %v841 = vmul.f32 %v832, %v840
          %v842 = vlaneseq
          %v843 = vshrl.u32 %v842, 7
          %v844 = vsub.s32 5, %v843
          %v845 = vrot.slane %v644, %v844
          %v846 = vadd.f32 %v841, %v845
          %v847 = vadd.f32 %v641, %v846
          %v848 = vmax.f32 %v847, 0.0
        $region93: #{tpu_custom_call.1} parent=87 // loop_footer
          %s639 = sadd.s32 1, %s635
        $region94: #{tpu_custom_call.1} parent=87 // loop_footer_branch
          %634 = sbr.rel target = $region90
        $region95: #{tpu_custom_call.1} parent=87 // loop_exit
          _
        %v849 = vld [vmem:[%s16] sm:$0x3f]
        %v850 = vpack.c.bf16 %v640, %v640
        %v851 = vld [vmem:[%s10] sm:$0xf]
        %v852 = vld [vmem:[%s10 + $0x4] sm:$0xf]
        %v853 = vld [vmem:[%s10 + $0x8] sm:$0xf]
        %v854 = vld [vmem:[%s10 + $0xc] sm:$0xf]
        %v855 = vld [vmem:[%s10 + $0x10] sm:$0xf]
        %v856 = vld [vmem:[%s10 + $0x14] sm:$0xf]
        %v857 = vld [vmem:[%s10 + $0x18] sm:$0xf]
        %v858 = vld [vmem:[%s10 + $0x1c] sm:$0xf]
        %v859 = vld [vmem:[%s10 + $0x20] sm:$0xf]
        %v860 = vld [vmem:[%s10 + $0x24] sm:$0xf]
        %v861 = vld [vmem:[%s10 + $0x28] sm:$0xf]
        %v862 = vld [vmem:[%s10 + $0x2c] sm:$0xf]
        %v863 = vld [vmem:[%s10 + $0x30] sm:$0xf]
        %v864 = vld [vmem:[%s10 + $0x34] sm:$0xf]
        %v865 = vld [vmem:[%s10 + $0x38] sm:$0xf]
        %v866 = vld [vmem:[%s10 + $0x3c] sm:$0xf]
        %v867 = vld [vmem:[%s11] sm:$0x1]
        %v868 = vld [vmem:[%s11 + $0x1] sm:$0x1]
        %v869 = vld [vmem:[%s11 + $0x2] sm:$0x1]
        %v870 = vld [vmem:[%s11 + $0x3] sm:$0x1]
        %v875 = vlaneseq
        %v876 = vshrl.u32 %v875, 7
        %v877 = vsub.s32 0, %v876
        %v878 = vrot.slane %v867, %v877
        %v879 = vlaneseq
        %v880 = vshrl.u32 %v879, 7
        %v881 = vsub.s32 0, %v880
        %v882 = vrot.slane %v868, %v881
        %v883 = vlaneseq
        %v884 = vshrl.u32 %v883, 7
        %v885 = vsub.s32 0, %v884
        %v886 = vrot.slane %v869, %v885
        %v887 = vlaneseq
        %v888 = vshrl.u32 %v887, 7
        %v889 = vsub.s32 0, %v888
        %v890 = vrot.slane %v870, %v889
        %v899 = vunpack.c.l.b16 %v851
        %v900 = vunpack.c.l.b16 %v852
        %v901 = vunpack.c.l.b16 %v853
        %v902 = vunpack.c.l.b16 %v854
        %v903 = vpack.c.b16 %v900, %v899
        %v904 = vpack.c.b16 %v902, %v901
        %vm907 = vcmask 261120
        %v909 = vsel %vm907, %v850, 0
        %911 = vmatprep.subr.bf16.mxu0 0
        %912 = vmatpush1.bf16.msra.mxu0 %v903
        %913 = vmatprep.subr.bf16.mxu0 0
        %914 = vmatpush1.bf16.msra.mxu0 %v904
        %915 = vmatprep.subr.bf16.mxu0 0
        %916 = vmatpush1.bf16.msra.mxu0 0
        %917 = vmatprep.subr.bf16.mxu0 0
        %918 = vmatpush1.bf16.msra.mxu0 0
        %919 = vmatprep.subr.bf16.mxu0 0
        %920 = vmatpush1.bf16.msra.mxu0 0
        %921 = vmatprep.subr.bf16.mxu0 0
        %922 = vmatpush1.bf16.msra.mxu0 0
        %923 = vmatprep.subr.bf16.mxu0 0
        %924 = vmatpush1.bf16.msra.mxu0 0
        %925 = vmatprep.subr.bf16.mxu0 0
        %926 = vmatpush1.bf16.msra.mxu0 0
        %927 = vmatprep.subr.bf16.mxu0 0
        %928 = vmatpush1.bf16.msra.mxu0 0
        %929 = vmatprep.subr.bf16.mxu0 0
        %930 = vmatpush1.bf16.msra.mxu0 0
        %931 = vmatprep.subr.bf16.mxu0 0
        %932 = vmatpush1.bf16.msra.mxu0 0
        %933 = vmatprep.subr.bf16.mxu0 0
        %934 = vmatpush1.bf16.msra.mxu0 0
        %935 = vmatprep.subr.bf16.mxu0 0
        %936 = vmatpush1.bf16.msra.mxu0 0
        %937 = vmatprep.subr.bf16.mxu0 0
        %938 = vmatpush1.bf16.msra.mxu0 0
        %939 = vmatprep.subr.bf16.mxu0 0
        %940 = vmatpush1.bf16.msra.mxu0 0
        %941 = vmatprep.subr.bf16.mxu0 0
        %942 = vmatpush1.bf16.msra.mxu0 0
        %943 = vmatprep.mubr.bf16.mxu0 0
        %944 = vmatmul.mubr.bf16.gmra.mrb[0].mxu0 %v909
        %v945 = vpop.f32.mrb[0].mxu0
        %v946 = vadd.f32 %v878, %v945
        %v947 = vpop.f32.mrb[0].mxu0
        %v948 = vpop.f32.mrb[0].mxu0
        %v949 = vpop.f32.mrb[0].mxu0
        %950 = vdwg.mxu0
        %v955 = vunpack.c.l.b16 %v855
        %v956 = vunpack.c.l.b16 %v856
        %v957 = vunpack.c.l.b16 %v857
        %v958 = vunpack.c.l.b16 %v858
        %v959 = vpack.c.b16 %v956, %v955
        %v960 = vpack.c.b16 %v958, %v957
        %963 = vmatprep.subr.bf16.mxu0 0
        %964 = vmatpush1.bf16.msra.mxu0 %v959
        %965 = vmatprep.subr.bf16.mxu0 0
        %966 = vmatpush1.bf16.msra.mxu0 %v960
        %967 = vmatprep.subr.bf16.mxu0 0
        %968 = vmatpush1.bf16.msra.mxu0 0
        %969 = vmatprep.subr.bf16.mxu0 0
        %970 = vmatpush1.bf16.msra.mxu0 0
        %971 = vmatprep.subr.bf16.mxu0 0
        %972 = vmatpush1.bf16.msra.mxu0 0
        %973 = vmatprep.subr.bf16.mxu0 0
        %974 = vmatpush1.bf16.msra.mxu0 0
        %975 = vmatprep.subr.bf16.mxu0 0
        %976 = vmatpush1.bf16.msra.mxu0 0
        %977 = vmatprep.subr.bf16.mxu0 0
        %978 = vmatpush1.bf16.msra.mxu0 0
        %979 = vmatprep.subr.bf16.mxu0 0
        %980 = vmatpush1.bf16.msra.mxu0 0
        %981 = vmatprep.subr.bf16.mxu0 0
        %982 = vmatpush1.bf16.msra.mxu0 0
        %983 = vmatprep.subr.bf16.mxu0 0
        %984 = vmatpush1.bf16.msra.mxu0 0
        %985 = vmatprep.subr.bf16.mxu0 0
        %986 = vmatpush1.bf16.msra.mxu0 0
        %987 = vmatprep.subr.bf16.mxu0 0
        %988 = vmatpush1.bf16.msra.mxu0 0
        %989 = vmatprep.subr.bf16.mxu0 0
        %990 = vmatpush1.bf16.msra.mxu0 0
        %991 = vmatprep.subr.bf16.mxu0 0
        %992 = vmatpush1.bf16.msra.mxu0 0
        %993 = vmatprep.subr.bf16.mxu0 0
        %994 = vmatpush1.bf16.msra.mxu0 0
        %995 = vmatprep.mubr.bf16.mxu0 0
        %996 = vmatmul.mubr.bf16.gmra.mrb[0].mxu0 %v909
        %v997 = vpop.f32.mrb[0].mxu0
        %v998 = vadd.f32 %v882, %v997
        %v999 = vpop.f32.mrb[0].mxu0
        %v1000 = vpop.f32.mrb[0].mxu0
        %v1001 = vpop.f32.mrb[0].mxu0
        %1002 = vdwg.mxu0
        %v1007 = vunpack.c.l.b16 %v859
        %v1008 = vunpack.c.l.b16 %v860
        %v1009 = vunpack.c.l.b16 %v861
        %v1010 = vunpack.c.l.b16 %v862
        %v1011 = vpack.c.b16 %v1008, %v1007
        %v1012 = vpack.c.b16 %v1010, %v1009
        %1015 = vmatprep.subr.bf16.mxu0 0
        %1016 = vmatpush1.bf16.msra.mxu0 %v1011
        %1017 = vmatprep.subr.bf16.mxu0 0
        %1018 = vmatpush1.bf16.msra.mxu0 %v1012
        %1019 = vmatprep.subr.bf16.mxu0 0
        %1020 = vmatpush1.bf16.msra.mxu0 0
        %1021 = vmatprep.subr.bf16.mxu0 0
        %1022 = vmatpush1.bf16.msra.mxu0 0
        %1023 = vmatprep.subr.bf16.mxu0 0
        %1024 = vmatpush1.bf16.msra.mxu0 0
        %1025 = vmatprep.subr.bf16.mxu0 0
        %1026 = vmatpush1.bf16.msra.mxu0 0
        %1027 = vmatprep.subr.bf16.mxu0 0
        %1028 = vmatpush1.bf16.msra.mxu0 0
        %1029 = vmatprep.subr.bf16.mxu0 0
        %1030 = vmatpush1.bf16.msra.mxu0 0
        %1031 = vmatprep.subr.bf16.mxu0 0
        %1032 = vmatpush1.bf16.msra.mxu0 0
        %1033 = vmatprep.subr.bf16.mxu0 0
        %1034 = vmatpush1.bf16.msra.mxu0 0
        %1035 = vmatprep.subr.bf16.mxu0 0
        %1036 = vmatpush1.bf16.msra.mxu0 0
        %1037 = vmatprep.subr.bf16.mxu0 0
        %1038 = vmatpush1.bf16.msra.mxu0 0
        %1039 = vmatprep.subr.bf16.mxu0 0
        %1040 = vmatpush1.bf16.msra.mxu0 0
        %1041 = vmatprep.subr.bf16.mxu0 0
        %1042 = vmatpush1.bf16.msra.mxu0 0
        %1043 = vmatprep.subr.bf16.mxu0 0
        %1044 = vmatpush1.bf16.msra.mxu0 0
        %1045 = vmatprep.subr.bf16.mxu0 0
        %1046 = vmatpush1.bf16.msra.mxu0 0
        %1047 = vmatprep.mubr.bf16.mxu0 0
        %1048 = vmatmul.mubr.bf16.gmra.mrb[0].mxu0 %v909
        %v1049 = vpop.f32.mrb[0].mxu0
        %v1050 = vadd.f32 %v886, %v1049
        %v1051 = vpop.f32.mrb[0].mxu0
        %v1052 = vpop.f32.mrb[0].mxu0
        %v1053 = vpop.f32.mrb[0].mxu0
        %1054 = vdwg.mxu0
        %v1059 = vunpack.c.l.b16 %v863
        %v1060 = vunpack.c.l.b16 %v864
        %v1061 = vunpack.c.l.b16 %v865
        %v1062 = vunpack.c.l.b16 %v866
        %v1063 = vpack.c.b16 %v1060, %v1059
        %v1064 = vpack.c.b16 %v1062, %v1061
        %1067 = vmatprep.subr.bf16.mxu0 0
        %1068 = vmatpush1.bf16.msra.mxu0 %v1063
        %1069 = vmatprep.subr.bf16.mxu0 0
        %1070 = vmatpush1.bf16.msra.mxu0 %v1064
        %1071 = vmatprep.subr.bf16.mxu0 0
        %1072 = vmatpush1.bf16.msra.mxu0 0
        %1073 = vmatprep.subr.bf16.mxu0 0
        %1074 = vmatpush1.bf16.msra.mxu0 0
        %1075 = vmatprep.subr.bf16.mxu0 0
        %1076 = vmatpush1.bf16.msra.mxu0 0
        %1077 = vmatprep.subr.bf16.mxu0 0
        %1078 = vmatpush1.bf16.msra.mxu0 0
        %1079 = vmatprep.subr.bf16.mxu0 0
        %1080 = vmatpush1.bf16.msra.mxu0 0
        %1081 = vmatprep.subr.bf16.mxu0 0
        %1082 = vmatpush1.bf16.msra.mxu0 0
        %1083 = vmatprep.subr.bf16.mxu0 0
        %1084 = vmatpush1.bf16.msra.mxu0 0
        %1085 = vmatprep.subr.bf16.mxu0 0
        %1086 = vmatpush1.bf16.msra.mxu0 0
        %1087 = vmatprep.subr.bf16.mxu0 0
        %1088 = vmatpush1.bf16.msra.mxu0 0
        %1089 = vmatprep.subr.bf16.mxu0 0
        %1090 = vmatpush1.bf16.msra.mxu0 0
        %1091 = vmatprep.subr.bf16.mxu0 0
        %1092 = vmatpush1.bf16.msra.mxu0 0
        %1093 = vmatprep.subr.bf16.mxu0 0
        %1094 = vmatpush1.bf16.msra.mxu0 0
        %1095 = vmatprep.subr.bf16.mxu0 0
        %1096 = vmatpush1.bf16.msra.mxu0 0
        %1097 = vmatprep.subr.bf16.mxu0 0
        %1098 = vmatpush1.bf16.msra.mxu0 0
        %1099 = vmatprep.mubr.bf16.mxu0 0
        %1100 = vmatmul.mubr.bf16.gmra.mrb[0].mxu0 %v909
        %v1101 = vpop.f32.mrb[0].mxu0
        %v1102 = vadd.f32 %v890, %v1101
        %v1103 = vpop.f32.mrb[0].mxu0
        %v1104 = vpop.f32.mrb[0].mxu0
        %v1105 = vpop.f32.mrb[0].mxu0
        %1106 = vdwg.mxu0
        %v1107 = vpack.c.bf16 %v946, %v946
        %v1108 = vpack.c.bf16 %v998, %v998
        %v1109 = vpack.c.bf16 %v1050, %v1050
        %v1110 = vpack.c.bf16 %v1102, %v1102
        %1112 = vrot.lane.b32.xlu0 %v1107, 120
        %v1113 = vpop.permute.xlu0 %1112
        %v1115 = vsel %vm586, %v1107, 0
        %v1118 = vsel %vm586, %v1113, 0
        %1120 = vmatprep.subr.bf16.mxu0 0
        %1121 = vmatpush1.bf16.xpose.msra.mxu0 %v1118
        %1122 = vmatprep.subr.bf16.mxu0 0
        %1123 = vmatpush1.bf16.xpose.msra.mxu0 0
        %1124 = vmatprep.subr.bf16.mxu0 0
        %1125 = vmatpush1.bf16.xpose.msra.mxu0 0
        %1126 = vmatprep.subr.bf16.mxu0 0
        %1127 = vmatpush1.bf16.xpose.msra.mxu0 0
        %1128 = vmatprep.subr.bf16.mxu0 0
        %1129 = vmatpush1.bf16.xpose.msra.mxu0 0
        %1130 = vmatprep.subr.bf16.mxu0 0
        %1131 = vmatpush1.bf16.xpose.msra.mxu0 0
        %1132 = vmatprep.subr.bf16.mxu0 0
        %1133 = vmatpush1.bf16.xpose.msra.mxu0 0
        %1134 = vmatprep.subr.bf16.mxu0 0
        %1135 = vmatpush1.bf16.xpose.msra.mxu0 0
        %1136 = vmatprep.subr.bf16.mxu0 0
        %1137 = vmatpush1.bf16.xpose.msra.mxu0 0
        %1138 = vmatprep.subr.bf16.mxu0 0
        %1139 = vmatpush1.bf16.xpose.msra.mxu0 0
        %1140 = vmatprep.subr.bf16.mxu0 0
        %1141 = vmatpush1.bf16.xpose.msra.mxu0 0
        %1142 = vmatprep.subr.bf16.mxu0 0
        %1143 = vmatpush1.bf16.xpose.msra.mxu0 0
        %1144 = vmatprep.subr.bf16.mxu0 0
        %1145 = vmatpush1.bf16.xpose.msra.mxu0 0
        %1146 = vmatprep.subr.bf16.mxu0 0
        %1147 = vmatpush1.bf16.xpose.msra.mxu0 0
        %1148 = vmatprep.subr.bf16.mxu0 0
        %1149 = vmatpush1.bf16.xpose.msra.mxu0 0
        %1150 = vmatprep.subr.bf16.mxu0 0
        %1151 = vmatpush1.bf16.xpose.msra.mxu0 0
        %1152 = vmatprep.mubr.bf16.mxu0 0
        %1153 = vmatmul.mubr.bf16.gmra.mrb[0].mxu0 %v1115
        %v1154 = vpop.f32.mrb[0].mxu0
        %v1155 = vadd.f32 0.0, %v1154
        %v1156 = vpop.f32.mrb[0].mxu0
        %v1157 = vpop.f32.mrb[0].mxu0
        %v1158 = vpop.f32.mrb[0].mxu0
        %1159 = vdwg.mxu0
        %1161 = vrot.lane.b32.xlu0 %v1108, 120
        %v1162 = vpop.permute.xlu0 %1161
        %v1164 = vsel %vm586, %v1108, 0
        %v1167 = vsel %vm586, %v1162, 0
        %1169 = vmatprep.subr.bf16.mxu0 0
        %1170 = vmatpush1.bf16.xpose.msra.mxu0 %v1167
        %1171 = vmatprep.subr.bf16.mxu0 0
        %1172 = vmatpush1.bf16.xpose.msra.mxu0 0
        %1173 = vmatprep.subr.bf16.mxu0 0
        %1174 = vmatpush1.bf16.xpose.msra.mxu0 0
        %1175 = vmatprep.subr.bf16.mxu0 0
        %1176 = vmatpush1.bf16.xpose.msra.mxu0 0
        %1177 = vmatprep.subr.bf16.mxu0 0
        %1178 = vmatpush1.bf16.xpose.msra.mxu0 0
        %1179 = vmatprep.subr.bf16.mxu0 0
        %1180 = vmatpush1.bf16.xpose.msra.mxu0 0
        %1181 = vmatprep.subr.bf16.mxu0 0
        %1182 = vmatpush1.bf16.xpose.msra.mxu0 0
        %1183 = vmatprep.subr.bf16.mxu0 0
        %1184 = vmatpush1.bf16.xpose.msra.mxu0 0
        %1185 = vmatprep.subr.bf16.mxu0 0
        %1186 = vmatpush1.bf16.xpose.msra.mxu0 0
        %1187 = vmatprep.subr.bf16.mxu0 0
        %1188 = vmatpush1.bf16.xpose.msra.mxu0 0
        %1189 = vmatprep.subr.bf16.mxu0 0
        %1190 = vmatpush1.bf16.xpose.msra.mxu0 0
        %1191 = vmatprep.subr.bf16.mxu0 0
        %1192 = vmatpush1.bf16.xpose.msra.mxu0 0
        %1193 = vmatprep.subr.bf16.mxu0 0
        %1194 = vmatpush1.bf16.xpose.msra.mxu0 0
        %1195 = vmatprep.subr.bf16.mxu0 0
        %1196 = vmatpush1.bf16.xpose.msra.mxu0 0
        %1197 = vmatprep.subr.bf16.mxu0 0
        %1198 = vmatpush1.bf16.xpose.msra.mxu0 0
        %1199 = vmatprep.subr.bf16.mxu0 0
        %1200 = vmatpush1.bf16.xpose.msra.mxu0 0
        %1201 = vmatprep.mubr.bf16.mxu0 0
        %1202 = vmatmul.mubr.bf16.gmra.mrb[0].mxu0 %v1164
        %v1203 = vpop.f32.mrb[0].mxu0
        %v1204 = vadd.f32 0.0, %v1203
        %v1205 = vpop.f32.mrb[0].mxu0
        %v1206 = vpop.f32.mrb[0].mxu0
        %v1207 = vpop.f32.mrb[0].mxu0
        %1208 = vdwg.mxu0
        %1210 = vrot.lane.b32.xlu0 %v1109, 120
        %v1211 = vpop.permute.xlu0 %1210
        %v1213 = vsel %vm586, %v1109, 0
        %v1216 = vsel %vm586, %v1211, 0
        %1218 = vmatprep.subr.bf16.mxu0 0
        %1219 = vmatpush1.bf16.xpose.msra.mxu0 %v1216
        %1220 = vmatprep.subr.bf16.mxu0 0
        %1221 = vmatpush1.bf16.xpose.msra.mxu0 0
        %1222 = vmatprep.subr.bf16.mxu0 0
        %1223 = vmatpush1.bf16.xpose.msra.mxu0 0
        %1224 = vmatprep.subr.bf16.mxu0 0
        %1225 = vmatpush1.bf16.xpose.msra.mxu0 0
        %1226 = vmatprep.subr.bf16.mxu0 0
        %1227 = vmatpush1.bf16.xpose.msra.mxu0 0
        %1228 = vmatprep.subr.bf16.mxu0 0
        %1229 = vmatpush1.bf16.xpose.msra.mxu0 0
        %1230 = vmatprep.subr.bf16.mxu0 0
        %1231 = vmatpush1.bf16.xpose.msra.mxu0 0
        %1232 = vmatprep.subr.bf16.mxu0 0
        %1233 = vmatpush1.bf16.xpose.msra.mxu0 0
        %1234 = vmatprep.subr.bf16.mxu0 0
        %1235 = vmatpush1.bf16.xpose.msra.mxu0 0
        %1236 = vmatprep.subr.bf16.mxu0 0
        %1237 = vmatpush1.bf16.xpose.msra.mxu0 0
        %1238 = vmatprep.subr.bf16.mxu0 0
        %1239 = vmatpush1.bf16.xpose.msra.mxu0 0
        %1240 = vmatprep.subr.bf16.mxu0 0
        %1241 = vmatpush1.bf16.xpose.msra.mxu0 0
        %1242 = vmatprep.subr.bf16.mxu0 0
        %1243 = vmatpush1.bf16.xpose.msra.mxu0 0
        %1244 = vmatprep.subr.bf16.mxu0 0
        %1245 = vmatpush1.bf16.xpose.msra.mxu0 0
        %1246 = vmatprep.subr.bf16.mxu0 0
        %1247 = vmatpush1.bf16.xpose.msra.mxu0 0
        %1248 = vmatprep.subr.bf16.mxu0 0
        %1249 = vmatpush1.bf16.xpose.msra.mxu0 0
        %1250 = vmatprep.mubr.bf16.mxu0 0
        %1251 = vmatmul.mubr.bf16.gmra.mrb[0].mxu0 %v1213
        %v1252 = vpop.f32.mrb[0].mxu0
        %v1253 = vadd.f32 0.0, %v1252
        %v1254 = vpop.f32.mrb[0].mxu0
        %v1255 = vpop.f32.mrb[0].mxu0
        %v1256 = vpop.f32.mrb[0].mxu0
        %1257 = vdwg.mxu0
        %1259 = vrot.lane.b32.xlu0 %v1110, 120
        %v1260 = vpop.permute.xlu0 %1259
        %v1262 = vsel %vm586, %v1110, 0
        %v1265 = vsel %vm586, %v1260, 0
        %1267 = vmatprep.subr.bf16.mxu0 0
        %1268 = vmatpush1.bf16.xpose.msra.mxu0 %v1265
        %1269 = vmatprep.subr.bf16.mxu0 0
        %1270 = vmatpush1.bf16.xpose.msra.mxu0 0
        %1271 = vmatprep.subr.bf16.mxu0 0
        %1272 = vmatpush1.bf16.xpose.msra.mxu0 0
        %1273 = vmatprep.subr.bf16.mxu0 0
        %1274 = vmatpush1.bf16.xpose.msra.mxu0 0
        %1275 = vmatprep.subr.bf16.mxu0 0
        %1276 = vmatpush1.bf16.xpose.msra.mxu0 0
        %1277 = vmatprep.subr.bf16.mxu0 0
        %1278 = vmatpush1.bf16.xpose.msra.mxu0 0
        %1279 = vmatprep.subr.bf16.mxu0 0
        %1280 = vmatpush1.bf16.xpose.msra.mxu0 0
        %1281 = vmatprep.subr.bf16.mxu0 0
        %1282 = vmatpush1.bf16.xpose.msra.mxu0 0
        %1283 = vmatprep.subr.bf16.mxu0 0
        %1284 = vmatpush1.bf16.xpose.msra.mxu0 0
        %1285 = vmatprep.subr.bf16.mxu0 0
        %1286 = vmatpush1.bf16.xpose.msra.mxu0 0
        %1287 = vmatprep.subr.bf16.mxu0 0
        %1288 = vmatpush1.bf16.xpose.msra.mxu0 0
        %1289 = vmatprep.subr.bf16.mxu0 0
        %1290 = vmatpush1.bf16.xpose.msra.mxu0 0
        %1291 = vmatprep.subr.bf16.mxu0 0
        %1292 = vmatpush1.bf16.xpose.msra.mxu0 0
        %1293 = vmatprep.subr.bf16.mxu0 0
        %1294 = vmatpush1.bf16.xpose.msra.mxu0 0
        %1295 = vmatprep.subr.bf16.mxu0 0
        %1296 = vmatpush1.bf16.xpose.msra.mxu0 0
        %1297 = vmatprep.subr.bf16.mxu0 0
        %1298 = vmatpush1.bf16.xpose.msra.mxu0 0
        %1299 = vmatprep.mubr.bf16.mxu0 0
        %1300 = vmatmul.mubr.bf16.gmra.mrb[0].mxu0 %v1262
        %v1301 = vpop.f32.mrb[0].mxu0
        %v1302 = vadd.f32 0.0, %v1301
        %v1303 = vpop.f32.mrb[0].mxu0
        %v1304 = vpop.f32.mrb[0].mxu0
        %v1305 = vpop.f32.mrb[0].mxu0
        %1306 = vdwg.mxu0
        %v1307 = vsel %vm586, %v1155, -inf
        %1308 = vmax.xlane.f32.xlu0 %v1307
        %v1309 = vpop.xlane.xlu0 %1308
        %v1310 = vsel %vm586, %v1204, -inf
        %1311 = vmax.xlane.f32.xlu0 %v1310
        %v1312 = vpop.xlane.xlu0 %1311
        %v1313 = vsel %vm586, %v1253, -inf
        %1314 = vmax.xlane.f32.xlu0 %v1313
        %v1315 = vpop.xlane.xlu0 %1314
        %v1316 = vsel %vm586, %v1302, -inf
        %1317 = vmax.xlane.f32.xlu0 %v1316
        %v1318 = vpop.xlane.xlu0 %1317
        %v1319 = vsub.f32 %v1155, %v1309
        %v1320 = vsub.f32 %v1204, %v1312
        %v1321 = vsub.f32 %v1253, %v1315
        %v1322 = vsub.f32 %v1302, %v1318
        %v1323 = vmul.f32 %v1319, 1.442695
        %v1324 = vpow.pop %v1323
        %v1325 = vmul.f32 %v1320, 1.442695
        %v1326 = vpow.pop %v1325
        %v1327 = vmul.f32 %v1321, 1.442695
        %v1328 = vpow.pop %v1327
        %v1329 = vmul.f32 %v1322, 1.442695
        %v1330 = vpow.pop %v1329
        %v1331 = vsel %vm586, %v1324, 0.0
        %1332 = vadd.xlane.f32.xlu0 %v1331
        %v1333 = vpop.xlane.xlu0 %1332
        %v1334 = vsel %vm586, %v1326, 0.0
        %1335 = vadd.xlane.f32.xlu0 %v1334
        %v1336 = vpop.xlane.xlu0 %1335
        %v1337 = vsel %vm586, %v1328, 0.0
        %1338 = vadd.xlane.f32.xlu0 %v1337
        %v1339 = vpop.xlane.xlu0 %1338
        %v1340 = vsel %vm586, %v1330, 0.0
        %1341 = vadd.xlane.f32.xlu0 %v1340
        %v1342 = vpop.xlane.xlu0 %1341
        %v1343 = vpack.c.bf16 %v1324, %v1324
        %v1344 = vpack.c.bf16 %v1326, %v1326
        %v1345 = vpack.c.bf16 %v1328, %v1328
        %v1346 = vpack.c.bf16 %v1330, %v1330
        %1347 = vrot.lane.b32.xlu0 %v1107, 112
        %v1348 = vpop.permute.xlu0 %1347
        %v1350 = vsel %vm586, %v1343, 0
        %v1353 = vsel %vm590, %v1348, 0
        %1355 = vmatprep.subr.bf16.mxu0 0
        %1356 = vmatpush1.bf16.msra.mxu0 %v1353
        %1357 = vmatprep.subr.bf16.mxu0 0
        %1358 = vmatpush1.bf16.msra.mxu0 0
        %1359 = vmatprep.subr.bf16.mxu0 0
        %1360 = vmatpush1.bf16.msra.mxu0 0
        %1361 = vmatprep.subr.bf16.mxu0 0
        %1362 = vmatpush1.bf16.msra.mxu0 0
        %1363 = vmatprep.subr.bf16.mxu0 0
        %1364 = vmatpush1.bf16.msra.mxu0 0
        %1365 = vmatprep.subr.bf16.mxu0 0
        %1366 = vmatpush1.bf16.msra.mxu0 0
        %1367 = vmatprep.subr.bf16.mxu0 0
        %1368 = vmatpush1.bf16.msra.mxu0 0
        %1369 = vmatprep.subr.bf16.mxu0 0
        %1370 = vmatpush1.bf16.msra.mxu0 0
        %1371 = vmatprep.subr.bf16.mxu0 0
        %1372 = vmatpush1.bf16.msra.mxu0 0
        %1373 = vmatprep.subr.bf16.mxu0 0
        %1374 = vmatpush1.bf16.msra.mxu0 0
        %1375 = vmatprep.subr.bf16.mxu0 0
        %1376 = vmatpush1.bf16.msra.mxu0 0
        %1377 = vmatprep.subr.bf16.mxu0 0
        %1378 = vmatpush1.bf16.msra.mxu0 0
        %1379 = vmatprep.subr.bf16.mxu0 0
        %1380 = vmatpush1.bf16.msra.mxu0 0
        %1381 = vmatprep.subr.bf16.mxu0 0
        %1382 = vmatpush1.bf16.msra.mxu0 0
        %1383 = vmatprep.subr.bf16.mxu0 0
        %1384 = vmatpush1.bf16.msra.mxu0 0
        %1385 = vmatprep.subr.bf16.mxu0 0
        %1386 = vmatpush1.bf16.msra.mxu0 0
        %1387 = vmatprep.mubr.bf16.mxu0 0
        %1388 = vmatmul.mubr.bf16.gmra.mrb[0].mxu0 %v1350
        %v1389 = vpop.f32.mrb[0].mxu0
        %v1390 = vadd.f32 0.0, %v1389
        %v1391 = vpop.f32.mrb[0].mxu0
        %v1392 = vpop.f32.mrb[0].mxu0
        %v1393 = vpop.f32.mrb[0].mxu0
        %1394 = vdwg.mxu0
        %1395 = vrot.lane.b32.xlu0 %v1108, 112
        %v1396 = vpop.permute.xlu0 %1395
        %v1398 = vsel %vm586, %v1344, 0
        %v1401 = vsel %vm590, %v1396, 0
        %1403 = vmatprep.subr.bf16.mxu0 0
        %1404 = vmatpush1.bf16.msra.mxu0 %v1401
        %1405 = vmatprep.subr.bf16.mxu0 0
        %1406 = vmatpush1.bf16.msra.mxu0 0
        %1407 = vmatprep.subr.bf16.mxu0 0
        %1408 = vmatpush1.bf16.msra.mxu0 0
        %1409 = vmatprep.subr.bf16.mxu0 0
        %1410 = vmatpush1.bf16.msra.mxu0 0
        %1411 = vmatprep.subr.bf16.mxu0 0
        %1412 = vmatpush1.bf16.msra.mxu0 0
        %1413 = vmatprep.subr.bf16.mxu0 0
        %1414 = vmatpush1.bf16.msra.mxu0 0
        %1415 = vmatprep.subr.bf16.mxu0 0
        %1416 = vmatpush1.bf16.msra.mxu0 0
        %1417 = vmatprep.subr.bf16.mxu0 0
        %1418 = vmatpush1.bf16.msra.mxu0 0
        %1419 = vmatprep.subr.bf16.mxu0 0
        %1420 = vmatpush1.bf16.msra.mxu0 0
        %1421 = vmatprep.subr.bf16.mxu0 0
        %1422 = vmatpush1.bf16.msra.mxu0 0
        %1423 = vmatprep.subr.bf16.mxu0 0
        %1424 = vmatpush1.bf16.msra.mxu0 0
        %1425 = vmatprep.subr.bf16.mxu0 0
        %1426 = vmatpush1.bf16.msra.mxu0 0
        %1427 = vmatprep.subr.bf16.mxu0 0
        %1428 = vmatpush1.bf16.msra.mxu0 0
        %1429 = vmatprep.subr.bf16.mxu0 0
        %1430 = vmatpush1.bf16.msra.mxu0 0
        %1431 = vmatprep.subr.bf16.mxu0 0
        %1432 = vmatpush1.bf16.msra.mxu0 0
        %1433 = vmatprep.subr.bf16.mxu0 0
        %1434 = vmatpush1.bf16.msra.mxu0 0
        %1435 = vmatprep.mubr.bf16.mxu0 0
        %1436 = vmatmul.mubr.bf16.gmra.mrb[0].mxu0 %v1398
        %v1437 = vpop.f32.mrb[0].mxu0
        %v1438 = vadd.f32 0.0, %v1437
        %v1439 = vpop.f32.mrb[0].mxu0
        %v1440 = vpop.f32.mrb[0].mxu0
        %v1441 = vpop.f32.mrb[0].mxu0
        %1442 = vdwg.mxu0
        %1443 = vrot.lane.b32.xlu0 %v1109, 112
        %v1444 = vpop.permute.xlu0 %1443
        %v1446 = vsel %vm586, %v1345, 0
        %v1449 = vsel %vm590, %v1444, 0
        %1451 = vmatprep.subr.bf16.mxu0 0
        %1452 = vmatpush1.bf16.msra.mxu0 %v1449
        %1453 = vmatprep.subr.bf16.mxu0 0
        %1454 = vmatpush1.bf16.msra.mxu0 0
        %1455 = vmatprep.subr.bf16.mxu0 0
        %1456 = vmatpush1.bf16.msra.mxu0 0
        %1457 = vmatprep.subr.bf16.mxu0 0
        %1458 = vmatpush1.bf16.msra.mxu0 0
        %1459 = vmatprep.subr.bf16.mxu0 0
        %1460 = vmatpush1.bf16.msra.mxu0 0
        %1461 = vmatprep.subr.bf16.mxu0 0
        %1462 = vmatpush1.bf16.msra.mxu0 0
        %1463 = vmatprep.subr.bf16.mxu0 0
        %1464 = vmatpush1.bf16.msra.mxu0 0
        %1465 = vmatprep.subr.bf16.mxu0 0
        %1466 = vmatpush1.bf16.msra.mxu0 0
        %1467 = vmatprep.subr.bf16.mxu0 0
        %1468 = vmatpush1.bf16.msra.mxu0 0
        %1469 = vmatprep.subr.bf16.mxu0 0
        %1470 = vmatpush1.bf16.msra.mxu0 0
        %1471 = vmatprep.subr.bf16.mxu0 0
        %1472 = vmatpush1.bf16.msra.mxu0 0
        %1473 = vmatprep.subr.bf16.mxu0 0
        %1474 = vmatpush1.bf16.msra.mxu0 0
        %1475 = vmatprep.subr.bf16.mxu0 0
        %1476 = vmatpush1.bf16.msra.mxu0 0
        %1477 = vmatprep.subr.bf16.mxu0 0
        %1478 = vmatpush1.bf16.msra.mxu0 0
        %1479 = vmatprep.subr.bf16.mxu0 0
        %1480 = vmatpush1.bf16.msra.mxu0 0
        %1481 = vmatprep.subr.bf16.mxu0 0
        %1482 = vmatpush1.bf16.msra.mxu0 0
        %1483 = vmatprep.mubr.bf16.mxu0 0
        %1484 = vmatmul.mubr.bf16.gmra.mrb[0].mxu0 %v1446
        %v1485 = vpop.f32.mrb[0].mxu0
        %v1486 = vadd.f32 0.0, %v1485
        %v1487 = vpop.f32.mrb[0].mxu0
        %v1488 = vpop.f32.mrb[0].mxu0
        %v1489 = vpop.f32.mrb[0].mxu0
        %1490 = vdwg.mxu0
        %1491 = vrot.lane.b32.xlu0 %v1110, 112
        %v1492 = vpop.permute.xlu0 %1491
        %v1494 = vsel %vm586, %v1346, 0
        %v1497 = vsel %vm590, %v1492, 0
        %1499 = vmatprep.subr.bf16.mxu0 0
        %1500 = vmatpush1.bf16.msra.mxu0 %v1497
        %1501 = vmatprep.subr.bf16.mxu0 0
        %1502 = vmatpush1.bf16.msra.mxu0 0
        %1503 = vmatprep.subr.bf16.mxu0 0
        %1504 = vmatpush1.bf16.msra.mxu0 0
        %1505 = vmatprep.subr.bf16.mxu0 0
        %1506 = vmatpush1.bf16.msra.mxu0 0
        %1507 = vmatprep.subr.bf16.mxu0 0
        %1508 = vmatpush1.bf16.msra.mxu0 0
        %1509 = vmatprep.subr.bf16.mxu0 0
        %1510 = vmatpush1.bf16.msra.mxu0 0
        %1511 = vmatprep.subr.bf16.mxu0 0
        %1512 = vmatpush1.bf16.msra.mxu0 0
        %1513 = vmatprep.subr.bf16.mxu0 0
        %1514 = vmatpush1.bf16.msra.mxu0 0
        %1515 = vmatprep.subr.bf16.mxu0 0
        %1516 = vmatpush1.bf16.msra.mxu0 0
        %1517 = vmatprep.subr.bf16.mxu0 0
        %1518 = vmatpush1.bf16.msra.mxu0 0
        %1519 = vmatprep.subr.bf16.mxu0 0
        %1520 = vmatpush1.bf16.msra.mxu0 0
        %1521 = vmatprep.subr.bf16.mxu0 0
        %1522 = vmatpush1.bf16.msra.mxu0 0
        %1523 = vmatprep.subr.bf16.mxu0 0
        %1524 = vmatpush1.bf16.msra.mxu0 0
        %1525 = vmatprep.subr.bf16.mxu0 0
        %1526 = vmatpush1.bf16.msra.mxu0 0
        %1527 = vmatprep.subr.bf16.mxu0 0
        %1528 = vmatpush1.bf16.msra.mxu0 0
        %1529 = vmatprep.subr.bf16.mxu0 0
        %1530 = vmatpush1.bf16.msra.mxu0 0
        %1531 = vmatprep.mubr.bf16.mxu0 0
        %1532 = vmatmul.mubr.bf16.gmra.mrb[0].mxu0 %v1494
        %v1533 = vpop.f32.mrb[0].mxu0
        %v1534 = vadd.f32 0.0, %v1533
        %v1535 = vpop.f32.mrb[0].mxu0
        %v1536 = vpop.f32.mrb[0].mxu0
        %v1537 = vpop.f32.mrb[0].mxu0
        %1538 = vdwg.mxu0
        %v1539 = vrcp.pop %v1333
        %v1540 = vrcp.pop %v1336
        %v1541 = vrcp.pop %v1339
        %v1542 = vrcp.pop %v1342
        %v1543 = vmul.f32 %v1390, %v1539
        %v1544 = vmul.f32 %v1438, %v1540
        %v1545 = vmul.f32 %v1486, %v1541
        %v1546 = vmul.f32 %v1534, %v1542
        %v1547 = vpack.c.bf16 %v1543, %v1543
        %v1548 = vpack.c.bf16 %v1544, %v1544
        %v1549 = vpack.c.bf16 %v1545, %v1545
        %v1550 = vpack.c.bf16 %v1546, %v1546
        %v1551 = vld [vmem:[%s12] sm:$0xf]
        %v1552 = vld [vmem:[%s12 + $0x4] sm:$0xf]
        %v1553 = vld [vmem:[%s12 + $0x8] sm:$0xf]
        %v1554 = vld [vmem:[%s12 + $0xc] sm:$0xf]
        %v1556 = vsel %vm586, %v1547, 0
        %v1559 = vsel %vm590, %v1551, 0
        %1561 = vmatprep.subr.bf16.mxu0 0
        %1562 = vmatpush1.bf16.msra.mxu0 %v1559
        %1563 = vmatprep.subr.bf16.mxu0 0
        %1564 = vmatpush1.bf16.msra.mxu0 0
        %1565 = vmatprep.subr.bf16.mxu0 0
        %1566 = vmatpush1.bf16.msra.mxu0 0
        %1567 = vmatprep.subr.bf16.mxu0 0
        %1568 = vmatpush1.bf16.msra.mxu0 0
        %1569 = vmatprep.subr.bf16.mxu0 0
        %1570 = vmatpush1.bf16.msra.mxu0 0
        %1571 = vmatprep.subr.bf16.mxu0 0
        %1572 = vmatpush1.bf16.msra.mxu0 0
        %1573 = vmatprep.subr.bf16.mxu0 0
        %1574 = vmatpush1.bf16.msra.mxu0 0
        %1575 = vmatprep.subr.bf16.mxu0 0
        %1576 = vmatpush1.bf16.msra.mxu0 0
        %1577 = vmatprep.subr.bf16.mxu0 0
        %1578 = vmatpush1.bf16.msra.mxu0 0
        %1579 = vmatprep.subr.bf16.mxu0 0
        %1580 = vmatpush1.bf16.msra.mxu0 0
        %1581 = vmatprep.subr.bf16.mxu0 0
        %1582 = vmatpush1.bf16.msra.mxu0 0
        %1583 = vmatprep.subr.bf16.mxu0 0
        %1584 = vmatpush1.bf16.msra.mxu0 0
        %1585 = vmatprep.subr.bf16.mxu0 0
        %1586 = vmatpush1.bf16.msra.mxu0 0
        %1587 = vmatprep.subr.bf16.mxu0 0
        %1588 = vmatpush1.bf16.msra.mxu0 0
        %1589 = vmatprep.subr.bf16.mxu0 0
        %1590 = vmatpush1.bf16.msra.mxu0 0
        %1591 = vmatprep.subr.bf16.mxu0 0
        %1592 = vmatpush1.bf16.msra.mxu0 0
        %1593 = vmatprep.mubr.bf16.mxu0 0
        %1594 = vmatmul.mubr.bf16.gmra.mrb[0].mxu0 %v1556
        %v1595 = vpop.f32.mrb[0].mxu0
        %v1596 = vadd.f32 0.0, %v1595
        %v1597 = vpop.f32.mrb[0].mxu0
        %v1598 = vpop.f32.mrb[0].mxu0
        %v1599 = vpop.f32.mrb[0].mxu0
        %1600 = vdwg.mxu0
        %v1602 = vsel %vm586, %v1548, 0
        %v1605 = vsel %vm590, %v1552, 0
        %1607 = vmatprep.subr.bf16.mxu0 0
        %1608 = vmatpush1.bf16.msra.mxu0 %v1605
        %1609 = vmatprep.subr.bf16.mxu0 0
        %1610 = vmatpush1.bf16.msra.mxu0 0
        %1611 = vmatprep.subr.bf16.mxu0 0
        %1612 = vmatpush1.bf16.msra.mxu0 0
        %1613 = vmatprep.subr.bf16.mxu0 0
        %1614 = vmatpush1.bf16.msra.mxu0 0
        %1615 = vmatprep.subr.bf16.mxu0 0
        %1616 = vmatpush1.bf16.msra.mxu0 0
        %1617 = vmatprep.subr.bf16.mxu0 0
        %1618 = vmatpush1.bf16.msra.mxu0 0
        %1619 = vmatprep.subr.bf16.mxu0 0
        %1620 = vmatpush1.bf16.msra.mxu0 0
        %1621 = vmatprep.subr.bf16.mxu0 0
        %1622 = vmatpush1.bf16.msra.mxu0 0
        %1623 = vmatprep.subr.bf16.mxu0 0
        %1624 = vmatpush1.bf16.msra.mxu0 0
        %1625 = vmatprep.subr.bf16.mxu0 0
        %1626 = vmatpush1.bf16.msra.mxu0 0
        %1627 = vmatprep.subr.bf16.mxu0 0
        %1628 = vmatpush1.bf16.msra.mxu0 0
        %1629 = vmatprep.subr.bf16.mxu0 0
        %1630 = vmatpush1.bf16.msra.mxu0 0
        %1631 = vmatprep.subr.bf16.mxu0 0
        %1632 = vmatpush1.bf16.msra.mxu0 0
        %1633 = vmatprep.subr.bf16.mxu0 0
        %1634 = vmatpush1.bf16.msra.mxu0 0
        %1635 = vmatprep.subr.bf16.mxu0 0
        %1636 = vmatpush1.bf16.msra.mxu0 0
        %1637 = vmatprep.subr.bf16.mxu0 0
        %1638 = vmatpush1.bf16.msra.mxu0 0
        %1639 = vmatprep.mubr.bf16.mxu0 0
        %1640 = vmatmul.mubr.bf16.gmra.mrb[0].mxu0 %v1602
        %v1641 = vpop.f32.mrb[0].mxu0
        %v1642 = vadd.f32 0.0, %v1641
        %v1643 = vpop.f32.mrb[0].mxu0
        %v1644 = vpop.f32.mrb[0].mxu0
        %v1645 = vpop.f32.mrb[0].mxu0
        %1646 = vdwg.mxu0
        %v1648 = vsel %vm586, %v1549, 0
        %v1651 = vsel %vm590, %v1553, 0
        %1653 = vmatprep.subr.bf16.mxu0 0
        %1654 = vmatpush1.bf16.msra.mxu0 %v1651
        %1655 = vmatprep.subr.bf16.mxu0 0
        %1656 = vmatpush1.bf16.msra.mxu0 0
        %1657 = vmatprep.subr.bf16.mxu0 0
        %1658 = vmatpush1.bf16.msra.mxu0 0
        %1659 = vmatprep.subr.bf16.mxu0 0
        %1660 = vmatpush1.bf16.msra.mxu0 0
        %1661 = vmatprep.subr.bf16.mxu0 0
        %1662 = vmatpush1.bf16.msra.mxu0 0
        %1663 = vmatprep.subr.bf16.mxu0 0
        %1664 = vmatpush1.bf16.msra.mxu0 0
        %1665 = vmatprep.subr.bf16.mxu0 0
        %1666 = vmatpush1.bf16.msra.mxu0 0
        %1667 = vmatprep.subr.bf16.mxu0 0
        %1668 = vmatpush1.bf16.msra.mxu0 0
        %1669 = vmatprep.subr.bf16.mxu0 0
        %1670 = vmatpush1.bf16.msra.mxu0 0
        %1671 = vmatprep.subr.bf16.mxu0 0
        %1672 = vmatpush1.bf16.msra.mxu0 0
        %1673 = vmatprep.subr.bf16.mxu0 0
        %1674 = vmatpush1.bf16.msra.mxu0 0
        %1675 = vmatprep.subr.bf16.mxu0 0
        %1676 = vmatpush1.bf16.msra.mxu0 0
        %1677 = vmatprep.subr.bf16.mxu0 0
        %1678 = vmatpush1.bf16.msra.mxu0 0
        %1679 = vmatprep.subr.bf16.mxu0 0
        %1680 = vmatpush1.bf16.msra.mxu0 0
        %1681 = vmatprep.subr.bf16.mxu0 0
        %1682 = vmatpush1.bf16.msra.mxu0 0
        %1683 = vmatprep.subr.bf16.mxu0 0
        %1684 = vmatpush1.bf16.msra.mxu0 0
        %1685 = vmatprep.mubr.bf16.mxu0 0
        %1686 = vmatmul.mubr.bf16.gmra.mrb[0].mxu0 %v1648
        %v1687 = vpop.f32.mrb[0].mxu0
        %v1688 = vadd.f32 0.0, %v1687
        %v1689 = vpop.f32.mrb[0].mxu0
        %v1690 = vpop.f32.mrb[0].mxu0
        %v1691 = vpop.f32.mrb[0].mxu0
        %1692 = vdwg.mxu0
        %v1694 = vsel %vm586, %v1550, 0
        %v1697 = vsel %vm590, %v1554, 0
        %1699 = vmatprep.subr.bf16.mxu0 0
        %1700 = vmatpush1.bf16.msra.mxu0 %v1697
        %1701 = vmatprep.subr.bf16.mxu0 0
        %1702 = vmatpush1.bf16.msra.mxu0 0
        %1703 = vmatprep.subr.bf16.mxu0 0
        %1704 = vmatpush1.bf16.msra.mxu0 0
        %1705 = vmatprep.subr.bf16.mxu0 0
        %1706 = vmatpush1.bf16.msra.mxu0 0
        %1707 = vmatprep.subr.bf16.mxu0 0
        %1708 = vmatpush1.bf16.msra.mxu0 0
        %1709 = vmatprep.subr.bf16.mxu0 0
        %1710 = vmatpush1.bf16.msra.mxu0 0
        %1711 = vmatprep.subr.bf16.mxu0 0
        %1712 = vmatpush1.bf16.msra.mxu0 0
        %1713 = vmatprep.subr.bf16.mxu0 0
        %1714 = vmatpush1.bf16.msra.mxu0 0
        %1715 = vmatprep.subr.bf16.mxu0 0
        %1716 = vmatpush1.bf16.msra.mxu0 0
        %1717 = vmatprep.subr.bf16.mxu0 0
        %1718 = vmatpush1.bf16.msra.mxu0 0
        %1719 = vmatprep.subr.bf16.mxu0 0
        %1720 = vmatpush1.bf16.msra.mxu0 0
        %1721 = vmatprep.subr.bf16.mxu0 0
        %1722 = vmatpush1.bf16.msra.mxu0 0
        %1723 = vmatprep.subr.bf16.mxu0 0
        %1724 = vmatpush1.bf16.msra.mxu0 0
        %1725 = vmatprep.subr.bf16.mxu0 0
        %1726 = vmatpush1.bf16.msra.mxu0 0
        %1727 = vmatprep.subr.bf16.mxu0 0
        %1728 = vmatpush1.bf16.msra.mxu0 0
        %1729 = vmatprep.subr.bf16.mxu0 0
        %1730 = vmatpush1.bf16.msra.mxu0 0
        %1731 = vmatprep.mubr.bf16.mxu0 0
        %1732 = vmatmul.mubr.bf16.gmra.mrb[0].mxu0 %v1694
        %v1733 = vpop.f32.mrb[0].mxu0
        %v1734 = vadd.f32 0.0, %v1733
        %v1735 = vpop.f32.mrb[0].mxu0
        %v1736 = vpop.f32.mrb[0].mxu0
        %v1737 = vpop.f32.mrb[0].mxu0
        %1738 = vdwg.mxu0
        %v1739 = vsel %vm907, %v1596, 0.0
        %v1740 = vsel %vm907, %v1642, 0.0
        %v1741 = vadd.f32 %v1739, %v1740
        %v1742 = vsel %vm907, %v1688, 0.0
        %v1743 = vadd.f32 %v1741, %v1742
        %v1744 = vsel %vm907, %v1734, 0.0
        %v1745 = vadd.f32 %v1743, %v1744
        %v1746 = vlaneseq
        %v1747 = vshrl.u32 %v1746, 7
        %v1748 = vsub.s32 0, %v1747
        %v1749 = vrot.slane %v849, %v1748
        %v1750 = vadd.f32 %v1745, %v1749
        %v1751 = vadd.f32 %v640, %v1750
        %v1752 = vsel %vm907, %v1751, 0.0
        %1753 = vadd.xlane.f32.xlu0 %v1752
        %v1754 = vpop.xlane.xlu0 %1753
        %v1755 = vmul.f32 %v1754, 0.03125
        %v1756 = vmul.f32 %v1751, %v1751
        %v1757 = vsel %vm907, %v1756, 0.0
        %1758 = vadd.xlane.f32.xlu0 %v1757
        %v1759 = vpop.xlane.xlu0 %1758
        %v1760 = vmul.f32 %v1759, 0.03125
        %v1761 = vmul.f32 %v1755, %v1755
        %v1762 = vsub.f32 %v1760, %v1761
        %v1763 = vmax.f32 %v1762, 0.0
        %v1764 = vsub.f32 %v1751, %v1755
        %v1765 = vadd.f32 %v1763, 1e-05
        %v1766 = vrsqrt.pop %v1765
        %v1767 = vmul.f32 %v1764, %v1766
        %v1768 = vlaneseq
        %v1769 = vshrl.u32 %v1768, 7
        %v1770 = vsub.s32 1, %v1769
        %v1771 = vrot.slane %v849, %v1770
        %v1772 = vmul.f32 %v1767, %v1771
        %v1773 = vlaneseq
        %v1774 = vshrl.u32 %v1773, 7
        %v1775 = vsub.s32 2, %v1774
        %v1776 = vrot.slane %v849, %v1775
        %v1777 = vadd.f32 %v1772, %v1776
        %v1778 = vld [vmem:[%s13] sm:$0xf]
        %v1779 = vld [vmem:[%s13 + $0x4] sm:$0xf]
        %v1780 = vld [vmem:[%s13 + $0x8] sm:$0xf]
        %v1781 = vld [vmem:[%s13 + $0xc] sm:$0xf]
        %v1782 = vpack.c.bf16 %v1777, %v1777
        %v1783 = vld [vmem:[%s14] sm:$0x1]
        %v1785 = vlaneseq
        %v1786 = vshrl.u32 %v1785, 7
        %v1787 = vsub.s32 0, %v1786
        %v1788 = vrot.slane %v1783, %v1787
        %v1794 = vunpack.c.l.b16 %v1778
        %v1795 = vunpack.c.l.b16 %v1779
        %v1796 = vunpack.c.l.b16 %v1780
        %v1797 = vunpack.c.l.b16 %v1781
        %v1798 = vpack.c.b16 %v1795, %v1794
        %v1799 = vpack.c.b16 %v1797, %v1796
        %v1803 = vsel %vm907, %v1782, 0
        %1805 = vmatprep.subr.bf16.mxu0 0
        %1806 = vmatpush1.bf16.msra.mxu0 %v1798
        %1807 = vmatprep.subr.bf16.mxu0 0
        %1808 = vmatpush1.bf16.msra.mxu0 %v1799
        %1809 = vmatprep.subr.bf16.mxu0 0
        %1810 = vmatpush1.bf16.msra.mxu0 0
        %1811 = vmatprep.subr.bf16.mxu0 0
        %1812 = vmatpush1.bf16.msra.mxu0 0
        %1813 = vmatprep.subr.bf16.mxu0 0
        %1814 = vmatpush1.bf16.msra.mxu0 0
        %1815 = vmatprep.subr.bf16.mxu0 0
        %1816 = vmatpush1.bf16.msra.mxu0 0
        %1817 = vmatprep.subr.bf16.mxu0 0
        %1818 = vmatpush1.bf16.msra.mxu0 0
        %1819 = vmatprep.subr.bf16.mxu0 0
        %1820 = vmatpush1.bf16.msra.mxu0 0
        %1821 = vmatprep.subr.bf16.mxu0 0
        %1822 = vmatpush1.bf16.msra.mxu0 0
        %1823 = vmatprep.subr.bf16.mxu0 0
        %1824 = vmatpush1.bf16.msra.mxu0 0
        %1825 = vmatprep.subr.bf16.mxu0 0
        %1826 = vmatpush1.bf16.msra.mxu0 0
        %1827 = vmatprep.subr.bf16.mxu0 0
        %1828 = vmatpush1.bf16.msra.mxu0 0
        %1829 = vmatprep.subr.bf16.mxu0 0
        %1830 = vmatpush1.bf16.msra.mxu0 0
        %1831 = vmatprep.subr.bf16.mxu0 0
        %1832 = vmatpush1.bf16.msra.mxu0 0
        %1833 = vmatprep.subr.bf16.mxu0 0
        %1834 = vmatpush1.bf16.msra.mxu0 0
        %1835 = vmatprep.subr.bf16.mxu0 0
        %1836 = vmatpush1.bf16.msra.mxu0 0
        %1837 = vmatprep.mubr.bf16.mxu0 0
        %1838 = vmatmul.mubr.bf16.gmra.mrb[0].mxu0 %v1803
        %v1839 = vpop.f32.mrb[0].mxu0
        %v1840 = vadd.f32 %v1788, %v1839
        %v1841 = vpop.f32.mrb[0].mxu0
        %v1842 = vpop.f32.mrb[0].mxu0
        %v1843 = vpop.f32.mrb[0].mxu0
        %1844 = vdwg.mxu0
        %v1845 = vmax.f32 %v1840, 0.0
        %v1846 = vld [vmem:[%s15] sm:$0xf]
        %v1847 = vld [vmem:[%s15 + $0x4] sm:$0xf]
        %v1848 = vld [vmem:[%s15 + $0x8] sm:$0xf]
        %v1849 = vld [vmem:[%s15 + $0xc] sm:$0xf]
        %v1850 = vld [vmem:[%s15 + $0x10] sm:$0xf]
        %v1851 = vld [vmem:[%s15 + $0x14] sm:$0xf]
        %v1852 = vld [vmem:[%s15 + $0x18] sm:$0xf]
        %v1853 = vld [vmem:[%s15 + $0x1c] sm:$0xf]
        %v1854 = vpack.c.bf16 %v1845, %v1845
        %v1855 = vlaneseq
        %v1856 = vshrl.u32 %v1855, 7
        %v1857 = vsub.s32 3, %v1856
        %v1858 = vrot.slane %v849, %v1857
        %v1867 = vunpack.c.l.b16 %v1846
        %v1868 = vunpack.c.l.b16 %v1847
        %v1869 = vunpack.c.l.b16 %v1848
        %v1870 = vunpack.c.l.b16 %v1849
        %v1871 = vunpack.c.l.b16 %v1850
        %v1872 = vunpack.c.l.b16 %v1851
        %v1873 = vunpack.c.l.b16 %v1852
        %v1874 = vunpack.c.l.b16 %v1853
        %v1875 = vpack.c.b16 %v1868, %v1867
        %v1876 = vpack.c.b16 %v1870, %v1869
        %v1877 = vpack.c.b16 %v1872, %v1871
        %v1878 = vpack.c.b16 %v1874, %v1873
        %vm1883 = vcmask 523264
        %v1885 = vsel %vm1883, %v1854, 0
        %1887 = vmatprep.subr.bf16.mxu0 0
        %1888 = vmatpush1.bf16.msra.mxu0 %v1875
        %1889 = vmatprep.subr.bf16.mxu0 0
        %1890 = vmatpush1.bf16.msra.mxu0 %v1876
        %1891 = vmatprep.subr.bf16.mxu0 0
        %1892 = vmatpush1.bf16.msra.mxu0 %v1877
        %1893 = vmatprep.subr.bf16.mxu0 0
        %1894 = vmatpush1.bf16.msra.mxu0 %v1878
        %1895 = vmatprep.subr.bf16.mxu0 0
        %1896 = vmatpush1.bf16.msra.mxu0 0
        %1897 = vmatprep.subr.bf16.mxu0 0
        %1898 = vmatpush1.bf16.msra.mxu0 0
        %1899 = vmatprep.subr.bf16.mxu0 0
        %1900 = vmatpush1.bf16.msra.mxu0 0
        %1901 = vmatprep.subr.bf16.mxu0 0
        %1902 = vmatpush1.bf16.msra.mxu0 0
        %1903 = vmatprep.subr.bf16.mxu0 0
        %1904 = vmatpush1.bf16.msra.mxu0 0
        %1905 = vmatprep.subr.bf16.mxu0 0
        %1906 = vmatpush1.bf16.msra.mxu0 0
        %1907 = vmatprep.subr.bf16.mxu0 0
        %1908 = vmatpush1.bf16.msra.mxu0 0
        %1909 = vmatprep.subr.bf16.mxu0 0
        %1910 = vmatpush1.bf16.msra.mxu0 0
        %1911 = vmatprep.subr.bf16.mxu0 0
        %1912 = vmatpush1.bf16.msra.mxu0 0
        %1913 = vmatprep.subr.bf16.mxu0 0
        %1914 = vmatpush1.bf16.msra.mxu0 0
        %1915 = vmatprep.subr.bf16.mxu0 0
        %1916 = vmatpush1.bf16.msra.mxu0 0
        %1917 = vmatprep.subr.bf16.mxu0 0
        %1918 = vmatpush1.bf16.msra.mxu0 0
        %1919 = vmatprep.mubr.bf16.mxu0 0
        %1920 = vmatmul.mubr.bf16.gmra.mrb[0].mxu0 %v1885
        %v1921 = vpop.f32.mrb[0].mxu0
        %v1922 = vadd.f32 %v1858, %v1921
        %v1923 = vpop.f32.mrb[0].mxu0
        %v1924 = vpop.f32.mrb[0].mxu0
        %v1925 = vpop.f32.mrb[0].mxu0
        %1926 = vdwg.mxu0
        %v1927 = vadd.f32 %v1777, %v1922
        %v1928 = vsel %vm907, %v1927, 0.0
        %1929 = vadd.xlane.f32.xlu0 %v1928
        %v1930 = vpop.xlane.xlu0 %1929
        %v1931 = vmul.f32 %v1930, 0.03125
        %v1932 = vmul.f32 %v1927, %v1927
        %v1933 = vsel %vm907, %v1932, 0.0
        %1934 = vadd.xlane.f32.xlu0 %v1933
        %v1935 = vpop.xlane.xlu0 %1934
        %v1936 = vmul.f32 %v1935, 0.03125
        %v1937 = vmul.f32 %v1931, %v1931
        %v1938 = vsub.f32 %v1936, %v1937
        %v1939 = vmax.f32 %v1938, 0.0
        %v1940 = vsub.f32 %v1927, %v1931
        %v1941 = vadd.f32 %v1939, 1e-05
        %v1942 = vrsqrt.pop %v1941
        %v1943 = vmul.f32 %v1940, %v1942
        %v1944 = vlaneseq
        %v1945 = vshrl.u32 %v1944, 7
        %v1946 = vsub.s32 4, %v1945
        %v1947 = vrot.slane %v849, %v1946
        %v1948 = vmul.f32 %v1943, %v1947
        %v1949 = vlaneseq
        %v1950 = vshrl.u32 %v1949, 7
        %v1951 = vsub.s32 5, %v1950
        %v1952 = vrot.slane %v849, %v1951
        %v1953 = vadd.f32 %v1948, %v1952
        %v1954 = vadd.f32 %v641, %v1953
        %s1955 = scalar_lea.vmem %s16, 8
        %v1956 = vld [vmem:[%s1955] sm:$0x3f]
        %v1957 = vpack.c.bf16 %v1954, %v1954
        %s1958 = scalar_lea.vmem %s10, 64
        %v1959 = vld [vmem:[%s1958] sm:$0xf]
        %v1960 = vld [vmem:[%s1958 + $0x4] sm:$0xf]
        %v1961 = vld [vmem:[%s1958 + $0x8] sm:$0xf]
        %v1962 = vld [vmem:[%s1958 + $0xc] sm:$0xf]
        %v1963 = vld [vmem:[%s1958 + $0x10] sm:$0xf]
        %v1964 = vld [vmem:[%s1958 + $0x14] sm:$0xf]
        %v1965 = vld [vmem:[%s1958 + $0x18] sm:$0xf]
        %v1966 = vld [vmem:[%s1958 + $0x1c] sm:$0xf]
        %v1967 = vld [vmem:[%s1958 + $0x20] sm:$0xf]
        %v1968 = vld [vmem:[%s1958 + $0x24] sm:$0xf]
        %v1969 = vld [vmem:[%s1958 + $0x28] sm:$0xf]
        %v1970 = vld [vmem:[%s1958 + $0x2c] sm:$0xf]
        %v1971 = vld [vmem:[%s1958 + $0x30] sm:$0xf]
        %v1972 = vld [vmem:[%s1958 + $0x34] sm:$0xf]
        %v1973 = vld [vmem:[%s1958 + $0x38] sm:$0xf]
        %v1974 = vld [vmem:[%s1958 + $0x3c] sm:$0xf]
        %s1975 = scalar_lea.vmem %s11, 4
        %v1976 = vld [vmem:[%s1975] sm:$0x1]
        %v1977 = vld [vmem:[%s1975 + $0x1] sm:$0x1]
        %v1978 = vld [vmem:[%s1975 + $0x2] sm:$0x1]
        %v1979 = vld [vmem:[%s1975 + $0x3] sm:$0x1]
        %v1984 = vlaneseq
        %v1985 = vshrl.u32 %v1984, 7
        %v1986 = vsub.s32 0, %v1985
        %v1987 = vrot.slane %v1976, %v1986
        %v1988 = vlaneseq
        %v1989 = vshrl.u32 %v1988, 7
        %v1990 = vsub.s32 0, %v1989
        %v1991 = vrot.slane %v1977, %v1990
        %v1992 = vlaneseq
        %v1993 = vshrl.u32 %v1992, 7
        %v1994 = vsub.s32 0, %v1993
        %v1995 = vrot.slane %v1978, %v1994
        %v1996 = vlaneseq
        %v1997 = vshrl.u32 %v1996, 7
        %v1998 = vsub.s32 0, %v1997
        %v1999 = vrot.slane %v1979, %v1998
        %v2008 = vunpack.c.l.b16 %v1959
        %v2009 = vunpack.c.l.b16 %v1960
        %v2010 = vunpack.c.l.b16 %v1961
        %v2011 = vunpack.c.l.b16 %v1962
        %v2012 = vpack.c.b16 %v2009, %v2008
        %v2013 = vpack.c.b16 %v2011, %v2010
        %v2017 = vsel %vm907, %v1957, 0
        %2019 = vmatprep.subr.bf16.mxu0 0
        %2020 = vmatpush1.bf16.msra.mxu0 %v2012
        %2021 = vmatprep.subr.bf16.mxu0 0
        %2022 = vmatpush1.bf16.msra.mxu0 %v2013
        %2023 = vmatprep.subr.bf16.mxu0 0
        %2024 = vmatpush1.bf16.msra.mxu0 0
        %2025 = vmatprep.subr.bf16.mxu0 0
        %2026 = vmatpush1.bf16.msra.mxu0 0
        %2027 = vmatprep.subr.bf16.mxu0 0
        %2028 = vmatpush1.bf16.msra.mxu0 0
        %2029 = vmatprep.subr.bf16.mxu0 0
        %2030 = vmatpush1.bf16.msra.mxu0 0
        %2031 = vmatprep.subr.bf16.mxu0 0
        %2032 = vmatpush1.bf16.msra.mxu0 0
        %2033 = vmatprep.subr.bf16.mxu0 0
        %2034 = vmatpush1.bf16.msra.mxu0 0
        %2035 = vmatprep.subr.bf16.mxu0 0
        %2036 = vmatpush1.bf16.msra.mxu0 0
        %2037 = vmatprep.subr.bf16.mxu0 0
        %2038 = vmatpush1.bf16.msra.mxu0 0
        %2039 = vmatprep.subr.bf16.mxu0 0
        %2040 = vmatpush1.bf16.msra.mxu0 0
        %2041 = vmatprep.subr.bf16.mxu0 0
        %2042 = vmatpush1.bf16.msra.mxu0 0
        %2043 = vmatprep.subr.bf16.mxu0 0
        %2044 = vmatpush1.bf16.msra.mxu0 0
        %2045 = vmatprep.subr.bf16.mxu0 0
        %2046 = vmatpush1.bf16.msra.mxu0 0
        %2047 = vmatprep.subr.bf16.mxu0 0
        %2048 = vmatpush1.bf16.msra.mxu0 0
        %2049 = vmatprep.subr.bf16.mxu0 0
        %2050 = vmatpush1.bf16.msra.mxu0 0
        %2051 = vmatprep.mubr.bf16.mxu0 0
        %2052 = vmatmul.mubr.bf16.gmra.mrb[0].mxu0 %v2017
        %v2053 = vpop.f32.mrb[0].mxu0
        %v2054 = vadd.f32 %v1987, %v2053
        %v2055 = vpop.f32.mrb[0].mxu0
        %v2056 = vpop.f32.mrb[0].mxu0
        %v2057 = vpop.f32.mrb[0].mxu0
        %2058 = vdwg.mxu0
        %v2063 = vunpack.c.l.b16 %v1963
        %v2064 = vunpack.c.l.b16 %v1964
        %v2065 = vunpack.c.l.b16 %v1965
        %v2066 = vunpack.c.l.b16 %v1966
        %v2067 = vpack.c.b16 %v2064, %v2063
        %v2068 = vpack.c.b16 %v2066, %v2065
        %2071 = vmatprep.subr.bf16.mxu0 0
        %2072 = vmatpush1.bf16.msra.mxu0 %v2067
        %2073 = vmatprep.subr.bf16.mxu0 0
        %2074 = vmatpush1.bf16.msra.mxu0 %v2068
        %2075 = vmatprep.subr.bf16.mxu0 0
        %2076 = vmatpush1.bf16.msra.mxu0 0
        %2077 = vmatprep.subr.bf16.mxu0 0
        %2078 = vmatpush1.bf16.msra.mxu0 0
        %2079 = vmatprep.subr.bf16.mxu0 0
        %2080 = vmatpush1.bf16.msra.mxu0 0
        %2081 = vmatprep.subr.bf16.mxu0 0
        %2082 = vmatpush1.bf16.msra.mxu0 0
        %2083 = vmatprep.subr.bf16.mxu0 0
        %2084 = vmatpush1.bf16.msra.mxu0 0
        %2085 = vmatprep.subr.bf16.mxu0 0
        %2086 = vmatpush1.bf16.msra.mxu0 0
        %2087 = vmatprep.subr.bf16.mxu0 0
        %2088 = vmatpush1.bf16.msra.mxu0 0
        %2089 = vmatprep.subr.bf16.mxu0 0
        %2090 = vmatpush1.bf16.msra.mxu0 0
        %2091 = vmatprep.subr.bf16.mxu0 0
        %2092 = vmatpush1.bf16.msra.mxu0 0
        %2093 = vmatprep.subr.bf16.mxu0 0
        %2094 = vmatpush1.bf16.msra.mxu0 0
        %2095 = vmatprep.subr.bf16.mxu0 0
        %2096 = vmatpush1.bf16.msra.mxu0 0
        %2097 = vmatprep.subr.bf16.mxu0 0
        %2098 = vmatpush1.bf16.msra.mxu0 0
        %2099 = vmatprep.subr.bf16.mxu0 0
        %2100 = vmatpush1.bf16.msra.mxu0 0
        %2101 = vmatprep.subr.bf16.mxu0 0
        %2102 = vmatpush1.bf16.msra.mxu0 0
        %2103 = vmatprep.mubr.bf16.mxu0 0
        %2104 = vmatmul.mubr.bf16.gmra.mrb[0].mxu0 %v2017
        %v2105 = vpop.f32.mrb[0].mxu0
        %v2106 = vadd.f32 %v1991, %v2105
        %v2107 = vpop.f32.mrb[0].mxu0
        %v2108 = vpop.f32.mrb[0].mxu0
        %v2109 = vpop.f32.mrb[0].mxu0
        %2110 = vdwg.mxu0
        %v2115 = vunpack.c.l.b16 %v1967
        %v2116 = vunpack.c.l.b16 %v1968
        %v2117 = vunpack.c.l.b16 %v1969
        %v2118 = vunpack.c.l.b16 %v1970
        %v2119 = vpack.c.b16 %v2116, %v2115
        %v2120 = vpack.c.b16 %v2118, %v2117
        %2123 = vmatprep.subr.bf16.mxu0 0
        %2124 = vmatpush1.bf16.msra.mxu0 %v2119
        %2125 = vmatprep.subr.bf16.mxu0 0
        %2126 = vmatpush1.bf16.msra.mxu0 %v2120
        %2127 = vmatprep.subr.bf16.mxu0 0
        %2128 = vmatpush1.bf16.msra.mxu0 0
        %2129 = vmatprep.subr.bf16.mxu0 0
        %2130 = vmatpush1.bf16.msra.mxu0 0
        %2131 = vmatprep.subr.bf16.mxu0 0
        %2132 = vmatpush1.bf16.msra.mxu0 0
        %2133 = vmatprep.subr.bf16.mxu0 0
        %2134 = vmatpush1.bf16.msra.mxu0 0
        %2135 = vmatprep.subr.bf16.mxu0 0
        %2136 = vmatpush1.bf16.msra.mxu0 0
        %2137 = vmatprep.subr.bf16.mxu0 0
        %2138 = vmatpush1.bf16.msra.mxu0 0
        %2139 = vmatprep.subr.bf16.mxu0 0
        %2140 = vmatpush1.bf16.msra.mxu0 0
        %2141 = vmatprep.subr.bf16.mxu0 0
        %2142 = vmatpush1.bf16.msra.mxu0 0
        %2143 = vmatprep.subr.bf16.mxu0 0
        %2144 = vmatpush1.bf16.msra.mxu0 0
        %2145 = vmatprep.subr.bf16.mxu0 0
        %2146 = vmatpush1.bf16.msra.mxu0 0
        %2147 = vmatprep.subr.bf16.mxu0 0
        %2148 = vmatpush1.bf16.msra.mxu0 0
        %2149 = vmatprep.subr.bf16.mxu0 0
        %2150 = vmatpush1.bf16.msra.mxu0 0
        %2151 = vmatprep.subr.bf16.mxu0 0
        %2152 = vmatpush1.bf16.msra.mxu0 0
        %2153 = vmatprep.subr.bf16.mxu0 0
        %2154 = vmatpush1.bf16.msra.mxu0 0
        %2155 = vmatprep.mubr.bf16.mxu0 0
        %2156 = vmatmul.mubr.bf16.gmra.mrb[0].mxu0 %v2017
        %v2157 = vpop.f32.mrb[0].mxu0
        %v2158 = vadd.f32 %v1995, %v2157
        %v2159 = vpop.f32.mrb[0].mxu0
        %v2160 = vpop.f32.mrb[0].mxu0
        %v2161 = vpop.f32.mrb[0].mxu0
        %2162 = vdwg.mxu0
        %v2167 = vunpack.c.l.b16 %v1971
        %v2168 = vunpack.c.l.b16 %v1972
        %v2169 = vunpack.c.l.b16 %v1973
        %v2170 = vunpack.c.l.b16 %v1974
        %v2171 = vpack.c.b16 %v2168, %v2167
        %v2172 = vpack.c.b16 %v2170, %v2169
        %2175 = vmatprep.subr.bf16.mxu0 0
        %2176 = vmatpush1.bf16.msra.mxu0 %v2171
        %2177 = vmatprep.subr.bf16.mxu0 0
        %2178 = vmatpush1.bf16.msra.mxu0 %v2172
        %2179 = vmatprep.subr.bf16.mxu0 0
        %2180 = vmatpush1.bf16.msra.mxu0 0
        %2181 = vmatprep.subr.bf16.mxu0 0
        %2182 = vmatpush1.bf16.msra.mxu0 0
        %2183 = vmatprep.subr.bf16.mxu0 0
        %2184 = vmatpush1.bf16.msra.mxu0 0
        %2185 = vmatprep.subr.bf16.mxu0 0
        %2186 = vmatpush1.bf16.msra.mxu0 0
        %2187 = vmatprep.subr.bf16.mxu0 0
        %2188 = vmatpush1.bf16.msra.mxu0 0
        %2189 = vmatprep.subr.bf16.mxu0 0
        %2190 = vmatpush1.bf16.msra.mxu0 0
        %2191 = vmatprep.subr.bf16.mxu0 0
        %2192 = vmatpush1.bf16.msra.mxu0 0
        %2193 = vmatprep.subr.bf16.mxu0 0
        %2194 = vmatpush1.bf16.msra.mxu0 0
        %2195 = vmatprep.subr.bf16.mxu0 0
        %2196 = vmatpush1.bf16.msra.mxu0 0
        %2197 = vmatprep.subr.bf16.mxu0 0
        %2198 = vmatpush1.bf16.msra.mxu0 0
        %2199 = vmatprep.subr.bf16.mxu0 0
        %2200 = vmatpush1.bf16.msra.mxu0 0
        %2201 = vmatprep.subr.bf16.mxu0 0
        %2202 = vmatpush1.bf16.msra.mxu0 0
        %2203 = vmatprep.subr.bf16.mxu0 0
        %2204 = vmatpush1.bf16.msra.mxu0 0
        %2205 = vmatprep.subr.bf16.mxu0 0
        %2206 = vmatpush1.bf16.msra.mxu0 0
        %2207 = vmatprep.mubr.bf16.mxu0 0
        %2208 = vmatmul.mubr.bf16.gmra.mrb[0].mxu0 %v2017
        %v2209 = vpop.f32.mrb[0].mxu0
        %v2210 = vadd.f32 %v1999, %v2209
        %v2211 = vpop.f32.mrb[0].mxu0
        %v2212 = vpop.f32.mrb[0].mxu0
        %v2213 = vpop.f32.mrb[0].mxu0
        %2214 = vdwg.mxu0
        %v2215 = vpack.c.bf16 %v2054, %v2054
        %v2216 = vpack.c.bf16 %v2106, %v2106
        %v2217 = vpack.c.bf16 %v2158, %v2158
        %v2218 = vpack.c.bf16 %v2210, %v2210
        %2220 = vrot.lane.b32.xlu0 %v2215, 120
        %v2221 = vpop.permute.xlu0 %2220
        %v2223 = vsel %vm586, %v2215, 0
        %v2226 = vsel %vm586, %v2221, 0
        %2228 = vmatprep.subr.bf16.mxu0 0
        %2229 = vmatpush1.bf16.xpose.msra.mxu0 %v2226
        %2230 = vmatprep.subr.bf16.mxu0 0
        %2231 = vmatpush1.bf16.xpose.msra.mxu0 0
        %2232 = vmatprep.subr.bf16.mxu0 0
        %2233 = vmatpush1.bf16.xpose.msra.mxu0 0
        %2234 = vmatprep.subr.bf16.mxu0 0
        %2235 = vmatpush1.bf16.xpose.msra.mxu0 0
        %2236 = vmatprep.subr.bf16.mxu0 0
        %2237 = vmatpush1.bf16.xpose.msra.mxu0 0
        %2238 = vmatprep.subr.bf16.mxu0 0
        %2239 = vmatpush1.bf16.xpose.msra.mxu0 0
        %2240 = vmatprep.subr.bf16.mxu0 0
        %2241 = vmatpush1.bf16.xpose.msra.mxu0 0
        %2242 = vmatprep.subr.bf16.mxu0 0
        %2243 = vmatpush1.bf16.xpose.msra.mxu0 0
        %2244 = vmatprep.subr.bf16.mxu0 0
        %2245 = vmatpush1.bf16.xpose.msra.mxu0 0
        %2246 = vmatprep.subr.bf16.mxu0 0
        %2247 = vmatpush1.bf16.xpose.msra.mxu0 0
        %2248 = vmatprep.subr.bf16.mxu0 0
        %2249 = vmatpush1.bf16.xpose.msra.mxu0 0
        %2250 = vmatprep.subr.bf16.mxu0 0
        %2251 = vmatpush1.bf16.xpose.msra.mxu0 0
        %2252 = vmatprep.subr.bf16.mxu0 0
        %2253 = vmatpush1.bf16.xpose.msra.mxu0 0
        %2254 = vmatprep.subr.bf16.mxu0 0
        %2255 = vmatpush1.bf16.xpose.msra.mxu0 0
        %2256 = vmatprep.subr.bf16.mxu0 0
        %2257 = vmatpush1.bf16.xpose.msra.mxu0 0
        %2258 = vmatprep.subr.bf16.mxu0 0
        %2259 = vmatpush1.bf16.xpose.msra.mxu0 0
        %2260 = vmatprep.mubr.bf16.mxu0 0
        %2261 = vmatmul.mubr.bf16.gmra.mrb[0].mxu0 %v2223
        %v2262 = vpop.f32.mrb[0].mxu0
        %v2263 = vadd.f32 0.0, %v2262
        %v2264 = vpop.f32.mrb[0].mxu0
        %v2265 = vpop.f32.mrb[0].mxu0
        %v2266 = vpop.f32.mrb[0].mxu0
        %2267 = vdwg.mxu0
        %2269 = vrot.lane.b32.xlu0 %v2216, 120
        %v2270 = vpop.permute.xlu0 %2269
        %v2272 = vsel %vm586, %v2216, 0
        %v2275 = vsel %vm586, %v2270, 0
        %2277 = vmatprep.subr.bf16.mxu0 0
        %2278 = vmatpush1.bf16.xpose.msra.mxu0 %v2275
        %2279 = vmatprep.subr.bf16.mxu0 0
        %2280 = vmatpush1.bf16.xpose.msra.mxu0 0
        %2281 = vmatprep.subr.bf16.mxu0 0
        %2282 = vmatpush1.bf16.xpose.msra.mxu0 0
        %2283 = vmatprep.subr.bf16.mxu0 0
        %2284 = vmatpush1.bf16.xpose.msra.mxu0 0
        %2285 = vmatprep.subr.bf16.mxu0 0
        %2286 = vmatpush1.bf16.xpose.msra.mxu0 0
        %2287 = vmatprep.subr.bf16.mxu0 0
        %2288 = vmatpush1.bf16.xpose.msra.mxu0 0
        %2289 = vmatprep.subr.bf16.mxu0 0
        %2290 = vmatpush1.bf16.xpose.msra.mxu0 0
        %2291 = vmatprep.subr.bf16.mxu0 0
        %2292 = vmatpush1.bf16.xpose.msra.mxu0 0
        %2293 = vmatprep.subr.bf16.mxu0 0
        %2294 = vmatpush1.bf16.xpose.msra.mxu0 0
        %2295 = vmatprep.subr.bf16.mxu0 0
        %2296 = vmatpush1.bf16.xpose.msra.mxu0 0
        %2297 = vmatprep.subr.bf16.mxu0 0
        %2298 = vmatpush1.bf16.xpose.msra.mxu0 0
        %2299 = vmatprep.subr.bf16.mxu0 0
        %2300 = vmatpush1.bf16.xpose.msra.mxu0 0
        %2301 = vmatprep.subr.bf16.mxu0 0
        %2302 = vmatpush1.bf16.xpose.msra.mxu0 0
        %2303 = vmatprep.subr.bf16.mxu0 0
        %2304 = vmatpush1.bf16.xpose.msra.mxu0 0
        %2305 = vmatprep.subr.bf16.mxu0 0
        %2306 = vmatpush1.bf16.xpose.msra.mxu0 0
        %2307 = vmatprep.subr.bf16.mxu0 0
        %2308 = vmatpush1.bf16.xpose.msra.mxu0 0
        %2309 = vmatprep.mubr.bf16.mxu0 0
        %2310 = vmatmul.mubr.bf16.gmra.mrb[0].mxu0 %v2272
        %v2311 = vpop.f32.mrb[0].mxu0
        %v2312 = vadd.f32 0.0, %v2311
        %v2313 = vpop.f32.mrb[0].mxu0
        %v2314 = vpop.f32.mrb[0].mxu0
        %v2315 = vpop.f32.mrb[0].mxu0
        %2316 = vdwg.mxu0
        %2318 = vrot.lane.b32.xlu0 %v2217, 120
        %v2319 = vpop.permute.xlu0 %2318
        %v2321 = vsel %vm586, %v2217, 0
        %v2324 = vsel %vm586, %v2319, 0
        %2326 = vmatprep.subr.bf16.mxu0 0
        %2327 = vmatpush1.bf16.xpose.msra.mxu0 %v2324
        %2328 = vmatprep.subr.bf16.mxu0 0
        %2329 = vmatpush1.bf16.xpose.msra.mxu0 0
        %2330 = vmatprep.subr.bf16.mxu0 0
        %2331 = vmatpush1.bf16.xpose.msra.mxu0 0
        %2332 = vmatprep.subr.bf16.mxu0 0
        %2333 = vmatpush1.bf16.xpose.msra.mxu0 0
        %2334 = vmatprep.subr.bf16.mxu0 0
        %2335 = vmatpush1.bf16.xpose.msra.mxu0 0
        %2336 = vmatprep.subr.bf16.mxu0 0
        %2337 = vmatpush1.bf16.xpose.msra.mxu0 0
        %2338 = vmatprep.subr.bf16.mxu0 0
        %2339 = vmatpush1.bf16.xpose.msra.mxu0 0
        %2340 = vmatprep.subr.bf16.mxu0 0
        %2341 = vmatpush1.bf16.xpose.msra.mxu0 0
        %2342 = vmatprep.subr.bf16.mxu0 0
        %2343 = vmatpush1.bf16.xpose.msra.mxu0 0
        %2344 = vmatprep.subr.bf16.mxu0 0
        %2345 = vmatpush1.bf16.xpose.msra.mxu0 0
        %2346 = vmatprep.subr.bf16.mxu0 0
        %2347 = vmatpush1.bf16.xpose.msra.mxu0 0
        %2348 = vmatprep.subr.bf16.mxu0 0
        %2349 = vmatpush1.bf16.xpose.msra.mxu0 0
        %2350 = vmatprep.subr.bf16.mxu0 0
        %2351 = vmatpush1.bf16.xpose.msra.mxu0 0
        %2352 = vmatprep.subr.bf16.mxu0 0
        %2353 = vmatpush1.bf16.xpose.msra.mxu0 0
        %2354 = vmatprep.subr.bf16.mxu0 0
        %2355 = vmatpush1.bf16.xpose.msra.mxu0 0
        %2356 = vmatprep.subr.bf16.mxu0 0
        %2357 = vmatpush1.bf16.xpose.msra.mxu0 0
        %2358 = vmatprep.mubr.bf16.mxu0 0
        %2359 = vmatmul.mubr.bf16.gmra.mrb[0].mxu0 %v2321
        %v2360 = vpop.f32.mrb[0].mxu0
        %v2361 = vadd.f32 0.0, %v2360
        %v2362 = vpop.f32.mrb[0].mxu0
        %v2363 = vpop.f32.mrb[0].mxu0
        %v2364 = vpop.f32.mrb[0].mxu0
        %2365 = vdwg.mxu0
        %2367 = vrot.lane.b32.xlu0 %v2218, 120
        %v2368 = vpop.permute.xlu0 %2367
        %v2370 = vsel %vm586, %v2218, 0
        %v2373 = vsel %vm586, %v2368, 0
        %2375 = vmatprep.subr.bf16.mxu0 0
        %2376 = vmatpush1.bf16.xpose.msra.mxu0 %v2373
        %2377 = vmatprep.subr.bf16.mxu0 0
        %2378 = vmatpush1.bf16.xpose.msra.mxu0 0
        %2379 = vmatprep.subr.bf16.mxu0 0
        %2380 = vmatpush1.bf16.xpose.msra.mxu0 0
        %2381 = vmatprep.subr.bf16.mxu0 0
        %2382 = vmatpush1.bf16.xpose.msra.mxu0 0
        %2383 = vmatprep.subr.bf16.mxu0 0
        %2384 = vmatpush1.bf16.xpose.msra.mxu0 0
        %2385 = vmatprep.subr.bf16.mxu0 0
        %2386 = vmatpush1.bf16.xpose.msra.mxu0 0
        %2387 = vmatprep.subr.bf16.mxu0 0
        %2388 = vmatpush1.bf16.xpose.msra.mxu0 0
        %2389 = vmatprep.subr.bf16.mxu0 0
        %2390 = vmatpush1.bf16.xpose.msra.mxu0 0
        %2391 = vmatprep.subr.bf16.mxu0 0
        %2392 = vmatpush1.bf16.xpose.msra.mxu0 0
        %2393 = vmatprep.subr.bf16.mxu0 0
        %2394 = vmatpush1.bf16.xpose.msra.mxu0 0
        %2395 = vmatprep.subr.bf16.mxu0 0
        %2396 = vmatpush1.bf16.xpose.msra.mxu0 0
        %2397 = vmatprep.subr.bf16.mxu0 0
        %2398 = vmatpush1.bf16.xpose.msra.mxu0 0
        %2399 = vmatprep.subr.bf16.mxu0 0
        %2400 = vmatpush1.bf16.xpose.msra.mxu0 0
        %2401 = vmatprep.subr.bf16.mxu0 0
        %2402 = vmatpush1.bf16.xpose.msra.mxu0 0
        %2403 = vmatprep.subr.bf16.mxu0 0
        %2404 = vmatpush1.bf16.xpose.msra.mxu0 0
        %2405 = vmatprep.subr.bf16.mxu0 0
        %2406 = vmatpush1.bf16.xpose.msra.mxu0 0
        %2407 = vmatprep.mubr.bf16.mxu0 0
        %2408 = vmatmul.mubr.bf16.gmra.mrb[0].mxu0 %v2370
        %v2409 = vpop.f32.mrb[0].mxu0
        %v2410 = vadd.f32 0.0, %v2409
        %v2411 = vpop.f32.mrb[0].mxu0
        %v2412 = vpop.f32.mrb[0].mxu0
        %v2413 = vpop.f32.mrb[0].mxu0
        %2414 = vdwg.mxu0
        %v2415 = vsel %vm586, %v2263, -inf
        %2416 = vmax.xlane.f32.xlu0 %v2415
        %v2417 = vpop.xlane.xlu0 %2416
        %v2418 = vsel %vm586, %v2312, -inf
        %2419 = vmax.xlane.f32.xlu0 %v2418
        %v2420 = vpop.xlane.xlu0 %2419
        %v2421 = vsel %vm586, %v2361, -inf
        %2422 = vmax.xlane.f32.xlu0 %v2421
        %v2423 = vpop.xlane.xlu0 %2422
        %v2424 = vsel %vm586, %v2410, -inf
        %2425 = vmax.xlane.f32.xlu0 %v2424
        %v2426 = vpop.xlane.xlu0 %2425
        %v2427 = vsub.f32 %v2263, %v2417
        %v2428 = vsub.f32 %v2312, %v2420
        %v2429 = vsub.f32 %v2361, %v2423
        %v2430 = vsub.f32 %v2410, %v2426
        %v2431 = vmul.f32 %v2427, 1.442695
        %v2432 = vpow.pop %v2431
        %v2433 = vmul.f32 %v2428, 1.442695
        %v2434 = vpow.pop %v2433
        %v2435 = vmul.f32 %v2429, 1.442695
        %v2436 = vpow.pop %v2435
        %v2437 = vmul.f32 %v2430, 1.442695
        %v2438 = vpow.pop %v2437
        %v2439 = vsel %vm586, %v2432, 0.0
        %2440 = vadd.xlane.f32.xlu0 %v2439
        %v2441 = vpop.xlane.xlu0 %2440
        %v2442 = vsel %vm586, %v2434, 0.0
        %2443 = vadd.xlane.f32.xlu0 %v2442
        %v2444 = vpop.xlane.xlu0 %2443
        %v2445 = vsel %vm586, %v2436, 0.0
        %2446 = vadd.xlane.f32.xlu0 %v2445
        %v2447 = vpop.xlane.xlu0 %2446
        %v2448 = vsel %vm586, %v2438, 0.0
        %2449 = vadd.xlane.f32.xlu0 %v2448
        %v2450 = vpop.xlane.xlu0 %2449
        %v2451 = vpack.c.bf16 %v2432, %v2432
        %v2452 = vpack.c.bf16 %v2434, %v2434
        %v2453 = vpack.c.bf16 %v2436, %v2436
        %v2454 = vpack.c.bf16 %v2438, %v2438
        %2455 = vrot.lane.b32.xlu0 %v2215, 112
        %v2456 = vpop.permute.xlu0 %2455
        %v2458 = vsel %vm586, %v2451, 0
        %v2461 = vsel %vm590, %v2456, 0
        %2463 = vmatprep.subr.bf16.mxu0 0
        %2464 = vmatpush1.bf16.msra.mxu0 %v2461
        %2465 = vmatprep.subr.bf16.mxu0 0
        %2466 = vmatpush1.bf16.msra.mxu0 0
        %2467 = vmatprep.subr.bf16.mxu0 0
        %2468 = vmatpush1.bf16.msra.mxu0 0
        %2469 = vmatprep.subr.bf16.mxu0 0
        %2470 = vmatpush1.bf16.msra.mxu0 0
        %2471 = vmatprep.subr.bf16.mxu0 0
        %2472 = vmatpush1.bf16.msra.mxu0 0
        %2473 = vmatprep.subr.bf16.mxu0 0
        %2474 = vmatpush1.bf16.msra.mxu0 0
        %2475 = vmatprep.subr.bf16.mxu0 0
        %2476 = vmatpush1.bf16.msra.mxu0 0
        %2477 = vmatprep.subr.bf16.mxu0 0
        %2478 = vmatpush1.bf16.msra.mxu0 0
        %2479 = vmatprep.subr.bf16.mxu0 0
        %2480 = vmatpush1.bf16.msra.mxu0 0
        %2481 = vmatprep.subr.bf16.mxu0 0
        %2482 = vmatpush1.bf16.msra.mxu0 0
        %2483 = vmatprep.subr.bf16.mxu0 0
        %2484 = vmatpush1.bf16.msra.mxu0 0
        %2485 = vmatprep.subr.bf16.mxu0 0
        %2486 = vmatpush1.bf16.msra.mxu0 0
        %2487 = vmatprep.subr.bf16.mxu0 0
        %2488 = vmatpush1.bf16.msra.mxu0 0
        %2489 = vmatprep.subr.bf16.mxu0 0
        %2490 = vmatpush1.bf16.msra.mxu0 0
        %2491 = vmatprep.subr.bf16.mxu0 0
        %2492 = vmatpush1.bf16.msra.mxu0 0
        %2493 = vmatprep.subr.bf16.mxu0 0
        %2494 = vmatpush1.bf16.msra.mxu0 0
        %2495 = vmatprep.mubr.bf16.mxu0 0
        %2496 = vmatmul.mubr.bf16.gmra.mrb[0].mxu0 %v2458
        %v2497 = vpop.f32.mrb[0].mxu0
        %v2498 = vadd.f32 0.0, %v2497
        %v2499 = vpop.f32.mrb[0].mxu0
        %v2500 = vpop.f32.mrb[0].mxu0
        %v2501 = vpop.f32.mrb[0].mxu0
        %2502 = vdwg.mxu0
        %2503 = vrot.lane.b32.xlu0 %v2216, 112
        %v2504 = vpop.permute.xlu0 %2503
        %v2506 = vsel %vm586, %v2452, 0
        %v2509 = vsel %vm590, %v2504, 0
        %2511 = vmatprep.subr.bf16.mxu0 0
        %2512 = vmatpush1.bf16.msra.mxu0 %v2509
        %2513 = vmatprep.subr.bf16.mxu0 0
        %2514 = vmatpush1.bf16.msra.mxu0 0
        %2515 = vmatprep.subr.bf16.mxu0 0
        %2516 = vmatpush1.bf16.msra.mxu0 0
        %2517 = vmatprep.subr.bf16.mxu0 0
        %2518 = vmatpush1.bf16.msra.mxu0 0
        %2519 = vmatprep.subr.bf16.mxu0 0
        %2520 = vmatpush1.bf16.msra.mxu0 0
        %2521 = vmatprep.subr.bf16.mxu0 0
        %2522 = vmatpush1.bf16.msra.mxu0 0
        %2523 = vmatprep.subr.bf16.mxu0 0
        %2524 = vmatpush1.bf16.msra.mxu0 0
        %2525 = vmatprep.subr.bf16.mxu0 0
        %2526 = vmatpush1.bf16.msra.mxu0 0
        %2527 = vmatprep.subr.bf16.mxu0 0
        %2528 = vmatpush1.bf16.msra.mxu0 0
        %2529 = vmatprep.subr.bf16.mxu0 0
        %2530 = vmatpush1.bf16.msra.mxu0 0
        %2531 = vmatprep.subr.bf16.mxu0 0
        %2532 = vmatpush1.bf16.msra.mxu0 0
        %2533 = vmatprep.subr.bf16.mxu0 0
        %2534 = vmatpush1.bf16.msra.mxu0 0
        %2535 = vmatprep.subr.bf16.mxu0 0
        %2536 = vmatpush1.bf16.msra.mxu0 0
        %2537 = vmatprep.subr.bf16.mxu0 0
        %2538 = vmatpush1.bf16.msra.mxu0 0
        %2539 = vmatprep.subr.bf16.mxu0 0
        %2540 = vmatpush1.bf16.msra.mxu0 0
        %2541 = vmatprep.subr.bf16.mxu0 0
        %2542 = vmatpush1.bf16.msra.mxu0 0
        %2543 = vmatprep.mubr.bf16.mxu0 0
        %2544 = vmatmul.mubr.bf16.gmra.mrb[0].mxu0 %v2506
        %v2545 = vpop.f32.mrb[0].mxu0
        %v2546 = vadd.f32 0.0, %v2545
        %v2547 = vpop.f32.mrb[0].mxu0
        %v2548 = vpop.f32.mrb[0].mxu0
        %v2549 = vpop.f32.mrb[0].mxu0
        %2550 = vdwg.mxu0
        %2551 = vrot.lane.b32.xlu0 %v2217, 112
        %v2552 = vpop.permute.xlu0 %2551
        %v2554 = vsel %vm586, %v2453, 0
        %v2557 = vsel %vm590, %v2552, 0
        %2559 = vmatprep.subr.bf16.mxu0 0
        %2560 = vmatpush1.bf16.msra.mxu0 %v2557
        %2561 = vmatprep.subr.bf16.mxu0 0
        %2562 = vmatpush1.bf16.msra.mxu0 0
        %2563 = vmatprep.subr.bf16.mxu0 0
        %2564 = vmatpush1.bf16.msra.mxu0 0
        %2565 = vmatprep.subr.bf16.mxu0 0
        %2566 = vmatpush1.bf16.msra.mxu0 0
        %2567 = vmatprep.subr.bf16.mxu0 0
        %2568 = vmatpush1.bf16.msra.mxu0 0
        %2569 = vmatprep.subr.bf16.mxu0 0
        %2570 = vmatpush1.bf16.msra.mxu0 0
        %2571 = vmatprep.subr.bf16.mxu0 0
        %2572 = vmatpush1.bf16.msra.mxu0 0
        %2573 = vmatprep.subr.bf16.mxu0 0
        %2574 = vmatpush1.bf16.msra.mxu0 0
        %2575 = vmatprep.subr.bf16.mxu0 0
        %2576 = vmatpush1.bf16.msra.mxu0 0
        %2577 = vmatprep.subr.bf16.mxu0 0
        %2578 = vmatpush1.bf16.msra.mxu0 0
        %2579 = vmatprep.subr.bf16.mxu0 0
        %2580 = vmatpush1.bf16.msra.mxu0 0
        %2581 = vmatprep.subr.bf16.mxu0 0
        %2582 = vmatpush1.bf16.msra.mxu0 0
        %2583 = vmatprep.subr.bf16.mxu0 0
        %2584 = vmatpush1.bf16.msra.mxu0 0
        %2585 = vmatprep.subr.bf16.mxu0 0
        %2586 = vmatpush1.bf16.msra.mxu0 0
        %2587 = vmatprep.subr.bf16.mxu0 0
        %2588 = vmatpush1.bf16.msra.mxu0 0
        %2589 = vmatprep.subr.bf16.mxu0 0
        %2590 = vmatpush1.bf16.msra.mxu0 0
        %2591 = vmatprep.mubr.bf16.mxu0 0
        %2592 = vmatmul.mubr.bf16.gmra.mrb[0].mxu0 %v2554
        %v2593 = vpop.f32.mrb[0].mxu0
        %v2594 = vadd.f32 0.0, %v2593
        %v2595 = vpop.f32.mrb[0].mxu0
        %v2596 = vpop.f32.mrb[0].mxu0
        %v2597 = vpop.f32.mrb[0].mxu0
        %2598 = vdwg.mxu0
        %2599 = vrot.lane.b32.xlu0 %v2218, 112
        %v2600 = vpop.permute.xlu0 %2599
        %v2602 = vsel %vm586, %v2454, 0
        %v2605 = vsel %vm590, %v2600, 0
        %2607 = vmatprep.subr.bf16.mxu0 0
        %2608 = vmatpush1.bf16.msra.mxu0 %v2605
        %2609 = vmatprep.subr.bf16.mxu0 0
        %2610 = vmatpush1.bf16.msra.mxu0 0
        %2611 = vmatprep.subr.bf16.mxu0 0
        %2612 = vmatpush1.bf16.msra.mxu0 0
        %2613 = vmatprep.subr.bf16.mxu0 0
        %2614 = vmatpush1.bf16.msra.mxu0 0
        %2615 = vmatprep.subr.bf16.mxu0 0
        %2616 = vmatpush1.bf16.msra.mxu0 0
        %2617 = vmatprep.subr.bf16.mxu0 0
        %2618 = vmatpush1.bf16.msra.mxu0 0
        %2619 = vmatprep.subr.bf16.mxu0 0
        %2620 = vmatpush1.bf16.msra.mxu0 0
        %2621 = vmatprep.subr.bf16.mxu0 0
        %2622 = vmatpush1.bf16.msra.mxu0 0
        %2623 = vmatprep.subr.bf16.mxu0 0
        %2624 = vmatpush1.bf16.msra.mxu0 0
        %2625 = vmatprep.subr.bf16.mxu0 0
        %2626 = vmatpush1.bf16.msra.mxu0 0
        %2627 = vmatprep.subr.bf16.mxu0 0
        %2628 = vmatpush1.bf16.msra.mxu0 0
        %2629 = vmatprep.subr.bf16.mxu0 0
        %2630 = vmatpush1.bf16.msra.mxu0 0
        %2631 = vmatprep.subr.bf16.mxu0 0
        %2632 = vmatpush1.bf16.msra.mxu0 0
        %2633 = vmatprep.subr.bf16.mxu0 0
        %2634 = vmatpush1.bf16.msra.mxu0 0
        %2635 = vmatprep.subr.bf16.mxu0 0
        %2636 = vmatpush1.bf16.msra.mxu0 0
        %2637 = vmatprep.subr.bf16.mxu0 0
        %2638 = vmatpush1.bf16.msra.mxu0 0
        %2639 = vmatprep.mubr.bf16.mxu0 0
        %2640 = vmatmul.mubr.bf16.gmra.mrb[0].mxu0 %v2602
        %v2641 = vpop.f32.mrb[0].mxu0
        %v2642 = vadd.f32 0.0, %v2641
        %v2643 = vpop.f32.mrb[0].mxu0
        %v2644 = vpop.f32.mrb[0].mxu0
        %v2645 = vpop.f32.mrb[0].mxu0
        %2646 = vdwg.mxu0
        %v2647 = vrcp.pop %v2441
        %v2648 = vrcp.pop %v2444
        %v2649 = vrcp.pop %v2447
        %v2650 = vrcp.pop %v2450
        %v2651 = vmul.f32 %v2498, %v2647
        %v2652 = vmul.f32 %v2546, %v2648
        %v2653 = vmul.f32 %v2594, %v2649
        %v2654 = vmul.f32 %v2642, %v2650
        %v2655 = vpack.c.bf16 %v2651, %v2651
        %v2656 = vpack.c.bf16 %v2652, %v2652
        %v2657 = vpack.c.bf16 %v2653, %v2653
        %v2658 = vpack.c.bf16 %v2654, %v2654
        %s2659 = scalar_lea.vmem %s12, 16
        %v2660 = vld [vmem:[%s2659] sm:$0xf]
        %v2661 = vld [vmem:[%s2659 + $0x4] sm:$0xf]
        %v2662 = vld [vmem:[%s2659 + $0x8] sm:$0xf]
        %v2663 = vld [vmem:[%s2659 + $0xc] sm:$0xf]
        %v2665 = vsel %vm586, %v2655, 0
        %v2668 = vsel %vm590, %v2660, 0
        %2670 = vmatprep.subr.bf16.mxu0 0
        %2671 = vmatpush1.bf16.msra.mxu0 %v2668
        %2672 = vmatprep.subr.bf16.mxu0 0
        %2673 = vmatpush1.bf16.msra.mxu0 0
        %2674 = vmatprep.subr.bf16.mxu0 0
        %2675 = vmatpush1.bf16.msra.mxu0 0
        %2676 = vmatprep.subr.bf16.mxu0 0
        %2677 = vmatpush1.bf16.msra.mxu0 0
        %2678 = vmatprep.subr.bf16.mxu0 0
        %2679 = vmatpush1.bf16.msra.mxu0 0
        %2680 = vmatprep.subr.bf16.mxu0 0
        %2681 = vmatpush1.bf16.msra.mxu0 0
        %2682 = vmatprep.subr.bf16.mxu0 0
        %2683 = vmatpush1.bf16.msra.mxu0 0
        %2684 = vmatprep.subr.bf16.mxu0 0
        %2685 = vmatpush1.bf16.msra.mxu0 0
        %2686 = vmatprep.subr.bf16.mxu0 0
        %2687 = vmatpush1.bf16.msra.mxu0 0
        %2688 = vmatprep.subr.bf16.mxu0 0
        %2689 = vmatpush1.bf16.msra.mxu0 0
        %2690 = vmatprep.subr.bf16.mxu0 0
        %2691 = vmatpush1.bf16.msra.mxu0 0
        %2692 = vmatprep.subr.bf16.mxu0 0
        %2693 = vmatpush1.bf16.msra.mxu0 0
        %2694 = vmatprep.subr.bf16.mxu0 0
        %2695 = vmatpush1.bf16.msra.mxu0 0
        %2696 = vmatprep.subr.bf16.mxu0 0
        %2697 = vmatpush1.bf16.msra.mxu0 0
        %2698 = vmatprep.subr.bf16.mxu0 0
        %2699 = vmatpush1.bf16.msra.mxu0 0
        %2700 = vmatprep.subr.bf16.mxu0 0
        %2701 = vmatpush1.bf16.msra.mxu0 0
        %2702 = vmatprep.mubr.bf16.mxu0 0
        %2703 = vmatmul.mubr.bf16.gmra.mrb[0].mxu0 %v2665
        %v2704 = vpop.f32.mrb[0].mxu0
        %v2705 = vadd.f32 0.0, %v2704
        %v2706 = vpop.f32.mrb[0].mxu0
        %v2707 = vpop.f32.mrb[0].mxu0
        %v2708 = vpop.f32.mrb[0].mxu0
        %2709 = vdwg.mxu0
        %v2711 = vsel %vm586, %v2656, 0
        %v2714 = vsel %vm590, %v2661, 0
        %2716 = vmatprep.subr.bf16.mxu0 0
        %2717 = vmatpush1.bf16.msra.mxu0 %v2714
        %2718 = vmatprep.subr.bf16.mxu0 0
        %2719 = vmatpush1.bf16.msra.mxu0 0
        %2720 = vmatprep.subr.bf16.mxu0 0
        %2721 = vmatpush1.bf16.msra.mxu0 0
        %2722 = vmatprep.subr.bf16.mxu0 0
        %2723 = vmatpush1.bf16.msra.mxu0 0
        %2724 = vmatprep.subr.bf16.mxu0 0
        %2725 = vmatpush1.bf16.msra.mxu0 0
        %2726 = vmatprep.subr.bf16.mxu0 0
        %2727 = vmatpush1.bf16.msra.mxu0 0
        %2728 = vmatprep.subr.bf16.mxu0 0
        %2729 = vmatpush1.bf16.msra.mxu0 0
        %2730 = vmatprep.subr.bf16.mxu0 0
        %2731 = vmatpush1.bf16.msra.mxu0 0
        %2732 = vmatprep.subr.bf16.mxu0 0
        %2733 = vmatpush1.bf16.msra.mxu0 0
        %2734 = vmatprep.subr.bf16.mxu0 0
        %2735 = vmatpush1.bf16.msra.mxu0 0
        %2736 = vmatprep.subr.bf16.mxu0 0
        %2737 = vmatpush1.bf16.msra.mxu0 0
        %2738 = vmatprep.subr.bf16.mxu0 0
        %2739 = vmatpush1.bf16.msra.mxu0 0
        %2740 = vmatprep.subr.bf16.mxu0 0
        %2741 = vmatpush1.bf16.msra.mxu0 0
        %2742 = vmatprep.subr.bf16.mxu0 0
        %2743 = vmatpush1.bf16.msra.mxu0 0
        %2744 = vmatprep.subr.bf16.mxu0 0
        %2745 = vmatpush1.bf16.msra.mxu0 0
        %2746 = vmatprep.subr.bf16.mxu0 0
        %2747 = vmatpush1.bf16.msra.mxu0 0
        %2748 = vmatprep.mubr.bf16.mxu0 0
        %2749 = vmatmul.mubr.bf16.gmra.mrb[0].mxu0 %v2711
        %v2750 = vpop.f32.mrb[0].mxu0
        %v2751 = vadd.f32 0.0, %v2750
        %v2752 = vpop.f32.mrb[0].mxu0
        %v2753 = vpop.f32.mrb[0].mxu0
        %v2754 = vpop.f32.mrb[0].mxu0
        %2755 = vdwg.mxu0
        %v2757 = vsel %vm586, %v2657, 0
        %v2760 = vsel %vm590, %v2662, 0
        %2762 = vmatprep.subr.bf16.mxu0 0
        %2763 = vmatpush1.bf16.msra.mxu0 %v2760
        %2764 = vmatprep.subr.bf16.mxu0 0
        %2765 = vmatpush1.bf16.msra.mxu0 0
        %2766 = vmatprep.subr.bf16.mxu0 0
        %2767 = vmatpush1.bf16.msra.mxu0 0
        %2768 = vmatprep.subr.bf16.mxu0 0
        %2769 = vmatpush1.bf16.msra.mxu0 0
        %2770 = vmatprep.subr.bf16.mxu0 0
        %2771 = vmatpush1.bf16.msra.mxu0 0
        %2772 = vmatprep.subr.bf16.mxu0 0
        %2773 = vmatpush1.bf16.msra.mxu0 0
        %2774 = vmatprep.subr.bf16.mxu0 0
        %2775 = vmatpush1.bf16.msra.mxu0 0
        %2776 = vmatprep.subr.bf16.mxu0 0
        %2777 = vmatpush1.bf16.msra.mxu0 0
        %2778 = vmatprep.subr.bf16.mxu0 0
        %2779 = vmatpush1.bf16.msra.mxu0 0
        %2780 = vmatprep.subr.bf16.mxu0 0
        %2781 = vmatpush1.bf16.msra.mxu0 0
        %2782 = vmatprep.subr.bf16.mxu0 0
        %2783 = vmatpush1.bf16.msra.mxu0 0
        %2784 = vmatprep.subr.bf16.mxu0 0
        %2785 = vmatpush1.bf16.msra.mxu0 0
        %2786 = vmatprep.subr.bf16.mxu0 0
        %2787 = vmatpush1.bf16.msra.mxu0 0
        %2788 = vmatprep.subr.bf16.mxu0 0
        %2789 = vmatpush1.bf16.msra.mxu0 0
        %2790 = vmatprep.subr.bf16.mxu0 0
        %2791 = vmatpush1.bf16.msra.mxu0 0
        %2792 = vmatprep.subr.bf16.mxu0 0
        %2793 = vmatpush1.bf16.msra.mxu0 0
        %2794 = vmatprep.mubr.bf16.mxu0 0
        %2795 = vmatmul.mubr.bf16.gmra.mrb[0].mxu0 %v2757
        %v2796 = vpop.f32.mrb[0].mxu0
        %v2797 = vadd.f32 0.0, %v2796
        %v2798 = vpop.f32.mrb[0].mxu0
        %v2799 = vpop.f32.mrb[0].mxu0
        %v2800 = vpop.f32.mrb[0].mxu0
        %2801 = vdwg.mxu0
        %v2803 = vsel %vm586, %v2658, 0
        %v2806 = vsel %vm590, %v2663, 0
        %2808 = vmatprep.subr.bf16.mxu0 0
        %2809 = vmatpush1.bf16.msra.mxu0 %v2806
        %2810 = vmatprep.subr.bf16.mxu0 0
        %2811 = vmatpush1.bf16.msra.mxu0 0
        %2812 = vmatprep.subr.bf16.mxu0 0
        %2813 = vmatpush1.bf16.msra.mxu0 0
        %2814 = vmatprep.subr.bf16.mxu0 0
        %2815 = vmatpush1.bf16.msra.mxu0 0
        %2816 = vmatprep.subr.bf16.mxu0 0
        %2817 = vmatpush1.bf16.msra.mxu0 0
        %2818 = vmatprep.subr.bf16.mxu0 0
        %2819 = vmatpush1.bf16.msra.mxu0 0
        %2820 = vmatprep.subr.bf16.mxu0 0
        %2821 = vmatpush1.bf16.msra.mxu0 0
        %2822 = vmatprep.subr.bf16.mxu0 0
        %2823 = vmatpush1.bf16.msra.mxu0 0
        %2824 = vmatprep.subr.bf16.mxu0 0
        %2825 = vmatpush1.bf16.msra.mxu0 0
        %2826 = vmatprep.subr.bf16.mxu0 0
        %2827 = vmatpush1.bf16.msra.mxu0 0
        %2828 = vmatprep.subr.bf16.mxu0 0
        %2829 = vmatpush1.bf16.msra.mxu0 0
        %2830 = vmatprep.subr.bf16.mxu0 0
        %2831 = vmatpush1.bf16.msra.mxu0 0
        %2832 = vmatprep.subr.bf16.mxu0 0
        %2833 = vmatpush1.bf16.msra.mxu0 0
        %2834 = vmatprep.subr.bf16.mxu0 0
        %2835 = vmatpush1.bf16.msra.mxu0 0
        %2836 = vmatprep.subr.bf16.mxu0 0
        %2837 = vmatpush1.bf16.msra.mxu0 0
        %2838 = vmatprep.subr.bf16.mxu0 0
        %2839 = vmatpush1.bf16.msra.mxu0 0
        %2840 = vmatprep.mubr.bf16.mxu0 0
        %2841 = vmatmul.mubr.bf16.gmra.mrb[0].mxu0 %v2803
        %v2842 = vpop.f32.mrb[0].mxu0
        %v2843 = vadd.f32 0.0, %v2842
        %v2844 = vpop.f32.mrb[0].mxu0
        %v2845 = vpop.f32.mrb[0].mxu0
        %v2846 = vpop.f32.mrb[0].mxu0
        %2847 = vdwg.mxu0
        %v2848 = vsel %vm907, %v2705, 0.0
        %v2849 = vsel %vm907, %v2751, 0.0
        %v2850 = vadd.f32 %v2848, %v2849
        %v2851 = vsel %vm907, %v2797, 0.0
        %v2852 = vadd.f32 %v2850, %v2851
        %v2853 = vsel %vm907, %v2843, 0.0
        %v2854 = vadd.f32 %v2852, %v2853
        %v2855 = vlaneseq
        %v2856 = vshrl.u32 %v2855, 7
        %v2857 = vsub.s32 0, %v2856
        %v2858 = vrot.slane %v1956, %v2857
        %v2859 = vadd.f32 %v2854, %v2858
        %v2860 = vadd.f32 %v1954, %v2859
        %v2861 = vsel %vm907, %v2860, 0.0
        %2862 = vadd.xlane.f32.xlu0 %v2861
        %v2863 = vpop.xlane.xlu0 %2862
        %v2864 = vmul.f32 %v2863, 0.03125
        %v2865 = vmul.f32 %v2860, %v2860
        %v2866 = vsel %vm907, %v2865, 0.0
        %2867 = vadd.xlane.f32.xlu0 %v2866
        %v2868 = vpop.xlane.xlu0 %2867
        %v2869 = vmul.f32 %v2868, 0.03125
        %v2870 = vmul.f32 %v2864, %v2864
        %v2871 = vsub.f32 %v2869, %v2870
        %v2872 = vmax.f32 %v2871, 0.0
        %v2873 = vsub.f32 %v2860, %v2864
        %v2874 = vadd.f32 %v2872, 1e-05
        %v2875 = vrsqrt.pop %v2874
        %v2876 = vmul.f32 %v2873, %v2875
        %v2877 = vlaneseq
        %v2878 = vshrl.u32 %v2877, 7
        %v2879 = vsub.s32 1, %v2878
        %v2880 = vrot.slane %v1956, %v2879
        %v2881 = vmul.f32 %v2876, %v2880
        %v2882 = vlaneseq
        %v2883 = vshrl.u32 %v2882, 7
        %v2884 = vsub.s32 2, %v2883
        %v2885 = vrot.slane %v1956, %v2884
        %v2886 = vadd.f32 %v2881, %v2885
        %s2887 = scalar_lea.vmem %s13, 16
        %v2888 = vld [vmem:[%s2887] sm:$0xf]
        %v2889 = vld [vmem:[%s2887 + $0x4] sm:$0xf]
        %v2890 = vld [vmem:[%s2887 + $0x8] sm:$0xf]
        %v2891 = vld [vmem:[%s2887 + $0xc] sm:$0xf]
        %v2892 = vpack.c.bf16 %v2886, %v2886
        %s2893 = scalar_lea.vmem %s14, 1
        %v2894 = vld [vmem:[%s2893] sm:$0x1]
        %v2896 = vlaneseq
        %v2897 = vshrl.u32 %v2896, 7
        %v2898 = vsub.s32 0, %v2897
        %v2899 = vrot.slane %v2894, %v2898
        %v2905 = vunpack.c.l.b16 %v2888
        %v2906 = vunpack.c.l.b16 %v2889
        %v2907 = vunpack.c.l.b16 %v2890
        %v2908 = vunpack.c.l.b16 %v2891
        %v2909 = vpack.c.b16 %v2906, %v2905
        %v2910 = vpack.c.b16 %v2908, %v2907
        %v2914 = vsel %vm907, %v2892, 0
        %2916 = vmatprep.subr.bf16.mxu0 0
        %2917 = vmatpush1.bf16.msra.mxu0 %v2909
        %2918 = vmatprep.subr.bf16.mxu0 0
        %2919 = vmatpush1.bf16.msra.mxu0 %v2910
        %2920 = vmatprep.subr.bf16.mxu0 0
        %2921 = vmatpush1.bf16.msra.mxu0 0
        %2922 = vmatprep.subr.bf16.mxu0 0
        %2923 = vmatpush1.bf16.msra.mxu0 0
        %2924 = vmatprep.subr.bf16.mxu0 0
        %2925 = vmatpush1.bf16.msra.mxu0 0
        %2926 = vmatprep.subr.bf16.mxu0 0
        %2927 = vmatpush1.bf16.msra.mxu0 0
        %2928 = vmatprep.subr.bf16.mxu0 0
        %2929 = vmatpush1.bf16.msra.mxu0 0
        %2930 = vmatprep.subr.bf16.mxu0 0
        %2931 = vmatpush1.bf16.msra.mxu0 0
        %2932 = vmatprep.subr.bf16.mxu0 0
        %2933 = vmatpush1.bf16.msra.mxu0 0
        %2934 = vmatprep.subr.bf16.mxu0 0
        %2935 = vmatpush1.bf16.msra.mxu0 0
        %2936 = vmatprep.subr.bf16.mxu0 0
        %2937 = vmatpush1.bf16.msra.mxu0 0
        %2938 = vmatprep.subr.bf16.mxu0 0
        %2939 = vmatpush1.bf16.msra.mxu0 0
        %2940 = vmatprep.subr.bf16.mxu0 0
        %2941 = vmatpush1.bf16.msra.mxu0 0
        %2942 = vmatprep.subr.bf16.mxu0 0
        %2943 = vmatpush1.bf16.msra.mxu0 0
        %2944 = vmatprep.subr.bf16.mxu0 0
        %2945 = vmatpush1.bf16.msra.mxu0 0
        %2946 = vmatprep.subr.bf16.mxu0 0
        %2947 = vmatpush1.bf16.msra.mxu0 0
        %2948 = vmatprep.mubr.bf16.mxu0 0
        %2949 = vmatmul.mubr.bf16.gmra.mrb[0].mxu0 %v2914
        %v2950 = vpop.f32.mrb[0].mxu0
        %v2951 = vadd.f32 %v2899, %v2950
        %v2952 = vpop.f32.mrb[0].mxu0
        %v2953 = vpop.f32.mrb[0].mxu0
        %v2954 = vpop.f32.mrb[0].mxu0
        %2955 = vdwg.mxu0
        %v2956 = vmax.f32 %v2951, 0.0
        %s2957 = scalar_lea.vmem %s15, 32
        %v2958 = vld [vmem:[%s2957] sm:$0xf]
        %v2959 = vld [vmem:[%s2957 + $0x4] sm:$0xf]
        %v2960 = vld [vmem:[%s2957 + $0x8] sm:$0xf]
        %v2961 = vld [vmem:[%s2957 + $0xc] sm:$0xf]
        %v2962 = vld [vmem:[%s2957 + $0x10] sm:$0xf]
        %v2963 = vld [vmem:[%s2957 + $0x14] sm:$0xf]
        %v2964 = vld [vmem:[%s2957 + $0x18] sm:$0xf]
        %v2965 = vld [vmem:[%s2957 + $0x1c] sm:$0xf]
        %v2966 = vpack.c.bf16 %v2956, %v2956
        %v2967 = vlaneseq
        %v2968 = vshrl.u32 %v2967, 7
        %v2969 = vsub.s32 3, %v2968
        %v2970 = vrot.slane %v1956, %v2969
        %v2979 = vunpack.c.l.b16 %v2958
        %v2980 = vunpack.c.l.b16 %v2959
        %v2981 = vunpack.c.l.b16 %v2960
        %v2982 = vunpack.c.l.b16 %v2961
        %v2983 = vunpack.c.l.b16 %v2962
        %v2984 = vunpack.c.l.b16 %v2963
        %v2985 = vunpack.c.l.b16 %v2964
        %v2986 = vunpack.c.l.b16 %v2965
        %v2987 = vpack.c.b16 %v2980, %v2979
        %v2988 = vpack.c.b16 %v2982, %v2981
        %v2989 = vpack.c.b16 %v2984, %v2983
        %v2990 = vpack.c.b16 %v2986, %v2985
        %v2996 = vsel %vm1883, %v2966, 0
        %2998 = vmatprep.subr.bf16.mxu0 0
        %2999 = vmatpush1.bf16.msra.mxu0 %v2987
        %3000 = vmatprep.subr.bf16.mxu0 0
        %3001 = vmatpush1.bf16.msra.mxu0 %v2988
        %3002 = vmatprep.subr.bf16.mxu0 0
        %3003 = vmatpush1.bf16.msra.mxu0 %v2989
        %3004 = vmatprep.subr.bf16.mxu0 0
        %3005 = vmatpush1.bf16.msra.mxu0 %v2990
        %3006 = vmatprep.subr.bf16.mxu0 0
        %3007 = vmatpush1.bf16.msra.mxu0 0
        %3008 = vmatprep.subr.bf16.mxu0 0
        %3009 = vmatpush1.bf16.msra.mxu0 0
        %3010 = vmatprep.subr.bf16.mxu0 0
        %3011 = vmatpush1.bf16.msra.mxu0 0
        %3012 = vmatprep.subr.bf16.mxu0 0
        %3013 = vmatpush1.bf16.msra.mxu0 0
        %3014 = vmatprep.subr.bf16.mxu0 0
        %3015 = vmatpush1.bf16.msra.mxu0 0
        %3016 = vmatprep.subr.bf16.mxu0 0
        %3017 = vmatpush1.bf16.msra.mxu0 0
        %3018 = vmatprep.subr.bf16.mxu0 0
        %3019 = vmatpush1.bf16.msra.mxu0 0
        %3020 = vmatprep.subr.bf16.mxu0 0
        %3021 = vmatpush1.bf16.msra.mxu0 0
        %3022 = vmatprep.subr.bf16.mxu0 0
        %3023 = vmatpush1.bf16.msra.mxu0 0
        %3024 = vmatprep.subr.bf16.mxu0 0
        %3025 = vmatpush1.bf16.msra.mxu0 0
        %3026 = vmatprep.subr.bf16.mxu0 0
        %3027 = vmatpush1.bf16.msra.mxu0 0
        %3028 = vmatprep.subr.bf16.mxu0 0
        %3029 = vmatpush1.bf16.msra.mxu0 0
        %3030 = vmatprep.mubr.bf16.mxu0 0
        %3031 = vmatmul.mubr.bf16.gmra.mrb[0].mxu0 %v2996
        %v3032 = vpop.f32.mrb[0].mxu0
        %v3033 = vadd.f32 %v2970, %v3032
        %v3034 = vpop.f32.mrb[0].mxu0
        %v3035 = vpop.f32.mrb[0].mxu0
        %v3036 = vpop.f32.mrb[0].mxu0
        %3037 = vdwg.mxu0
        %v3038 = vadd.f32 %v2886, %v3033
        %v3039 = vsel %vm907, %v3038, 0.0
        %3040 = vadd.xlane.f32.xlu0 %v3039
        %v3041 = vpop.xlane.xlu0 %3040
        %v3042 = vmul.f32 %v3041, 0.03125
        %v3043 = vmul.f32 %v3038, %v3038
        %v3044 = vsel %vm907, %v3043, 0.0
        %3045 = vadd.xlane.f32.xlu0 %v3044
        %v3046 = vpop.xlane.xlu0 %3045
        %v3047 = vmul.f32 %v3046, 0.03125
        %v3048 = vmul.f32 %v3042, %v3042
        %v3049 = vsub.f32 %v3047, %v3048
        %v3050 = vmax.f32 %v3049, 0.0
        %v3051 = vsub.f32 %v3038, %v3042
        %v3052 = vadd.f32 %v3050, 1e-05
        %v3053 = vrsqrt.pop %v3052
        %v3054 = vmul.f32 %v3051, %v3053
        %v3055 = vlaneseq
        %v3056 = vshrl.u32 %v3055, 7
        %v3057 = vsub.s32 4, %v3056
        %v3058 = vrot.slane %v1956, %v3057
        %v3059 = vmul.f32 %v3054, %v3058
        %v3060 = vlaneseq
        %v3061 = vshrl.u32 %v3060, 7
        %v3062 = vsub.s32 5, %v3061
        %v3063 = vrot.slane %v1956, %v3062
        %v3064 = vadd.f32 %v3059, %v3063
        %v3065 = vadd.f32 %v1954, %v3064
        loop: start=4, step=1, limit=8
        $region96: #{tpu_custom_call.1} parent=87 // loop_pre_header
          _
        $region97: #{tpu_custom_call.1} parent=87 // loop_header
          %s3067 = sphi 4, %s3071
          %p3068 = scmp.ge.s32.totalorder %s3067, 8
          %v3072 = vphi %v3065, %v3279
          %v3073 = vphi %v3065, %v3278
        $region98: #{tpu_custom_call.1} parent=87 // loop_header_branch
          %3070 = sbr.rel (%p3068) target = $region102
        $region99: #{tpu_custom_call.1} parent=87 // loop_body
          %s3074 = smul.u32 %s3067, 8
          %s3075 = scalar_lea.vmem %s9, %s3074
          %v3076 = vld [vmem:[%s3075] sm:$0x3f]
          %v3077 = vpack.c.bf16 %v3072, %v3072
          %v3079 = vsel %vm586, %v575, 0
          %v3082 = vsel %vm590, %v3077, 0
          %3084 = vmatprep.subr.bf16.mxu0 0
          %3085 = vmatpush1.bf16.msra.mxu0 %v3082
          %3086 = vmatprep.subr.bf16.mxu0 0
          %3087 = vmatpush1.bf16.msra.mxu0 0
          %3088 = vmatprep.subr.bf16.mxu0 0
          %3089 = vmatpush1.bf16.msra.mxu0 0
          %3090 = vmatprep.subr.bf16.mxu0 0
          %3091 = vmatpush1.bf16.msra.mxu0 0
          %3092 = vmatprep.subr.bf16.mxu0 0
          %3093 = vmatpush1.bf16.msra.mxu0 0
          %3094 = vmatprep.subr.bf16.mxu0 0
          %3095 = vmatpush1.bf16.msra.mxu0 0
          %3096 = vmatprep.subr.bf16.mxu0 0
          %3097 = vmatpush1.bf16.msra.mxu0 0
          %3098 = vmatprep.subr.bf16.mxu0 0
          %3099 = vmatpush1.bf16.msra.mxu0 0
          %3100 = vmatprep.subr.bf16.mxu0 0
          %3101 = vmatpush1.bf16.msra.mxu0 0
          %3102 = vmatprep.subr.bf16.mxu0 0
          %3103 = vmatpush1.bf16.msra.mxu0 0
          %3104 = vmatprep.subr.bf16.mxu0 0
          %3105 = vmatpush1.bf16.msra.mxu0 0
          %3106 = vmatprep.subr.bf16.mxu0 0
          %3107 = vmatpush1.bf16.msra.mxu0 0
          %3108 = vmatprep.subr.bf16.mxu0 0
          %3109 = vmatpush1.bf16.msra.mxu0 0
          %3110 = vmatprep.subr.bf16.mxu0 0
          %3111 = vmatpush1.bf16.msra.mxu0 0
          %3112 = vmatprep.subr.bf16.mxu0 0
          %3113 = vmatpush1.bf16.msra.mxu0 0
          %3114 = vmatprep.subr.bf16.mxu0 0
          %3115 = vmatpush1.bf16.msra.mxu0 0
          %3116 = vmatprep.mubr.bf16.mxu0 0
          %3117 = vmatmul.mubr.bf16.gmra.mrb[0].mxu0 %v3079
          %v3118 = vpop.f32.mrb[0].mxu0
          %v3119 = vadd.f32 0.0, %v3118
          %v3120 = vpop.f32.mrb[0].mxu0
          %v3121 = vpop.f32.mrb[0].mxu0
          %v3122 = vpop.f32.mrb[0].mxu0
          %3123 = vdwg.mxu0
          %s3124 = smul.u32 %s3067, 4
          %s3125 = smul.addr %s3124, 4
          %s3126 = scalar_lea.vmem %s7, %s3125
          %v3127 = vld [vmem:[%s3126] sm:$0xf]
          %v3128 = vld [vmem:[%s3126 + $0x4] sm:$0xf]
          %v3129 = vld [vmem:[%s3126 + $0x8] sm:$0xf]
          %v3130 = vld [vmem:[%s3126 + $0xc] sm:$0xf]
          %v3131 = vpack.c.bf16 %v3119, %v3119
          %v3132 = vlaneseq
          %v3133 = vshrl.u32 %v3132, 7
          %v3134 = vsub.s32 0, %v3133
          %v3135 = vrot.slane %v3076, %v3134
          %v3140 = vunpack.c.l.b16 %v3127
          %v3141 = vunpack.c.l.b16 %v3128
          %v3142 = vunpack.c.l.b16 %v3129
          %v3143 = vunpack.c.l.b16 %v3130
          %v3144 = vpack.c.b16 %v3141, %v3140
          %v3145 = vpack.c.b16 %v3143, %v3142
          %v3149 = vsel %vm907, %v3131, 0
          %3151 = vmatprep.subr.bf16.mxu0 0
          %3152 = vmatpush1.bf16.msra.mxu0 %v3144
          %3153 = vmatprep.subr.bf16.mxu0 0
          %3154 = vmatpush1.bf16.msra.mxu0 %v3145
          %3155 = vmatprep.subr.bf16.mxu0 0
          %3156 = vmatpush1.bf16.msra.mxu0 0
          %3157 = vmatprep.subr.bf16.mxu0 0
          %3158 = vmatpush1.bf16.msra.mxu0 0
          %3159 = vmatprep.subr.bf16.mxu0 0
          %3160 = vmatpush1.bf16.msra.mxu0 0
          %3161 = vmatprep.subr.bf16.mxu0 0
          %3162 = vmatpush1.bf16.msra.mxu0 0
          %3163 = vmatprep.subr.bf16.mxu0 0
          %3164 = vmatpush1.bf16.msra.mxu0 0
          %3165 = vmatprep.subr.bf16.mxu0 0
          %3166 = vmatpush1.bf16.msra.mxu0 0
          %3167 = vmatprep.subr.bf16.mxu0 0
          %3168 = vmatpush1.bf16.msra.mxu0 0
          %3169 = vmatprep.subr.bf16.mxu0 0
          %3170 = vmatpush1.bf16.msra.mxu0 0
          %3171 = vmatprep.subr.bf16.mxu0 0
          %3172 = vmatpush1.bf16.msra.mxu0 0
          %3173 = vmatprep.subr.bf16.mxu0 0
          %3174 = vmatpush1.bf16.msra.mxu0 0
          %3175 = vmatprep.subr.bf16.mxu0 0
          %3176 = vmatpush1.bf16.msra.mxu0 0
          %3177 = vmatprep.subr.bf16.mxu0 0
          %3178 = vmatpush1.bf16.msra.mxu0 0
          %3179 = vmatprep.subr.bf16.mxu0 0
          %3180 = vmatpush1.bf16.msra.mxu0 0
          %3181 = vmatprep.subr.bf16.mxu0 0
          %3182 = vmatpush1.bf16.msra.mxu0 0
          %3183 = vmatprep.mubr.bf16.mxu0 0
          %3184 = vmatmul.mubr.bf16.gmra.mrb[0].mxu0 %v3149
          %v3185 = vpop.f32.mrb[0].mxu0
          %v3186 = vadd.f32 %v3135, %v3185
          %v3187 = vpop.f32.mrb[0].mxu0
          %v3188 = vpop.f32.mrb[0].mxu0
          %v3189 = vpop.f32.mrb[0].mxu0
          %3190 = vdwg.mxu0
          %v3191 = vlaneseq
          %v3192 = vshrl.u32 %v3191, 7
          %v3193 = vsub.s32 1, %v3192
          %v3194 = vrot.slane %v3076, %v3193
          %v3195 = vmul.f32 %v3186, %v3194
          %v3196 = vlaneseq
          %v3197 = vshrl.u32 %v3196, 7
          %v3198 = vsub.s32 2, %v3197
          %v3199 = vrot.slane %v3076, %v3198
          %v3200 = vadd.f32 %v3195, %v3199
          %v3201 = vmax.f32 %v3200, 0.0
          %s3202 = smul.addr %s3124, 4
          %s3203 = scalar_lea.vmem %s8, %s3202
          %v3204 = vld [vmem:[%s3203] sm:$0xf]
          %v3205 = vld [vmem:[%s3203 + $0x4] sm:$0xf]
          %v3206 = vld [vmem:[%s3203 + $0x8] sm:$0xf]
          %v3207 = vld [vmem:[%s3203 + $0xc] sm:$0xf]
          %v3208 = vpack.c.bf16 %v3201, %v3201
          %v3209 = vlaneseq
          %v3210 = vshrl.u32 %v3209, 7
          %v3211 = vsub.s32 3, %v3210
          %v3212 = vrot.slane %v3076, %v3211
          %v3217 = vunpack.c.l.b16 %v3204
          %v3218 = vunpack.c.l.b16 %v3205
          %v3219 = vunpack.c.l.b16 %v3206
          %v3220 = vunpack.c.l.b16 %v3207
          %v3221 = vpack.c.b16 %v3218, %v3217
          %v3222 = vpack.c.b16 %v3220, %v3219
          %v3226 = vsel %vm907, %v3208, 0
          %3228 = vmatprep.subr.bf16.mxu0 0
          %3229 = vmatpush1.bf16.msra.mxu0 %v3221
          %3230 = vmatprep.subr.bf16.mxu0 0
          %3231 = vmatpush1.bf16.msra.mxu0 %v3222
          %3232 = vmatprep.subr.bf16.mxu0 0
          %3233 = vmatpush1.bf16.msra.mxu0 0
          %3234 = vmatprep.subr.bf16.mxu0 0
          %3235 = vmatpush1.bf16.msra.mxu0 0
          %3236 = vmatprep.subr.bf16.mxu0 0
          %3237 = vmatpush1.bf16.msra.mxu0 0
          %3238 = vmatprep.subr.bf16.mxu0 0
          %3239 = vmatpush1.bf16.msra.mxu0 0
          %3240 = vmatprep.subr.bf16.mxu0 0
          %3241 = vmatpush1.bf16.msra.mxu0 0
          %3242 = vmatprep.subr.bf16.mxu0 0
          %3243 = vmatpush1.bf16.msra.mxu0 0
          %3244 = vmatprep.subr.bf16.mxu0 0
          %3245 = vmatpush1.bf16.msra.mxu0 0
          %3246 = vmatprep.subr.bf16.mxu0 0
          %3247 = vmatpush1.bf16.msra.mxu0 0
          %3248 = vmatprep.subr.bf16.mxu0 0
          %3249 = vmatpush1.bf16.msra.mxu0 0
          %3250 = vmatprep.subr.bf16.mxu0 0
          %3251 = vmatpush1.bf16.msra.mxu0 0
          %3252 = vmatprep.subr.bf16.mxu0 0
          %3253 = vmatpush1.bf16.msra.mxu0 0
          %3254 = vmatprep.subr.bf16.mxu0 0
          %3255 = vmatpush1.bf16.msra.mxu0 0
          %3256 = vmatprep.subr.bf16.mxu0 0
          %3257 = vmatpush1.bf16.msra.mxu0 0
          %3258 = vmatprep.subr.bf16.mxu0 0
          %3259 = vmatpush1.bf16.msra.mxu0 0
          %3260 = vmatprep.mubr.bf16.mxu0 0
          %3261 = vmatmul.mubr.bf16.gmra.mrb[0].mxu0 %v3226
          %v3262 = vpop.f32.mrb[0].mxu0
          %v3263 = vadd.f32 %v3212, %v3262
          %v3264 = vpop.f32.mrb[0].mxu0
          %v3265 = vpop.f32.mrb[0].mxu0
          %v3266 = vpop.f32.mrb[0].mxu0
          %3267 = vdwg.mxu0
          %v3268 = vlaneseq
          %v3269 = vshrl.u32 %v3268, 7
          %v3270 = vsub.s32 4, %v3269
          %v3271 = vrot.slane %v3076, %v3270
          %v3272 = vmul.f32 %v3263, %v3271
          %v3273 = vlaneseq
          %v3274 = vshrl.u32 %v3273, 7
          %v3275 = vsub.s32 5, %v3274
          %v3276 = vrot.slane %v3076, %v3275
          %v3277 = vadd.f32 %v3272, %v3276
          %v3278 = vadd.f32 %v3073, %v3277
          %v3279 = vmax.f32 %v3278, 0.0
        $region100: #{tpu_custom_call.1} parent=87 // loop_footer
          %s3071 = sadd.s32 1, %s3067
        $region101: #{tpu_custom_call.1} parent=87 // loop_footer_branch
          %3066 = sbr.rel target = $region97
        $region102: #{tpu_custom_call.1} parent=87 // loop_exit
          _
        %s3280 = scalar_lea.vmem %s16, 16
        %v3281 = vld [vmem:[%s3280] sm:$0x3f]
        %v3282 = vpack.c.bf16 %v3072, %v3072
        %s3283 = scalar_lea.vmem %s10, 128
        %v3284 = vld [vmem:[%s3283] sm:$0xf]
        %v3285 = vld [vmem:[%s3283 + $0x4] sm:$0xf]
        %v3286 = vld [vmem:[%s3283 + $0x8] sm:$0xf]
        %v3287 = vld [vmem:[%s3283 + $0xc] sm:$0xf]
        %v3288 = vld [vmem:[%s3283 + $0x10] sm:$0xf]
        %v3289 = vld [vmem:[%s3283 + $0x14] sm:$0xf]
        %v3290 = vld [vmem:[%s3283 + $0x18] sm:$0xf]
        %v3291 = vld [vmem:[%s3283 + $0x1c] sm:$0xf]
        %v3292 = vld [vmem:[%s3283 + $0x20] sm:$0xf]
        %v3293 = vld [vmem:[%s3283 + $0x24] sm:$0xf]
        %v3294 = vld [vmem:[%s3283 + $0x28] sm:$0xf]
        %v3295 = vld [vmem:[%s3283 + $0x2c] sm:$0xf]
        %v3296 = vld [vmem:[%s3283 + $0x30] sm:$0xf]
        %v3297 = vld [vmem:[%s3283 + $0x34] sm:$0xf]
        %v3298 = vld [vmem:[%s3283 + $0x38] sm:$0xf]
        %v3299 = vld [vmem:[%s3283 + $0x3c] sm:$0xf]
        %s3300 = scalar_lea.vmem %s11, 8
        %v3301 = vld [vmem:[%s3300] sm:$0x1]
        %v3302 = vld [vmem:[%s3300 + $0x1] sm:$0x1]
        %v3303 = vld [vmem:[%s3300 + $0x2] sm:$0x1]
        %v3304 = vld [vmem:[%s3300 + $0x3] sm:$0x1]
        %v3309 = vlaneseq
        %v3310 = vshrl.u32 %v3309, 7
        %v3311 = vsub.s32 0, %v3310
        %v3312 = vrot.slane %v3301, %v3311
        %v3313 = vlaneseq
        %v3314 = vshrl.u32 %v3313, 7
        %v3315 = vsub.s32 0, %v3314
        %v3316 = vrot.slane %v3302, %v3315
        %v3317 = vlaneseq
        %v3318 = vshrl.u32 %v3317, 7
        %v3319 = vsub.s32 0, %v3318
        %v3320 = vrot.slane %v3303, %v3319
        %v3321 = vlaneseq
        %v3322 = vshrl.u32 %v3321, 7
        %v3323 = vsub.s32 0, %v3322
        %v3324 = vrot.slane %v3304, %v3323
        %v3333 = vunpack.c.l.b16 %v3284
        %v3334 = vunpack.c.l.b16 %v3285
        %v3335 = vunpack.c.l.b16 %v3286
        %v3336 = vunpack.c.l.b16 %v3287
        %v3337 = vpack.c.b16 %v3334, %v3333
        %v3338 = vpack.c.b16 %v3336, %v3335
        %v3342 = vsel %vm907, %v3282, 0
        %3344 = vmatprep.subr.bf16.mxu0 0
        %3345 = vmatpush1.bf16.msra.mxu0 %v3337
        %3346 = vmatprep.subr.bf16.mxu0 0
        %3347 = vmatpush1.bf16.msra.mxu0 %v3338
        %3348 = vmatprep.subr.bf16.mxu0 0
        %3349 = vmatpush1.bf16.msra.mxu0 0
        %3350 = vmatprep.subr.bf16.mxu0 0
        %3351 = vmatpush1.bf16.msra.mxu0 0
        %3352 = vmatprep.subr.bf16.mxu0 0
        %3353 = vmatpush1.bf16.msra.mxu0 0
        %3354 = vmatprep.subr.bf16.mxu0 0
        %3355 = vmatpush1.bf16.msra.mxu0 0
        %3356 = vmatprep.subr.bf16.mxu0 0
        %3357 = vmatpush1.bf16.msra.mxu0 0
        %3358 = vmatprep.subr.bf16.mxu0 0
        %3359 = vmatpush1.bf16.msra.mxu0 0
        %3360 = vmatprep.subr.bf16.mxu0 0
        %3361 = vmatpush1.bf16.msra.mxu0 0
        %3362 = vmatprep.subr.bf16.mxu0 0
        %3363 = vmatpush1.bf16.msra.mxu0 0
        %3364 = vmatprep.subr.bf16.mxu0 0
        %3365 = vmatpush1.bf16.msra.mxu0 0
        %3366 = vmatprep.subr.bf16.mxu0 0
        %3367 = vmatpush1.bf16.msra.mxu0 0
        %3368 = vmatprep.subr.bf16.mxu0 0
        %3369 = vmatpush1.bf16.msra.mxu0 0
        %3370 = vmatprep.subr.bf16.mxu0 0
        %3371 = vmatpush1.bf16.msra.mxu0 0
        %3372 = vmatprep.subr.bf16.mxu0 0
        %3373 = vmatpush1.bf16.msra.mxu0 0
        %3374 = vmatprep.subr.bf16.mxu0 0
        %3375 = vmatpush1.bf16.msra.mxu0 0
        %3376 = vmatprep.mubr.bf16.mxu0 0
        %3377 = vmatmul.mubr.bf16.gmra.mrb[0].mxu0 %v3342
        %v3378 = vpop.f32.mrb[0].mxu0
        %v3379 = vadd.f32 %v3312, %v3378
        %v3380 = vpop.f32.mrb[0].mxu0
        %v3381 = vpop.f32.mrb[0].mxu0
        %v3382 = vpop.f32.mrb[0].mxu0
        %3383 = vdwg.mxu0
        %v3388 = vunpack.c.l.b16 %v3288
        %v3389 = vunpack.c.l.b16 %v3289
        %v3390 = vunpack.c.l.b16 %v3290
        %v3391 = vunpack.c.l.b16 %v3291
        %v3392 = vpack.c.b16 %v3389, %v3388
        %v3393 = vpack.c.b16 %v3391, %v3390
        %3396 = vmatprep.subr.bf16.mxu0 0
        %3397 = vmatpush1.bf16.msra.mxu0 %v3392
        %3398 = vmatprep.subr.bf16.mxu0 0
        %3399 = vmatpush1.bf16.msra.mxu0 %v3393
        %3400 = vmatprep.subr.bf16.mxu0 0
        %3401 = vmatpush1.bf16.msra.mxu0 0
        %3402 = vmatprep.subr.bf16.mxu0 0
        %3403 = vmatpush1.bf16.msra.mxu0 0
        %3404 = vmatprep.subr.bf16.mxu0 0
        %3405 = vmatpush1.bf16.msra.mxu0 0
        %3406 = vmatprep.subr.bf16.mxu0 0
        %3407 = vmatpush1.bf16.msra.mxu0 0
        %3408 = vmatprep.subr.bf16.mxu0 0
        %3409 = vmatpush1.bf16.msra.mxu0 0
        %3410 = vmatprep.subr.bf16.mxu0 0
        %3411 = vmatpush1.bf16.msra.mxu0 0
        %3412 = vmatprep.subr.bf16.mxu0 0
        %3413 = vmatpush1.bf16.msra.mxu0 0
        %3414 = vmatprep.subr.bf16.mxu0 0
        %3415 = vmatpush1.bf16.msra.mxu0 0
        %3416 = vmatprep.subr.bf16.mxu0 0
        %3417 = vmatpush1.bf16.msra.mxu0 0
        %3418 = vmatprep.subr.bf16.mxu0 0
        %3419 = vmatpush1.bf16.msra.mxu0 0
        %3420 = vmatprep.subr.bf16.mxu0 0
        %3421 = vmatpush1.bf16.msra.mxu0 0
        %3422 = vmatprep.subr.bf16.mxu0 0
        %3423 = vmatpush1.bf16.msra.mxu0 0
        %3424 = vmatprep.subr.bf16.mxu0 0
        %3425 = vmatpush1.bf16.msra.mxu0 0
        %3426 = vmatprep.subr.bf16.mxu0 0
        %3427 = vmatpush1.bf16.msra.mxu0 0
        %3428 = vmatprep.mubr.bf16.mxu0 0
        %3429 = vmatmul.mubr.bf16.gmra.mrb[0].mxu0 %v3342
        %v3430 = vpop.f32.mrb[0].mxu0
        %v3431 = vadd.f32 %v3316, %v3430
        %v3432 = vpop.f32.mrb[0].mxu0
        %v3433 = vpop.f32.mrb[0].mxu0
        %v3434 = vpop.f32.mrb[0].mxu0
        %3435 = vdwg.mxu0
        %v3440 = vunpack.c.l.b16 %v3292
        %v3441 = vunpack.c.l.b16 %v3293
        %v3442 = vunpack.c.l.b16 %v3294
        %v3443 = vunpack.c.l.b16 %v3295
        %v3444 = vpack.c.b16 %v3441, %v3440
        %v3445 = vpack.c.b16 %v3443, %v3442
        %3448 = vmatprep.subr.bf16.mxu0 0
        %3449 = vmatpush1.bf16.msra.mxu0 %v3444
        %3450 = vmatprep.subr.bf16.mxu0 0
        %3451 = vmatpush1.bf16.msra.mxu0 %v3445
        %3452 = vmatprep.subr.bf16.mxu0 0
        %3453 = vmatpush1.bf16.msra.mxu0 0
        %3454 = vmatprep.subr.bf16.mxu0 0
        %3455 = vmatpush1.bf16.msra.mxu0 0
        %3456 = vmatprep.subr.bf16.mxu0 0
        %3457 = vmatpush1.bf16.msra.mxu0 0
        %3458 = vmatprep.subr.bf16.mxu0 0
        %3459 = vmatpush1.bf16.msra.mxu0 0
        %3460 = vmatprep.subr.bf16.mxu0 0
        %3461 = vmatpush1.bf16.msra.mxu0 0
        %3462 = vmatprep.subr.bf16.mxu0 0
        %3463 = vmatpush1.bf16.msra.mxu0 0
        %3464 = vmatprep.subr.bf16.mxu0 0
        %3465 = vmatpush1.bf16.msra.mxu0 0
        %3466 = vmatprep.subr.bf16.mxu0 0
        %3467 = vmatpush1.bf16.msra.mxu0 0
        %3468 = vmatprep.subr.bf16.mxu0 0
        %3469 = vmatpush1.bf16.msra.mxu0 0
        %3470 = vmatprep.subr.bf16.mxu0 0
        %3471 = vmatpush1.bf16.msra.mxu0 0
        %3472 = vmatprep.subr.bf16.mxu0 0
        %3473 = vmatpush1.bf16.msra.mxu0 0
        %3474 = vmatprep.subr.bf16.mxu0 0
        %3475 = vmatpush1.bf16.msra.mxu0 0
        %3476 = vmatprep.subr.bf16.mxu0 0
        %3477 = vmatpush1.bf16.msra.mxu0 0
        %3478 = vmatprep.subr.bf16.mxu0 0
        %3479 = vmatpush1.bf16.msra.mxu0 0
        %3480 = vmatprep.mubr.bf16.mxu0 0
        %3481 = vmatmul.mubr.bf16.gmra.mrb[0].mxu0 %v3342
        %v3482 = vpop.f32.mrb[0].mxu0
        %v3483 = vadd.f32 %v3320, %v3482
        %v3484 = vpop.f32.mrb[0].mxu0
        %v3485 = vpop.f32.mrb[0].mxu0
        %v3486 = vpop.f32.mrb[0].mxu0
        %3487 = vdwg.mxu0
        %v3492 = vunpack.c.l.b16 %v3296
        %v3493 = vunpack.c.l.b16 %v3297
        %v3494 = vunpack.c.l.b16 %v3298
        %v3495 = vunpack.c.l.b16 %v3299
        %v3496 = vpack.c.b16 %v3493, %v3492
        %v3497 = vpack.c.b16 %v3495, %v3494
        %3500 = vmatprep.subr.bf16.mxu0 0
        %3501 = vmatpush1.bf16.msra.mxu0 %v3496
        %3502 = vmatprep.subr.bf16.mxu0 0
        %3503 = vmatpush1.bf16.msra.mxu0 %v3497
        %3504 = vmatprep.subr.bf16.mxu0 0
        %3505 = vmatpush1.bf16.msra.mxu0 0
        %3506 = vmatprep.subr.bf16.mxu0 0
        %3507 = vmatpush1.bf16.msra.mxu0 0
        %3508 = vmatprep.subr.bf16.mxu0 0
        %3509 = vmatpush1.bf16.msra.mxu0 0
        %3510 = vmatprep.subr.bf16.mxu0 0
        %3511 = vmatpush1.bf16.msra.mxu0 0
        %3512 = vmatprep.subr.bf16.mxu0 0
        %3513 = vmatpush1.bf16.msra.mxu0 0
        %3514 = vmatprep.subr.bf16.mxu0 0
        %3515 = vmatpush1.bf16.msra.mxu0 0
        %3516 = vmatprep.subr.bf16.mxu0 0
        %3517 = vmatpush1.bf16.msra.mxu0 0
        %3518 = vmatprep.subr.bf16.mxu0 0
        %3519 = vmatpush1.bf16.msra.mxu0 0
        %3520 = vmatprep.subr.bf16.mxu0 0
        %3521 = vmatpush1.bf16.msra.mxu0 0
        %3522 = vmatprep.subr.bf16.mxu0 0
        %3523 = vmatpush1.bf16.msra.mxu0 0
        %3524 = vmatprep.subr.bf16.mxu0 0
        %3525 = vmatpush1.bf16.msra.mxu0 0
        %3526 = vmatprep.subr.bf16.mxu0 0
        %3527 = vmatpush1.bf16.msra.mxu0 0
        %3528 = vmatprep.subr.bf16.mxu0 0
        %3529 = vmatpush1.bf16.msra.mxu0 0
        %3530 = vmatprep.subr.bf16.mxu0 0
        %3531 = vmatpush1.bf16.msra.mxu0 0
        %3532 = vmatprep.mubr.bf16.mxu0 0
        %3533 = vmatmul.mubr.bf16.gmra.mrb[0].mxu0 %v3342
        %v3534 = vpop.f32.mrb[0].mxu0
        %v3535 = vadd.f32 %v3324, %v3534
        %v3536 = vpop.f32.mrb[0].mxu0
        %v3537 = vpop.f32.mrb[0].mxu0
        %v3538 = vpop.f32.mrb[0].mxu0
        %3539 = vdwg.mxu0
        %v3540 = vpack.c.bf16 %v3379, %v3379
        %v3541 = vpack.c.bf16 %v3431, %v3431
        %v3542 = vpack.c.bf16 %v3483, %v3483
        %v3543 = vpack.c.bf16 %v3535, %v3535
        %3545 = vrot.lane.b32.xlu0 %v3540, 120
        %v3546 = vpop.permute.xlu0 %3545
        %v3548 = vsel %vm586, %v3540, 0
        %v3551 = vsel %vm586, %v3546, 0
        %3553 = vmatprep.subr.bf16.mxu0 0
        %3554 = vmatpush1.bf16.xpose.msra.mxu0 %v3551
        %3555 = vmatprep.subr.bf16.mxu0 0
        %3556 = vmatpush1.bf16.xpose.msra.mxu0 0
        %3557 = vmatprep.subr.bf16.mxu0 0
        %3558 = vmatpush1.bf16.xpose.msra.mxu0 0
        %3559 = vmatprep.subr.bf16.mxu0 0
        %3560 = vmatpush1.bf16.xpose.msra.mxu0 0
        %3561 = vmatprep.subr.bf16.mxu0 0
        %3562 = vmatpush1.bf16.xpose.msra.mxu0 0
        %3563 = vmatprep.subr.bf16.mxu0 0
        %3564 = vmatpush1.bf16.xpose.msra.mxu0 0
        %3565 = vmatprep.subr.bf16.mxu0 0
        %3566 = vmatpush1.bf16.xpose.msra.mxu0 0
        %3567 = vmatprep.subr.bf16.mxu0 0
        %3568 = vmatpush1.bf16.xpose.msra.mxu0 0
        %3569 = vmatprep.subr.bf16.mxu0 0
        %3570 = vmatpush1.bf16.xpose.msra.mxu0 0
        %3571 = vmatprep.subr.bf16.mxu0 0
        %3572 = vmatpush1.bf16.xpose.msra.mxu0 0
        %3573 = vmatprep.subr.bf16.mxu0 0
        %3574 = vmatpush1.bf16.xpose.msra.mxu0 0
        %3575 = vmatprep.subr.bf16.mxu0 0
        %3576 = vmatpush1.bf16.xpose.msra.mxu0 0
        %3577 = vmatprep.subr.bf16.mxu0 0
        %3578 = vmatpush1.bf16.xpose.msra.mxu0 0
        %3579 = vmatprep.subr.bf16.mxu0 0
        %3580 = vmatpush1.bf16.xpose.msra.mxu0 0
        %3581 = vmatprep.subr.bf16.mxu0 0
        %3582 = vmatpush1.bf16.xpose.msra.mxu0 0
        %3583 = vmatprep.subr.bf16.mxu0 0
        %3584 = vmatpush1.bf16.xpose.msra.mxu0 0
        %3585 = vmatprep.mubr.bf16.mxu0 0
        %3586 = vmatmul.mubr.bf16.gmra.mrb[0].mxu0 %v3548
        %v3587 = vpop.f32.mrb[0].mxu0
        %v3588 = vadd.f32 0.0, %v3587
        %v3589 = vpop.f32.mrb[0].mxu0
        %v3590 = vpop.f32.mrb[0].mxu0
        %v3591 = vpop.f32.mrb[0].mxu0
        %3592 = vdwg.mxu0
        %3594 = vrot.lane.b32.xlu0 %v3541, 120
        %v3595 = vpop.permute.xlu0 %3594
        %v3597 = vsel %vm586, %v3541, 0
        %v3600 = vsel %vm586, %v3595, 0
        %3602 = vmatprep.subr.bf16.mxu0 0
        %3603 = vmatpush1.bf16.xpose.msra.mxu0 %v3600
        %3604 = vmatprep.subr.bf16.mxu0 0
        %3605 = vmatpush1.bf16.xpose.msra.mxu0 0
        %3606 = vmatprep.subr.bf16.mxu0 0
        %3607 = vmatpush1.bf16.xpose.msra.mxu0 0
        %3608 = vmatprep.subr.bf16.mxu0 0
        %3609 = vmatpush1.bf16.xpose.msra.mxu0 0
        %3610 = vmatprep.subr.bf16.mxu0 0
        %3611 = vmatpush1.bf16.xpose.msra.mxu0 0
        %3612 = vmatprep.subr.bf16.mxu0 0
        %3613 = vmatpush1.bf16.xpose.msra.mxu0 0
        %3614 = vmatprep.subr.bf16.mxu0 0
        %3615 = vmatpush1.bf16.xpose.msra.mxu0 0
        %3616 = vmatprep.subr.bf16.mxu0 0
        %3617 = vmatpush1.bf16.xpose.msra.mxu0 0
        %3618 = vmatprep.subr.bf16.mxu0 0
        %3619 = vmatpush1.bf16.xpose.msra.mxu0 0
        %3620 = vmatprep.subr.bf16.mxu0 0
        %3621 = vmatpush1.bf16.xpose.msra.mxu0 0
        %3622 = vmatprep.subr.bf16.mxu0 0
        %3623 = vmatpush1.bf16.xpose.msra.mxu0 0
        %3624 = vmatprep.subr.bf16.mxu0 0
        %3625 = vmatpush1.bf16.xpose.msra.mxu0 0
        %3626 = vmatprep.subr.bf16.mxu0 0
        %3627 = vmatpush1.bf16.xpose.msra.mxu0 0
        %3628 = vmatprep.subr.bf16.mxu0 0
        %3629 = vmatpush1.bf16.xpose.msra.mxu0 0
        %3630 = vmatprep.subr.bf16.mxu0 0
        %3631 = vmatpush1.bf16.xpose.msra.mxu0 0
        %3632 = vmatprep.subr.bf16.mxu0 0
        %3633 = vmatpush1.bf16.xpose.msra.mxu0 0
        %3634 = vmatprep.mubr.bf16.mxu0 0
        %3635 = vmatmul.mubr.bf16.gmra.mrb[0].mxu0 %v3597
        %v3636 = vpop.f32.mrb[0].mxu0
        %v3637 = vadd.f32 0.0, %v3636
        %v3638 = vpop.f32.mrb[0].mxu0
        %v3639 = vpop.f32.mrb[0].mxu0
        %v3640 = vpop.f32.mrb[0].mxu0
        %3641 = vdwg.mxu0
        %3643 = vrot.lane.b32.xlu0 %v3542, 120
        %v3644 = vpop.permute.xlu0 %3643
        %v3646 = vsel %vm586, %v3542, 0
        %v3649 = vsel %vm586, %v3644, 0
        %3651 = vmatprep.subr.bf16.mxu0 0
        %3652 = vmatpush1.bf16.xpose.msra.mxu0 %v3649
        %3653 = vmatprep.subr.bf16.mxu0 0
        %3654 = vmatpush1.bf16.xpose.msra.mxu0 0
        %3655 = vmatprep.subr.bf16.mxu0 0
        %3656 = vmatpush1.bf16.xpose.msra.mxu0 0
        %3657 = vmatprep.subr.bf16.mxu0 0
        %3658 = vmatpush1.bf16.xpose.msra.mxu0 0
        %3659 = vmatprep.subr.bf16.mxu0 0
        %3660 = vmatpush1.bf16.xpose.msra.mxu0 0
        %3661 = vmatprep.subr.bf16.mxu0 0
        %3662 = vmatpush1.bf16.xpose.msra.mxu0 0
        %3663 = vmatprep.subr.bf16.mxu0 0
        %3664 = vmatpush1.bf16.xpose.msra.mxu0 0
        %3665 = vmatprep.subr.bf16.mxu0 0
        %3666 = vmatpush1.bf16.xpose.msra.mxu0 0
        %3667 = vmatprep.subr.bf16.mxu0 0
        %3668 = vmatpush1.bf16.xpose.msra.mxu0 0
        %3669 = vmatprep.subr.bf16.mxu0 0
        %3670 = vmatpush1.bf16.xpose.msra.mxu0 0
        %3671 = vmatprep.subr.bf16.mxu0 0
        %3672 = vmatpush1.bf16.xpose.msra.mxu0 0
        %3673 = vmatprep.subr.bf16.mxu0 0
        %3674 = vmatpush1.bf16.xpose.msra.mxu0 0
        %3675 = vmatprep.subr.bf16.mxu0 0
        %3676 = vmatpush1.bf16.xpose.msra.mxu0 0
        %3677 = vmatprep.subr.bf16.mxu0 0
        %3678 = vmatpush1.bf16.xpose.msra.mxu0 0
        %3679 = vmatprep.subr.bf16.mxu0 0
        %3680 = vmatpush1.bf16.xpose.msra.mxu0 0
        %3681 = vmatprep.subr.bf16.mxu0 0
        %3682 = vmatpush1.bf16.xpose.msra.mxu0 0
        %3683 = vmatprep.mubr.bf16.mxu0 0
        %3684 = vmatmul.mubr.bf16.gmra.mrb[0].mxu0 %v3646
        %v3685 = vpop.f32.mrb[0].mxu0
        %v3686 = vadd.f32 0.0, %v3685
        %v3687 = vpop.f32.mrb[0].mxu0
        %v3688 = vpop.f32.mrb[0].mxu0
        %v3689 = vpop.f32.mrb[0].mxu0
        %3690 = vdwg.mxu0
        %3692 = vrot.lane.b32.xlu0 %v3543, 120
        %v3693 = vpop.permute.xlu0 %3692
        %v3695 = vsel %vm586, %v3543, 0
        %v3698 = vsel %vm586, %v3693, 0
        %3700 = vmatprep.subr.bf16.mxu0 0
        %3701 = vmatpush1.bf16.xpose.msra.mxu0 %v3698
        %3702 = vmatprep.subr.bf16.mxu0 0
        %3703 = vmatpush1.bf16.xpose.msra.mxu0 0
        %3704 = vmatprep.subr.bf16.mxu0 0
        %3705 = vmatpush1.bf16.xpose.msra.mxu0 0
        %3706 = vmatprep.subr.bf16.mxu0 0
        %3707 = vmatpush1.bf16.xpose.msra.mxu0 0
        %3708 = vmatprep.subr.bf16.mxu0 0
        %3709 = vmatpush1.bf16.xpose.msra.mxu0 0
        %3710 = vmatprep.subr.bf16.mxu0 0
        %3711 = vmatpush1.bf16.xpose.msra.mxu0 0
        %3712 = vmatprep.subr.bf16.mxu0 0
        %3713 = vmatpush1.bf16.xpose.msra.mxu0 0
        %3714 = vmatprep.subr.bf16.mxu0 0
        %3715 = vmatpush1.bf16.xpose.msra.mxu0 0
        %3716 = vmatprep.subr.bf16.mxu0 0
        %3717 = vmatpush1.bf16.xpose.msra.mxu0 0
        %3718 = vmatprep.subr.bf16.mxu0 0
        %3719 = vmatpush1.bf16.xpose.msra.mxu0 0
        %3720 = vmatprep.subr.bf16.mxu0 0
        %3721 = vmatpush1.bf16.xpose.msra.mxu0 0
        %3722 = vmatprep.subr.bf16.mxu0 0
        %3723 = vmatpush1.bf16.xpose.msra.mxu0 0
        %3724 = vmatprep.subr.bf16.mxu0 0
        %3725 = vmatpush1.bf16.xpose.msra.mxu0 0
        %3726 = vmatprep.subr.bf16.mxu0 0
        %3727 = vmatpush1.bf16.xpose.msra.mxu0 0
        %3728 = vmatprep.subr.bf16.mxu0 0
        %3729 = vmatpush1.bf16.xpose.msra.mxu0 0
        %3730 = vmatprep.subr.bf16.mxu0 0
        %3731 = vmatpush1.bf16.xpose.msra.mxu0 0
        %3732 = vmatprep.mubr.bf16.mxu0 0
        %3733 = vmatmul.mubr.bf16.gmra.mrb[0].mxu0 %v3695
        %v3734 = vpop.f32.mrb[0].mxu0
        %v3735 = vadd.f32 0.0, %v3734
        %v3736 = vpop.f32.mrb[0].mxu0
        %v3737 = vpop.f32.mrb[0].mxu0
        %v3738 = vpop.f32.mrb[0].mxu0
        %3739 = vdwg.mxu0
        %v3740 = vsel %vm586, %v3588, -inf
        %3741 = vmax.xlane.f32.xlu0 %v3740
        %v3742 = vpop.xlane.xlu0 %3741
        %v3743 = vsel %vm586, %v3637, -inf
        %3744 = vmax.xlane.f32.xlu0 %v3743
        %v3745 = vpop.xlane.xlu0 %3744
        %v3746 = vsel %vm586, %v3686, -inf
        %3747 = vmax.xlane.f32.xlu0 %v3746
        %v3748 = vpop.xlane.xlu0 %3747
        %v3749 = vsel %vm586, %v3735, -inf
        %3750 = vmax.xlane.f32.xlu0 %v3749
        %v3751 = vpop.xlane.xlu0 %3750
        %v3752 = vsub.f32 %v3588, %v3742
        %v3753 = vsub.f32 %v3637, %v3745
        %v3754 = vsub.f32 %v3686, %v3748
        %v3755 = vsub.f32 %v3735, %v3751
        %v3756 = vmul.f32 %v3752, 1.442695
        %v3757 = vpow.pop %v3756
        %v3758 = vmul.f32 %v3753, 1.442695
        %v3759 = vpow.pop %v3758
        %v3760 = vmul.f32 %v3754, 1.442695
        %v3761 = vpow.pop %v3760
        %v3762 = vmul.f32 %v3755, 1.442695
        %v3763 = vpow.pop %v3762
        %v3764 = vsel %vm586, %v3757, 0.0
        %3765 = vadd.xlane.f32.xlu0 %v3764
        %v3766 = vpop.xlane.xlu0 %3765
        %v3767 = vsel %vm586, %v3759, 0.0
        %3768 = vadd.xlane.f32.xlu0 %v3767
        %v3769 = vpop.xlane.xlu0 %3768
        %v3770 = vsel %vm586, %v3761, 0.0
        %3771 = vadd.xlane.f32.xlu0 %v3770
        %v3772 = vpop.xlane.xlu0 %3771
        %v3773 = vsel %vm586, %v3763, 0.0
        %3774 = vadd.xlane.f32.xlu0 %v3773
        %v3775 = vpop.xlane.xlu0 %3774
        %v3776 = vpack.c.bf16 %v3757, %v3757
        %v3777 = vpack.c.bf16 %v3759, %v3759
        %v3778 = vpack.c.bf16 %v3761, %v3761
        %v3779 = vpack.c.bf16 %v3763, %v3763
        %3780 = vrot.lane.b32.xlu0 %v3540, 112
        %v3781 = vpop.permute.xlu0 %3780
        %v3783 = vsel %vm586, %v3776, 0
        %v3786 = vsel %vm590, %v3781, 0
        %3788 = vmatprep.subr.bf16.mxu0 0
        %3789 = vmatpush1.bf16.msra.mxu0 %v3786
        %3790 = vmatprep.subr.bf16.mxu0 0
        %3791 = vmatpush1.bf16.msra.mxu0 0
        %3792 = vmatprep.subr.bf16.mxu0 0
        %3793 = vmatpush1.bf16.msra.mxu0 0
        %3794 = vmatprep.subr.bf16.mxu0 0
        %3795 = vmatpush1.bf16.msra.mxu0 0
        %3796 = vmatprep.subr.bf16.mxu0 0
        %3797 = vmatpush1.bf16.msra.mxu0 0
        %3798 = vmatprep.subr.bf16.mxu0 0
        %3799 = vmatpush1.bf16.msra.mxu0 0
        %3800 = vmatprep.subr.bf16.mxu0 0
        %3801 = vmatpush1.bf16.msra.mxu0 0
        %3802 = vmatprep.subr.bf16.mxu0 0
        %3803 = vmatpush1.bf16.msra.mxu0 0
        %3804 = vmatprep.subr.bf16.mxu0 0
        %3805 = vmatpush1.bf16.msra.mxu0 0
        %3806 = vmatprep.subr.bf16.mxu0 0
        %3807 = vmatpush1.bf16.msra.mxu0 0
        %3808 = vmatprep.subr.bf16.mxu0 0
        %3809 = vmatpush1.bf16.msra.mxu0 0
        %3810 = vmatprep.subr.bf16.mxu0 0
        %3811 = vmatpush1.bf16.msra.mxu0 0
        %3812 = vmatprep.subr.bf16.mxu0 0
        %3813 = vmatpush1.bf16.msra.mxu0 0
        %3814 = vmatprep.subr.bf16.mxu0 0
        %3815 = vmatpush1.bf16.msra.mxu0 0
        %3816 = vmatprep.subr.bf16.mxu0 0
        %3817 = vmatpush1.bf16.msra.mxu0 0
        %3818 = vmatprep.subr.bf16.mxu0 0
        %3819 = vmatpush1.bf16.msra.mxu0 0
        %3820 = vmatprep.mubr.bf16.mxu0 0
        %3821 = vmatmul.mubr.bf16.gmra.mrb[0].mxu0 %v3783
        %v3822 = vpop.f32.mrb[0].mxu0
        %v3823 = vadd.f32 0.0, %v3822
        %v3824 = vpop.f32.mrb[0].mxu0
        %v3825 = vpop.f32.mrb[0].mxu0
        %v3826 = vpop.f32.mrb[0].mxu0
        %3827 = vdwg.mxu0
        %3828 = vrot.lane.b32.xlu0 %v3541, 112
        %v3829 = vpop.permute.xlu0 %3828
        %v3831 = vsel %vm586, %v3777, 0
        %v3834 = vsel %vm590, %v3829, 0
        %3836 = vmatprep.subr.bf16.mxu0 0
        %3837 = vmatpush1.bf16.msra.mxu0 %v3834
        %3838 = vmatprep.subr.bf16.mxu0 0
        %3839 = vmatpush1.bf16.msra.mxu0 0
        %3840 = vmatprep.subr.bf16.mxu0 0
        %3841 = vmatpush1.bf16.msra.mxu0 0
        %3842 = vmatprep.subr.bf16.mxu0 0
        %3843 = vmatpush1.bf16.msra.mxu0 0
        %3844 = vmatprep.subr.bf16.mxu0 0
        %3845 = vmatpush1.bf16.msra.mxu0 0
        %3846 = vmatprep.subr.bf16.mxu0 0
        %3847 = vmatpush1.bf16.msra.mxu0 0
        %3848 = vmatprep.subr.bf16.mxu0 0
        %3849 = vmatpush1.bf16.msra.mxu0 0
        %3850 = vmatprep.subr.bf16.mxu0 0
        %3851 = vmatpush1.bf16.msra.mxu0 0
        %3852 = vmatprep.subr.bf16.mxu0 0
        %3853 = vmatpush1.bf16.msra.mxu0 0
        %3854 = vmatprep.subr.bf16.mxu0 0
        %3855 = vmatpush1.bf16.msra.mxu0 0
        %3856 = vmatprep.subr.bf16.mxu0 0
        %3857 = vmatpush1.bf16.msra.mxu0 0
        %3858 = vmatprep.subr.bf16.mxu0 0
        %3859 = vmatpush1.bf16.msra.mxu0 0
        %3860 = vmatprep.subr.bf16.mxu0 0
        %3861 = vmatpush1.bf16.msra.mxu0 0
        %3862 = vmatprep.subr.bf16.mxu0 0
        %3863 = vmatpush1.bf16.msra.mxu0 0
        %3864 = vmatprep.subr.bf16.mxu0 0
        %3865 = vmatpush1.bf16.msra.mxu0 0
        %3866 = vmatprep.subr.bf16.mxu0 0
        %3867 = vmatpush1.bf16.msra.mxu0 0
        %3868 = vmatprep.mubr.bf16.mxu0 0
        %3869 = vmatmul.mubr.bf16.gmra.mrb[0].mxu0 %v3831
        %v3870 = vpop.f32.mrb[0].mxu0
        %v3871 = vadd.f32 0.0, %v3870
        %v3872 = vpop.f32.mrb[0].mxu0
        %v3873 = vpop.f32.mrb[0].mxu0
        %v3874 = vpop.f32.mrb[0].mxu0
        %3875 = vdwg.mxu0
        %3876 = vrot.lane.b32.xlu0 %v3542, 112
        %v3877 = vpop.permute.xlu0 %3876
        %v3879 = vsel %vm586, %v3778, 0
        %v3882 = vsel %vm590, %v3877, 0
        %3884 = vmatprep.subr.bf16.mxu0 0
        %3885 = vmatpush1.bf16.msra.mxu0 %v3882
        %3886 = vmatprep.subr.bf16.mxu0 0
        %3887 = vmatpush1.bf16.msra.mxu0 0
        %3888 = vmatprep.subr.bf16.mxu0 0
        %3889 = vmatpush1.bf16.msra.mxu0 0
        %3890 = vmatprep.subr.bf16.mxu0 0
        %3891 = vmatpush1.bf16.msra.mxu0 0
        %3892 = vmatprep.subr.bf16.mxu0 0
        %3893 = vmatpush1.bf16.msra.mxu0 0
        %3894 = vmatprep.subr.bf16.mxu0 0
        %3895 = vmatpush1.bf16.msra.mxu0 0
        %3896 = vmatprep.subr.bf16.mxu0 0
        %3897 = vmatpush1.bf16.msra.mxu0 0
        %3898 = vmatprep.subr.bf16.mxu0 0
        %3899 = vmatpush1.bf16.msra.mxu0 0
        %3900 = vmatprep.subr.bf16.mxu0 0
        %3901 = vmatpush1.bf16.msra.mxu0 0
        %3902 = vmatprep.subr.bf16.mxu0 0
        %3903 = vmatpush1.bf16.msra.mxu0 0
        %3904 = vmatprep.subr.bf16.mxu0 0
        %3905 = vmatpush1.bf16.msra.mxu0 0
        %3906 = vmatprep.subr.bf16.mxu0 0
        %3907 = vmatpush1.bf16.msra.mxu0 0
        %3908 = vmatprep.subr.bf16.mxu0 0
        %3909 = vmatpush1.bf16.msra.mxu0 0
        %3910 = vmatprep.subr.bf16.mxu0 0
        %3911 = vmatpush1.bf16.msra.mxu0 0
        %3912 = vmatprep.subr.bf16.mxu0 0
        %3913 = vmatpush1.bf16.msra.mxu0 0
        %3914 = vmatprep.subr.bf16.mxu0 0
        %3915 = vmatpush1.bf16.msra.mxu0 0
        %3916 = vmatprep.mubr.bf16.mxu0 0
        %3917 = vmatmul.mubr.bf16.gmra.mrb[0].mxu0 %v3879
        %v3918 = vpop.f32.mrb[0].mxu0
        %v3919 = vadd.f32 0.0, %v3918
        %v3920 = vpop.f32.mrb[0].mxu0
        %v3921 = vpop.f32.mrb[0].mxu0
        %v3922 = vpop.f32.mrb[0].mxu0
        %3923 = vdwg.mxu0
        %3924 = vrot.lane.b32.xlu0 %v3543, 112
        %v3925 = vpop.permute.xlu0 %3924
        %v3927 = vsel %vm586, %v3779, 0
        %v3930 = vsel %vm590, %v3925, 0
        %3932 = vmatprep.subr.bf16.mxu0 0
        %3933 = vmatpush1.bf16.msra.mxu0 %v3930
        %3934 = vmatprep.subr.bf16.mxu0 0
        %3935 = vmatpush1.bf16.msra.mxu0 0
        %3936 = vmatprep.subr.bf16.mxu0 0
        %3937 = vmatpush1.bf16.msra.mxu0 0
        %3938 = vmatprep.subr.bf16.mxu0 0
        %3939 = vmatpush1.bf16.msra.mxu0 0
        %3940 = vmatprep.subr.bf16.mxu0 0
        %3941 = vmatpush1.bf16.msra.mxu0 0
        %3942 = vmatprep.subr.bf16.mxu0 0
        %3943 = vmatpush1.bf16.msra.mxu0 0
        %3944 = vmatprep.subr.bf16.mxu0 0
        %3945 = vmatpush1.bf16.msra.mxu0 0
        %3946 = vmatprep.subr.bf16.mxu0 0
        %3947 = vmatpush1.bf16.msra.mxu0 0
        %3948 = vmatprep.subr.bf16.mxu0 0
        %3949 = vmatpush1.bf16.msra.mxu0 0
        %3950 = vmatprep.subr.bf16.mxu0 0
        %3951 = vmatpush1.bf16.msra.mxu0 0
        %3952 = vmatprep.subr.bf16.mxu0 0
        %3953 = vmatpush1.bf16.msra.mxu0 0
        %3954 = vmatprep.subr.bf16.mxu0 0
        %3955 = vmatpush1.bf16.msra.mxu0 0
        %3956 = vmatprep.subr.bf16.mxu0 0
        %3957 = vmatpush1.bf16.msra.mxu0 0
        %3958 = vmatprep.subr.bf16.mxu0 0
        %3959 = vmatpush1.bf16.msra.mxu0 0
        %3960 = vmatprep.subr.bf16.mxu0 0
        %3961 = vmatpush1.bf16.msra.mxu0 0
        %3962 = vmatprep.subr.bf16.mxu0 0
        %3963 = vmatpush1.bf16.msra.mxu0 0
        %3964 = vmatprep.mubr.bf16.mxu0 0
        %3965 = vmatmul.mubr.bf16.gmra.mrb[0].mxu0 %v3927
        %v3966 = vpop.f32.mrb[0].mxu0
        %v3967 = vadd.f32 0.0, %v3966
        %v3968 = vpop.f32.mrb[0].mxu0
        %v3969 = vpop.f32.mrb[0].mxu0
        %v3970 = vpop.f32.mrb[0].mxu0
        %3971 = vdwg.mxu0
        %v3972 = vrcp.pop %v3766
        %v3973 = vrcp.pop %v3769
        %v3974 = vrcp.pop %v3772
        %v3975 = vrcp.pop %v3775
        %v3976 = vmul.f32 %v3823, %v3972
        %v3977 = vmul.f32 %v3871, %v3973
        %v3978 = vmul.f32 %v3919, %v3974
        %v3979 = vmul.f32 %v3967, %v3975
        %v3980 = vpack.c.bf16 %v3976, %v3976
        %v3981 = vpack.c.bf16 %v3977, %v3977
        %v3982 = vpack.c.bf16 %v3978, %v3978
        %v3983 = vpack.c.bf16 %v3979, %v3979
        %s3984 = scalar_lea.vmem %s12, 32
        %v3985 = vld [vmem:[%s3984] sm:$0xf]
        %v3986 = vld [vmem:[%s3984 + $0x4] sm:$0xf]
        %v3987 = vld [vmem:[%s3984 + $0x8] sm:$0xf]
        %v3988 = vld [vmem:[%s3984 + $0xc] sm:$0xf]
        %v3990 = vsel %vm586, %v3980, 0
        %v3993 = vsel %vm590, %v3985, 0
        %3995 = vmatprep.subr.bf16.mxu0 0
        %3996 = vmatpush1.bf16.msra.mxu0 %v3993
        %3997 = vmatprep.subr.bf16.mxu0 0
        %3998 = vmatpush1.bf16.msra.mxu0 0
        %3999 = vmatprep.subr.bf16.mxu0 0
        %4000 = vmatpush1.bf16.msra.mxu0 0
        %4001 = vmatprep.subr.bf16.mxu0 0
        %4002 = vmatpush1.bf16.msra.mxu0 0
        %4003 = vmatprep.subr.bf16.mxu0 0
        %4004 = vmatpush1.bf16.msra.mxu0 0
        %4005 = vmatprep.subr.bf16.mxu0 0
        %4006 = vmatpush1.bf16.msra.mxu0 0
        %4007 = vmatprep.subr.bf16.mxu0 0
        %4008 = vmatpush1.bf16.msra.mxu0 0
        %4009 = vmatprep.subr.bf16.mxu0 0
        %4010 = vmatpush1.bf16.msra.mxu0 0
        %4011 = vmatprep.subr.bf16.mxu0 0
        %4012 = vmatpush1.bf16.msra.mxu0 0
        %4013 = vmatprep.subr.bf16.mxu0 0
        %4014 = vmatpush1.bf16.msra.mxu0 0
        %4015 = vmatprep.subr.bf16.mxu0 0
        %4016 = vmatpush1.bf16.msra.mxu0 0
        %4017 = vmatprep.subr.bf16.mxu0 0
        %4018 = vmatpush1.bf16.msra.mxu0 0
        %4019 = vmatprep.subr.bf16.mxu0 0
        %4020 = vmatpush1.bf16.msra.mxu0 0
        %4021 = vmatprep.subr.bf16.mxu0 0
        %4022 = vmatpush1.bf16.msra.mxu0 0
        %4023 = vmatprep.subr.bf16.mxu0 0
        %4024 = vmatpush1.bf16.msra.mxu0 0
        %4025 = vmatprep.subr.bf16.mxu0 0
        %4026 = vmatpush1.bf16.msra.mxu0 0
        %4027 = vmatprep.mubr.bf16.mxu0 0
        %4028 = vmatmul.mubr.bf16.gmra.mrb[0].mxu0 %v3990
        %v4029 = vpop.f32.mrb[0].mxu0
        %v4030 = vadd.f32 0.0, %v4029
        %v4031 = vpop.f32.mrb[0].mxu0
        %v4032 = vpop.f32.mrb[0].mxu0
        %v4033 = vpop.f32.mrb[0].mxu0
        %4034 = vdwg.mxu0
        %v4036 = vsel %vm586, %v3981, 0
        %v4039 = vsel %vm590, %v3986, 0
        %4041 = vmatprep.subr.bf16.mxu0 0
        %4042 = vmatpush1.bf16.msra.mxu0 %v4039
        %4043 = vmatprep.subr.bf16.mxu0 0
        %4044 = vmatpush1.bf16.msra.mxu0 0
        %4045 = vmatprep.subr.bf16.mxu0 0
        %4046 = vmatpush1.bf16.msra.mxu0 0
        %4047 = vmatprep.subr.bf16.mxu0 0
        %4048 = vmatpush1.bf16.msra.mxu0 0
        %4049 = vmatprep.subr.bf16.mxu0 0
        %4050 = vmatpush1.bf16.msra.mxu0 0
        %4051 = vmatprep.subr.bf16.mxu0 0
        %4052 = vmatpush1.bf16.msra.mxu0 0
        %4053 = vmatprep.subr.bf16.mxu0 0
        %4054 = vmatpush1.bf16.msra.mxu0 0
        %4055 = vmatprep.subr.bf16.mxu0 0
        %4056 = vmatpush1.bf16.msra.mxu0 0
        %4057 = vmatprep.subr.bf16.mxu0 0
        %4058 = vmatpush1.bf16.msra.mxu0 0
        %4059 = vmatprep.subr.bf16.mxu0 0
        %4060 = vmatpush1.bf16.msra.mxu0 0
        %4061 = vmatprep.subr.bf16.mxu0 0
        %4062 = vmatpush1.bf16.msra.mxu0 0
        %4063 = vmatprep.subr.bf16.mxu0 0
        %4064 = vmatpush1.bf16.msra.mxu0 0
        %4065 = vmatprep.subr.bf16.mxu0 0
        %4066 = vmatpush1.bf16.msra.mxu0 0
        %4067 = vmatprep.subr.bf16.mxu0 0
        %4068 = vmatpush1.bf16.msra.mxu0 0
        %4069 = vmatprep.subr.bf16.mxu0 0
        %4070 = vmatpush1.bf16.msra.mxu0 0
        %4071 = vmatprep.subr.bf16.mxu0 0
        %4072 = vmatpush1.bf16.msra.mxu0 0
        %4073 = vmatprep.mubr.bf16.mxu0 0
        %4074 = vmatmul.mubr.bf16.gmra.mrb[0].mxu0 %v4036
        %v4075 = vpop.f32.mrb[0].mxu0
        %v4076 = vadd.f32 0.0, %v4075
        %v4077 = vpop.f32.mrb[0].mxu0
        %v4078 = vpop.f32.mrb[0].mxu0
        %v4079 = vpop.f32.mrb[0].mxu0
        %4080 = vdwg.mxu0
        %v4082 = vsel %vm586, %v3982, 0
        %v4085 = vsel %vm590, %v3987, 0
        %4087 = vmatprep.subr.bf16.mxu0 0
        %4088 = vmatpush1.bf16.msra.mxu0 %v4085
        %4089 = vmatprep.subr.bf16.mxu0 0
        %4090 = vmatpush1.bf16.msra.mxu0 0
        %4091 = vmatprep.subr.bf16.mxu0 0
        %4092 = vmatpush1.bf16.msra.mxu0 0
        %4093 = vmatprep.subr.bf16.mxu0 0
        %4094 = vmatpush1.bf16.msra.mxu0 0
        %4095 = vmatprep.subr.bf16.mxu0 0
        %4096 = vmatpush1.bf16.msra.mxu0 0
        %4097 = vmatprep.subr.bf16.mxu0 0
        %4098 = vmatpush1.bf16.msra.mxu0 0
        %4099 = vmatprep.subr.bf16.mxu0 0
        %4100 = vmatpush1.bf16.msra.mxu0 0
        %4101 = vmatprep.subr.bf16.mxu0 0
        %4102 = vmatpush1.bf16.msra.mxu0 0
        %4103 = vmatprep.subr.bf16.mxu0 0
        %4104 = vmatpush1.bf16.msra.mxu0 0
        %4105 = vmatprep.subr.bf16.mxu0 0
        %4106 = vmatpush1.bf16.msra.mxu0 0
        %4107 = vmatprep.subr.bf16.mxu0 0
        %4108 = vmatpush1.bf16.msra.mxu0 0
        %4109 = vmatprep.subr.bf16.mxu0 0
        %4110 = vmatpush1.bf16.msra.mxu0 0
        %4111 = vmatprep.subr.bf16.mxu0 0
        %4112 = vmatpush1.bf16.msra.mxu0 0
        %4113 = vmatprep.subr.bf16.mxu0 0
        %4114 = vmatpush1.bf16.msra.mxu0 0
        %4115 = vmatprep.subr.bf16.mxu0 0
        %4116 = vmatpush1.bf16.msra.mxu0 0
        %4117 = vmatprep.subr.bf16.mxu0 0
        %4118 = vmatpush1.bf16.msra.mxu0 0
        %4119 = vmatprep.mubr.bf16.mxu0 0
        %4120 = vmatmul.mubr.bf16.gmra.mrb[0].mxu0 %v4082
        %v4121 = vpop.f32.mrb[0].mxu0
        %v4122 = vadd.f32 0.0, %v4121
        %v4123 = vpop.f32.mrb[0].mxu0
        %v4124 = vpop.f32.mrb[0].mxu0
        %v4125 = vpop.f32.mrb[0].mxu0
        %4126 = vdwg.mxu0
        %v4128 = vsel %vm586, %v3983, 0
        %v4131 = vsel %vm590, %v3988, 0
        %4133 = vmatprep.subr.bf16.mxu0 0
        %4134 = vmatpush1.bf16.msra.mxu0 %v4131
        %4135 = vmatprep.subr.bf16.mxu0 0
        %4136 = vmatpush1.bf16.msra.mxu0 0
        %4137 = vmatprep.subr.bf16.mxu0 0
        %4138 = vmatpush1.bf16.msra.mxu0 0
        %4139 = vmatprep.subr.bf16.mxu0 0
        %4140 = vmatpush1.bf16.msra.mxu0 0
        %4141 = vmatprep.subr.bf16.mxu0 0
        %4142 = vmatpush1.bf16.msra.mxu0 0
        %4143 = vmatprep.subr.bf16.mxu0 0
        %4144 = vmatpush1.bf16.msra.mxu0 0
        %4145 = vmatprep.subr.bf16.mxu0 0
        %4146 = vmatpush1.bf16.msra.mxu0 0
        %4147 = vmatprep.subr.bf16.mxu0 0
        %4148 = vmatpush1.bf16.msra.mxu0 0
        %4149 = vmatprep.subr.bf16.mxu0 0
        %4150 = vmatpush1.bf16.msra.mxu0 0
        %4151 = vmatprep.subr.bf16.mxu0 0
        %4152 = vmatpush1.bf16.msra.mxu0 0
        %4153 = vmatprep.subr.bf16.mxu0 0
        %4154 = vmatpush1.bf16.msra.mxu0 0
        %4155 = vmatprep.subr.bf16.mxu0 0
        %4156 = vmatpush1.bf16.msra.mxu0 0
        %4157 = vmatprep.subr.bf16.mxu0 0
        %4158 = vmatpush1.bf16.msra.mxu0 0
        %4159 = vmatprep.subr.bf16.mxu0 0
        %4160 = vmatpush1.bf16.msra.mxu0 0
        %4161 = vmatprep.subr.bf16.mxu0 0
        %4162 = vmatpush1.bf16.msra.mxu0 0
        %4163 = vmatprep.subr.bf16.mxu0 0
        %4164 = vmatpush1.bf16.msra.mxu0 0
        %4165 = vmatprep.mubr.bf16.mxu0 0
        %4166 = vmatmul.mubr.bf16.gmra.mrb[0].mxu0 %v4128
        %v4167 = vpop.f32.mrb[0].mxu0
        %v4168 = vadd.f32 0.0, %v4167
        %v4169 = vpop.f32.mrb[0].mxu0
        %v4170 = vpop.f32.mrb[0].mxu0
        %v4171 = vpop.f32.mrb[0].mxu0
        %4172 = vdwg.mxu0
        %v4173 = vsel %vm907, %v4030, 0.0
        %v4174 = vsel %vm907, %v4076, 0.0
        %v4175 = vadd.f32 %v4173, %v4174
        %v4176 = vsel %vm907, %v4122, 0.0
        %v4177 = vadd.f32 %v4175, %v4176
        %v4178 = vsel %vm907, %v4168, 0.0
        %v4179 = vadd.f32 %v4177, %v4178
        %v4180 = vlaneseq
        %v4181 = vshrl.u32 %v4180, 7
        %v4182 = vsub.s32 0, %v4181
        %v4183 = vrot.slane %v3281, %v4182
        %v4184 = vadd.f32 %v4179, %v4183
        %v4185 = vadd.f32 %v3072, %v4184
        %v4186 = vsel %vm907, %v4185, 0.0
        %4187 = vadd.xlane.f32.xlu0 %v4186
        %v4188 = vpop.xlane.xlu0 %4187
        %v4189 = vmul.f32 %v4188, 0.03125
        %v4190 = vmul.f32 %v4185, %v4185
        %v4191 = vsel %vm907, %v4190, 0.0
        %4192 = vadd.xlane.f32.xlu0 %v4191
        %v4193 = vpop.xlane.xlu0 %4192
        %v4194 = vmul.f32 %v4193, 0.03125
        %v4195 = vmul.f32 %v4189, %v4189
        %v4196 = vsub.f32 %v4194, %v4195
        %v4197 = vmax.f32 %v4196, 0.0
        %v4198 = vsub.f32 %v4185, %v4189
        %v4199 = vadd.f32 %v4197, 1e-05
        %v4200 = vrsqrt.pop %v4199
        %v4201 = vmul.f32 %v4198, %v4200
        %v4202 = vlaneseq
        %v4203 = vshrl.u32 %v4202, 7
        %v4204 = vsub.s32 1, %v4203
        %v4205 = vrot.slane %v3281, %v4204
        %v4206 = vmul.f32 %v4201, %v4205
        %v4207 = vlaneseq
        %v4208 = vshrl.u32 %v4207, 7
        %v4209 = vsub.s32 2, %v4208
        %v4210 = vrot.slane %v3281, %v4209
        %v4211 = vadd.f32 %v4206, %v4210
        %s4212 = scalar_lea.vmem %s13, 32
        %v4213 = vld [vmem:[%s4212] sm:$0xf]
        %v4214 = vld [vmem:[%s4212 + $0x4] sm:$0xf]
        %v4215 = vld [vmem:[%s4212 + $0x8] sm:$0xf]
        %v4216 = vld [vmem:[%s4212 + $0xc] sm:$0xf]
        %v4217 = vpack.c.bf16 %v4211, %v4211
        %s4218 = scalar_lea.vmem %s14, 2
        %v4219 = vld [vmem:[%s4218] sm:$0x1]
        %v4221 = vlaneseq
        %v4222 = vshrl.u32 %v4221, 7
        %v4223 = vsub.s32 0, %v4222
        %v4224 = vrot.slane %v4219, %v4223
        %v4230 = vunpack.c.l.b16 %v4213
        %v4231 = vunpack.c.l.b16 %v4214
        %v4232 = vunpack.c.l.b16 %v4215
        %v4233 = vunpack.c.l.b16 %v4216
        %v4234 = vpack.c.b16 %v4231, %v4230
        %v4235 = vpack.c.b16 %v4233, %v4232
        %v4239 = vsel %vm907, %v4217, 0
        %4241 = vmatprep.subr.bf16.mxu0 0
        %4242 = vmatpush1.bf16.msra.mxu0 %v4234
        %4243 = vmatprep.subr.bf16.mxu0 0
        %4244 = vmatpush1.bf16.msra.mxu0 %v4235
        %4245 = vmatprep.subr.bf16.mxu0 0
        %4246 = vmatpush1.bf16.msra.mxu0 0
        %4247 = vmatprep.subr.bf16.mxu0 0
        %4248 = vmatpush1.bf16.msra.mxu0 0
        %4249 = vmatprep.subr.bf16.mxu0 0
        %4250 = vmatpush1.bf16.msra.mxu0 0
        %4251 = vmatprep.subr.bf16.mxu0 0
        %4252 = vmatpush1.bf16.msra.mxu0 0
        %4253 = vmatprep.subr.bf16.mxu0 0
        %4254 = vmatpush1.bf16.msra.mxu0 0
        %4255 = vmatprep.subr.bf16.mxu0 0
        %4256 = vmatpush1.bf16.msra.mxu0 0
        %4257 = vmatprep.subr.bf16.mxu0 0
        %4258 = vmatpush1.bf16.msra.mxu0 0
        %4259 = vmatprep.subr.bf16.mxu0 0
        %4260 = vmatpush1.bf16.msra.mxu0 0
        %4261 = vmatprep.subr.bf16.mxu0 0
        %4262 = vmatpush1.bf16.msra.mxu0 0
        %4263 = vmatprep.subr.bf16.mxu0 0
        %4264 = vmatpush1.bf16.msra.mxu0 0
        %4265 = vmatprep.subr.bf16.mxu0 0
        %4266 = vmatpush1.bf16.msra.mxu0 0
        %4267 = vmatprep.subr.bf16.mxu0 0
        %4268 = vmatpush1.bf16.msra.mxu0 0
        %4269 = vmatprep.subr.bf16.mxu0 0
        %4270 = vmatpush1.bf16.msra.mxu0 0
        %4271 = vmatprep.subr.bf16.mxu0 0
        %4272 = vmatpush1.bf16.msra.mxu0 0
        %4273 = vmatprep.mubr.bf16.mxu0 0
        %4274 = vmatmul.mubr.bf16.gmra.mrb[0].mxu0 %v4239
        %v4275 = vpop.f32.mrb[0].mxu0
        %v4276 = vadd.f32 %v4224, %v4275
        %v4277 = vpop.f32.mrb[0].mxu0
        %v4278 = vpop.f32.mrb[0].mxu0
        %v4279 = vpop.f32.mrb[0].mxu0
        %4280 = vdwg.mxu0
        %v4281 = vmax.f32 %v4276, 0.0
        %s4282 = scalar_lea.vmem %s15, 64
        %v4283 = vld [vmem:[%s4282] sm:$0xf]
        %v4284 = vld [vmem:[%s4282 + $0x4] sm:$0xf]
        %v4285 = vld [vmem:[%s4282 + $0x8] sm:$0xf]
        %v4286 = vld [vmem:[%s4282 + $0xc] sm:$0xf]
        %v4287 = vld [vmem:[%s4282 + $0x10] sm:$0xf]
        %v4288 = vld [vmem:[%s4282 + $0x14] sm:$0xf]
        %v4289 = vld [vmem:[%s4282 + $0x18] sm:$0xf]
        %v4290 = vld [vmem:[%s4282 + $0x1c] sm:$0xf]
        %v4291 = vpack.c.bf16 %v4281, %v4281
        %v4292 = vlaneseq
        %v4293 = vshrl.u32 %v4292, 7
        %v4294 = vsub.s32 3, %v4293
        %v4295 = vrot.slane %v3281, %v4294
        %v4304 = vunpack.c.l.b16 %v4283
        %v4305 = vunpack.c.l.b16 %v4284
        %v4306 = vunpack.c.l.b16 %v4285
        %v4307 = vunpack.c.l.b16 %v4286
        %v4308 = vunpack.c.l.b16 %v4287
        %v4309 = vunpack.c.l.b16 %v4288
        %v4310 = vunpack.c.l.b16 %v4289
        %v4311 = vunpack.c.l.b16 %v4290
        %v4312 = vpack.c.b16 %v4305, %v4304
        %v4313 = vpack.c.b16 %v4307, %v4306
        %v4314 = vpack.c.b16 %v4309, %v4308
        %v4315 = vpack.c.b16 %v4311, %v4310
        %v4321 = vsel %vm1883, %v4291, 0
        %4323 = vmatprep.subr.bf16.mxu0 0
        %4324 = vmatpush1.bf16.msra.mxu0 %v4312
        %4325 = vmatprep.subr.bf16.mxu0 0
        %4326 = vmatpush1.bf16.msra.mxu0 %v4313
        %4327 = vmatprep.subr.bf16.mxu0 0
        %4328 = vmatpush1.bf16.msra.mxu0 %v4314
        %4329 = vmatprep.subr.bf16.mxu0 0
        %4330 = vmatpush1.bf16.msra.mxu0 %v4315
        %4331 = vmatprep.subr.bf16.mxu0 0
        %4332 = vmatpush1.bf16.msra.mxu0 0
        %4333 = vmatprep.subr.bf16.mxu0 0
        %4334 = vmatpush1.bf16.msra.mxu0 0
        %4335 = vmatprep.subr.bf16.mxu0 0
        %4336 = vmatpush1.bf16.msra.mxu0 0
        %4337 = vmatprep.subr.bf16.mxu0 0
        %4338 = vmatpush1.bf16.msra.mxu0 0
        %4339 = vmatprep.subr.bf16.mxu0 0
        %4340 = vmatpush1.bf16.msra.mxu0 0
        %4341 = vmatprep.subr.bf16.mxu0 0
        %4342 = vmatpush1.bf16.msra.mxu0 0
        %4343 = vmatprep.subr.bf16.mxu0 0
        %4344 = vmatpush1.bf16.msra.mxu0 0
        %4345 = vmatprep.subr.bf16.mxu0 0
        %4346 = vmatpush1.bf16.msra.mxu0 0
        %4347 = vmatprep.subr.bf16.mxu0 0
        %4348 = vmatpush1.bf16.msra.mxu0 0
        %4349 = vmatprep.subr.bf16.mxu0 0
        %4350 = vmatpush1.bf16.msra.mxu0 0
        %4351 = vmatprep.subr.bf16.mxu0 0
        %4352 = vmatpush1.bf16.msra.mxu0 0
        %4353 = vmatprep.subr.bf16.mxu0 0
        %4354 = vmatpush1.bf16.msra.mxu0 0
        %4355 = vmatprep.mubr.bf16.mxu0 0
        %4356 = vmatmul.mubr.bf16.gmra.mrb[0].mxu0 %v4321
        %v4357 = vpop.f32.mrb[0].mxu0
        %v4358 = vadd.f32 %v4295, %v4357
        %v4359 = vpop.f32.mrb[0].mxu0
        %v4360 = vpop.f32.mrb[0].mxu0
        %v4361 = vpop.f32.mrb[0].mxu0
        %4362 = vdwg.mxu0
        %v4363 = vadd.f32 %v4211, %v4358
        %v4364 = vsel %vm907, %v4363, 0.0
        %4365 = vadd.xlane.f32.xlu0 %v4364
        %v4366 = vpop.xlane.xlu0 %4365
        %v4367 = vmul.f32 %v4366, 0.03125
        %v4368 = vmul.f32 %v4363, %v4363
        %v4369 = vsel %vm907, %v4368, 0.0
        %4370 = vadd.xlane.f32.xlu0 %v4369
        %v4371 = vpop.xlane.xlu0 %4370
        %v4372 = vmul.f32 %v4371, 0.03125
        %v4373 = vmul.f32 %v4367, %v4367
        %v4374 = vsub.f32 %v4372, %v4373
        %v4375 = vmax.f32 %v4374, 0.0
        %v4376 = vsub.f32 %v4363, %v4367
        %v4377 = vadd.f32 %v4375, 1e-05
        %v4378 = vrsqrt.pop %v4377
        %v4379 = vmul.f32 %v4376, %v4378
        %v4380 = vlaneseq
        %v4381 = vshrl.u32 %v4380, 7
        %v4382 = vsub.s32 4, %v4381
        %v4383 = vrot.slane %v3281, %v4382
        %v4384 = vmul.f32 %v4379, %v4383
        %v4385 = vlaneseq
        %v4386 = vshrl.u32 %v4385, 7
        %v4387 = vsub.s32 5, %v4386
        %v4388 = vrot.slane %v3281, %v4387
        %v4389 = vadd.f32 %v4384, %v4388
        %v4390 = vadd.f32 %v3073, %v4389
        %s4391 = scalar_lea.vmem %s16, 24
        %v4392 = vld [vmem:[%s4391] sm:$0x3f]
        %v4393 = vpack.c.bf16 %v4390, %v4390
        %s4394 = scalar_lea.vmem %s10, 192
        %v4395 = vld [vmem:[%s4394] sm:$0xf]
        %v4396 = vld [vmem:[%s4394 + $0x4] sm:$0xf]
        %v4397 = vld [vmem:[%s4394 + $0x8] sm:$0xf]
        %v4398 = vld [vmem:[%s4394 + $0xc] sm:$0xf]
        %v4399 = vld [vmem:[%s4394 + $0x10] sm:$0xf]
        %v4400 = vld [vmem:[%s4394 + $0x14] sm:$0xf]
        %v4401 = vld [vmem:[%s4394 + $0x18] sm:$0xf]
        %v4402 = vld [vmem:[%s4394 + $0x1c] sm:$0xf]
        %v4403 = vld [vmem:[%s4394 + $0x20] sm:$0xf]
        %v4404 = vld [vmem:[%s4394 + $0x24] sm:$0xf]
        %v4405 = vld [vmem:[%s4394 + $0x28] sm:$0xf]
        %v4406 = vld [vmem:[%s4394 + $0x2c] sm:$0xf]
        %v4407 = vld [vmem:[%s4394 + $0x30] sm:$0xf]
        %v4408 = vld [vmem:[%s4394 + $0x34] sm:$0xf]
        %v4409 = vld [vmem:[%s4394 + $0x38] sm:$0xf]
        %v4410 = vld [vmem:[%s4394 + $0x3c] sm:$0xf]
        %s4411 = scalar_lea.vmem %s11, 12
        %v4412 = vld [vmem:[%s4411] sm:$0x1]
        %v4413 = vld [vmem:[%s4411 + $0x1] sm:$0x1]
        %v4414 = vld [vmem:[%s4411 + $0x2] sm:$0x1]
        %v4415 = vld [vmem:[%s4411 + $0x3] sm:$0x1]
        %v4420 = vlaneseq
        %v4421 = vshrl.u32 %v4420, 7
        %v4422 = vsub.s32 0, %v4421
        %v4423 = vrot.slane %v4412, %v4422
        %v4424 = vlaneseq
        %v4425 = vshrl.u32 %v4424, 7
        %v4426 = vsub.s32 0, %v4425
        %v4427 = vrot.slane %v4413, %v4426
        %v4428 = vlaneseq
        %v4429 = vshrl.u32 %v4428, 7
        %v4430 = vsub.s32 0, %v4429
        %v4431 = vrot.slane %v4414, %v4430
        %v4432 = vlaneseq
        %v4433 = vshrl.u32 %v4432, 7
        %v4434 = vsub.s32 0, %v4433
        %v4435 = vrot.slane %v4415, %v4434
        %v4444 = vunpack.c.l.b16 %v4395
        %v4445 = vunpack.c.l.b16 %v4396
        %v4446 = vunpack.c.l.b16 %v4397
        %v4447 = vunpack.c.l.b16 %v4398
        %v4448 = vpack.c.b16 %v4445, %v4444
        %v4449 = vpack.c.b16 %v4447, %v4446
        %v4453 = vsel %vm907, %v4393, 0
        %4455 = vmatprep.subr.bf16.mxu0 0
        %4456 = vmatpush1.bf16.msra.mxu0 %v4448
        %4457 = vmatprep.subr.bf16.mxu0 0
        %4458 = vmatpush1.bf16.msra.mxu0 %v4449
        %4459 = vmatprep.subr.bf16.mxu0 0
        %4460 = vmatpush1.bf16.msra.mxu0 0
        %4461 = vmatprep.subr.bf16.mxu0 0
        %4462 = vmatpush1.bf16.msra.mxu0 0
        %4463 = vmatprep.subr.bf16.mxu0 0
        %4464 = vmatpush1.bf16.msra.mxu0 0
        %4465 = vmatprep.subr.bf16.mxu0 0
        %4466 = vmatpush1.bf16.msra.mxu0 0
        %4467 = vmatprep.subr.bf16.mxu0 0
        %4468 = vmatpush1.bf16.msra.mxu0 0
        %4469 = vmatprep.subr.bf16.mxu0 0
        %4470 = vmatpush1.bf16.msra.mxu0 0
        %4471 = vmatprep.subr.bf16.mxu0 0
        %4472 = vmatpush1.bf16.msra.mxu0 0
        %4473 = vmatprep.subr.bf16.mxu0 0
        %4474 = vmatpush1.bf16.msra.mxu0 0
        %4475 = vmatprep.subr.bf16.mxu0 0
        %4476 = vmatpush1.bf16.msra.mxu0 0
        %4477 = vmatprep.subr.bf16.mxu0 0
        %4478 = vmatpush1.bf16.msra.mxu0 0
        %4479 = vmatprep.subr.bf16.mxu0 0
        %4480 = vmatpush1.bf16.msra.mxu0 0
        %4481 = vmatprep.subr.bf16.mxu0 0
        %4482 = vmatpush1.bf16.msra.mxu0 0
        %4483 = vmatprep.subr.bf16.mxu0 0
        %4484 = vmatpush1.bf16.msra.mxu0 0
        %4485 = vmatprep.subr.bf16.mxu0 0
        %4486 = vmatpush1.bf16.msra.mxu0 0
        %4487 = vmatprep.mubr.bf16.mxu0 0
        %4488 = vmatmul.mubr.bf16.gmra.mrb[0].mxu0 %v4453
        %v4489 = vpop.f32.mrb[0].mxu0
        %v4490 = vadd.f32 %v4423, %v4489
        %v4491 = vpop.f32.mrb[0].mxu0
        %v4492 = vpop.f32.mrb[0].mxu0
        %v4493 = vpop.f32.mrb[0].mxu0
        %4494 = vdwg.mxu0
        %v4499 = vunpack.c.l.b16 %v4399
        %v4500 = vunpack.c.l.b16 %v4400
        %v4501 = vunpack.c.l.b16 %v4401
        %v4502 = vunpack.c.l.b16 %v4402
        %v4503 = vpack.c.b16 %v4500, %v4499
        %v4504 = vpack.c.b16 %v4502, %v4501
        %4507 = vmatprep.subr.bf16.mxu0 0
        %4508 = vmatpush1.bf16.msra.mxu0 %v4503
        %4509 = vmatprep.subr.bf16.mxu0 0
        %4510 = vmatpush1.bf16.msra.mxu0 %v4504
        %4511 = vmatprep.subr.bf16.mxu0 0
        %4512 = vmatpush1.bf16.msra.mxu0 0
        %4513 = vmatprep.subr.bf16.mxu0 0
        %4514 = vmatpush1.bf16.msra.mxu0 0
        %4515 = vmatprep.subr.bf16.mxu0 0
        %4516 = vmatpush1.bf16.msra.mxu0 0
        %4517 = vmatprep.subr.bf16.mxu0 0
        %4518 = vmatpush1.bf16.msra.mxu0 0
        %4519 = vmatprep.subr.bf16.mxu0 0
        %4520 = vmatpush1.bf16.msra.mxu0 0
        %4521 = vmatprep.subr.bf16.mxu0 0
        %4522 = vmatpush1.bf16.msra.mxu0 0
        %4523 = vmatprep.subr.bf16.mxu0 0
        %4524 = vmatpush1.bf16.msra.mxu0 0
        %4525 = vmatprep.subr.bf16.mxu0 0
        %4526 = vmatpush1.bf16.msra.mxu0 0
        %4527 = vmatprep.subr.bf16.mxu0 0
        %4528 = vmatpush1.bf16.msra.mxu0 0
        %4529 = vmatprep.subr.bf16.mxu0 0
        %4530 = vmatpush1.bf16.msra.mxu0 0
        %4531 = vmatprep.subr.bf16.mxu0 0
        %4532 = vmatpush1.bf16.msra.mxu0 0
        %4533 = vmatprep.subr.bf16.mxu0 0
        %4534 = vmatpush1.bf16.msra.mxu0 0
        %4535 = vmatprep.subr.bf16.mxu0 0
        %4536 = vmatpush1.bf16.msra.mxu0 0
        %4537 = vmatprep.subr.bf16.mxu0 0
        %4538 = vmatpush1.bf16.msra.mxu0 0
        %4539 = vmatprep.mubr.bf16.mxu0 0
        %4540 = vmatmul.mubr.bf16.gmra.mrb[0].mxu0 %v4453
        %v4541 = vpop.f32.mrb[0].mxu0
        %v4542 = vadd.f32 %v4427, %v4541
        %v4543 = vpop.f32.mrb[0].mxu0
        %v4544 = vpop.f32.mrb[0].mxu0
        %v4545 = vpop.f32.mrb[0].mxu0
        %4546 = vdwg.mxu0
        %v4551 = vunpack.c.l.b16 %v4403
        %v4552 = vunpack.c.l.b16 %v4404
        %v4553 = vunpack.c.l.b16 %v4405
        %v4554 = vunpack.c.l.b16 %v4406
        %v4555 = vpack.c.b16 %v4552, %v4551
        %v4556 = vpack.c.b16 %v4554, %v4553
        %4559 = vmatprep.subr.bf16.mxu0 0
        %4560 = vmatpush1.bf16.msra.mxu0 %v4555
        %4561 = vmatprep.subr.bf16.mxu0 0
        %4562 = vmatpush1.bf16.msra.mxu0 %v4556
        %4563 = vmatprep.subr.bf16.mxu0 0
        %4564 = vmatpush1.bf16.msra.mxu0 0
        %4565 = vmatprep.subr.bf16.mxu0 0
        %4566 = vmatpush1.bf16.msra.mxu0 0
        %4567 = vmatprep.subr.bf16.mxu0 0
        %4568 = vmatpush1.bf16.msra.mxu0 0
        %4569 = vmatprep.subr.bf16.mxu0 0
        %4570 = vmatpush1.bf16.msra.mxu0 0
        %4571 = vmatprep.subr.bf16.mxu0 0
        %4572 = vmatpush1.bf16.msra.mxu0 0
        %4573 = vmatprep.subr.bf16.mxu0 0
        %4574 = vmatpush1.bf16.msra.mxu0 0
        %4575 = vmatprep.subr.bf16.mxu0 0
        %4576 = vmatpush1.bf16.msra.mxu0 0
        %4577 = vmatprep.subr.bf16.mxu0 0
        %4578 = vmatpush1.bf16.msra.mxu0 0
        %4579 = vmatprep.subr.bf16.mxu0 0
        %4580 = vmatpush1.bf16.msra.mxu0 0
        %4581 = vmatprep.subr.bf16.mxu0 0
        %4582 = vmatpush1.bf16.msra.mxu0 0
        %4583 = vmatprep.subr.bf16.mxu0 0
        %4584 = vmatpush1.bf16.msra.mxu0 0
        %4585 = vmatprep.subr.bf16.mxu0 0
        %4586 = vmatpush1.bf16.msra.mxu0 0
        %4587 = vmatprep.subr.bf16.mxu0 0
        %4588 = vmatpush1.bf16.msra.mxu0 0
        %4589 = vmatprep.subr.bf16.mxu0 0
        %4590 = vmatpush1.bf16.msra.mxu0 0
        %4591 = vmatprep.mubr.bf16.mxu0 0
        %4592 = vmatmul.mubr.bf16.gmra.mrb[0].mxu0 %v4453
        %v4593 = vpop.f32.mrb[0].mxu0
        %v4594 = vadd.f32 %v4431, %v4593
        %v4595 = vpop.f32.mrb[0].mxu0
        %v4596 = vpop.f32.mrb[0].mxu0
        %v4597 = vpop.f32.mrb[0].mxu0
        %4598 = vdwg.mxu0
        %v4603 = vunpack.c.l.b16 %v4407
        %v4604 = vunpack.c.l.b16 %v4408
        %v4605 = vunpack.c.l.b16 %v4409
        %v4606 = vunpack.c.l.b16 %v4410
        %v4607 = vpack.c.b16 %v4604, %v4603
        %v4608 = vpack.c.b16 %v4606, %v4605
        %4611 = vmatprep.subr.bf16.mxu0 0
        %4612 = vmatpush1.bf16.msra.mxu0 %v4607
        %4613 = vmatprep.subr.bf16.mxu0 0
        %4614 = vmatpush1.bf16.msra.mxu0 %v4608
        %4615 = vmatprep.subr.bf16.mxu0 0
        %4616 = vmatpush1.bf16.msra.mxu0 0
        %4617 = vmatprep.subr.bf16.mxu0 0
        %4618 = vmatpush1.bf16.msra.mxu0 0
        %4619 = vmatprep.subr.bf16.mxu0 0
        %4620 = vmatpush1.bf16.msra.mxu0 0
        %4621 = vmatprep.subr.bf16.mxu0 0
        %4622 = vmatpush1.bf16.msra.mxu0 0
        %4623 = vmatprep.subr.bf16.mxu0 0
        %4624 = vmatpush1.bf16.msra.mxu0 0
        %4625 = vmatprep.subr.bf16.mxu0 0
        %4626 = vmatpush1.bf16.msra.mxu0 0
        %4627 = vmatprep.subr.bf16.mxu0 0
        %4628 = vmatpush1.bf16.msra.mxu0 0
        %4629 = vmatprep.subr.bf16.mxu0 0
        %4630 = vmatpush1.bf16.msra.mxu0 0
        %4631 = vmatprep.subr.bf16.mxu0 0
        %4632 = vmatpush1.bf16.msra.mxu0 0
        %4633 = vmatprep.subr.bf16.mxu0 0
        %4634 = vmatpush1.bf16.msra.mxu0 0
        %4635 = vmatprep.subr.bf16.mxu0 0
        %4636 = vmatpush1.bf16.msra.mxu0 0
        %4637 = vmatprep.subr.bf16.mxu0 0
        %4638 = vmatpush1.bf16.msra.mxu0 0
        %4639 = vmatprep.subr.bf16.mxu0 0
        %4640 = vmatpush1.bf16.msra.mxu0 0
        %4641 = vmatprep.subr.bf16.mxu0 0
        %4642 = vmatpush1.bf16.msra.mxu0 0
        %4643 = vmatprep.mubr.bf16.mxu0 0
        %4644 = vmatmul.mubr.bf16.gmra.mrb[0].mxu0 %v4453
        %v4645 = vpop.f32.mrb[0].mxu0
        %v4646 = vadd.f32 %v4435, %v4645
        %v4647 = vpop.f32.mrb[0].mxu0
        %v4648 = vpop.f32.mrb[0].mxu0
        %v4649 = vpop.f32.mrb[0].mxu0
        %4650 = vdwg.mxu0
        %v4651 = vpack.c.bf16 %v4490, %v4490
        %v4652 = vpack.c.bf16 %v4542, %v4542
        %v4653 = vpack.c.bf16 %v4594, %v4594
        %v4654 = vpack.c.bf16 %v4646, %v4646
        %4656 = vrot.lane.b32.xlu0 %v4651, 120
        %v4657 = vpop.permute.xlu0 %4656
        %v4659 = vsel %vm586, %v4651, 0
        %v4662 = vsel %vm586, %v4657, 0
        %4664 = vmatprep.subr.bf16.mxu0 0
        %4665 = vmatpush1.bf16.xpose.msra.mxu0 %v4662
        %4666 = vmatprep.subr.bf16.mxu0 0
        %4667 = vmatpush1.bf16.xpose.msra.mxu0 0
        %4668 = vmatprep.subr.bf16.mxu0 0
        %4669 = vmatpush1.bf16.xpose.msra.mxu0 0
        %4670 = vmatprep.subr.bf16.mxu0 0
        %4671 = vmatpush1.bf16.xpose.msra.mxu0 0
        %4672 = vmatprep.subr.bf16.mxu0 0
        %4673 = vmatpush1.bf16.xpose.msra.mxu0 0
        %4674 = vmatprep.subr.bf16.mxu0 0
        %4675 = vmatpush1.bf16.xpose.msra.mxu0 0
        %4676 = vmatprep.subr.bf16.mxu0 0
        %4677 = vmatpush1.bf16.xpose.msra.mxu0 0
        %4678 = vmatprep.subr.bf16.mxu0 0
        %4679 = vmatpush1.bf16.xpose.msra.mxu0 0
        %4680 = vmatprep.subr.bf16.mxu0 0
        %4681 = vmatpush1.bf16.xpose.msra.mxu0 0
        %4682 = vmatprep.subr.bf16.mxu0 0
        %4683 = vmatpush1.bf16.xpose.msra.mxu0 0
        %4684 = vmatprep.subr.bf16.mxu0 0
        %4685 = vmatpush1.bf16.xpose.msra.mxu0 0
        %4686 = vmatprep.subr.bf16.mxu0 0
        %4687 = vmatpush1.bf16.xpose.msra.mxu0 0
        %4688 = vmatprep.subr.bf16.mxu0 0
        %4689 = vmatpush1.bf16.xpose.msra.mxu0 0
        %4690 = vmatprep.subr.bf16.mxu0 0
        %4691 = vmatpush1.bf16.xpose.msra.mxu0 0
        %4692 = vmatprep.subr.bf16.mxu0 0
        %4693 = vmatpush1.bf16.xpose.msra.mxu0 0
        %4694 = vmatprep.subr.bf16.mxu0 0
        %4695 = vmatpush1.bf16.xpose.msra.mxu0 0
        %4696 = vmatprep.mubr.bf16.mxu0 0
        %4697 = vmatmul.mubr.bf16.gmra.mrb[0].mxu0 %v4659
        %v4698 = vpop.f32.mrb[0].mxu0
        %v4699 = vadd.f32 0.0, %v4698
        %v4700 = vpop.f32.mrb[0].mxu0
        %v4701 = vpop.f32.mrb[0].mxu0
        %v4702 = vpop.f32.mrb[0].mxu0
        %4703 = vdwg.mxu0
        %4705 = vrot.lane.b32.xlu0 %v4652, 120
        %v4706 = vpop.permute.xlu0 %4705
        %v4708 = vsel %vm586, %v4652, 0
        %v4711 = vsel %vm586, %v4706, 0
        %4713 = vmatprep.subr.bf16.mxu0 0
        %4714 = vmatpush1.bf16.xpose.msra.mxu0 %v4711
        %4715 = vmatprep.subr.bf16.mxu0 0
        %4716 = vmatpush1.bf16.xpose.msra.mxu0 0
        %4717 = vmatprep.subr.bf16.mxu0 0
        %4718 = vmatpush1.bf16.xpose.msra.mxu0 0
        %4719 = vmatprep.subr.bf16.mxu0 0
        %4720 = vmatpush1.bf16.xpose.msra.mxu0 0
        %4721 = vmatprep.subr.bf16.mxu0 0
        %4722 = vmatpush1.bf16.xpose.msra.mxu0 0
        %4723 = vmatprep.subr.bf16.mxu0 0
        %4724 = vmatpush1.bf16.xpose.msra.mxu0 0
        %4725 = vmatprep.subr.bf16.mxu0 0
        %4726 = vmatpush1.bf16.xpose.msra.mxu0 0
        %4727 = vmatprep.subr.bf16.mxu0 0
        %4728 = vmatpush1.bf16.xpose.msra.mxu0 0
        %4729 = vmatprep.subr.bf16.mxu0 0
        %4730 = vmatpush1.bf16.xpose.msra.mxu0 0
        %4731 = vmatprep.subr.bf16.mxu0 0
        %4732 = vmatpush1.bf16.xpose.msra.mxu0 0
        %4733 = vmatprep.subr.bf16.mxu0 0
        %4734 = vmatpush1.bf16.xpose.msra.mxu0 0
        %4735 = vmatprep.subr.bf16.mxu0 0
        %4736 = vmatpush1.bf16.xpose.msra.mxu0 0
        %4737 = vmatprep.subr.bf16.mxu0 0
        %4738 = vmatpush1.bf16.xpose.msra.mxu0 0
        %4739 = vmatprep.subr.bf16.mxu0 0
        %4740 = vmatpush1.bf16.xpose.msra.mxu0 0
        %4741 = vmatprep.subr.bf16.mxu0 0
        %4742 = vmatpush1.bf16.xpose.msra.mxu0 0
        %4743 = vmatprep.subr.bf16.mxu0 0
        %4744 = vmatpush1.bf16.xpose.msra.mxu0 0
        %4745 = vmatprep.mubr.bf16.mxu0 0
        %4746 = vmatmul.mubr.bf16.gmra.mrb[0].mxu0 %v4708
        %v4747 = vpop.f32.mrb[0].mxu0
        %v4748 = vadd.f32 0.0, %v4747
        %v4749 = vpop.f32.mrb[0].mxu0
        %v4750 = vpop.f32.mrb[0].mxu0
        %v4751 = vpop.f32.mrb[0].mxu0
        %4752 = vdwg.mxu0
        %4754 = vrot.lane.b32.xlu0 %v4653, 120
        %v4755 = vpop.permute.xlu0 %4754
        %v4757 = vsel %vm586, %v4653, 0
        %v4760 = vsel %vm586, %v4755, 0
        %4762 = vmatprep.subr.bf16.mxu0 0
        %4763 = vmatpush1.bf16.xpose.msra.mxu0 %v4760
        %4764 = vmatprep.subr.bf16.mxu0 0
        %4765 = vmatpush1.bf16.xpose.msra.mxu0 0
        %4766 = vmatprep.subr.bf16.mxu0 0
        %4767 = vmatpush1.bf16.xpose.msra.mxu0 0
        %4768 = vmatprep.subr.bf16.mxu0 0
        %4769 = vmatpush1.bf16.xpose.msra.mxu0 0
        %4770 = vmatprep.subr.bf16.mxu0 0
        %4771 = vmatpush1.bf16.xpose.msra.mxu0 0
        %4772 = vmatprep.subr.bf16.mxu0 0
        %4773 = vmatpush1.bf16.xpose.msra.mxu0 0
        %4774 = vmatprep.subr.bf16.mxu0 0
        %4775 = vmatpush1.bf16.xpose.msra.mxu0 0
        %4776 = vmatprep.subr.bf16.mxu0 0
        %4777 = vmatpush1.bf16.xpose.msra.mxu0 0
        %4778 = vmatprep.subr.bf16.mxu0 0
        %4779 = vmatpush1.bf16.xpose.msra.mxu0 0
        %4780 = vmatprep.subr.bf16.mxu0 0
        %4781 = vmatpush1.bf16.xpose.msra.mxu0 0
        %4782 = vmatprep.subr.bf16.mxu0 0
        %4783 = vmatpush1.bf16.xpose.msra.mxu0 0
        %4784 = vmatprep.subr.bf16.mxu0 0
        %4785 = vmatpush1.bf16.xpose.msra.mxu0 0
        %4786 = vmatprep.subr.bf16.mxu0 0
        %4787 = vmatpush1.bf16.xpose.msra.mxu0 0
        %4788 = vmatprep.subr.bf16.mxu0 0
        %4789 = vmatpush1.bf16.xpose.msra.mxu0 0
        %4790 = vmatprep.subr.bf16.mxu0 0
        %4791 = vmatpush1.bf16.xpose.msra.mxu0 0
        %4792 = vmatprep.subr.bf16.mxu0 0
        %4793 = vmatpush1.bf16.xpose.msra.mxu0 0
        %4794 = vmatprep.mubr.bf16.mxu0 0
        %4795 = vmatmul.mubr.bf16.gmra.mrb[0].mxu0 %v4757
        %v4796 = vpop.f32.mrb[0].mxu0
        %v4797 = vadd.f32 0.0, %v4796
        %v4798 = vpop.f32.mrb[0].mxu0
        %v4799 = vpop.f32.mrb[0].mxu0
        %v4800 = vpop.f32.mrb[0].mxu0
        %4801 = vdwg.mxu0
        %4803 = vrot.lane.b32.xlu0 %v4654, 120
        %v4804 = vpop.permute.xlu0 %4803
        %v4806 = vsel %vm586, %v4654, 0
        %v4809 = vsel %vm586, %v4804, 0
        %4811 = vmatprep.subr.bf16.mxu0 0
        %4812 = vmatpush1.bf16.xpose.msra.mxu0 %v4809
        %4813 = vmatprep.subr.bf16.mxu0 0
        %4814 = vmatpush1.bf16.xpose.msra.mxu0 0
        %4815 = vmatprep.subr.bf16.mxu0 0
        %4816 = vmatpush1.bf16.xpose.msra.mxu0 0
        %4817 = vmatprep.subr.bf16.mxu0 0
        %4818 = vmatpush1.bf16.xpose.msra.mxu0 0
        %4819 = vmatprep.subr.bf16.mxu0 0
        %4820 = vmatpush1.bf16.xpose.msra.mxu0 0
        %4821 = vmatprep.subr.bf16.mxu0 0
        %4822 = vmatpush1.bf16.xpose.msra.mxu0 0
        %4823 = vmatprep.subr.bf16.mxu0 0
        %4824 = vmatpush1.bf16.xpose.msra.mxu0 0
        %4825 = vmatprep.subr.bf16.mxu0 0
        %4826 = vmatpush1.bf16.xpose.msra.mxu0 0
        %4827 = vmatprep.subr.bf16.mxu0 0
        %4828 = vmatpush1.bf16.xpose.msra.mxu0 0
        %4829 = vmatprep.subr.bf16.mxu0 0
        %4830 = vmatpush1.bf16.xpose.msra.mxu0 0
        %4831 = vmatprep.subr.bf16.mxu0 0
        %4832 = vmatpush1.bf16.xpose.msra.mxu0 0
        %4833 = vmatprep.subr.bf16.mxu0 0
        %4834 = vmatpush1.bf16.xpose.msra.mxu0 0
        %4835 = vmatprep.subr.bf16.mxu0 0
        %4836 = vmatpush1.bf16.xpose.msra.mxu0 0
        %4837 = vmatprep.subr.bf16.mxu0 0
        %4838 = vmatpush1.bf16.xpose.msra.mxu0 0
        %4839 = vmatprep.subr.bf16.mxu0 0
        %4840 = vmatpush1.bf16.xpose.msra.mxu0 0
        %4841 = vmatprep.subr.bf16.mxu0 0
        %4842 = vmatpush1.bf16.xpose.msra.mxu0 0
        %4843 = vmatprep.mubr.bf16.mxu0 0
        %4844 = vmatmul.mubr.bf16.gmra.mrb[0].mxu0 %v4806
        %v4845 = vpop.f32.mrb[0].mxu0
        %v4846 = vadd.f32 0.0, %v4845
        %v4847 = vpop.f32.mrb[0].mxu0
        %v4848 = vpop.f32.mrb[0].mxu0
        %v4849 = vpop.f32.mrb[0].mxu0
        %4850 = vdwg.mxu0
        %v4851 = vsel %vm586, %v4699, -inf
        %4852 = vmax.xlane.f32.xlu0 %v4851
        %v4853 = vpop.xlane.xlu0 %4852
        %v4854 = vsel %vm586, %v4748, -inf
        %4855 = vmax.xlane.f32.xlu0 %v4854
        %v4856 = vpop.xlane.xlu0 %4855
        %v4857 = vsel %vm586, %v4797, -inf
        %4858 = vmax.xlane.f32.xlu0 %v4857
        %v4859 = vpop.xlane.xlu0 %4858
        %v4860 = vsel %vm586, %v4846, -inf
        %4861 = vmax.xlane.f32.xlu0 %v4860
        %v4862 = vpop.xlane.xlu0 %4861
        %v4863 = vsub.f32 %v4699, %v4853
        %v4864 = vsub.f32 %v4748, %v4856
        %v4865 = vsub.f32 %v4797, %v4859
        %v4866 = vsub.f32 %v4846, %v4862
        %v4867 = vmul.f32 %v4863, 1.442695
        %v4868 = vpow.pop %v4867
        %v4869 = vmul.f32 %v4864, 1.442695
        %v4870 = vpow.pop %v4869
        %v4871 = vmul.f32 %v4865, 1.442695
        %v4872 = vpow.pop %v4871
        %v4873 = vmul.f32 %v4866, 1.442695
        %v4874 = vpow.pop %v4873
        %v4875 = vsel %vm586, %v4868, 0.0
        %4876 = vadd.xlane.f32.xlu0 %v4875
        %v4877 = vpop.xlane.xlu0 %4876
        %v4878 = vsel %vm586, %v4870, 0.0
        %4879 = vadd.xlane.f32.xlu0 %v4878
        %v4880 = vpop.xlane.xlu0 %4879
        %v4881 = vsel %vm586, %v4872, 0.0
        %4882 = vadd.xlane.f32.xlu0 %v4881
        %v4883 = vpop.xlane.xlu0 %4882
        %v4884 = vsel %vm586, %v4874, 0.0
        %4885 = vadd.xlane.f32.xlu0 %v4884
        %v4886 = vpop.xlane.xlu0 %4885
        %v4887 = vpack.c.bf16 %v4868, %v4868
        %v4888 = vpack.c.bf16 %v4870, %v4870
        %v4889 = vpack.c.bf16 %v4872, %v4872
        %v4890 = vpack.c.bf16 %v4874, %v4874
        %4891 = vrot.lane.b32.xlu0 %v4651, 112
        %v4892 = vpop.permute.xlu0 %4891
        %v4894 = vsel %vm586, %v4887, 0
        %v4897 = vsel %vm590, %v4892, 0
        %4899 = vmatprep.subr.bf16.mxu0 0
        %4900 = vmatpush1.bf16.msra.mxu0 %v4897
        %4901 = vmatprep.subr.bf16.mxu0 0
        %4902 = vmatpush1.bf16.msra.mxu0 0
        %4903 = vmatprep.subr.bf16.mxu0 0
        %4904 = vmatpush1.bf16.msra.mxu0 0
        %4905 = vmatprep.subr.bf16.mxu0 0
        %4906 = vmatpush1.bf16.msra.mxu0 0
        %4907 = vmatprep.subr.bf16.mxu0 0
        %4908 = vmatpush1.bf16.msra.mxu0 0
        %4909 = vmatprep.subr.bf16.mxu0 0
        %4910 = vmatpush1.bf16.msra.mxu0 0
        %4911 = vmatprep.subr.bf16.mxu0 0
        %4912 = vmatpush1.bf16.msra.mxu0 0
        %4913 = vmatprep.subr.bf16.mxu0 0
        %4914 = vmatpush1.bf16.msra.mxu0 0
        %4915 = vmatprep.subr.bf16.mxu0 0
        %4916 = vmatpush1.bf16.msra.mxu0 0
        %4917 = vmatprep.subr.bf16.mxu0 0
        %4918 = vmatpush1.bf16.msra.mxu0 0
        %4919 = vmatprep.subr.bf16.mxu0 0
        %4920 = vmatpush1.bf16.msra.mxu0 0
        %4921 = vmatprep.subr.bf16.mxu0 0
        %4922 = vmatpush1.bf16.msra.mxu0 0
        %4923 = vmatprep.subr.bf16.mxu0 0
        %4924 = vmatpush1.bf16.msra.mxu0 0
        %4925 = vmatprep.subr.bf16.mxu0 0
        %4926 = vmatpush1.bf16.msra.mxu0 0
        %4927 = vmatprep.subr.bf16.mxu0 0
        %4928 = vmatpush1.bf16.msra.mxu0 0
        %4929 = vmatprep.subr.bf16.mxu0 0
        %4930 = vmatpush1.bf16.msra.mxu0 0
        %4931 = vmatprep.mubr.bf16.mxu0 0
        %4932 = vmatmul.mubr.bf16.gmra.mrb[0].mxu0 %v4894
        %v4933 = vpop.f32.mrb[0].mxu0
        %v4934 = vadd.f32 0.0, %v4933
        %v4935 = vpop.f32.mrb[0].mxu0
        %v4936 = vpop.f32.mrb[0].mxu0
        %v4937 = vpop.f32.mrb[0].mxu0
        %4938 = vdwg.mxu0
        %4939 = vrot.lane.b32.xlu0 %v4652, 112
        %v4940 = vpop.permute.xlu0 %4939
        %v4942 = vsel %vm586, %v4888, 0
        %v4945 = vsel %vm590, %v4940, 0
        %4947 = vmatprep.subr.bf16.mxu0 0
        %4948 = vmatpush1.bf16.msra.mxu0 %v4945
        %4949 = vmatprep.subr.bf16.mxu0 0
        %4950 = vmatpush1.bf16.msra.mxu0 0
        %4951 = vmatprep.subr.bf16.mxu0 0
        %4952 = vmatpush1.bf16.msra.mxu0 0
        %4953 = vmatprep.subr.bf16.mxu0 0
        %4954 = vmatpush1.bf16.msra.mxu0 0
        %4955 = vmatprep.subr.bf16.mxu0 0
        %4956 = vmatpush1.bf16.msra.mxu0 0
        %4957 = vmatprep.subr.bf16.mxu0 0
        %4958 = vmatpush1.bf16.msra.mxu0 0
        %4959 = vmatprep.subr.bf16.mxu0 0
        %4960 = vmatpush1.bf16.msra.mxu0 0
        %4961 = vmatprep.subr.bf16.mxu0 0
        %4962 = vmatpush1.bf16.msra.mxu0 0
        %4963 = vmatprep.subr.bf16.mxu0 0
        %4964 = vmatpush1.bf16.msra.mxu0 0
        %4965 = vmatprep.subr.bf16.mxu0 0
        %4966 = vmatpush1.bf16.msra.mxu0 0
        %4967 = vmatprep.subr.bf16.mxu0 0
        %4968 = vmatpush1.bf16.msra.mxu0 0
        %4969 = vmatprep.subr.bf16.mxu0 0
        %4970 = vmatpush1.bf16.msra.mxu0 0
        %4971 = vmatprep.subr.bf16.mxu0 0
        %4972 = vmatpush1.bf16.msra.mxu0 0
        %4973 = vmatprep.subr.bf16.mxu0 0
        %4974 = vmatpush1.bf16.msra.mxu0 0
        %4975 = vmatprep.subr.bf16.mxu0 0
        %4976 = vmatpush1.bf16.msra.mxu0 0
        %4977 = vmatprep.subr.bf16.mxu0 0
        %4978 = vmatpush1.bf16.msra.mxu0 0
        %4979 = vmatprep.mubr.bf16.mxu0 0
        %4980 = vmatmul.mubr.bf16.gmra.mrb[0].mxu0 %v4942
        %v4981 = vpop.f32.mrb[0].mxu0
        %v4982 = vadd.f32 0.0, %v4981
        %v4983 = vpop.f32.mrb[0].mxu0
        %v4984 = vpop.f32.mrb[0].mxu0
        %v4985 = vpop.f32.mrb[0].mxu0
        %4986 = vdwg.mxu0
        %4987 = vrot.lane.b32.xlu0 %v4653, 112
        %v4988 = vpop.permute.xlu0 %4987
        %v4990 = vsel %vm586, %v4889, 0
        %v4993 = vsel %vm590, %v4988, 0
        %4995 = vmatprep.subr.bf16.mxu0 0
        %4996 = vmatpush1.bf16.msra.mxu0 %v4993
        %4997 = vmatprep.subr.bf16.mxu0 0
        %4998 = vmatpush1.bf16.msra.mxu0 0
        %4999 = vmatprep.subr.bf16.mxu0 0
        %5000 = vmatpush1.bf16.msra.mxu0 0
        %5001 = vmatprep.subr.bf16.mxu0 0
        %5002 = vmatpush1.bf16.msra.mxu0 0
        %5003 = vmatprep.subr.bf16.mxu0 0
        %5004 = vmatpush1.bf16.msra.mxu0 0
        %5005 = vmatprep.subr.bf16.mxu0 0
        %5006 = vmatpush1.bf16.msra.mxu0 0
        %5007 = vmatprep.subr.bf16.mxu0 0
        %5008 = vmatpush1.bf16.msra.mxu0 0
        %5009 = vmatprep.subr.bf16.mxu0 0
        %5010 = vmatpush1.bf16.msra.mxu0 0
        %5011 = vmatprep.subr.bf16.mxu0 0
        %5012 = vmatpush1.bf16.msra.mxu0 0
        %5013 = vmatprep.subr.bf16.mxu0 0
        %5014 = vmatpush1.bf16.msra.mxu0 0
        %5015 = vmatprep.subr.bf16.mxu0 0
        %5016 = vmatpush1.bf16.msra.mxu0 0
        %5017 = vmatprep.subr.bf16.mxu0 0
        %5018 = vmatpush1.bf16.msra.mxu0 0
        %5019 = vmatprep.subr.bf16.mxu0 0
        %5020 = vmatpush1.bf16.msra.mxu0 0
        %5021 = vmatprep.subr.bf16.mxu0 0
        %5022 = vmatpush1.bf16.msra.mxu0 0
        %5023 = vmatprep.subr.bf16.mxu0 0
        %5024 = vmatpush1.bf16.msra.mxu0 0
        %5025 = vmatprep.subr.bf16.mxu0 0
        %5026 = vmatpush1.bf16.msra.mxu0 0
        %5027 = vmatprep.mubr.bf16.mxu0 0
        %5028 = vmatmul.mubr.bf16.gmra.mrb[0].mxu0 %v4990
        %v5029 = vpop.f32.mrb[0].mxu0
        %v5030 = vadd.f32 0.0, %v5029
        %v5031 = vpop.f32.mrb[0].mxu0
        %v5032 = vpop.f32.mrb[0].mxu0
        %v5033 = vpop.f32.mrb[0].mxu0
        %5034 = vdwg.mxu0
        %5035 = vrot.lane.b32.xlu0 %v4654, 112
        %v5036 = vpop.permute.xlu0 %5035
        %v5038 = vsel %vm586, %v4890, 0
        %v5041 = vsel %vm590, %v5036, 0
        %5043 = vmatprep.subr.bf16.mxu0 0
        %5044 = vmatpush1.bf16.msra.mxu0 %v5041
        %5045 = vmatprep.subr.bf16.mxu0 0
        %5046 = vmatpush1.bf16.msra.mxu0 0
        %5047 = vmatprep.subr.bf16.mxu0 0
        %5048 = vmatpush1.bf16.msra.mxu0 0
        %5049 = vmatprep.subr.bf16.mxu0 0
        %5050 = vmatpush1.bf16.msra.mxu0 0
        %5051 = vmatprep.subr.bf16.mxu0 0
        %5052 = vmatpush1.bf16.msra.mxu0 0
        %5053 = vmatprep.subr.bf16.mxu0 0
        %5054 = vmatpush1.bf16.msra.mxu0 0
        %5055 = vmatprep.subr.bf16.mxu0 0
        %5056 = vmatpush1.bf16.msra.mxu0 0
        %5057 = vmatprep.subr.bf16.mxu0 0
        %5058 = vmatpush1.bf16.msra.mxu0 0
        %5059 = vmatprep.subr.bf16.mxu0 0
        %5060 = vmatpush1.bf16.msra.mxu0 0
        %5061 = vmatprep.subr.bf16.mxu0 0
        %5062 = vmatpush1.bf16.msra.mxu0 0
        %5063 = vmatprep.subr.bf16.mxu0 0
        %5064 = vmatpush1.bf16.msra.mxu0 0
        %5065 = vmatprep.subr.bf16.mxu0 0
        %5066 = vmatpush1.bf16.msra.mxu0 0
        %5067 = vmatprep.subr.bf16.mxu0 0
        %5068 = vmatpush1.bf16.msra.mxu0 0
        %5069 = vmatprep.subr.bf16.mxu0 0
        %5070 = vmatpush1.bf16.msra.mxu0 0
        %5071 = vmatprep.subr.bf16.mxu0 0
        %5072 = vmatpush1.bf16.msra.mxu0 0
        %5073 = vmatprep.subr.bf16.mxu0 0
        %5074 = vmatpush1.bf16.msra.mxu0 0
        %5075 = vmatprep.mubr.bf16.mxu0 0
        %5076 = vmatmul.mubr.bf16.gmra.mrb[0].mxu0 %v5038
        %v5077 = vpop.f32.mrb[0].mxu0
        %v5078 = vadd.f32 0.0, %v5077
        %v5079 = vpop.f32.mrb[0].mxu0
        %v5080 = vpop.f32.mrb[0].mxu0
        %v5081 = vpop.f32.mrb[0].mxu0
        %5082 = vdwg.mxu0
        %v5083 = vrcp.pop %v4877
        %v5084 = vrcp.pop %v4880
        %v5085 = vrcp.pop %v4883
        %v5086 = vrcp.pop %v4886
        %v5087 = vmul.f32 %v4934, %v5083
        %v5088 = vmul.f32 %v4982, %v5084
        %v5089 = vmul.f32 %v5030, %v5085
        %v5090 = vmul.f32 %v5078, %v5086
        %v5091 = vpack.c.bf16 %v5087, %v5087
        %v5092 = vpack.c.bf16 %v5088, %v5088
        %v5093 = vpack.c.bf16 %v5089, %v5089
        %v5094 = vpack.c.bf16 %v5090, %v5090
        %s5095 = scalar_lea.vmem %s12, 48
        %v5096 = vld [vmem:[%s5095] sm:$0xf]
        %v5097 = vld [vmem:[%s5095 + $0x4] sm:$0xf]
        %v5098 = vld [vmem:[%s5095 + $0x8] sm:$0xf]
        %v5099 = vld [vmem:[%s5095 + $0xc] sm:$0xf]
        %v5101 = vsel %vm586, %v5091, 0
        %v5104 = vsel %vm590, %v5096, 0
        %5106 = vmatprep.subr.bf16.mxu0 0
        %5107 = vmatpush1.bf16.msra.mxu0 %v5104
        %5108 = vmatprep.subr.bf16.mxu0 0
        %5109 = vmatpush1.bf16.msra.mxu0 0
        %5110 = vmatprep.subr.bf16.mxu0 0
        %5111 = vmatpush1.bf16.msra.mxu0 0
        %5112 = vmatprep.subr.bf16.mxu0 0
        %5113 = vmatpush1.bf16.msra.mxu0 0
        %5114 = vmatprep.subr.bf16.mxu0 0
        %5115 = vmatpush1.bf16.msra.mxu0 0
        %5116 = vmatprep.subr.bf16.mxu0 0
        %5117 = vmatpush1.bf16.msra.mxu0 0
        %5118 = vmatprep.subr.bf16.mxu0 0
        %5119 = vmatpush1.bf16.msra.mxu0 0
        %5120 = vmatprep.subr.bf16.mxu0 0
        %5121 = vmatpush1.bf16.msra.mxu0 0
        %5122 = vmatprep.subr.bf16.mxu0 0
        %5123 = vmatpush1.bf16.msra.mxu0 0
        %5124 = vmatprep.subr.bf16.mxu0 0
        %5125 = vmatpush1.bf16.msra.mxu0 0
        %5126 = vmatprep.subr.bf16.mxu0 0
        %5127 = vmatpush1.bf16.msra.mxu0 0
        %5128 = vmatprep.subr.bf16.mxu0 0
        %5129 = vmatpush1.bf16.msra.mxu0 0
        %5130 = vmatprep.subr.bf16.mxu0 0
        %5131 = vmatpush1.bf16.msra.mxu0 0
        %5132 = vmatprep.subr.bf16.mxu0 0
        %5133 = vmatpush1.bf16.msra.mxu0 0
        %5134 = vmatprep.subr.bf16.mxu0 0
        %5135 = vmatpush1.bf16.msra.mxu0 0
        %5136 = vmatprep.subr.bf16.mxu0 0
        %5137 = vmatpush1.bf16.msra.mxu0 0
        %5138 = vmatprep.mubr.bf16.mxu0 0
        %5139 = vmatmul.mubr.bf16.gmra.mrb[0].mxu0 %v5101
        %v5140 = vpop.f32.mrb[0].mxu0
        %v5141 = vadd.f32 0.0, %v5140
        %v5142 = vpop.f32.mrb[0].mxu0
        %v5143 = vpop.f32.mrb[0].mxu0
        %v5144 = vpop.f32.mrb[0].mxu0
        %5145 = vdwg.mxu0
        %v5147 = vsel %vm586, %v5092, 0
        %v5150 = vsel %vm590, %v5097, 0
        %5152 = vmatprep.subr.bf16.mxu0 0
        %5153 = vmatpush1.bf16.msra.mxu0 %v5150
        %5154 = vmatprep.subr.bf16.mxu0 0
        %5155 = vmatpush1.bf16.msra.mxu0 0
        %5156 = vmatprep.subr.bf16.mxu0 0
        %5157 = vmatpush1.bf16.msra.mxu0 0
        %5158 = vmatprep.subr.bf16.mxu0 0
        %5159 = vmatpush1.bf16.msra.mxu0 0
        %5160 = vmatprep.subr.bf16.mxu0 0
        %5161 = vmatpush1.bf16.msra.mxu0 0
        %5162 = vmatprep.subr.bf16.mxu0 0
        %5163 = vmatpush1.bf16.msra.mxu0 0
        %5164 = vmatprep.subr.bf16.mxu0 0
        %5165 = vmatpush1.bf16.msra.mxu0 0
        %5166 = vmatprep.subr.bf16.mxu0 0
        %5167 = vmatpush1.bf16.msra.mxu0 0
        %5168 = vmatprep.subr.bf16.mxu0 0
        %5169 = vmatpush1.bf16.msra.mxu0 0
        %5170 = vmatprep.subr.bf16.mxu0 0
        %5171 = vmatpush1.bf16.msra.mxu0 0
        %5172 = vmatprep.subr.bf16.mxu0 0
        %5173 = vmatpush1.bf16.msra.mxu0 0
        %5174 = vmatprep.subr.bf16.mxu0 0
        %5175 = vmatpush1.bf16.msra.mxu0 0
        %5176 = vmatprep.subr.bf16.mxu0 0
        %5177 = vmatpush1.bf16.msra.mxu0 0
        %5178 = vmatprep.subr.bf16.mxu0 0
        %5179 = vmatpush1.bf16.msra.mxu0 0
        %5180 = vmatprep.subr.bf16.mxu0 0
        %5181 = vmatpush1.bf16.msra.mxu0 0
        %5182 = vmatprep.subr.bf16.mxu0 0
        %5183 = vmatpush1.bf16.msra.mxu0 0
        %5184 = vmatprep.mubr.bf16.mxu0 0
        %5185 = vmatmul.mubr.bf16.gmra.mrb[0].mxu0 %v5147
        %v5186 = vpop.f32.mrb[0].mxu0
        %v5187 = vadd.f32 0.0, %v5186
        %v5188 = vpop.f32.mrb[0].mxu0
        %v5189 = vpop.f32.mrb[0].mxu0
        %v5190 = vpop.f32.mrb[0].mxu0
        %5191 = vdwg.mxu0
        %v5193 = vsel %vm586, %v5093, 0
        %v5196 = vsel %vm590, %v5098, 0
        %5198 = vmatprep.subr.bf16.mxu0 0
        %5199 = vmatpush1.bf16.msra.mxu0 %v5196
        %5200 = vmatprep.subr.bf16.mxu0 0
        %5201 = vmatpush1.bf16.msra.mxu0 0
        %5202 = vmatprep.subr.bf16.mxu0 0
        %5203 = vmatpush1.bf16.msra.mxu0 0
        %5204 = vmatprep.subr.bf16.mxu0 0
        %5205 = vmatpush1.bf16.msra.mxu0 0
        %5206 = vmatprep.subr.bf16.mxu0 0
        %5207 = vmatpush1.bf16.msra.mxu0 0
        %5208 = vmatprep.subr.bf16.mxu0 0
        %5209 = vmatpush1.bf16.msra.mxu0 0
        %5210 = vmatprep.subr.bf16.mxu0 0
        %5211 = vmatpush1.bf16.msra.mxu0 0
        %5212 = vmatprep.subr.bf16.mxu0 0
        %5213 = vmatpush1.bf16.msra.mxu0 0
        %5214 = vmatprep.subr.bf16.mxu0 0
        %5215 = vmatpush1.bf16.msra.mxu0 0
        %5216 = vmatprep.subr.bf16.mxu0 0
        %5217 = vmatpush1.bf16.msra.mxu0 0
        %5218 = vmatprep.subr.bf16.mxu0 0
        %5219 = vmatpush1.bf16.msra.mxu0 0
        %5220 = vmatprep.subr.bf16.mxu0 0
        %5221 = vmatpush1.bf16.msra.mxu0 0
        %5222 = vmatprep.subr.bf16.mxu0 0
        %5223 = vmatpush1.bf16.msra.mxu0 0
        %5224 = vmatprep.subr.bf16.mxu0 0
        %5225 = vmatpush1.bf16.msra.mxu0 0
        %5226 = vmatprep.subr.bf16.mxu0 0
        %5227 = vmatpush1.bf16.msra.mxu0 0
        %5228 = vmatprep.subr.bf16.mxu0 0
        %5229 = vmatpush1.bf16.msra.mxu0 0
        %5230 = vmatprep.mubr.bf16.mxu0 0
        %5231 = vmatmul.mubr.bf16.gmra.mrb[0].mxu0 %v5193
        %v5232 = vpop.f32.mrb[0].mxu0
        %v5233 = vadd.f32 0.0, %v5232
        %v5234 = vpop.f32.mrb[0].mxu0
        %v5235 = vpop.f32.mrb[0].mxu0
        %v5236 = vpop.f32.mrb[0].mxu0
        %5237 = vdwg.mxu0
        %v5239 = vsel %vm586, %v5094, 0
        %v5242 = vsel %vm590, %v5099, 0
        %5244 = vmatprep.subr.bf16.mxu0 0
        %5245 = vmatpush1.bf16.msra.mxu0 %v5242
        %5246 = vmatprep.subr.bf16.mxu0 0
        %5247 = vmatpush1.bf16.msra.mxu0 0
        %5248 = vmatprep.subr.bf16.mxu0 0
        %5249 = vmatpush1.bf16.msra.mxu0 0
        %5250 = vmatprep.subr.bf16.mxu0 0
        %5251 = vmatpush1.bf16.msra.mxu0 0
        %5252 = vmatprep.subr.bf16.mxu0 0
        %5253 = vmatpush1.bf16.msra.mxu0 0
        %5254 = vmatprep.subr.bf16.mxu0 0
        %5255 = vmatpush1.bf16.msra.mxu0 0
        %5256 = vmatprep.subr.bf16.mxu0 0
        %5257 = vmatpush1.bf16.msra.mxu0 0
        %5258 = vmatprep.subr.bf16.mxu0 0
        %5259 = vmatpush1.bf16.msra.mxu0 0
        %5260 = vmatprep.subr.bf16.mxu0 0
        %5261 = vmatpush1.bf16.msra.mxu0 0
        %5262 = vmatprep.subr.bf16.mxu0 0
        %5263 = vmatpush1.bf16.msra.mxu0 0
        %5264 = vmatprep.subr.bf16.mxu0 0
        %5265 = vmatpush1.bf16.msra.mxu0 0
        %5266 = vmatprep.subr.bf16.mxu0 0
        %5267 = vmatpush1.bf16.msra.mxu0 0
        %5268 = vmatprep.subr.bf16.mxu0 0
        %5269 = vmatpush1.bf16.msra.mxu0 0
        %5270 = vmatprep.subr.bf16.mxu0 0
        %5271 = vmatpush1.bf16.msra.mxu0 0
        %5272 = vmatprep.subr.bf16.mxu0 0
        %5273 = vmatpush1.bf16.msra.mxu0 0
        %5274 = vmatprep.subr.bf16.mxu0 0
        %5275 = vmatpush1.bf16.msra.mxu0 0
        %5276 = vmatprep.mubr.bf16.mxu0 0
        %5277 = vmatmul.mubr.bf16.gmra.mrb[0].mxu0 %v5239
        %v5278 = vpop.f32.mrb[0].mxu0
        %v5279 = vadd.f32 0.0, %v5278
        %v5280 = vpop.f32.mrb[0].mxu0
        %v5281 = vpop.f32.mrb[0].mxu0
        %v5282 = vpop.f32.mrb[0].mxu0
        %5283 = vdwg.mxu0
        %v5284 = vsel %vm907, %v5141, 0.0
        %v5285 = vsel %vm907, %v5187, 0.0
        %v5286 = vadd.f32 %v5284, %v5285
        %v5287 = vsel %vm907, %v5233, 0.0
        %v5288 = vadd.f32 %v5286, %v5287
        %v5289 = vsel %vm907, %v5279, 0.0
        %v5290 = vadd.f32 %v5288, %v5289
        %v5291 = vlaneseq
        %v5292 = vshrl.u32 %v5291, 7
        %v5293 = vsub.s32 0, %v5292
        %v5294 = vrot.slane %v4392, %v5293
        %v5295 = vadd.f32 %v5290, %v5294
        %v5296 = vadd.f32 %v4390, %v5295
        %v5297 = vsel %vm907, %v5296, 0.0
        %5298 = vadd.xlane.f32.xlu0 %v5297
        %v5299 = vpop.xlane.xlu0 %5298
        %v5300 = vmul.f32 %v5299, 0.03125
        %v5301 = vmul.f32 %v5296, %v5296
        %v5302 = vsel %vm907, %v5301, 0.0
        %5303 = vadd.xlane.f32.xlu0 %v5302
        %v5304 = vpop.xlane.xlu0 %5303
        %v5305 = vmul.f32 %v5304, 0.03125
        %v5306 = vmul.f32 %v5300, %v5300
        %v5307 = vsub.f32 %v5305, %v5306
        %v5308 = vmax.f32 %v5307, 0.0
        %v5309 = vsub.f32 %v5296, %v5300
        %v5310 = vadd.f32 %v5308, 1e-05
        %v5311 = vrsqrt.pop %v5310
        %v5312 = vmul.f32 %v5309, %v5311
        %v5313 = vlaneseq
        %v5314 = vshrl.u32 %v5313, 7
        %v5315 = vsub.s32 1, %v5314
        %v5316 = vrot.slane %v4392, %v5315
        %v5317 = vmul.f32 %v5312, %v5316
        %v5318 = vlaneseq
        %v5319 = vshrl.u32 %v5318, 7
        %v5320 = vsub.s32 2, %v5319
        %v5321 = vrot.slane %v4392, %v5320
        %v5322 = vadd.f32 %v5317, %v5321
        %s5323 = scalar_lea.vmem %s13, 48
        %v5324 = vld [vmem:[%s5323] sm:$0xf]
        %v5325 = vld [vmem:[%s5323 + $0x4] sm:$0xf]
        %v5326 = vld [vmem:[%s5323 + $0x8] sm:$0xf]
        %v5327 = vld [vmem:[%s5323 + $0xc] sm:$0xf]
        %v5328 = vpack.c.bf16 %v5322, %v5322
        %s5329 = scalar_lea.vmem %s14, 3
        %v5330 = vld [vmem:[%s5329] sm:$0x1]
        %v5332 = vlaneseq
        %v5333 = vshrl.u32 %v5332, 7
        %v5334 = vsub.s32 0, %v5333
        %v5335 = vrot.slane %v5330, %v5334
        %v5341 = vunpack.c.l.b16 %v5324
        %v5342 = vunpack.c.l.b16 %v5325
        %v5343 = vunpack.c.l.b16 %v5326
        %v5344 = vunpack.c.l.b16 %v5327
        %v5345 = vpack.c.b16 %v5342, %v5341
        %v5346 = vpack.c.b16 %v5344, %v5343
        %v5350 = vsel %vm907, %v5328, 0
        %5352 = vmatprep.subr.bf16.mxu0 0
        %5353 = vmatpush1.bf16.msra.mxu0 %v5345
        %5354 = vmatprep.subr.bf16.mxu0 0
        %5355 = vmatpush1.bf16.msra.mxu0 %v5346
        %5356 = vmatprep.subr.bf16.mxu0 0
        %5357 = vmatpush1.bf16.msra.mxu0 0
        %5358 = vmatprep.subr.bf16.mxu0 0
        %5359 = vmatpush1.bf16.msra.mxu0 0
        %5360 = vmatprep.subr.bf16.mxu0 0
        %5361 = vmatpush1.bf16.msra.mxu0 0
        %5362 = vmatprep.subr.bf16.mxu0 0
        %5363 = vmatpush1.bf16.msra.mxu0 0
        %5364 = vmatprep.subr.bf16.mxu0 0
        %5365 = vmatpush1.bf16.msra.mxu0 0
        %5366 = vmatprep.subr.bf16.mxu0 0
        %5367 = vmatpush1.bf16.msra.mxu0 0
        %5368 = vmatprep.subr.bf16.mxu0 0
        %5369 = vmatpush1.bf16.msra.mxu0 0
        %5370 = vmatprep.subr.bf16.mxu0 0
        %5371 = vmatpush1.bf16.msra.mxu0 0
        %5372 = vmatprep.subr.bf16.mxu0 0
        %5373 = vmatpush1.bf16.msra.mxu0 0
        %5374 = vmatprep.subr.bf16.mxu0 0
        %5375 = vmatpush1.bf16.msra.mxu0 0
        %5376 = vmatprep.subr.bf16.mxu0 0
        %5377 = vmatpush1.bf16.msra.mxu0 0
        %5378 = vmatprep.subr.bf16.mxu0 0
        %5379 = vmatpush1.bf16.msra.mxu0 0
        %5380 = vmatprep.subr.bf16.mxu0 0
        %5381 = vmatpush1.bf16.msra.mxu0 0
        %5382 = vmatprep.subr.bf16.mxu0 0
        %5383 = vmatpush1.bf16.msra.mxu0 0
        %5384 = vmatprep.mubr.bf16.mxu0 0
        %5385 = vmatmul.mubr.bf16.gmra.mrb[0].mxu0 %v5350
        %v5386 = vpop.f32.mrb[0].mxu0
        %v5387 = vadd.f32 %v5335, %v5386
        %v5388 = vpop.f32.mrb[0].mxu0
        %v5389 = vpop.f32.mrb[0].mxu0
        %v5390 = vpop.f32.mrb[0].mxu0
        %5391 = vdwg.mxu0
        %v5392 = vmax.f32 %v5387, 0.0
        %s5393 = scalar_lea.vmem %s15, 96
        %v5394 = vld [vmem:[%s5393] sm:$0xf]
        %v5395 = vld [vmem:[%s5393 + $0x4] sm:$0xf]
        %v5396 = vld [vmem:[%s5393 + $0x8] sm:$0xf]
        %v5397 = vld [vmem:[%s5393 + $0xc] sm:$0xf]
        %v5398 = vld [vmem:[%s5393 + $0x10] sm:$0xf]
        %v5399 = vld [vmem:[%s5393 + $0x14] sm:$0xf]
        %v5400 = vld [vmem:[%s5393 + $0x18] sm:$0xf]
        %v5401 = vld [vmem:[%s5393 + $0x1c] sm:$0xf]
        %v5402 = vpack.c.bf16 %v5392, %v5392
        %v5403 = vlaneseq
        %v5404 = vshrl.u32 %v5403, 7
        %v5405 = vsub.s32 3, %v5404
        %v5406 = vrot.slane %v4392, %v5405
        %v5415 = vunpack.c.l.b16 %v5394
        %v5416 = vunpack.c.l.b16 %v5395
        %v5417 = vunpack.c.l.b16 %v5396
        %v5418 = vunpack.c.l.b16 %v5397
        %v5419 = vunpack.c.l.b16 %v5398
        %v5420 = vunpack.c.l.b16 %v5399
        %v5421 = vunpack.c.l.b16 %v5400
        %v5422 = vunpack.c.l.b16 %v5401
        %v5423 = vpack.c.b16 %v5416, %v5415
        %v5424 = vpack.c.b16 %v5418, %v5417
        %v5425 = vpack.c.b16 %v5420, %v5419
        %v5426 = vpack.c.b16 %v5422, %v5421
        %v5432 = vsel %vm1883, %v5402, 0
        %5434 = vmatprep.subr.bf16.mxu0 0
        %5435 = vmatpush1.bf16.msra.mxu0 %v5423
        %5436 = vmatprep.subr.bf16.mxu0 0
        %5437 = vmatpush1.bf16.msra.mxu0 %v5424
        %5438 = vmatprep.subr.bf16.mxu0 0
        %5439 = vmatpush1.bf16.msra.mxu0 %v5425
        %5440 = vmatprep.subr.bf16.mxu0 0
        %5441 = vmatpush1.bf16.msra.mxu0 %v5426
        %5442 = vmatprep.subr.bf16.mxu0 0
        %5443 = vmatpush1.bf16.msra.mxu0 0
        %5444 = vmatprep.subr.bf16.mxu0 0
        %5445 = vmatpush1.bf16.msra.mxu0 0
        %5446 = vmatprep.subr.bf16.mxu0 0
        %5447 = vmatpush1.bf16.msra.mxu0 0
        %5448 = vmatprep.subr.bf16.mxu0 0
        %5449 = vmatpush1.bf16.msra.mxu0 0
        %5450 = vmatprep.subr.bf16.mxu0 0
        %5451 = vmatpush1.bf16.msra.mxu0 0
        %5452 = vmatprep.subr.bf16.mxu0 0
        %5453 = vmatpush1.bf16.msra.mxu0 0
        %5454 = vmatprep.subr.bf16.mxu0 0
        %5455 = vmatpush1.bf16.msra.mxu0 0
        %5456 = vmatprep.subr.bf16.mxu0 0
        %5457 = vmatpush1.bf16.msra.mxu0 0
        %5458 = vmatprep.subr.bf16.mxu0 0
        %5459 = vmatpush1.bf16.msra.mxu0 0
        %5460 = vmatprep.subr.bf16.mxu0 0
        %5461 = vmatpush1.bf16.msra.mxu0 0
        %5462 = vmatprep.subr.bf16.mxu0 0
        %5463 = vmatpush1.bf16.msra.mxu0 0
        %5464 = vmatprep.subr.bf16.mxu0 0
        %5465 = vmatpush1.bf16.msra.mxu0 0
        %5466 = vmatprep.mubr.bf16.mxu0 0
        %5467 = vmatmul.mubr.bf16.gmra.mrb[0].mxu0 %v5432
        %v5468 = vpop.f32.mrb[0].mxu0
        %v5469 = vadd.f32 %v5406, %v5468
        %v5470 = vpop.f32.mrb[0].mxu0
        %v5471 = vpop.f32.mrb[0].mxu0
        %v5472 = vpop.f32.mrb[0].mxu0
        %5473 = vdwg.mxu0
        %v5474 = vadd.f32 %v5322, %v5469
        %v5475 = vsel %vm907, %v5474, 0.0
        %5476 = vadd.xlane.f32.xlu0 %v5475
        %v5477 = vpop.xlane.xlu0 %5476
        %v5478 = vmul.f32 %v5477, 0.03125
        %v5479 = vmul.f32 %v5474, %v5474
        %v5480 = vsel %vm907, %v5479, 0.0
        %5481 = vadd.xlane.f32.xlu0 %v5480
        %v5482 = vpop.xlane.xlu0 %5481
        %v5483 = vmul.f32 %v5482, 0.03125
        %v5484 = vmul.f32 %v5478, %v5478
        %v5485 = vsub.f32 %v5483, %v5484
        %v5486 = vmax.f32 %v5485, 0.0
        %v5487 = vsub.f32 %v5474, %v5478
        %v5488 = vadd.f32 %v5486, 1e-05
        %v5489 = vrsqrt.pop %v5488
        %v5490 = vmul.f32 %v5487, %v5489
        %v5491 = vlaneseq
        %v5492 = vshrl.u32 %v5491, 7
        %v5493 = vsub.s32 4, %v5492
        %v5494 = vrot.slane %v4392, %v5493
        %v5495 = vmul.f32 %v5490, %v5494
        %v5496 = vlaneseq
        %v5497 = vshrl.u32 %v5496, 7
        %v5498 = vsub.s32 5, %v5497
        %v5499 = vrot.slane %v4392, %v5498
        %v5500 = vadd.f32 %v5495, %v5499
        %v5501 = vadd.f32 %v4390, %v5500
        %v5502 = vld [vmem:[%s573] sm:$0x1]
        %v5504 = vsel %vm586, %v5502, 0
        %5506 = vmatprep.subr.mxu0 0.0
        %5507 = vmatpush1.msra.mxu0 %v5501
        %5508 = vmatprep.subr.mxu0 0.0
        %5509 = vmatpush1.msra.mxu0 0.0
        %5510 = vmatprep.subr.mxu0 0.0
        %5511 = vmatpush1.msra.mxu0 0.0
        %5512 = vmatprep.subr.mxu0 0.0
        %5513 = vmatpush1.msra.mxu0 0.0
        %5514 = vmatprep.subr.mxu0 0.0
        %5515 = vmatpush1.msra.mxu0 0.0
        %5516 = vmatprep.subr.mxu0 0.0
        %5517 = vmatpush1.msra.mxu0 0.0
        %5518 = vmatprep.subr.mxu0 0.0
        %5519 = vmatpush1.msra.mxu0 0.0
        %5520 = vmatprep.subr.mxu0 0.0
        %5521 = vmatpush1.msra.mxu0 0.0
        %5522 = vmatprep.subr.mxu0 0.0
        %5523 = vmatpush1.msra.mxu0 0.0
        %5524 = vmatprep.subr.mxu0 0.0
        %5525 = vmatpush1.msra.mxu0 0.0
        %5526 = vmatprep.subr.mxu0 0.0
        %5527 = vmatpush1.msra.mxu0 0.0
        %5528 = vmatprep.subr.mxu0 0.0
        %5529 = vmatpush1.msra.mxu0 0.0
        %5530 = vmatprep.subr.mxu0 0.0
        %5531 = vmatpush1.msra.mxu0 0.0
        %5532 = vmatprep.subr.mxu0 0.0
        %5533 = vmatpush1.msra.mxu0 0.0
        %5534 = vmatprep.subr.mxu0 0.0
        %5535 = vmatpush1.msra.mxu0 0.0
        %5536 = vmatprep.subr.mxu0 0.0
        %5537 = vmatpush1.msra.mxu0 0.0
        %5538 = vmatprep.subr.mxu0 0.0
        %5539 = vmatpush1.msra.mxu0 0.0
        %5540 = vmatprep.subr.mxu0 0.0
        %5541 = vmatpush1.msra.mxu0 0.0
        %5542 = vmatprep.subr.mxu0 0.0
        %5543 = vmatpush1.msra.mxu0 0.0
        %5544 = vmatprep.subr.mxu0 0.0
        %5545 = vmatpush1.msra.mxu0 0.0
        %5546 = vmatprep.subr.mxu0 0.0
        %5547 = vmatpush1.msra.mxu0 0.0
        %5548 = vmatprep.subr.mxu0 0.0
        %5549 = vmatpush1.msra.mxu0 0.0
        %5550 = vmatprep.subr.mxu0 0.0
        %5551 = vmatpush1.msra.mxu0 0.0
        %5552 = vmatprep.subr.mxu0 0.0
        %5553 = vmatpush1.msra.mxu0 0.0
        %5554 = vmatprep.subr.mxu0 0.0
        %5555 = vmatpush1.msra.mxu0 0.0
        %5556 = vmatprep.subr.mxu0 0.0
        %5557 = vmatpush1.msra.mxu0 0.0
        %5558 = vmatprep.subr.mxu0 0.0
        %5559 = vmatpush1.msra.mxu0 0.0
        %5560 = vmatprep.subr.mxu0 0.0
        %5561 = vmatpush1.msra.mxu0 0.0
        %5562 = vmatprep.subr.mxu0 0.0
        %5563 = vmatpush1.msra.mxu0 0.0
        %5564 = vmatprep.subr.mxu0 0.0
        %5565 = vmatpush1.msra.mxu0 0.0
        %5566 = vmatprep.subr.mxu0 0.0
        %5567 = vmatpush1.msra.mxu0 0.0
        %5568 = vmatprep.subr.mxu0 0.0
        %5569 = vmatpush1.msra.mxu0 0.0
        %5570 = vmatprep.mubr.f32.mxu0 0.0
        %5571 = vmatmul.mubr.f32.gmra.mrb[0].mxu0 %v5504
        %v5572 = vpop.f32.mrb[0].mxu0
        %v5573 = vadd.f32 0.0, %v5572
        %v5574 = vpop.f32.mrb[0].mxu0
        %5575 = vdwg.mxu0
        %v5576 = vld [vmem:[%s5] sm:$0xf]
        %v5577 = vld [vmem:[%s5 + $0x4] sm:$0xf]
        %v5578 = vld [vmem:[%s5 + $0x8] sm:$0xf]
        %v5579 = vld [vmem:[%s5 + $0xc] sm:$0xf]
        %v5580 = vpack.c.bf16 %v5573, %v5573
        %v5581 = vld [vmem:[%s6] sm:$0x1]
        %v5586 = vunpack.c.l.b16 %v5576
        %v5587 = vunpack.c.l.b16 %v5577
        %v5588 = vunpack.c.l.b16 %v5578
        %v5589 = vunpack.c.l.b16 %v5579
        %v5590 = vpack.c.b16 %v5587, %v5586
        %v5591 = vpack.c.b16 %v5589, %v5588
        %v5595 = vsel %vm907, %v5580, 0
        %5597 = vmatprep.subr.bf16.mxu0 0
        %5598 = vmatpush1.bf16.msra.mxu0 %v5590
        %5599 = vmatprep.subr.bf16.mxu0 0
        %5600 = vmatpush1.bf16.msra.mxu0 %v5591
        %5601 = vmatprep.subr.bf16.mxu0 0
        %5602 = vmatpush1.bf16.msra.mxu0 0
        %5603 = vmatprep.subr.bf16.mxu0 0
        %5604 = vmatpush1.bf16.msra.mxu0 0
        %5605 = vmatprep.subr.bf16.mxu0 0
        %5606 = vmatpush1.bf16.msra.mxu0 0
        %5607 = vmatprep.subr.bf16.mxu0 0
        %5608 = vmatpush1.bf16.msra.mxu0 0
        %5609 = vmatprep.subr.bf16.mxu0 0
        %5610 = vmatpush1.bf16.msra.mxu0 0
        %5611 = vmatprep.subr.bf16.mxu0 0
        %5612 = vmatpush1.bf16.msra.mxu0 0
        %5613 = vmatprep.subr.bf16.mxu0 0
        %5614 = vmatpush1.bf16.msra.mxu0 0
        %5615 = vmatprep.subr.bf16.mxu0 0
        %5616 = vmatpush1.bf16.msra.mxu0 0
        %5617 = vmatprep.subr.bf16.mxu0 0
        %5618 = vmatpush1.bf16.msra.mxu0 0
        %5619 = vmatprep.subr.bf16.mxu0 0
        %5620 = vmatpush1.bf16.msra.mxu0 0
        %5621 = vmatprep.subr.bf16.mxu0 0
        %5622 = vmatpush1.bf16.msra.mxu0 0
        %5623 = vmatprep.subr.bf16.mxu0 0
        %5624 = vmatpush1.bf16.msra.mxu0 0
        %5625 = vmatprep.subr.bf16.mxu0 0
        %5626 = vmatpush1.bf16.msra.mxu0 0
        %5627 = vmatprep.subr.bf16.mxu0 0
        %5628 = vmatpush1.bf16.msra.mxu0 0
        %5629 = vmatprep.mubr.bf16.mxu0 0
        %5630 = vmatmul.mubr.bf16.gmra.mrb[0].mxu0 %v5595
        %v5631 = vpop.f32.mrb[0].mxu0
        %v5632 = vadd.f32 %v5581, %v5631
        %v5633 = vpop.f32.mrb[0].mxu0
        %v5634 = vpop.f32.mrb[0].mxu0
        %v5635 = vpop.f32.mrb[0].mxu0
        %5636 = vdwg.mxu0
        %vm5637 = vcmask 24576
        %5638 = vst.msk [vmem:[%s562] sm:$0x1] %vm5637, %v5632
        %s5639 = sand.u32 %s411, 1
        %s5640 = scalar_lea.sflag [#allocation3], %s5639
        %s5641 = sand.u32 %s411, 1
        %s5642 = scalar_lea.vmem [#allocation2], %s5641
        // Predicated region
        $region103: #{tpu_custom_call.1} parent=87 // pred_check
          %p5643 = pneg %p421
        $region104: #{tpu_custom_call.1} parent=87 // pred_check_branch
          %5645 = sbr.rel (%p5643) target = $region106
        $region105: #{tpu_custom_call.1} parent=87 // pred_region
          %s5647 = ssub.s32 16, 16
          %5648 = vsyncadd %s5640, %s5647
          %s5649 = smul.addr %s31, 16
          %s5650 = scalar_lea.hbm %s17, %s5649
          %s5652 = sshll.u32 %s5642, 4
          %s5653 = int_to_ptr.vmem [resolvable:$true] %s5652
          %5655 = dma.vmem_to_hbm [thread:$0]  %s5653, 16, %s5650, %s5640
        $region106: #{tpu_custom_call.1} parent=87 // pred_fallthru
          _
      $region88: #{tpu_custom_call.1} parent=5 // pred_fallthru
        _
      %p5656 = scmp.le.s32.totalorder 2, %s26
      // Predicated region
      $region107: #{tpu_custom_call.1} parent=5 // pred_check
        %p5657 = pneg %p5656
      $region108: #{tpu_custom_call.1} parent=5 // pred_check_branch
        %5659 = sbr.rel (%p5657) target = $region110
      $region109: #{tpu_custom_call.1} parent=5 // pred_region
        %s5660 = ssub.s32 %s26, 2
        // Predicated region
        $region111: #{tpu_custom_call.1} parent=109 // pred_check
          %p5661 = pneg %p427
        $region112: #{tpu_custom_call.1} parent=109 // pred_check_branch
          %5663 = sbr.rel (%p5661) target = $region114
        $region113: #{tpu_custom_call.1} parent=109 // pred_region
          %s5664 = sand.u32 %s412, 1
          %s5665 = scalar_lea.sflag [#allocation3], %s5664
          %s5666 = sand.u32 %s412, 1
          %s5667 = scalar_lea.vmem [#allocation2], %s5666
          %5668 = dma.done %s5665, 16
        $region114: #{tpu_custom_call.1} parent=109 // pred_fallthru
          _
      $region110: #{tpu_custom_call.1} parent=5 // pred_fallthru
        _
    $region6: #{tpu_custom_call.1} parent=1 // loop_footer
      %s30 = sadd.s32 1, %s26
    $region7: #{tpu_custom_call.1} parent=1 // loop_footer_branch
      %25 = sbr.rel target = $region3
    $region8: #{tpu_custom_call.1} parent=1 // loop_exit
      _
    %5669 = vsyncpa [#allocation3], 1
    %s5670 = scalar_lea.sflag [#allocation3], 1
    %5671 = vsyncpa %s5670, 1

</llo_original>
